<compile_context>
chip_gen: v7x
topology: tpu7x:2x2x1
jax: 0.10.0
libtpu: 0.0.40
codegen_flags: <defaults>
</compile_context>

<pallas_src>
import numpy as np
import jax
import jax.numpy as jnp
from jax.experimental import pallas as pl
from jax.experimental.pallas import tpu as pltpu

# ----------------------------- hyper-parameters (small) -----------------------------
d_model = 32
d_k = 8
d_v = 8
n_heads = 4
d_ff = 64
n_layers = 2
TOTAL_EVENT_NUM = 40
PAD_IDX = 0
NUM_MEL_BINS = d_model          # encoder consumes log-mel directly, so must equal d_model
FFT_SIZE = 64
HOP_WIDTH = 32
SAMPLING_RATE = 16000
MEL_LO_HZ = 20.0
MEL_HI_HZ = 7600.0
INT16_MAX = 32767.0
LN_EPS = 1e-5
MAX_LEN = 64
NEG_INF = -1e9

N_FREQS = FFT_SIZE // 2 + 1                 # 33
F_PAD = ((N_FREQS + 7) // 8) * 8            # 40: sublane-aligned mel contraction dim
V_PAD = 128                                 # lane-dense vocabulary projection

HDK = n_heads * d_k                         # 32
HDV = n_heads * d_v                         # 32
ATTN_SLAB_W = 2 * HDK + HDV + d_model       # 128  [W_Q | W_K | W_V | W_O]
FFN_SLAB_W = d_ff + d_model                 # 96   [W_1 (rows 0:D) | W_2]


# --------------------------------- in-kernel helpers ---------------------------------
def _layernorm(y, gamma, beta):
    mean = jnp.mean(y, axis=-1, keepdims=True)
    var = jnp.mean((y - mean) ** 2, axis=-1, keepdims=True)
    return (y - mean) * jax.lax.rsqrt(var + LN_EPS) * gamma + beta


# --------------------------------- fused Pallas kernel -------------------------------
def transformer_kernel(mag_ref, fb_ref, pos_ref, decx_ref,
                       ebias_ref, sbias_ref, cbias_ref,
                       attw_ref, ffnw_ref, ln_ref,
                       logits_ref, eattn_ref, sattn_ref, cattn_ref):
    """Whole forward pass: spectrogram-to-logits, all weights VMEM resident."""

    def ln_params(idx):
        v = ln_ref[idx]                                   # (1, 2*D)
        return v[:, :d_model], v[:, d_model:2 * d_model]  # gamma, beta (1, D)

    def mha(x_q, x_kv, bias, blk, ln_idx, attn_ref, layer, fused_qkv):
        """Block-diagonal multi-head attention on full (B*L, D) slabs.

        bias: (B*Lq, B*Lk) additive (0 within batch & allowed, -1e9 otherwise),
        so cross-batch pairs contribute exactly 0 after the softmax.
        """
        w = attw_ref[blk]                                 # (D, 128)
        if fused_qkv:
            qkv = jnp.dot(x_q, w[:, :2 * HDK + HDV],
                          preferred_element_type=jnp.float32)        # (BLq, 96)
            q = qkv[:, :HDK]
            k = qkv[:, HDK:2 * HDK]
            v = qkv[:, 2 * HDK:2 * HDK + HDV]
        else:                                             # cross-attention: separate Q / KV
            q = jnp.dot(x_q, w[:, :HDK], preferred_element_type=jnp.float32)
            kv = jnp.dot(x_kv, w[:, HDK:2 * HDK + HDV],
                         preferred_element_type=jnp.float32)
            k = kv[:, :HDK]
            v = kv[:, HDK:HDK + HDV]
        wo = w[:, 2 * HDK + HDV:2 * HDK + HDV + d_model]  # (H*dv, D)

        out = None
        for h in range(n_heads):                          # static unroll (H=4)
            qh = q[:, h * d_k:(h + 1) * d_k]              # (BLq, dk)
            kh = k[:, h * d_k:(h + 1) * d_k]              # (BLk, dk)
            vh = v[:, h * d_v:(h + 1) * d_v]              # (BLk, dv)
            # scores over the full (B*Lq, B*Lk) grid; W_Q already carries 1/sqrt(dk)
            s = jax.lax.dot_general(qh, kh, (((1,), (1,)), ((), ())),
                                    preferred_element_type=jnp.float32) + bias
            m = jnp.max(s, axis=-1, keepdims=True)
            e = jnp.exp(s - m)
            p = e / jnp.sum(e, axis=-1, keepdims=True)    # exact division (review note)
            attn_ref[layer * n_heads + h] = p             # (BLq, BLk) probs (block-diag)
            ctx = jnp.dot(p, vh, preferred_element_type=jnp.float32)            # (BLq, dv)
            part = jnp.dot(ctx, wo[h * d_v:(h + 1) * d_v, :],
                           preferred_element_type=jnp.float32)                  # (BLq, D)
            out = part if out is None else out + part
        gamma, beta = ln_params(ln_idx)
        return _layernorm(out + x_q, gamma, beta)

    def ffn(x, idx, ln_idx):
        slab = ffnw_ref[idx]                              # (d_ff, d_ff + D)
        w1 = slab[:d_model, :d_ff]                        # (D, d_ff)
        w2 = slab[:, d_ff:d_ff + d_model]                 # (d_ff, D)
        h = jnp.maximum(jnp.dot(x, w1, preferred_element_type=jnp.float32), 0.0)
        o = jnp.dot(h, w2, preferred_element_type=jnp.float32)
        gamma, beta = ln_params(ln_idx)
        return _layernorm(o + x, gamma, beta)

    # ---- spectrogram front-end: mel matmul + safe log + positional add ----
    mel = jnp.dot(mag_ref[...], fb_ref[...], preferred_element_type=jnp.float32)
    x = jnp.log(jnp.where(mel <= 0.0, jnp.float32(1e-5), mel)) + pos_ref[...]

    # ---- encoder stack ----
    ebias = ebias_ref[...]
    for l in range(n_layers):
        x = mha(x, x, ebias, blk=l, ln_idx=l,
                attn_ref=eattn_ref, layer=l, fused_qkv=True)
        x = ffn(x, idx=l, ln_idx=n_layers + l)

    # ---- decoder stack (encoder output stays in VMEM / vregs) ----
    y = decx_ref[...]
    sbias = sbias_ref[...]
    cbias = cbias_ref[...]
    for l in range(n_layers):
        y = mha(y, y, sbias, blk=n_layers + l, ln_idx=2 * n_layers + l,
                attn_ref=sattn_ref, layer=l, fused_qkv=True)
        y = mha(y, x, cbias, blk=2 * n_layers + l, ln_idx=3 * n_layers + l,
                attn_ref=cattn_ref, layer=l, fused_qkv=False)
        y = ffn(y, idx=n_layers + l, ln_idx=4 * n_layers + l)

    # ---- lane-dense (padded to 128) vocabulary projection ----
    logits_ref[...] = jnp.dot(y, attw_ref[3 * n_layers],
                              preferred_element_type=jnp.float32)


# --------------------------------- kernel wrapper ------------------------------------
def run_transformer(mag_pad, fb_pad, pos_enc, dec_x, ebias, sbias, cbias,
                    attn_pack, ffn_pack, ln_pack):
    BT = mag_pad.shape[0]
    BLd = dec_x.shape[0]
    ins = [mag_pad, fb_pad, pos_enc, dec_x, ebias, sbias, cbias,
           attn_pack, ffn_pack, ln_pack]
    out_shape = (
        jax.ShapeDtypeStruct((BLd, V_PAD), jnp.float32),                  # padded logits
        jax.ShapeDtypeStruct((n_layers * n_heads, BT, BT), jnp.float32),  # enc self attn
        jax.ShapeDtypeStruct((n_layers * n_heads, BLd, BLd), jnp.float32),  # dec self attn
        jax.ShapeDtypeStruct((n_layers * n_heads, BLd, BT), jnp.float32),   # dec cross attn
    )
    vmem = pltpu.MemorySpace.VMEM
    return pl.pallas_call(
        transformer_kernel,
        out_shape=out_shape,
        in_specs=[pl.BlockSpec(memory_space=vmem) for _ in ins],
        out_specs=tuple(pl.BlockSpec(memory_space=vmem) for _ in out_shape),
    )(*ins)


# --------------------------------- plain-JAX glue ------------------------------------
def melscale_fbanks_htk(n_freqs, f_min, f_max, n_mels, sample_rate):
    all_freqs = np.linspace(0, sample_rate // 2, n_freqs)
    hz_to_mel = lambda f: 2595.0 * np.log10(1.0 + f / 700.0)
    mel_to_hz = lambda m: 700.0 * (10.0 ** (m / 2595.0) - 1.0)
    m_pts = np.linspace(hz_to_mel(f_min), hz_to_mel(f_max), n_mels + 2)
    f_pts = mel_to_hz(m_pts)
    f_diff = f_pts[1:] - f_pts[:-1]
    slopes = f_pts[None, :] - all_freqs[:, None]
    down = -slopes[:, :-2] / f_diff[:-1]
    up = slopes[:, 2:] / f_diff[1:]
    fb = np.maximum(0.0, np.minimum(down, up))
    return jnp.asarray(fb, dtype=jnp.float32)          # (n_freqs, n_mels)


def positional_table(max_len, d):
    tbl = np.array([[pos / np.power(10000, 2 * i / d) for i in range(d)]
                    if pos != 0 else np.zeros(d) for pos in range(max_len)])
    tbl[1:, 0::2] = np.sin(tbl[1:, 0::2])
    tbl[1:, 1::2] = np.cos(tbl[1:, 1::2])
    return jnp.asarray(tbl, dtype=jnp.float32)


def _block_diag_bias(masked):
    """(B, Lq, Lk) bool (True = disallowed) -> (B*Lq, B*Lk) additive bias.

    Cross-batch pairs also get -1e9 so a single softmax over all B*Lk keys
    equals the per-batch softmax (masked terms underflow to exactly 0)."""
    B, Lq, Lk = masked.shape
    full = jnp.full((B * Lq, B * Lk), jnp.float32(NEG_INF))
    for b in range(B):
        blk = jnp.where(masked[b], jnp.float32(NEG_INF), jnp.float32(0.0))
        full = jax.lax.dynamic_update_slice(full, blk, (b * Lq, b * Lk))
    return full


def _split_attns(a, B, Lq, Lk):
    """(n_layers*H, B*Lq, B*Lk) block-diag probs -> list of (B, H, Lq, Lk) per layer."""
    a = a.reshape(n_layers, n_heads, B * Lq, B * Lk)
    outs = []
    for l in range(n_layers):
        outs.append(jnp.stack(
            [a[l, :, b * Lq:(b + 1) * Lq, b * Lk:(b + 1) * Lk] for b in range(B)],
            axis=0))
    return outs


# --------------------------------- parameters ----------------------------------------
def init_params(key):
    assert ATTN_SLAB_W == V_PAD == 128
    ks = jax.random.split(key, 16)
    s = 0.05
    q_scale = 1.0 / np.sqrt(d_k)       # 1/sqrt(d_k) folded into W_Q

    def attn_slab(k):
        kq, kk, kv, ko = jax.random.split(k, 4)
        wq = jax.random.normal(kq, (d_model, HDK), jnp.float32) * (s * q_scale)
        wk = jax.random.normal(kk, (d_model, HDK), jnp.float32) * s
        wv = jax.random.normal(kv, (d_model, HDV), jnp.float32) * s
        wo = jax.random.normal(ko, (HDV, d_model), jnp.float32) * s
        # HDV == d_model here, so W_O shares the same 32-row slab.
        return jnp.concatenate([wq, wk, wv, wo], axis=1)          # (32, 128)

    def ffn_slab(k):
        k1, k2 = jax.random.split(k, 2)
        w1 = jax.random.normal(k1, (d_model, d_ff), jnp.float32) * s
        w2 = jax.random.normal(k2, (d_ff, d_model), jnp.float32) * s
        slab = jnp.zeros((d_ff, FFN_SLAB_W), jnp.float32)
        slab = slab.at[:d_model, :d_ff].set(w1)
        slab = slab.at[:, d_ff:].set(w2)
        return slab                                               # (64, 96)

    # attention pack: [enc l0..l1 | dec_self l0..l1 | dec_cross l0..l1 | vocab proj]
    attn_slabs = [attn_slab(ks[i]) for i in range(3 * n_layers)]
    w_proj = jax.random.normal(ks[6], (d_model, TOTAL_EVENT_NUM), jnp.float32) * s
    w_proj_pad = jnp.pad(w_proj, ((0, 0), (0, V_PAD - TOTAL_EVENT_NUM)))
    attn_pack = jnp.stack(attn_slabs + [w_proj_pad], axis=0)      # (7, 32, 128)

    # FFN pack: [enc l0, enc l1, dec l0, dec l1]
    ffn_pack = jnp.stack([ffn_slab(ks[7 + i]) for i in range(2 * n_layers)], axis=0)

    # LayerNorm pack (gamma | beta), 5*n_layers blocks:
    # [enc_attn l | enc_ffn l | dec_self l | dec_cross l | dec_ffn l]
    ln_pack = jnp.concatenate(
        [jnp.ones((5 * n_layers, 1, d_model), jnp.float32),
         jnp.zeros((5 * n_layers, 1, d_model), jnp.float32)], axis=-1)  # (10, 1, 64)

    fb = melscale_fbanks_htk(N_FREQS, MEL_LO_HZ, MEL_HI_HZ, NUM_MEL_BINS, SAMPLING_RATE)
    fb_pad = jnp.pad(fb, ((0, F_PAD - fb.shape[0]), (0, 0)))      # (40, 32)

    return dict(
        attn_pack=attn_pack,
        ffn_pack=ffn_pack,
        ln_pack=ln_pack,
        mel_fb_pad=fb_pad,
        tgt_emb=jax.random.normal(ks[11], (TOTAL_EVENT_NUM + 1, d_model),
                                  jnp.float32) * s,
        pos_table=positional_table(MAX_LEN, d_model),
    )


# --------------------------------- forward pass --------------------------------------
def transformer_forward(params, enc_audio, inputs_mask, dec_inputs):
    B = enc_audio.shape[0]

    # ---- Spectrogram framing + rFFT (glue) ----
    # TODO(synk): torch.stft (framing + rFFT) has no clean Pallas equivalent; done in JAX.
    x = enc_audio.astype(jnp.float32) / INT16_MAX
    T = 1 + (x.shape[1] - FFT_SIZE) // HOP_WIDTH
    idx = jnp.arange(T)[:, None] * HOP_WIDTH + jnp.arange(FFT_SIZE)[None, :]
    frames = x[:, idx]                                                 # rectangular window
    mag = jnp.abs(jnp.fft.rfft(frames, axis=-1)).astype(jnp.float32)   # (B, T, 33)
    mag_pad = jnp.pad(mag.reshape(B * T, N_FREQS), ((0, 0), (0, F_PAD - N_FREQS)))

    # ---- positional encodings / decoder embedding (glue) ----
    # TODO(synk): nn.Dropout(p=0.1) applied only in train mode; eval-mode identity here.
    pos_enc = jnp.tile(params["pos_table"][:T], (B, 1))                # (B*T, D)
    Ld = dec_inputs.shape[1]
    dec_x = (params["tgt_emb"][dec_inputs]
             + params["pos_table"][:Ld]).reshape(B * Ld, d_model)

    # ---- additive mask biases (block-diagonal over batch) ----
    enc_masked = jnp.broadcast_to((inputs_mask == 0)[:, None, :], (B, T, T))
    pad_m = jnp.broadcast_to((dec_inputs == PAD_IDX)[:, None, :], (B, Ld, Ld))
    subseq = (jnp.triu(jnp.ones((Ld, Ld), jnp.int32), k=1) > 0)[None]
    self_masked = pad_m | subseq
    cross_masked = jnp.broadcast_to((inputs_mask == 0)[:, None, :], (B, Ld, T))

    enc_bias = _block_diag_bias(enc_masked)      # (B*T,  B*T)
    self_bias = _block_diag_bias(self_masked)    # (B*Ld, B*Ld)
    cross_bias = _block_diag_bias(cross_masked)  # (B*Ld, B*T)

    # ---- entire network: ONE fused Pallas kernel ----
    logits_pad, enc_attn, dec_self_attn, dec_enc_attn = run_transformer(
        mag_pad, params["mel_fb_pad"], pos_enc, dec_x,
        enc_bias, self_bias, cross_bias,
        params["attn_pack"], params["ffn_pack"], params["ln_pack"])

    dec_logits = logits_pad[:, :TOTAL_EVENT_NUM].reshape(B, Ld, TOTAL_EVENT_NUM)
    enc_self_attns = _split_attns(enc_attn, B, T, T)
    dec_self_attns = _split_attns(dec_self_attn, B, Ld, Ld)
    dec_enc_attns = _split_attns(dec_enc_attn, B, Ld, T)
    return dec_logits, enc_self_attns, dec_self_attns, dec_enc_attns


# ------------------------------------- main -------------------------------------------
if __name__ == "__main__":
    key = jax.random.PRNGKey(0)
    k_params, k_audio = jax.random.split(key)
    params = init_params(k_params)

    B = 2
    num_samples = FFT_SIZE + 7 * HOP_WIDTH        # -> 8 STFT frames (T_enc = 8)
    enc_audio = jax.random.normal(k_audio, (B, num_samples), jnp.float32) * 8000.0
    inputs_mask = jnp.array([[1, 1, 1, 1, 1, 1, 1, 1],
                             [1, 1, 1, 1, 1, 1, 0, 0]], dtype=jnp.int32)   # (B, T_enc)
    dec_inputs = jnp.array([[1, 5, 7, 9, 3, 2, 8, 4],
                            [1, 6, 2, 0, 0, 0, 0, 0]], dtype=jnp.int32)    # (B, L_dec)

    fwd = jax.jit(transformer_forward)
    logits, enc_attns, dec_self_attns, dec_enc_attns = fwd(
        params, enc_audio, inputs_mask, dec_inputs)
    jax.block_until_ready(logits)
    for a in enc_attns + dec_self_attns + dec_enc_attns:
        jax.block_until_ready(a)

    assert logits.shape == (B, 8, TOTAL_EVENT_NUM)
    assert all(a.shape == (B, n_heads, 8, 8) for a in enc_attns)
    assert all(a.shape == (B, n_heads, 8, 8) for a in dec_self_attns)
    assert all(a.shape == (B, n_heads, 8, 8) for a in dec_enc_attns)
    assert bool(jnp.all(jnp.isfinite(logits)))
    print("KERNEL_OK")
</pallas_src>

<mosaic_0001>
module attributes {stable_mosaic.version = 11 : i64} {
  func.func @transformer_kernel(%arg0: memref<16x40xf32, #tpu.memory_space<vmem>>, %arg1: memref<40x32xf32, #tpu.memory_space<vmem>>, %arg2: memref<16x32xf32, #tpu.memory_space<vmem>>, %arg3: memref<16x32xf32, #tpu.memory_space<vmem>>, %arg4: memref<16x16xf32, #tpu.memory_space<vmem>>, %arg5: memref<16x16xf32, #tpu.memory_space<vmem>>, %arg6: memref<16x16xf32, #tpu.memory_space<vmem>>, %arg7: memref<7x32x128xf32, #tpu.memory_space<vmem>>, %arg8: memref<4x64x96xf32, #tpu.memory_space<vmem>>, %arg9: memref<10x1x64xf32, #tpu.memory_space<vmem>>, %arg10: memref<16x128xf32, #tpu.memory_space<vmem>>, %arg11: memref<8x16x16xf32, #tpu.memory_space<vmem>>, %arg12: memref<8x16x16xf32, #tpu.memory_space<vmem>>, %arg13: memref<8x16x16xf32, #tpu.memory_space<vmem>>) attributes {dimension_semantics = [], scalar_prefetch = 0 : i64, scratch_operands = 0 : i64, tpu.core_type = #tpu.core_type<tc>} {
    %c0 = arith.constant 0 : index
    %c0_0 = arith.constant 0 : index
    %0 = vector.load %arg0[%c0, %c0_0] : memref<16x40xf32, #tpu.memory_space<vmem>>, vector<16x40xf32>
    %c0_1 = arith.constant 0 : index
    %c0_2 = arith.constant 0 : index
    %1 = vector.load %arg1[%c0_1, %c0_2] : memref<40x32xf32, #tpu.memory_space<vmem>>, vector<40x32xf32>
    %cst = arith.constant dense<0.000000e+00> : vector<16x32xf32>
    %2 = tpu.matmul %0, %1, %cst {dimension_numbers = #tpu.dot_dimension_numbers<[1], [0], [0], [1], [0, 0, 1, 1], [], []>} : vector<16x40xf32>, vector<40x32xf32>, vector<16x32xf32> -> vector<16x32xf32>
    %cst_3 = arith.constant 0.000000e+00 : f32
    %3 = vector.broadcast %cst_3 : f32 to vector<16x32xf32>
    %4 = arith.cmpf ole, %2, %3 : vector<16x32xf32>
    %cst_4 = arith.constant 9.99999974E-6 : f32
    %5 = vector.broadcast %cst_4 : f32 to vector<16x32xf32>
    %6 = arith.select %4, %5, %2 : vector<16x32xi1>, vector<16x32xf32>
    %7 = math.log %6 : vector<16x32xf32>
    %c0_5 = arith.constant 0 : index
    %c0_6 = arith.constant 0 : index
    %8 = vector.load %arg2[%c0_5, %c0_6] : memref<16x32xf32, #tpu.memory_space<vmem>>, vector<16x32xf32>
    %9 = arith.addf %7, %8 : vector<16x32xf32>
    %c0_7 = arith.constant 0 : index
    %c0_8 = arith.constant 0 : index
    %10 = vector.load %arg4[%c0_7, %c0_8] : memref<16x16xf32, #tpu.memory_space<vmem>>, vector<16x16xf32>
    %c0_9 = arith.constant 0 : index
    %c0_10 = arith.constant 0 : index
    %c0_11 = arith.constant 0 : index
    %11 = vector.load %arg7[%c0_9, %c0_10, %c0_11] : memref<7x32x128xf32, #tpu.memory_space<vmem>>, vector<1x32x128xf32>
    %12 = vector.shape_cast %11 : vector<1x32x128xf32> to vector<32x128xf32>
    %13 = vector.extract_strided_slice %12 {offsets = [0, 0], sizes = [32, 96], strides = [1, 1]} : vector<32x128xf32> to vector<32x96xf32>
    %cst_12 = arith.constant dense<0.000000e+00> : vector<16x96xf32>
    %14 = tpu.matmul %9, %13, %cst_12 {dimension_numbers = #tpu.dot_dimension_numbers<[1], [0], [0], [1], [0, 0, 1, 1], [], []>} : vector<16x32xf32>, vector<32x96xf32>, vector<16x96xf32> -> vector<16x96xf32>
    %15 = vector.extract_strided_slice %14 {offsets = [0, 0], sizes = [16, 32], strides = [1, 1]} : vector<16x96xf32> to vector<16x32xf32>
    %16 = vector.extract_strided_slice %14 {offsets = [0, 32], sizes = [16, 32], strides = [1, 1]} : vector<16x96xf32> to vector<16x32xf32>
    %17 = vector.extract_strided_slice %14 {offsets = [0, 64], sizes = [16, 32], strides = [1, 1]} : vector<16x96xf32> to vector<16x32xf32>
    %18 = vector.extract_strided_slice %12 {offsets = [0, 96], sizes = [32, 32], strides = [1, 1]} : vector<32x128xf32> to vector<32x32xf32>
    %19 = vector.extract_strided_slice %15 {offsets = [0, 0], sizes = [16, 8], strides = [1, 1]} : vector<16x32xf32> to vector<16x8xf32>
    %20 = vector.extract_strided_slice %16 {offsets = [0, 0], sizes = [16, 8], strides = [1, 1]} : vector<16x32xf32> to vector<16x8xf32>
    %21 = vector.extract_strided_slice %17 {offsets = [0, 0], sizes = [16, 8], strides = [1, 1]} : vector<16x32xf32> to vector<16x8xf32>
    %cst_13 = arith.constant dense<0.000000e+00> : vector<16x16xf32>
    %22 = tpu.matmul %19, %20, %cst_13 {dimension_numbers = #tpu.dot_dimension_numbers<[1], [1], [0], [0], [0, 0, 1, 0], [], []>} : vector<16x8xf32>, vector<16x8xf32>, vector<16x16xf32> -> vector<16x16xf32>
    %23 = arith.addf %22, %10 : vector<16x16xf32>
    %cst_14 = arith.constant dense<0xFF800000> : vector<16xf32>
    %24 = vector.multi_reduction <maximumf>, %23, %cst_14 [1] : vector<16x16xf32> to vector<16xf32>
    %25 = vector.shape_cast %24 : vector<16xf32> to vector<16x1xf32>
    %26 = vector.broadcast %25 : vector<16x1xf32> to vector<16x16xf32>
    %27 = arith.subf %23, %26 : vector<16x16xf32>
    %28 = math.exp %27 : vector<16x16xf32>
    %cst_15 = arith.constant dense<0.000000e+00> : vector<16xf32>
    %29 = vector.multi_reduction <add>, %28, %cst_15 [1] : vector<16x16xf32> to vector<16xf32>
    %30 = vector.shape_cast %29 : vector<16xf32> to vector<16x1xf32>
    %31 = vector.broadcast %30 : vector<16x1xf32> to vector<16x16xf32>
    %32 = arith.divf %28, %31 : vector<16x16xf32>
    %c0_16 = arith.constant 0 : index
    %c0_17 = arith.constant 0 : index
    %c0_18 = arith.constant 0 : index
    %33 = vector.load %arg11[%c0_16, %c0_17, %c0_18] : memref<8x16x16xf32, #tpu.memory_space<vmem>>, vector<1x16x16xf32>
    %34 = vector.shape_cast %33 : vector<1x16x16xf32> to vector<16x16xf32>
    %35 = vector.shape_cast %32 : vector<16x16xf32> to vector<1x16x16xf32>
    tpu.vector_store %arg11[%c0_16, %c0_17, %c0_18], %35 {strides = array<i32>} : memref<8x16x16xf32, #tpu.memory_space<vmem>>, vector<1x16x16xf32>,
    %cst_19 = arith.constant dense<0.000000e+00> : vector<16x8xf32>
    %36 = tpu.matmul %32, %21, %cst_19 {dimension_numbers = #tpu.dot_dimension_numbers<[1], [0], [0], [1], [0, 0, 1, 1], [], []>} : vector<16x16xf32>, vector<16x8xf32>, vector<16x8xf32> -> vector<16x8xf32>
    %37 = vector.extract_strided_slice %18 {offsets = [0, 0], sizes = [8, 32], strides = [1, 1]} : vector<32x32xf32> to vector<8x32xf32>
    %cst_20 = arith.constant dense<0.000000e+00> : vector<16x32xf32>
    %38 = tpu.matmul %36, %37, %cst_20 {dimension_numbers = #tpu.dot_dimension_numbers<[1], [0], [0], [1], [0, 0, 1, 1], [], []>} : vector<16x8xf32>, vector<8x32xf32>, vector<16x32xf32> -> vector<16x32xf32>
    %39 = vector.extract_strided_slice %15 {offsets = [0, 8], sizes = [16, 8], strides = [1, 1]} : vector<16x32xf32> to vector<16x8xf32>
    %40 = vector.extract_strided_slice %16 {offsets = [0, 8], sizes = [16, 8], strides = [1, 1]} : vector<16x32xf32> to vector<16x8xf32>
    %41 = vector.extract_strided_slice %17 {offsets = [0, 8], sizes = [16, 8], strides = [1, 1]} : vector<16x32xf32> to vector<16x8xf32>
    %cst_21 = arith.constant dense<0.000000e+00> : vector<16x16xf32>
    %42 = tpu.matmul %39, %40, %cst_21 {dimension_numbers = #tpu.dot_dimension_numbers<[1], [1], [0], [0], [0, 0, 1, 0], [], []>} : vector<16x8xf32>, vector<16x8xf32>, vector<16x16xf32> -> vector<16x16xf32>
    %43 = arith.addf %42, %10 : vector<16x16xf32>
    %cst_22 = arith.constant dense<0xFF800000> : vector<16xf32>
    %44 = vector.multi_reduction <maximumf>, %43, %cst_22 [1] : vector<16x16xf32> to vector<16xf32>
    %45 = vector.shape_cast %44 : vector<16xf32> to vector<16x1xf32>
    %46 = vector.broadcast %45 : vector<16x1xf32> to vector<16x16xf32>
    %47 = arith.subf %43, %46 : vector<16x16xf32>
    %48 = math.exp %47 : vector<16x16xf32>
    %cst_23 = arith.constant dense<0.000000e+00> : vector<16xf32>
    %49 = vector.multi_reduction <add>, %48, %cst_23 [1] : vector<16x16xf32> to vector<16xf32>
    %50 = vector.shape_cast %49 : vector<16xf32> to vector<16x1xf32>
    %51 = vector.broadcast %50 : vector<16x1xf32> to vector<16x16xf32>
    %52 = arith.divf %48, %51 : vector<16x16xf32>
    %c1 = arith.constant 1 : index
    %c0_24 = arith.constant 0 : index
    %c0_25 = arith.constant 0 : index
    %53 = vector.load %arg11[%c1, %c0_24, %c0_25] : memref<8x16x16xf32, #tpu.memory_space<vmem>>, vector<1x16x16xf32>
    %54 = vector.shape_cast %53 : vector<1x16x16xf32> to vector<16x16xf32>
    %55 = vector.shape_cast %52 : vector<16x16xf32> to vector<1x16x16xf32>
    tpu.vector_store %arg11[%c1, %c0_24, %c0_25], %55 {strides = array<i32>} : memref<8x16x16xf32, #tpu.memory_space<vmem>>, vector<1x16x16xf32>,
    %cst_26 = arith.constant dense<0.000000e+00> : vector<16x8xf32>
    %56 = tpu.matmul %52, %41, %cst_26 {dimension_numbers = #tpu.dot_dimension_numbers<[1], [0], [0], [1], [0, 0, 1, 1], [], []>} : vector<16x16xf32>, vector<16x8xf32>, vector<16x8xf32> -> vector<16x8xf32>
    %57 = vector.extract_strided_slice %18 {offsets = [8, 0], sizes = [8, 32], strides = [1, 1]} : vector<32x32xf32> to vector<8x32xf32>
    %cst_27 = arith.constant dense<0.000000e+00> : vector<16x32xf32>
    %58 = tpu.matmul %56, %57, %cst_27 {dimension_numbers = #tpu.dot_dimension_numbers<[1], [0], [0], [1], [0, 0, 1, 1], [], []>} : vector<16x8xf32>, vector<8x32xf32>, vector<16x32xf32> -> vector<16x32xf32>
    %59 = arith.addf %38, %58 : vector<16x32xf32>
    %60 = vector.extract_strided_slice %15 {offsets = [0, 16], sizes = [16, 8], strides = [1, 1]} : vector<16x32xf32> to vector<16x8xf32>
    %61 = vector.extract_strided_slice %16 {offsets = [0, 16], sizes = [16, 8], strides = [1, 1]} : vector<16x32xf32> to vector<16x8xf32>
    %62 = vector.extract_strided_slice %17 {offsets = [0, 16], sizes = [16, 8], strides = [1, 1]} : vector<16x32xf32> to vector<16x8xf32>
    %cst_28 = arith.constant dense<0.000000e+00> : vector<16x16xf32>
    %63 = tpu.matmul %60, %61, %cst_28 {dimension_numbers = #tpu.dot_dimension_numbers<[1], [1], [0], [0], [0, 0, 1, 0], [], []>} : vector<16x8xf32>, vector<16x8xf32>, vector<16x16xf32> -> vector<16x16xf32>
    %64 = arith.addf %63, %10 : vector<16x16xf32>
    %cst_29 = arith.constant dense<0xFF800000> : vector<16xf32>
    %65 = vector.multi_reduction <maximumf>, %64, %cst_29 [1] : vector<16x16xf32> to vector<16xf32>
    %66 = vector.shape_cast %65 : vector<16xf32> to vector<16x1xf32>
    %67 = vector.broadcast %66 : vector<16x1xf32> to vector<16x16xf32>
    %68 = arith.subf %64, %67 : vector<16x16xf32>
    %69 = math.exp %68 : vector<16x16xf32>
    %cst_30 = arith.constant dense<0.000000e+00> : vector<16xf32>
    %70 = vector.multi_reduction <add>, %69, %cst_30 [1] : vector<16x16xf32> to vector<16xf32>
    %71 = vector.shape_cast %70 : vector<16xf32> to vector<16x1xf32>
    %72 = vector.broadcast %71 : vector<16x1xf32> to vector<16x16xf32>
    %73 = arith.divf %69, %72 : vector<16x16xf32>
    %c2 = arith.constant 2 : index
    %c0_31 = arith.constant 0 : index
    %c0_32 = arith.constant 0 : index
    %74 = vector.load %arg11[%c2, %c0_31, %c0_32] : memref<8x16x16xf32, #tpu.memory_space<vmem>>, vector<1x16x16xf32>
    %75 = vector.shape_cast %74 : vector<1x16x16xf32> to vector<16x16xf32>
    %76 = vector.shape_cast %73 : vector<16x16xf32> to vector<1x16x16xf32>
    tpu.vector_store %arg11[%c2, %c0_31, %c0_32], %76 {strides = array<i32>} : memref<8x16x16xf32, #tpu.memory_space<vmem>>, vector<1x16x16xf32>,
    %cst_33 = arith.constant dense<0.000000e+00> : vector<16x8xf32>
    %77 = tpu.matmul %73, %62, %cst_33 {dimension_numbers = #tpu.dot_dimension_numbers<[1], [0], [0], [1], [0, 0, 1, 1], [], []>} : vector<16x16xf32>, vector<16x8xf32>, vector<16x8xf32> -> vector<16x8xf32>
    %78 = vector.extract_strided_slice %18 {offsets = [16, 0], sizes = [8, 32], strides = [1, 1]} : vector<32x32xf32> to vector<8x32xf32>
    %cst_34 = arith.constant dense<0.000000e+00> : vector<16x32xf32>
    %79 = tpu.matmul %77, %78, %cst_34 {dimension_numbers = #tpu.dot_dimension_numbers<[1], [0], [0], [1], [0, 0, 1, 1], [], []>} : vector<16x8xf32>, vector<8x32xf32>, vector<16x32xf32> -> vector<16x32xf32>
    %80 = arith.addf %59, %79 : vector<16x32xf32>
    %81 = vector.extract_strided_slice %15 {offsets = [0, 24], sizes = [16, 8], strides = [1, 1]} : vector<16x32xf32> to vector<16x8xf32>
    %82 = vector.extract_strided_slice %16 {offsets = [0, 24], sizes = [16, 8], strides = [1, 1]} : vector<16x32xf32> to vector<16x8xf32>
    %83 = vector.extract_strided_slice %17 {offsets = [0, 24], sizes = [16, 8], strides = [1, 1]} : vector<16x32xf32> to vector<16x8xf32>
    %cst_35 = arith.constant dense<0.000000e+00> : vector<16x16xf32>
    %84 = tpu.matmul %81, %82, %cst_35 {dimension_numbers = #tpu.dot_dimension_numbers<[1], [1], [0], [0], [0, 0, 1, 0], [], []>} : vector<16x8xf32>, vector<16x8xf32>, vector<16x16xf32> -> vector<16x16xf32>
    %85 = arith.addf %84, %10 : vector<16x16xf32>
    %cst_36 = arith.constant dense<0xFF800000> : vector<16xf32>
    %86 = vector.multi_reduction <maximumf>, %85, %cst_36 [1] : vector<16x16xf32> to vector<16xf32>
    %87 = vector.shape_cast %86 : vector<16xf32> to vector<16x1xf32>
    %88 = vector.broadcast %87 : vector<16x1xf32> to vector<16x16xf32>
    %89 = arith.subf %85, %88 : vector<16x16xf32>
    %90 = math.exp %89 : vector<16x16xf32>
    %cst_37 = arith.constant dense<0.000000e+00> : vector<16xf32>
    %91 = vector.multi_reduction <add>, %90, %cst_37 [1] : vector<16x16xf32> to vector<16xf32>
    %92 = vector.shape_cast %91 : vector<16xf32> to vector<16x1xf32>
    %93 = vector.broadcast %92 : vector<16x1xf32> to vector<16x16xf32>
    %94 = arith.divf %90, %93 : vector<16x16xf32>
    %c3 = arith.constant 3 : index
    %c0_38 = arith.constant 0 : index
    %c0_39 = arith.constant 0 : index
    %95 = vector.load %arg11[%c3, %c0_38, %c0_39] : memref<8x16x16xf32, #tpu.memory_space<vmem>>, vector<1x16x16xf32>
    %96 = vector.shape_cast %95 : vector<1x16x16xf32> to vector<16x16xf32>
    %97 = vector.shape_cast %94 : vector<16x16xf32> to vector<1x16x16xf32>
    tpu.vector_store %arg11[%c3, %c0_38, %c0_39], %97 {strides = array<i32>} : memref<8x16x16xf32, #tpu.memory_space<vmem>>, vector<1x16x16xf32>,
    %cst_40 = arith.constant dense<0.000000e+00> : vector<16x8xf32>
    %98 = tpu.matmul %94, %83, %cst_40 {dimension_numbers = #tpu.dot_dimension_numbers<[1], [0], [0], [1], [0, 0, 1, 1], [], []>} : vector<16x16xf32>, vector<16x8xf32>, vector<16x8xf32> -> vector<16x8xf32>
    %99 = vector.extract_strided_slice %18 {offsets = [24, 0], sizes = [8, 32], strides = [1, 1]} : vector<32x32xf32> to vector<8x32xf32>
    %cst_41 = arith.constant dense<0.000000e+00> : vector<16x32xf32>
    %100 = tpu.matmul %98, %99, %cst_41 {dimension_numbers = #tpu.dot_dimension_numbers<[1], [0], [0], [1], [0, 0, 1, 1], [], []>} : vector<16x8xf32>, vector<8x32xf32>, vector<16x32xf32> -> vector<16x32xf32>
    %101 = arith.addf %80, %100 : vector<16x32xf32>
    %c0_42 = arith.constant 0 : index
    %c0_43 = arith.constant 0 : index
    %c0_44 = arith.constant 0 : index
    %102 = vector.load %arg9[%c0_42, %c0_43, %c0_44] : memref<10x1x64xf32, #tpu.memory_space<vmem>>, vector<1x1x64xf32>
    %103 = vector.shape_cast %102 : vector<1x1x64xf32> to vector<1x64xf32>
    %104 = vector.extract_strided_slice %103 {offsets = [0, 0], sizes = [1, 32], strides = [1, 1]} : vector<1x64xf32> to vector<1x32xf32>
    %105 = vector.extract_strided_slice %103 {offsets = [0, 32], sizes = [1, 32], strides = [1, 1]} : vector<1x64xf32> to vector<1x32xf32>
    %106 = arith.addf %101, %9 : vector<16x32xf32>
    %cst_45 = arith.constant dense<0.000000e+00> : vector<16xf32>
    %107 = vector.multi_reduction <add>, %106, %cst_45 [1] : vector<16x32xf32> to vector<16xf32>
    %108 = vector.shape_cast %107 : vector<16xf32> to vector<16x1xf32>
    %cst_46 = arith.constant 3.200000e+01 : f32
    %109 = vector.broadcast %cst_46 : f32 to vector<16x1xf32>
    %110 = arith.divf %108, %109 : vector<16x1xf32>
    %111 = vector.broadcast %110 : vector<16x1xf32> to vector<16x32xf32>
    %112 = arith.subf %106, %111 : vector<16x32xf32>
    %113 = arith.mulf %112, %112 : vector<16x32xf32>
    %cst_47 = arith.constant dense<0.000000e+00> : vector<16xf32>
    %114 = vector.multi_reduction <add>, %113, %cst_47 [1] : vector<16x32xf32> to vector<16xf32>
    %115 = vector.shape_cast %114 : vector<16xf32> to vector<16x1xf32>
    %cst_48 = arith.constant 3.200000e+01 : f32
    %116 = vector.broadcast %cst_48 : f32 to vector<16x1xf32>
    %117 = arith.divf %115, %116 : vector<16x1xf32>
    %118 = vector.broadcast %110 : vector<16x1xf32> to vector<16x32xf32>
    %119 = arith.subf %106, %118 : vector<16x32xf32>
    %cst_49 = arith.constant 9.99999974E-6 : f32
    %120 = vector.broadcast %cst_49 : f32 to vector<16x1xf32>
    %121 = arith.addf %117, %120 : vector<16x1xf32>
    %122 = math.rsqrt %121 : vector<16x1xf32>
    %123 = vector.broadcast %122 : vector<16x1xf32> to vector<16x32xf32>
    %124 = arith.mulf %119, %123 : vector<16x32xf32>
    %125 = vector.broadcast %104 : vector<1x32xf32> to vector<16x32xf32>
    %126 = arith.mulf %124, %125 : vector<16x32xf32>
    %127 = vector.broadcast %105 : vector<1x32xf32> to vector<16x32xf32>
    %128 = arith.addf %126, %127 : vector<16x32xf32>
    %c0_50 = arith.constant 0 : index
    %c0_51 = arith.constant 0 : index
    %c0_52 = arith.constant 0 : index
    %129 = vector.load %arg8[%c0_50, %c0_51, %c0_52] : memref<4x64x96xf32, #tpu.memory_space<vmem>>, vector<1x64x96xf32>
    %130 = vector.shape_cast %129 : vector<1x64x96xf32> to vector<64x96xf32>
    %131 = vector.extract_strided_slice %130 {offsets = [0, 0], sizes = [32, 64], strides = [1, 1]} : vector<64x96xf32> to vector<32x64xf32>
    %132 = vector.extract_strided_slice %130 {offsets = [0, 64], sizes = [64, 32], strides = [1, 1]} : vector<64x96xf32> to vector<64x32xf32>
    %cst_53 = arith.constant dense<0.000000e+00> : vector<16x64xf32>
    %133 = tpu.matmul %128, %131, %cst_53 {dimension_numbers = #tpu.dot_dimension_numbers<[1], [0], [0], [1], [0, 0, 1, 1], [], []>} : vector<16x32xf32>, vector<32x64xf32>, vector<16x64xf32> -> vector<16x64xf32>
    %cst_54 = arith.constant 0.000000e+00 : f32
    %134 = vector.broadcast %cst_54 : f32 to vector<16x64xf32>
    %135 = arith.maximumf %133, %134 : vector<16x64xf32>
    %cst_55 = arith.constant dense<0.000000e+00> : vector<16x32xf32>
    %136 = tpu.matmul %135, %132, %cst_55 {dimension_numbers = #tpu.dot_dimension_numbers<[1], [0], [0], [1], [0, 0, 1, 1], [], []>} : vector<16x64xf32>, vector<64x32xf32>, vector<16x32xf32> -> vector<16x32xf32>
    %c2_56 = arith.constant 2 : index
    %c0_57 = arith.constant 0 : index
    %c0_58 = arith.constant 0 : index
    %137 = vector.load %arg9[%c2_56, %c0_57, %c0_58] : memref<10x1x64xf32, #tpu.memory_space<vmem>>, vector<1x1x64xf32>
    %138 = vector.shape_cast %137 : vector<1x1x64xf32> to vector<1x64xf32>
    %139 = vector.extract_strided_slice %138 {offsets = [0, 0], sizes = [1, 32], strides = [1, 1]} : vector<1x64xf32> to vector<1x32xf32>
    %140 = vector.extract_strided_slice %138 {offsets = [0, 32], sizes = [1, 32], strides = [1, 1]} : vector<1x64xf32> to vector<1x32xf32>
    %141 = arith.addf %136, %128 : vector<16x32xf32>
    %cst_59 = arith.constant dense<0.000000e+00> : vector<16xf32>
    %142 = vector.multi_reduction <add>, %141, %cst_59 [1] : vector<16x32xf32> to vector<16xf32>
    %143 = vector.shape_cast %142 : vector<16xf32> to vector<16x1xf32>
    %cst_60 = arith.constant 3.200000e+01 : f32
    %144 = vector.broadcast %cst_60 : f32 to vector<16x1xf32>
    %145 = arith.divf %143, %144 : vector<16x1xf32>
    %146 = vector.broadcast %145 : vector<16x1xf32> to vector<16x32xf32>
    %147 = arith.subf %141, %146 : vector<16x32xf32>
    %148 = arith.mulf %147, %147 : vector<16x32xf32>
    %cst_61 = arith.constant dense<0.000000e+00> : vector<16xf32>
    %149 = vector.multi_reduction <add>, %148, %cst_61 [1] : vector<16x32xf32> to vector<16xf32>
    %150 = vector.shape_cast %149 : vector<16xf32> to vector<16x1xf32>
    %cst_62 = arith.constant 3.200000e+01 : f32
    %151 = vector.broadcast %cst_62 : f32 to vector<16x1xf32>
    %152 = arith.divf %150, %151 : vector<16x1xf32>
    %153 = vector.broadcast %145 : vector<16x1xf32> to vector<16x32xf32>
    %154 = arith.subf %141, %153 : vector<16x32xf32>
    %cst_63 = arith.constant 9.99999974E-6 : f32
    %155 = vector.broadcast %cst_63 : f32 to vector<16x1xf32>
    %156 = arith.addf %152, %155 : vector<16x1xf32>
    %157 = math.rsqrt %156 : vector<16x1xf32>
    %158 = vector.broadcast %157 : vector<16x1xf32> to vector<16x32xf32>
    %159 = arith.mulf %154, %158 : vector<16x32xf32>
    %160 = vector.broadcast %139 : vector<1x32xf32> to vector<16x32xf32>
    %161 = arith.mulf %159, %160 : vector<16x32xf32>
    %162 = vector.broadcast %140 : vector<1x32xf32> to vector<16x32xf32>
    %163 = arith.addf %161, %162 : vector<16x32xf32>
    %c1_64 = arith.constant 1 : index
    %c0_65 = arith.constant 0 : index
    %c0_66 = arith.constant 0 : index
    %164 = vector.load %arg7[%c1_64, %c0_65, %c0_66] : memref<7x32x128xf32, #tpu.memory_space<vmem>>, vector<1x32x128xf32>
    %165 = vector.shape_cast %164 : vector<1x32x128xf32> to vector<32x128xf32>
    %166 = vector.extract_strided_slice %165 {offsets = [0, 0], sizes = [32, 96], strides = [1, 1]} : vector<32x128xf32> to vector<32x96xf32>
    %cst_67 = arith.constant dense<0.000000e+00> : vector<16x96xf32>
    %167 = tpu.matmul %163, %166, %cst_67 {dimension_numbers = #tpu.dot_dimension_numbers<[1], [0], [0], [1], [0, 0, 1, 1], [], []>} : vector<16x32xf32>, vector<32x96xf32>, vector<16x96xf32> -> vector<16x96xf32>
    %168 = vector.extract_strided_slice %167 {offsets = [0, 0], sizes = [16, 32], strides = [1, 1]} : vector<16x96xf32> to vector<16x32xf32>
    %169 = vector.extract_strided_slice %167 {offsets = [0, 32], sizes = [16, 32], strides = [1, 1]} : vector<16x96xf32> to vector<16x32xf32>
    %170 = vector.extract_strided_slice %167 {offsets = [0, 64], sizes = [16, 32], strides = [1, 1]} : vector<16x96xf32> to vector<16x32xf32>
    %171 = vector.extract_strided_slice %165 {offsets = [0, 96], sizes = [32, 32], strides = [1, 1]} : vector<32x128xf32> to vector<32x32xf32>
    %172 = vector.extract_strided_slice %168 {offsets = [0, 0], sizes = [16, 8], strides = [1, 1]} : vector<16x32xf32> to vector<16x8xf32>
    %173 = vector.extract_strided_slice %169 {offsets = [0, 0], sizes = [16, 8], strides = [1, 1]} : vector<16x32xf32> to vector<16x8xf32>
    %174 = vector.extract_strided_slice %170 {offsets = [0, 0], sizes = [16, 8], strides = [1, 1]} : vector<16x32xf32> to vector<16x8xf32>
    %cst_68 = arith.constant dense<0.000000e+00> : vector<16x16xf32>
    %175 = tpu.matmul %172, %173, %cst_68 {dimension_numbers = #tpu.dot_dimension_numbers<[1], [1], [0], [0], [0, 0, 1, 0], [], []>} : vector<16x8xf32>, vector<16x8xf32>, vector<16x16xf32> -> vector<16x16xf32>
    %176 = arith.addf %175, %10 : vector<16x16xf32>
    %cst_69 = arith.constant dense<0xFF800000> : vector<16xf32>
    %177 = vector.multi_reduction <maximumf>, %176, %cst_69 [1] : vector<16x16xf32> to vector<16xf32>
    %178 = vector.shape_cast %177 : vector<16xf32> to vector<16x1xf32>
    %179 = vector.broadcast %178 : vector<16x1xf32> to vector<16x16xf32>
    %180 = arith.subf %176, %179 : vector<16x16xf32>
    %181 = math.exp %180 : vector<16x16xf32>
    %cst_70 = arith.constant dense<0.000000e+00> : vector<16xf32>
    %182 = vector.multi_reduction <add>, %181, %cst_70 [1] : vector<16x16xf32> to vector<16xf32>
    %183 = vector.shape_cast %182 : vector<16xf32> to vector<16x1xf32>
    %184 = vector.broadcast %183 : vector<16x1xf32> to vector<16x16xf32>
    %185 = arith.divf %181, %184 : vector<16x16xf32>
    %c4 = arith.constant 4 : index
    %c0_71 = arith.constant 0 : index
    %c0_72 = arith.constant 0 : index
    %186 = vector.load %arg11[%c4, %c0_71, %c0_72] : memref<8x16x16xf32, #tpu.memory_space<vmem>>, vector<1x16x16xf32>
    %187 = vector.shape_cast %186 : vector<1x16x16xf32> to vector<16x16xf32>
    %188 = vector.shape_cast %185 : vector<16x16xf32> to vector<1x16x16xf32>
    tpu.vector_store %arg11[%c4, %c0_71, %c0_72], %188 {strides = array<i32>} : memref<8x16x16xf32, #tpu.memory_space<vmem>>, vector<1x16x16xf32>,
    %cst_73 = arith.constant dense<0.000000e+00> : vector<16x8xf32>
    %189 = tpu.matmul %185, %174, %cst_73 {dimension_numbers = #tpu.dot_dimension_numbers<[1], [0], [0], [1], [0, 0, 1, 1], [], []>} : vector<16x16xf32>, vector<16x8xf32>, vector<16x8xf32> -> vector<16x8xf32>
    %190 = vector.extract_strided_slice %171 {offsets = [0, 0], sizes = [8, 32], strides = [1, 1]} : vector<32x32xf32> to vector<8x32xf32>
    %cst_74 = arith.constant dense<0.000000e+00> : vector<16x32xf32>
    %191 = tpu.matmul %189, %190, %cst_74 {dimension_numbers = #tpu.dot_dimension_numbers<[1], [0], [0], [1], [0, 0, 1, 1], [], []>} : vector<16x8xf32>, vector<8x32xf32>, vector<16x32xf32> -> vector<16x32xf32>
    %192 = vector.extract_strided_slice %168 {offsets = [0, 8], sizes = [16, 8], strides = [1, 1]} : vector<16x32xf32> to vector<16x8xf32>
    %193 = vector.extract_strided_slice %169 {offsets = [0, 8], sizes = [16, 8], strides = [1, 1]} : vector<16x32xf32> to vector<16x8xf32>
    %194 = vector.extract_strided_slice %170 {offsets = [0, 8], sizes = [16, 8], strides = [1, 1]} : vector<16x32xf32> to vector<16x8xf32>
    %cst_75 = arith.constant dense<0.000000e+00> : vector<16x16xf32>
    %195 = tpu.matmul %192, %193, %cst_75 {dimension_numbers = #tpu.dot_dimension_numbers<[1], [1], [0], [0], [0, 0, 1, 0], [], []>} : vector<16x8xf32>, vector<16x8xf32>, vector<16x16xf32> -> vector<16x16xf32>
    %196 = arith.addf %195, %10 : vector<16x16xf32>
    %cst_76 = arith.constant dense<0xFF800000> : vector<16xf32>
    %197 = vector.multi_reduction <maximumf>, %196, %cst_76 [1] : vector<16x16xf32> to vector<16xf32>
    %198 = vector.shape_cast %197 : vector<16xf32> to vector<16x1xf32>
    %199 = vector.broadcast %198 : vector<16x1xf32> to vector<16x16xf32>
    %200 = arith.subf %196, %199 : vector<16x16xf32>
    %201 = math.exp %200 : vector<16x16xf32>
    %cst_77 = arith.constant dense<0.000000e+00> : vector<16xf32>
    %202 = vector.multi_reduction <add>, %201, %cst_77 [1] : vector<16x16xf32> to vector<16xf32>
    %203 = vector.shape_cast %202 : vector<16xf32> to vector<16x1xf32>
    %204 = vector.broadcast %203 : vector<16x1xf32> to vector<16x16xf32>
    %205 = arith.divf %201, %204 : vector<16x16xf32>
    %c5 = arith.constant 5 : index
    %c0_78 = arith.constant 0 : index
    %c0_79 = arith.constant 0 : index
    %206 = vector.load %arg11[%c5, %c0_78, %c0_79] : memref<8x16x16xf32, #tpu.memory_space<vmem>>, vector<1x16x16xf32>
    %207 = vector.shape_cast %206 : vector<1x16x16xf32> to vector<16x16xf32>
    %208 = vector.shape_cast %205 : vector<16x16xf32> to vector<1x16x16xf32>
    tpu.vector_store %arg11[%c5, %c0_78, %c0_79], %208 {strides = array<i32>} : memref<8x16x16xf32, #tpu.memory_space<vmem>>, vector<1x16x16xf32>,
    %cst_80 = arith.constant dense<0.000000e+00> : vector<16x8xf32>
    %209 = tpu.matmul %205, %194, %cst_80 {dimension_numbers = #tpu.dot_dimension_numbers<[1], [0], [0], [1], [0, 0, 1, 1], [], []>} : vector<16x16xf32>, vector<16x8xf32>, vector<16x8xf32> -> vector<16x8xf32>
    %210 = vector.extract_strided_slice %171 {offsets = [8, 0], sizes = [8, 32], strides = [1, 1]} : vector<32x32xf32> to vector<8x32xf32>
    %cst_81 = arith.constant dense<0.000000e+00> : vector<16x32xf32>
    %211 = tpu.matmul %209, %210, %cst_81 {dimension_numbers = #tpu.dot_dimension_numbers<[1], [0], [0], [1], [0, 0, 1, 1], [], []>} : vector<16x8xf32>, vector<8x32xf32>, vector<16x32xf32> -> vector<16x32xf32>
    %212 = arith.addf %191, %211 : vector<16x32xf32>
    %213 = vector.extract_strided_slice %168 {offsets = [0, 16], sizes = [16, 8], strides = [1, 1]} : vector<16x32xf32> to vector<16x8xf32>
    %214 = vector.extract_strided_slice %169 {offsets = [0, 16], sizes = [16, 8], strides = [1, 1]} : vector<16x32xf32> to vector<16x8xf32>
    %215 = vector.extract_strided_slice %170 {offsets = [0, 16], sizes = [16, 8], strides = [1, 1]} : vector<16x32xf32> to vector<16x8xf32>
    %cst_82 = arith.constant dense<0.000000e+00> : vector<16x16xf32>
    %216 = tpu.matmul %213, %214, %cst_82 {dimension_numbers = #tpu.dot_dimension_numbers<[1], [1], [0], [0], [0, 0, 1, 0], [], []>} : vector<16x8xf32>, vector<16x8xf32>, vector<16x16xf32> -> vector<16x16xf32>
    %217 = arith.addf %216, %10 : vector<16x16xf32>
    %cst_83 = arith.constant dense<0xFF800000> : vector<16xf32>
    %218 = vector.multi_reduction <maximumf>, %217, %cst_83 [1] : vector<16x16xf32> to vector<16xf32>
    %219 = vector.shape_cast %218 : vector<16xf32> to vector<16x1xf32>
    %220 = vector.broadcast %219 : vector<16x1xf32> to vector<16x16xf32>
    %221 = arith.subf %217, %220 : vector<16x16xf32>
    %222 = math.exp %221 : vector<16x16xf32>
    %cst_84 = arith.constant dense<0.000000e+00> : vector<16xf32>
    %223 = vector.multi_reduction <add>, %222, %cst_84 [1] : vector<16x16xf32> to vector<16xf32>
    %224 = vector.shape_cast %223 : vector<16xf32> to vector<16x1xf32>
    %225 = vector.broadcast %224 : vector<16x1xf32> to vector<16x16xf32>
    %226 = arith.divf %222, %225 : vector<16x16xf32>
    %c6 = arith.constant 6 : index
    %c0_85 = arith.constant 0 : index
    %c0_86 = arith.constant 0 : index
    %227 = vector.load %arg11[%c6, %c0_85, %c0_86] : memref<8x16x16xf32, #tpu.memory_space<vmem>>, vector<1x16x16xf32>
    %228 = vector.shape_cast %227 : vector<1x16x16xf32> to vector<16x16xf32>
    %229 = vector.shape_cast %226 : vector<16x16xf32> to vector<1x16x16xf32>
    tpu.vector_store %arg11[%c6, %c0_85, %c0_86], %229 {strides = array<i32>} : memref<8x16x16xf32, #tpu.memory_space<vmem>>, vector<1x16x16xf32>,
    %cst_87 = arith.constant dense<0.000000e+00> : vector<16x8xf32>
    %230 = tpu.matmul %226, %215, %cst_87 {dimension_numbers = #tpu.dot_dimension_numbers<[1], [0], [0], [1], [0, 0, 1, 1], [], []>} : vector<16x16xf32>, vector<16x8xf32>, vector<16x8xf32> -> vector<16x8xf32>
    %231 = vector.extract_strided_slice %171 {offsets = [16, 0], sizes = [8, 32], strides = [1, 1]} : vector<32x32xf32> to vector<8x32xf32>
    %cst_88 = arith.constant dense<0.000000e+00> : vector<16x32xf32>
    %232 = tpu.matmul %230, %231, %cst_88 {dimension_numbers = #tpu.dot_dimension_numbers<[1], [0], [0], [1], [0, 0, 1, 1], [], []>} : vector<16x8xf32>, vector<8x32xf32>, vector<16x32xf32> -> vector<16x32xf32>
    %233 = arith.addf %212, %232 : vector<16x32xf32>
    %234 = vector.extract_strided_slice %168 {offsets = [0, 24], sizes = [16, 8], strides = [1, 1]} : vector<16x32xf32> to vector<16x8xf32>
    %235 = vector.extract_strided_slice %169 {offsets = [0, 24], sizes = [16, 8], strides = [1, 1]} : vector<16x32xf32> to vector<16x8xf32>
    %236 = vector.extract_strided_slice %170 {offsets = [0, 24], sizes = [16, 8], strides = [1, 1]} : vector<16x32xf32> to vector<16x8xf32>
    %cst_89 = arith.constant dense<0.000000e+00> : vector<16x16xf32>
    %237 = tpu.matmul %234, %235, %cst_89 {dimension_numbers = #tpu.dot_dimension_numbers<[1], [1], [0], [0], [0, 0, 1, 0], [], []>} : vector<16x8xf32>, vector<16x8xf32>, vector<16x16xf32> -> vector<16x16xf32>
    %238 = arith.addf %237, %10 : vector<16x16xf32>
    %cst_90 = arith.constant dense<0xFF800000> : vector<16xf32>
    %239 = vector.multi_reduction <maximumf>, %238, %cst_90 [1] : vector<16x16xf32> to vector<16xf32>
    %240 = vector.shape_cast %239 : vector<16xf32> to vector<16x1xf32>
    %241 = vector.broadcast %240 : vector<16x1xf32> to vector<16x16xf32>
    %242 = arith.subf %238, %241 : vector<16x16xf32>
    %243 = math.exp %242 : vector<16x16xf32>
    %cst_91 = arith.constant dense<0.000000e+00> : vector<16xf32>
    %244 = vector.multi_reduction <add>, %243, %cst_91 [1] : vector<16x16xf32> to vector<16xf32>
    %245 = vector.shape_cast %244 : vector<16xf32> to vector<16x1xf32>
    %246 = vector.broadcast %245 : vector<16x1xf32> to vector<16x16xf32>
    %247 = arith.divf %243, %246 : vector<16x16xf32>
    %c7 = arith.constant 7 : index
    %c0_92 = arith.constant 0 : index
    %c0_93 = arith.constant 0 : index
    %248 = vector.load %arg11[%c7, %c0_92, %c0_93] : memref<8x16x16xf32, #tpu.memory_space<vmem>>, vector<1x16x16xf32>
    %249 = vector.shape_cast %248 : vector<1x16x16xf32> to vector<16x16xf32>
    %250 = vector.shape_cast %247 : vector<16x16xf32> to vector<1x16x16xf32>
    tpu.vector_store %arg11[%c7, %c0_92, %c0_93], %250 {strides = array<i32>} : memref<8x16x16xf32, #tpu.memory_space<vmem>>, vector<1x16x16xf32>,
    %cst_94 = arith.constant dense<0.000000e+00> : vector<16x8xf32>
    %251 = tpu.matmul %247, %236, %cst_94 {dimension_numbers = #tpu.dot_dimension_numbers<[1], [0], [0], [1], [0, 0, 1, 1], [], []>} : vector<16x16xf32>, vector<16x8xf32>, vector<16x8xf32> -> vector<16x8xf32>
    %252 = vector.extract_strided_slice %171 {offsets = [24, 0], sizes = [8, 32], strides = [1, 1]} : vector<32x32xf32> to vector<8x32xf32>
    %cst_95 = arith.constant dense<0.000000e+00> : vector<16x32xf32>
    %253 = tpu.matmul %251, %252, %cst_95 {dimension_numbers = #tpu.dot_dimension_numbers<[1], [0], [0], [1], [0, 0, 1, 1], [], []>} : vector<16x8xf32>, vector<8x32xf32>, vector<16x32xf32> -> vector<16x32xf32>
    %254 = arith.addf %233, %253 : vector<16x32xf32>
    %c1_96 = arith.constant 1 : index
    %c0_97 = arith.constant 0 : index
    %c0_98 = arith.constant 0 : index
    %255 = vector.load %arg9[%c1_96, %c0_97, %c0_98] : memref<10x1x64xf32, #tpu.memory_space<vmem>>, vector<1x1x64xf32>
    %256 = vector.shape_cast %255 : vector<1x1x64xf32> to vector<1x64xf32>
    %257 = vector.extract_strided_slice %256 {offsets = [0, 0], sizes = [1, 32], strides = [1, 1]} : vector<1x64xf32> to vector<1x32xf32>
    %258 = vector.extract_strided_slice %256 {offsets = [0, 32], sizes = [1, 32], strides = [1, 1]} : vector<1x64xf32> to vector<1x32xf32>
    %259 = arith.addf %254, %163 : vector<16x32xf32>
    %cst_99 = arith.constant dense<0.000000e+00> : vector<16xf32>
    %260 = vector.multi_reduction <add>, %259, %cst_99 [1] : vector<16x32xf32> to vector<16xf32>
    %261 = vector.shape_cast %260 : vector<16xf32> to vector<16x1xf32>
    %cst_100 = arith.constant 3.200000e+01 : f32
    %262 = vector.broadcast %cst_100 : f32 to vector<16x1xf32>
    %263 = arith.divf %261, %262 : vector<16x1xf32>
    %264 = vector.broadcast %263 : vector<16x1xf32> to vector<16x32xf32>
    %265 = arith.subf %259, %264 : vector<16x32xf32>
    %266 = arith.mulf %265, %265 : vector<16x32xf32>
    %cst_101 = arith.constant dense<0.000000e+00> : vector<16xf32>
    %267 = vector.multi_reduction <add>, %266, %cst_101 [1] : vector<16x32xf32> to vector<16xf32>
    %268 = vector.shape_cast %267 : vector<16xf32> to vector<16x1xf32>
    %cst_102 = arith.constant 3.200000e+01 : f32
    %269 = vector.broadcast %cst_102 : f32 to vector<16x1xf32>
    %270 = arith.divf %268, %269 : vector<16x1xf32>
    %271 = vector.broadcast %263 : vector<16x1xf32> to vector<16x32xf32>
    %272 = arith.subf %259, %271 : vector<16x32xf32>
    %cst_103 = arith.constant 9.99999974E-6 : f32
    %273 = vector.broadcast %cst_103 : f32 to vector<16x1xf32>
    %274 = arith.addf %270, %273 : vector<16x1xf32>
    %275 = math.rsqrt %274 : vector<16x1xf32>
    %276 = vector.broadcast %275 : vector<16x1xf32> to vector<16x32xf32>
    %277 = arith.mulf %272, %276 : vector<16x32xf32>
    %278 = vector.broadcast %257 : vector<1x32xf32> to vector<16x32xf32>
    %279 = arith.mulf %277, %278 : vector<16x32xf32>
    %280 = vector.broadcast %258 : vector<1x32xf32> to vector<16x32xf32>
    %281 = arith.addf %279, %280 : vector<16x32xf32>
    %c1_104 = arith.constant 1 : index
    %c0_105 = arith.constant 0 : index
    %c0_106 = arith.constant 0 : index
    %282 = vector.load %arg8[%c1_104, %c0_105, %c0_106] : memref<4x64x96xf32, #tpu.memory_space<vmem>>, vector<1x64x96xf32>
    %283 = vector.shape_cast %282 : vector<1x64x96xf32> to vector<64x96xf32>
    %284 = vector.extract_strided_slice %283 {offsets = [0, 0], sizes = [32, 64], strides = [1, 1]} : vector<64x96xf32> to vector<32x64xf32>
    %285 = vector.extract_strided_slice %283 {offsets = [0, 64], sizes = [64, 32], strides = [1, 1]} : vector<64x96xf32> to vector<64x32xf32>
    %cst_107 = arith.constant dense<0.000000e+00> : vector<16x64xf32>
    %286 = tpu.matmul %281, %284, %cst_107 {dimension_numbers = #tpu.dot_dimension_numbers<[1], [0], [0], [1], [0, 0, 1, 1], [], []>} : vector<16x32xf32>, vector<32x64xf32>, vector<16x64xf32> -> vector<16x64xf32>
    %cst_108 = arith.constant 0.000000e+00 : f32
    %287 = vector.broadcast %cst_108 : f32 to vector<16x64xf32>
    %288 = arith.maximumf %286, %287 : vector<16x64xf32>
    %cst_109 = arith.constant dense<0.000000e+00> : vector<16x32xf32>
    %289 = tpu.matmul %288, %285, %cst_109 {dimension_numbers = #tpu.dot_dimension_numbers<[1], [0], [0], [1], [0, 0, 1, 1], [], []>} : vector<16x64xf32>, vector<64x32xf32>, vector<16x32xf32> -> vector<16x32xf32>
    %c3_110 = arith.constant 3 : index
    %c0_111 = arith.constant 0 : index
    %c0_112 = arith.constant 0 : index
    %290 = vector.load %arg9[%c3_110, %c0_111, %c0_112] : memref<10x1x64xf32, #tpu.memory_space<vmem>>, vector<1x1x64xf32>
    %291 = vector.shape_cast %290 : vector<1x1x64xf32> to vector<1x64xf32>
    %292 = vector.extract_strided_slice %291 {offsets = [0, 0], sizes = [1, 32], strides = [1, 1]} : vector<1x64xf32> to vector<1x32xf32>
    %293 = vector.extract_strided_slice %291 {offsets = [0, 32], sizes = [1, 32], strides = [1, 1]} : vector<1x64xf32> to vector<1x32xf32>
    %294 = arith.addf %289, %281 : vector<16x32xf32>
    %cst_113 = arith.constant dense<0.000000e+00> : vector<16xf32>
    %295 = vector.multi_reduction <add>, %294, %cst_113 [1] : vector<16x32xf32> to vector<16xf32>
    %296 = vector.shape_cast %295 : vector<16xf32> to vector<16x1xf32>
    %cst_114 = arith.constant 3.200000e+01 : f32
    %297 = vector.broadcast %cst_114 : f32 to vector<16x1xf32>
    %298 = arith.divf %296, %297 : vector<16x1xf32>
    %299 = vector.broadcast %298 : vector<16x1xf32> to vector<16x32xf32>
    %300 = arith.subf %294, %299 : vector<16x32xf32>
    %301 = arith.mulf %300, %300 : vector<16x32xf32>
    %cst_115 = arith.constant dense<0.000000e+00> : vector<16xf32>
    %302 = vector.multi_reduction <add>, %301, %cst_115 [1] : vector<16x32xf32> to vector<16xf32>
    %303 = vector.shape_cast %302 : vector<16xf32> to vector<16x1xf32>
    %cst_116 = arith.constant 3.200000e+01 : f32
    %304 = vector.broadcast %cst_116 : f32 to vector<16x1xf32>
    %305 = arith.divf %303, %304 : vector<16x1xf32>
    %306 = vector.broadcast %298 : vector<16x1xf32> to vector<16x32xf32>
    %307 = arith.subf %294, %306 : vector<16x32xf32>
    %cst_117 = arith.constant 9.99999974E-6 : f32
    %308 = vector.broadcast %cst_117 : f32 to vector<16x1xf32>
    %309 = arith.addf %305, %308 : vector<16x1xf32>
    %310 = math.rsqrt %309 : vector<16x1xf32>
    %311 = vector.broadcast %310 : vector<16x1xf32> to vector<16x32xf32>
    %312 = arith.mulf %307, %311 : vector<16x32xf32>
    %313 = vector.broadcast %292 : vector<1x32xf32> to vector<16x32xf32>
    %314 = arith.mulf %312, %313 : vector<16x32xf32>
    %315 = vector.broadcast %293 : vector<1x32xf32> to vector<16x32xf32>
    %316 = arith.addf %314, %315 : vector<16x32xf32>
    %c0_118 = arith.constant 0 : index
    %c0_119 = arith.constant 0 : index
    %317 = vector.load %arg3[%c0_118, %c0_119] : memref<16x32xf32, #tpu.memory_space<vmem>>, vector<16x32xf32>
    %c0_120 = arith.constant 0 : index
    %c0_121 = arith.constant 0 : index
    %318 = vector.load %arg5[%c0_120, %c0_121] : memref<16x16xf32, #tpu.memory_space<vmem>>, vector<16x16xf32>
    %c0_122 = arith.constant 0 : index
    %c0_123 = arith.constant 0 : index
    %319 = vector.load %arg6[%c0_122, %c0_123] : memref<16x16xf32, #tpu.memory_space<vmem>>, vector<16x16xf32>
    %c2_124 = arith.constant 2 : index
    %c0_125 = arith.constant 0 : index
    %c0_126 = arith.constant 0 : index
    %320 = vector.load %arg7[%c2_124, %c0_125, %c0_126] : memref<7x32x128xf32, #tpu.memory_space<vmem>>, vector<1x32x128xf32>
    %321 = vector.shape_cast %320 : vector<1x32x128xf32> to vector<32x128xf32>
    %322 = vector.extract_strided_slice %321 {offsets = [0, 0], sizes = [32, 96], strides = [1, 1]} : vector<32x128xf32> to vector<32x96xf32>
    %cst_127 = arith.constant dense<0.000000e+00> : vector<16x96xf32>
    %323 = tpu.matmul %317, %322, %cst_127 {dimension_numbers = #tpu.dot_dimension_numbers<[1], [0], [0], [1], [0, 0, 1, 1], [], []>} : vector<16x32xf32>, vector<32x96xf32>, vector<16x96xf32> -> vector<16x96xf32>
    %324 = vector.extract_strided_slice %323 {offsets = [0, 0], sizes = [16, 32], strides = [1, 1]} : vector<16x96xf32> to vector<16x32xf32>
    %325 = vector.extract_strided_slice %323 {offsets = [0, 32], sizes = [16, 32], strides = [1, 1]} : vector<16x96xf32> to vector<16x32xf32>
    %326 = vector.extract_strided_slice %323 {offsets = [0, 64], sizes = [16, 32], strides = [1, 1]} : vector<16x96xf32> to vector<16x32xf32>
    %327 = vector.extract_strided_slice %321 {offsets = [0, 96], sizes = [32, 32], strides = [1, 1]} : vector<32x128xf32> to vector<32x32xf32>
    %328 = vector.extract_strided_slice %324 {offsets = [0, 0], sizes = [16, 8], strides = [1, 1]} : vector<16x32xf32> to vector<16x8xf32>
    %329 = vector.extract_strided_slice %325 {offsets = [0, 0], sizes = [16, 8], strides = [1, 1]} : vector<16x32xf32> to vector<16x8xf32>
    %330 = vector.extract_strided_slice %326 {offsets = [0, 0], sizes = [16, 8], strides = [1, 1]} : vector<16x32xf32> to vector<16x8xf32>
    %cst_128 = arith.constant dense<0.000000e+00> : vector<16x16xf32>
    %331 = tpu.matmul %328, %329, %cst_128 {dimension_numbers = #tpu.dot_dimension_numbers<[1], [1], [0], [0], [0, 0, 1, 0], [], []>} : vector<16x8xf32>, vector<16x8xf32>, vector<16x16xf32> -> vector<16x16xf32>
    %332 = arith.addf %331, %318 : vector<16x16xf32>
    %cst_129 = arith.constant dense<0xFF800000> : vector<16xf32>
    %333 = vector.multi_reduction <maximumf>, %332, %cst_129 [1] : vector<16x16xf32> to vector<16xf32>
    %334 = vector.shape_cast %333 : vector<16xf32> to vector<16x1xf32>
    %335 = vector.broadcast %334 : vector<16x1xf32> to vector<16x16xf32>
    %336 = arith.subf %332, %335 : vector<16x16xf32>
    %337 = math.exp %336 : vector<16x16xf32>
    %cst_130 = arith.constant dense<0.000000e+00> : vector<16xf32>
    %338 = vector.multi_reduction <add>, %337, %cst_130 [1] : vector<16x16xf32> to vector<16xf32>
    %339 = vector.shape_cast %338 : vector<16xf32> to vector<16x1xf32>
    %340 = vector.broadcast %339 : vector<16x1xf32> to vector<16x16xf32>
    %341 = arith.divf %337, %340 : vector<16x16xf32>
    %c0_131 = arith.constant 0 : index
    %c0_132 = arith.constant 0 : index
    %c0_133 = arith.constant 0 : index
    %342 = vector.load %arg12[%c0_131, %c0_132, %c0_133] : memref<8x16x16xf32, #tpu.memory_space<vmem>>, vector<1x16x16xf32>
    %343 = vector.shape_cast %342 : vector<1x16x16xf32> to vector<16x16xf32>
    %344 = vector.shape_cast %341 : vector<16x16xf32> to vector<1x16x16xf32>
    tpu.vector_store %arg12[%c0_131, %c0_132, %c0_133], %344 {strides = array<i32>} : memref<8x16x16xf32, #tpu.memory_space<vmem>>, vector<1x16x16xf32>,
    %cst_134 = arith.constant dense<0.000000e+00> : vector<16x8xf32>
    %345 = tpu.matmul %341, %330, %cst_134 {dimension_numbers = #tpu.dot_dimension_numbers<[1], [0], [0], [1], [0, 0, 1, 1], [], []>} : vector<16x16xf32>, vector<16x8xf32>, vector<16x8xf32> -> vector<16x8xf32>
    %346 = vector.extract_strided_slice %327 {offsets = [0, 0], sizes = [8, 32], strides = [1, 1]} : vector<32x32xf32> to vector<8x32xf32>
    %cst_135 = arith.constant dense<0.000000e+00> : vector<16x32xf32>
    %347 = tpu.matmul %345, %346, %cst_135 {dimension_numbers = #tpu.dot_dimension_numbers<[1], [0], [0], [1], [0, 0, 1, 1], [], []>} : vector<16x8xf32>, vector<8x32xf32>, vector<16x32xf32> -> vector<16x32xf32>
    %348 = vector.extract_strided_slice %324 {offsets = [0, 8], sizes = [16, 8], strides = [1, 1]} : vector<16x32xf32> to vector<16x8xf32>
    %349 = vector.extract_strided_slice %325 {offsets = [0, 8], sizes = [16, 8], strides = [1, 1]} : vector<16x32xf32> to vector<16x8xf32>
    %350 = vector.extract_strided_slice %326 {offsets = [0, 8], sizes = [16, 8], strides = [1, 1]} : vector<16x32xf32> to vector<16x8xf32>
    %cst_136 = arith.constant dense<0.000000e+00> : vector<16x16xf32>
    %351 = tpu.matmul %348, %349, %cst_136 {dimension_numbers = #tpu.dot_dimension_numbers<[1], [1], [0], [0], [0, 0, 1, 0], [], []>} : vector<16x8xf32>, vector<16x8xf32>, vector<16x16xf32> -> vector<16x16xf32>
    %352 = arith.addf %351, %318 : vector<16x16xf32>
    %cst_137 = arith.constant dense<0xFF800000> : vector<16xf32>
    %353 = vector.multi_reduction <maximumf>, %352, %cst_137 [1] : vector<16x16xf32> to vector<16xf32>
    %354 = vector.shape_cast %353 : vector<16xf32> to vector<16x1xf32>
    %355 = vector.broadcast %354 : vector<16x1xf32> to vector<16x16xf32>
    %356 = arith.subf %352, %355 : vector<16x16xf32>
    %357 = math.exp %356 : vector<16x16xf32>
    %cst_138 = arith.constant dense<0.000000e+00> : vector<16xf32>
    %358 = vector.multi_reduction <add>, %357, %cst_138 [1] : vector<16x16xf32> to vector<16xf32>
    %359 = vector.shape_cast %358 : vector<16xf32> to vector<16x1xf32>
    %360 = vector.broadcast %359 : vector<16x1xf32> to vector<16x16xf32>
    %361 = arith.divf %357, %360 : vector<16x16xf32>
    %c1_139 = arith.constant 1 : index
    %c0_140 = arith.constant 0 : index
    %c0_141 = arith.constant 0 : index
    %362 = vector.load %arg12[%c1_139, %c0_140, %c0_141] : memref<8x16x16xf32, #tpu.memory_space<vmem>>, vector<1x16x16xf32>
    %363 = vector.shape_cast %362 : vector<1x16x16xf32> to vector<16x16xf32>
    %364 = vector.shape_cast %361 : vector<16x16xf32> to vector<1x16x16xf32>
    tpu.vector_store %arg12[%c1_139, %c0_140, %c0_141], %364 {strides = array<i32>} : memref<8x16x16xf32, #tpu.memory_space<vmem>>, vector<1x16x16xf32>,
    %cst_142 = arith.constant dense<0.000000e+00> : vector<16x8xf32>
    %365 = tpu.matmul %361, %350, %cst_142 {dimension_numbers = #tpu.dot_dimension_numbers<[1], [0], [0], [1], [0, 0, 1, 1], [], []>} : vector<16x16xf32>, vector<16x8xf32>, vector<16x8xf32> -> vector<16x8xf32>
    %366 = vector.extract_strided_slice %327 {offsets = [8, 0], sizes = [8, 32], strides = [1, 1]} : vector<32x32xf32> to vector<8x32xf32>
    %cst_143 = arith.constant dense<0.000000e+00> : vector<16x32xf32>
    %367 = tpu.matmul %365, %366, %cst_143 {dimension_numbers = #tpu.dot_dimension_numbers<[1], [0], [0], [1], [0, 0, 1, 1], [], []>} : vector<16x8xf32>, vector<8x32xf32>, vector<16x32xf32> -> vector<16x32xf32>
    %368 = arith.addf %347, %367 : vector<16x32xf32>
    %369 = vector.extract_strided_slice %324 {offsets = [0, 16], sizes = [16, 8], strides = [1, 1]} : vector<16x32xf32> to vector<16x8xf32>
    %370 = vector.extract_strided_slice %325 {offsets = [0, 16], sizes = [16, 8], strides = [1, 1]} : vector<16x32xf32> to vector<16x8xf32>
    %371 = vector.extract_strided_slice %326 {offsets = [0, 16], sizes = [16, 8], strides = [1, 1]} : vector<16x32xf32> to vector<16x8xf32>
    %cst_144 = arith.constant dense<0.000000e+00> : vector<16x16xf32>
    %372 = tpu.matmul %369, %370, %cst_144 {dimension_numbers = #tpu.dot_dimension_numbers<[1], [1], [0], [0], [0, 0, 1, 0], [], []>} : vector<16x8xf32>, vector<16x8xf32>, vector<16x16xf32> -> vector<16x16xf32>
    %373 = arith.addf %372, %318 : vector<16x16xf32>
    %cst_145 = arith.constant dense<0xFF800000> : vector<16xf32>
    %374 = vector.multi_reduction <maximumf>, %373, %cst_145 [1] : vector<16x16xf32> to vector<16xf32>
    %375 = vector.shape_cast %374 : vector<16xf32> to vector<16x1xf32>
    %376 = vector.broadcast %375 : vector<16x1xf32> to vector<16x16xf32>
    %377 = arith.subf %373, %376 : vector<16x16xf32>
    %378 = math.exp %377 : vector<16x16xf32>
    %cst_146 = arith.constant dense<0.000000e+00> : vector<16xf32>
    %379 = vector.multi_reduction <add>, %378, %cst_146 [1] : vector<16x16xf32> to vector<16xf32>
    %380 = vector.shape_cast %379 : vector<16xf32> to vector<16x1xf32>
    %381 = vector.broadcast %380 : vector<16x1xf32> to vector<16x16xf32>
    %382 = arith.divf %378, %381 : vector<16x16xf32>
    %c2_147 = arith.constant 2 : index
    %c0_148 = arith.constant 0 : index
    %c0_149 = arith.constant 0 : index
    %383 = vector.load %arg12[%c2_147, %c0_148, %c0_149] : memref<8x16x16xf32, #tpu.memory_space<vmem>>, vector<1x16x16xf32>
    %384 = vector.shape_cast %383 : vector<1x16x16xf32> to vector<16x16xf32>
    %385 = vector.shape_cast %382 : vector<16x16xf32> to vector<1x16x16xf32>
    tpu.vector_store %arg12[%c2_147, %c0_148, %c0_149], %385 {strides = array<i32>} : memref<8x16x16xf32, #tpu.memory_space<vmem>>, vector<1x16x16xf32>,
    %cst_150 = arith.constant dense<0.000000e+00> : vector<16x8xf32>
    %386 = tpu.matmul %382, %371, %cst_150 {dimension_numbers = #tpu.dot_dimension_numbers<[1], [0], [0], [1], [0, 0, 1, 1], [], []>} : vector<16x16xf32>, vector<16x8xf32>, vector<16x8xf32> -> vector<16x8xf32>
    %387 = vector.extract_strided_slice %327 {offsets = [16, 0], sizes = [8, 32], strides = [1, 1]} : vector<32x32xf32> to vector<8x32xf32>
    %cst_151 = arith.constant dense<0.000000e+00> : vector<16x32xf32>
    %388 = tpu.matmul %386, %387, %cst_151 {dimension_numbers = #tpu.dot_dimension_numbers<[1], [0], [0], [1], [0, 0, 1, 1], [], []>} : vector<16x8xf32>, vector<8x32xf32>, vector<16x32xf32> -> vector<16x32xf32>
    %389 = arith.addf %368, %388 : vector<16x32xf32>
    %390 = vector.extract_strided_slice %324 {offsets = [0, 24], sizes = [16, 8], strides = [1, 1]} : vector<16x32xf32> to vector<16x8xf32>
    %391 = vector.extract_strided_slice %325 {offsets = [0, 24], sizes = [16, 8], strides = [1, 1]} : vector<16x32xf32> to vector<16x8xf32>
    %392 = vector.extract_strided_slice %326 {offsets = [0, 24], sizes = [16, 8], strides = [1, 1]} : vector<16x32xf32> to vector<16x8xf32>
    %cst_152 = arith.constant dense<0.000000e+00> : vector<16x16xf32>
    %393 = tpu.matmul %390, %391, %cst_152 {dimension_numbers = #tpu.dot_dimension_numbers<[1], [1], [0], [0], [0, 0, 1, 0], [], []>} : vector<16x8xf32>, vector<16x8xf32>, vector<16x16xf32> -> vector<16x16xf32>
    %394 = arith.addf %393, %318 : vector<16x16xf32>
    %cst_153 = arith.constant dense<0xFF800000> : vector<16xf32>
    %395 = vector.multi_reduction <maximumf>, %394, %cst_153 [1] : vector<16x16xf32> to vector<16xf32>
    %396 = vector.shape_cast %395 : vector<16xf32> to vector<16x1xf32>
    %397 = vector.broadcast %396 : vector<16x1xf32> to vector<16x16xf32>
    %398 = arith.subf %394, %397 : vector<16x16xf32>
    %399 = math.exp %398 : vector<16x16xf32>
    %cst_154 = arith.constant dense<0.000000e+00> : vector<16xf32>
    %400 = vector.multi_reduction <add>, %399, %cst_154 [1] : vector<16x16xf32> to vector<16xf32>
    %401 = vector.shape_cast %400 : vector<16xf32> to vector<16x1xf32>
    %402 = vector.broadcast %401 : vector<16x1xf32> to vector<16x16xf32>
    %403 = arith.divf %399, %402 : vector<16x16xf32>
    %c3_155 = arith.constant 3 : index
    %c0_156 = arith.constant 0 : index
    %c0_157 = arith.constant 0 : index
    %404 = vector.load %arg12[%c3_155, %c0_156, %c0_157] : memref<8x16x16xf32, #tpu.memory_space<vmem>>, vector<1x16x16xf32>
    %405 = vector.shape_cast %404 : vector<1x16x16xf32> to vector<16x16xf32>
    %406 = vector.shape_cast %403 : vector<16x16xf32> to vector<1x16x16xf32>
    tpu.vector_store %arg12[%c3_155, %c0_156, %c0_157], %406 {strides = array<i32>} : memref<8x16x16xf32, #tpu.memory_space<vmem>>, vector<1x16x16xf32>,
    %cst_158 = arith.constant dense<0.000000e+00> : vector<16x8xf32>
    %407 = tpu.matmul %403, %392, %cst_158 {dimension_numbers = #tpu.dot_dimension_numbers<[1], [0], [0], [1], [0, 0, 1, 1], [], []>} : vector<16x16xf32>, vector<16x8xf32>, vector<16x8xf32> -> vector<16x8xf32>
    %408 = vector.extract_strided_slice %327 {offsets = [24, 0], sizes = [8, 32], strides = [1, 1]} : vector<32x32xf32> to vector<8x32xf32>
    %cst_159 = arith.constant dense<0.000000e+00> : vector<16x32xf32>
    %409 = tpu.matmul %407, %408, %cst_159 {dimension_numbers = #tpu.dot_dimension_numbers<[1], [0], [0], [1], [0, 0, 1, 1], [], []>} : vector<16x8xf32>, vector<8x32xf32>, vector<16x32xf32> -> vector<16x32xf32>
    %410 = arith.addf %389, %409 : vector<16x32xf32>
    %c4_160 = arith.constant 4 : index
    %c0_161 = arith.constant 0 : index
    %c0_162 = arith.constant 0 : index
    %411 = vector.load %arg9[%c4_160, %c0_161, %c0_162] : memref<10x1x64xf32, #tpu.memory_space<vmem>>, vector<1x1x64xf32>
    %412 = vector.shape_cast %411 : vector<1x1x64xf32> to vector<1x64xf32>
    %413 = vector.extract_strided_slice %412 {offsets = [0, 0], sizes = [1, 32], strides = [1, 1]} : vector<1x64xf32> to vector<1x32xf32>
    %414 = vector.extract_strided_slice %412 {offsets = [0, 32], sizes = [1, 32], strides = [1, 1]} : vector<1x64xf32> to vector<1x32xf32>
    %415 = arith.addf %410, %317 : vector<16x32xf32>
    %cst_163 = arith.constant dense<0.000000e+00> : vector<16xf32>
    %416 = vector.multi_reduction <add>, %415, %cst_163 [1] : vector<16x32xf32> to vector<16xf32>
    %417 = vector.shape_cast %416 : vector<16xf32> to vector<16x1xf32>
    %cst_164 = arith.constant 3.200000e+01 : f32
    %418 = vector.broadcast %cst_164 : f32 to vector<16x1xf32>
    %419 = arith.divf %417, %418 : vector<16x1xf32>
    %420 = vector.broadcast %419 : vector<16x1xf32> to vector<16x32xf32>
    %421 = arith.subf %415, %420 : vector<16x32xf32>
    %422 = arith.mulf %421, %421 : vector<16x32xf32>
    %cst_165 = arith.constant dense<0.000000e+00> : vector<16xf32>
    %423 = vector.multi_reduction <add>, %422, %cst_165 [1] : vector<16x32xf32> to vector<16xf32>
    %424 = vector.shape_cast %423 : vector<16xf32> to vector<16x1xf32>
    %cst_166 = arith.constant 3.200000e+01 : f32
    %425 = vector.broadcast %cst_166 : f32 to vector<16x1xf32>
    %426 = arith.divf %424, %425 : vector<16x1xf32>
    %427 = vector.broadcast %419 : vector<16x1xf32> to vector<16x32xf32>
    %428 = arith.subf %415, %427 : vector<16x32xf32>
    %cst_167 = arith.constant 9.99999974E-6 : f32
    %429 = vector.broadcast %cst_167 : f32 to vector<16x1xf32>
    %430 = arith.addf %426, %429 : vector<16x1xf32>
    %431 = math.rsqrt %430 : vector<16x1xf32>
    %432 = vector.broadcast %431 : vector<16x1xf32> to vector<16x32xf32>
    %433 = arith.mulf %428, %432 : vector<16x32xf32>
    %434 = vector.broadcast %413 : vector<1x32xf32> to vector<16x32xf32>
    %435 = arith.mulf %433, %434 : vector<16x32xf32>
    %436 = vector.broadcast %414 : vector<1x32xf32> to vector<16x32xf32>
    %437 = arith.addf %435, %436 : vector<16x32xf32>
    %c4_168 = arith.constant 4 : index
    %c0_169 = arith.constant 0 : index
    %c0_170 = arith.constant 0 : index
    %438 = vector.load %arg7[%c4_168, %c0_169, %c0_170] : memref<7x32x128xf32, #tpu.memory_space<vmem>>, vector<1x32x128xf32>
    %439 = vector.shape_cast %438 : vector<1x32x128xf32> to vector<32x128xf32>
    %440 = vector.extract_strided_slice %439 {offsets = [0, 0], sizes = [32, 32], strides = [1, 1]} : vector<32x128xf32> to vector<32x32xf32>
    %cst_171 = arith.constant dense<0.000000e+00> : vector<16x32xf32>
    %441 = tpu.matmul %437, %440, %cst_171 {dimension_numbers = #tpu.dot_dimension_numbers<[1], [0], [0], [1], [0, 0, 1, 1], [], []>} : vector<16x32xf32>, vector<32x32xf32>, vector<16x32xf32> -> vector<16x32xf32>
    %442 = vector.extract_strided_slice %439 {offsets = [0, 32], sizes = [32, 64], strides = [1, 1]} : vector<32x128xf32> to vector<32x64xf32>
    %cst_172 = arith.constant dense<0.000000e+00> : vector<16x64xf32>
    %443 = tpu.matmul %316, %442, %cst_172 {dimension_numbers = #tpu.dot_dimension_numbers<[1], [0], [0], [1], [0, 0, 1, 1], [], []>} : vector<16x32xf32>, vector<32x64xf32>, vector<16x64xf32> -> vector<16x64xf32>
    %444 = vector.extract_strided_slice %443 {offsets = [0, 0], sizes = [16, 32], strides = [1, 1]} : vector<16x64xf32> to vector<16x32xf32>
    %445 = vector.extract_strided_slice %443 {offsets = [0, 32], sizes = [16, 32], strides = [1, 1]} : vector<16x64xf32> to vector<16x32xf32>
    %446 = vector.extract_strided_slice %439 {offsets = [0, 96], sizes = [32, 32], strides = [1, 1]} : vector<32x128xf32> to vector<32x32xf32>
    %447 = vector.extract_strided_slice %441 {offsets = [0, 0], sizes = [16, 8], strides = [1, 1]} : vector<16x32xf32> to vector<16x8xf32>
    %448 = vector.extract_strided_slice %444 {offsets = [0, 0], sizes = [16, 8], strides = [1, 1]} : vector<16x32xf32> to vector<16x8xf32>
    %449 = vector.extract_strided_slice %445 {offsets = [0, 0], sizes = [16, 8], strides = [1, 1]} : vector<16x32xf32> to vector<16x8xf32>
    %cst_173 = arith.constant dense<0.000000e+00> : vector<16x16xf32>
    %450 = tpu.matmul %447, %448, %cst_173 {dimension_numbers = #tpu.dot_dimension_numbers<[1], [1], [0], [0], [0, 0, 1, 0], [], []>} : vector<16x8xf32>, vector<16x8xf32>, vector<16x16xf32> -> vector<16x16xf32>
    %451 = arith.addf %450, %319 : vector<16x16xf32>
    %cst_174 = arith.constant dense<0xFF800000> : vector<16xf32>
    %452 = vector.multi_reduction <maximumf>, %451, %cst_174 [1] : vector<16x16xf32> to vector<16xf32>
    %453 = vector.shape_cast %452 : vector<16xf32> to vector<16x1xf32>
    %454 = vector.broadcast %453 : vector<16x1xf32> to vector<16x16xf32>
    %455 = arith.subf %451, %454 : vector<16x16xf32>
    %456 = math.exp %455 : vector<16x16xf32>
    %cst_175 = arith.constant dense<0.000000e+00> : vector<16xf32>
    %457 = vector.multi_reduction <add>, %456, %cst_175 [1] : vector<16x16xf32> to vector<16xf32>
    %458 = vector.shape_cast %457 : vector<16xf32> to vector<16x1xf32>
    %459 = vector.broadcast %458 : vector<16x1xf32> to vector<16x16xf32>
    %460 = arith.divf %456, %459 : vector<16x16xf32>
    %c0_176 = arith.constant 0 : index
    %c0_177 = arith.constant 0 : index
    %c0_178 = arith.constant 0 : index
    %461 = vector.load %arg13[%c0_176, %c0_177, %c0_178] : memref<8x16x16xf32, #tpu.memory_space<vmem>>, vector<1x16x16xf32>
    %462 = vector.shape_cast %461 : vector<1x16x16xf32> to vector<16x16xf32>
    %463 = vector.shape_cast %460 : vector<16x16xf32> to vector<1x16x16xf32>
    tpu.vector_store %arg13[%c0_176, %c0_177, %c0_178], %463 {strides = array<i32>} : memref<8x16x16xf32, #tpu.memory_space<vmem>>, vector<1x16x16xf32>,
    %cst_179 = arith.constant dense<0.000000e+00> : vector<16x8xf32>
    %464 = tpu.matmul %460, %449, %cst_179 {dimension_numbers = #tpu.dot_dimension_numbers<[1], [0], [0], [1], [0, 0, 1, 1], [], []>} : vector<16x16xf32>, vector<16x8xf32>, vector<16x8xf32> -> vector<16x8xf32>
    %465 = vector.extract_strided_slice %446 {offsets = [0, 0], sizes = [8, 32], strides = [1, 1]} : vector<32x32xf32> to vector<8x32xf32>
    %cst_180 = arith.constant dense<0.000000e+00> : vector<16x32xf32>
    %466 = tpu.matmul %464, %465, %cst_180 {dimension_numbers = #tpu.dot_dimension_numbers<[1], [0], [0], [1], [0, 0, 1, 1], [], []>} : vector<16x8xf32>, vector<8x32xf32>, vector<16x32xf32> -> vector<16x32xf32>
    %467 = vector.extract_strided_slice %441 {offsets = [0, 8], sizes = [16, 8], strides = [1, 1]} : vector<16x32xf32> to vector<16x8xf32>
    %468 = vector.extract_strided_slice %444 {offsets = [0, 8], sizes = [16, 8], strides = [1, 1]} : vector<16x32xf32> to vector<16x8xf32>
    %469 = vector.extract_strided_slice %445 {offsets = [0, 8], sizes = [16, 8], strides = [1, 1]} : vector<16x32xf32> to vector<16x8xf32>
    %cst_181 = arith.constant dense<0.000000e+00> : vector<16x16xf32>
    %470 = tpu.matmul %467, %468, %cst_181 {dimension_numbers = #tpu.dot_dimension_numbers<[1], [1], [0], [0], [0, 0, 1, 0], [], []>} : vector<16x8xf32>, vector<16x8xf32>, vector<16x16xf32> -> vector<16x16xf32>
    %471 = arith.addf %470, %319 : vector<16x16xf32>
    %cst_182 = arith.constant dense<0xFF800000> : vector<16xf32>
    %472 = vector.multi_reduction <maximumf>, %471, %cst_182 [1] : vector<16x16xf32> to vector<16xf32>
    %473 = vector.shape_cast %472 : vector<16xf32> to vector<16x1xf32>
    %474 = vector.broadcast %473 : vector<16x1xf32> to vector<16x16xf32>
    %475 = arith.subf %471, %474 : vector<16x16xf32>
    %476 = math.exp %475 : vector<16x16xf32>
    %cst_183 = arith.constant dense<0.000000e+00> : vector<16xf32>
    %477 = vector.multi_reduction <add>, %476, %cst_183 [1] : vector<16x16xf32> to vector<16xf32>
    %478 = vector.shape_cast %477 : vector<16xf32> to vector<16x1xf32>
    %479 = vector.broadcast %478 : vector<16x1xf32> to vector<16x16xf32>
    %480 = arith.divf %476, %479 : vector<16x16xf32>
    %c1_184 = arith.constant 1 : index
    %c0_185 = arith.constant 0 : index
    %c0_186 = arith.constant 0 : index
    %481 = vector.load %arg13[%c1_184, %c0_185, %c0_186] : memref<8x16x16xf32, #tpu.memory_space<vmem>>, vector<1x16x16xf32>
    %482 = vector.shape_cast %481 : vector<1x16x16xf32> to vector<16x16xf32>
    %483 = vector.shape_cast %480 : vector<16x16xf32> to vector<1x16x16xf32>
    tpu.vector_store %arg13[%c1_184, %c0_185, %c0_186], %483 {strides = array<i32>} : memref<8x16x16xf32, #tpu.memory_space<vmem>>, vector<1x16x16xf32>,
    %cst_187 = arith.constant dense<0.000000e+00> : vector<16x8xf32>
    %484 = tpu.matmul %480, %469, %cst_187 {dimension_numbers = #tpu.dot_dimension_numbers<[1], [0], [0], [1], [0, 0, 1, 1], [], []>} : vector<16x16xf32>, vector<16x8xf32>, vector<16x8xf32> -> vector<16x8xf32>
    %485 = vector.extract_strided_slice %446 {offsets = [8, 0], sizes = [8, 32], strides = [1, 1]} : vector<32x32xf32> to vector<8x32xf32>
    %cst_188 = arith.constant dense<0.000000e+00> : vector<16x32xf32>
    %486 = tpu.matmul %484, %485, %cst_188 {dimension_numbers = #tpu.dot_dimension_numbers<[1], [0], [0], [1], [0, 0, 1, 1], [], []>} : vector<16x8xf32>, vector<8x32xf32>, vector<16x32xf32> -> vector<16x32xf32>
    %487 = arith.addf %466, %486 : vector<16x32xf32>
    %488 = vector.extract_strided_slice %441 {offsets = [0, 16], sizes = [16, 8], strides = [1, 1]} : vector<16x32xf32> to vector<16x8xf32>
    %489 = vector.extract_strided_slice %444 {offsets = [0, 16], sizes = [16, 8], strides = [1, 1]} : vector<16x32xf32> to vector<16x8xf32>
    %490 = vector.extract_strided_slice %445 {offsets = [0, 16], sizes = [16, 8], strides = [1, 1]} : vector<16x32xf32> to vector<16x8xf32>
    %cst_189 = arith.constant dense<0.000000e+00> : vector<16x16xf32>
    %491 = tpu.matmul %488, %489, %cst_189 {dimension_numbers = #tpu.dot_dimension_numbers<[1], [1], [0], [0], [0, 0, 1, 0], [], []>} : vector<16x8xf32>, vector<16x8xf32>, vector<16x16xf32> -> vector<16x16xf32>
    %492 = arith.addf %491, %319 : vector<16x16xf32>
    %cst_190 = arith.constant dense<0xFF800000> : vector<16xf32>
    %493 = vector.multi_reduction <maximumf>, %492, %cst_190 [1] : vector<16x16xf32> to vector<16xf32>
    %494 = vector.shape_cast %493 : vector<16xf32> to vector<16x1xf32>
    %495 = vector.broadcast %494 : vector<16x1xf32> to vector<16x16xf32>
    %496 = arith.subf %492, %495 : vector<16x16xf32>
    %497 = math.exp %496 : vector<16x16xf32>
    %cst_191 = arith.constant dense<0.000000e+00> : vector<16xf32>
    %498 = vector.multi_reduction <add>, %497, %cst_191 [1] : vector<16x16xf32> to vector<16xf32>
    %499 = vector.shape_cast %498 : vector<16xf32> to vector<16x1xf32>
    %500 = vector.broadcast %499 : vector<16x1xf32> to vector<16x16xf32>
    %501 = arith.divf %497, %500 : vector<16x16xf32>
    %c2_192 = arith.constant 2 : index
    %c0_193 = arith.constant 0 : index
    %c0_194 = arith.constant 0 : index
    %502 = vector.load %arg13[%c2_192, %c0_193, %c0_194] : memref<8x16x16xf32, #tpu.memory_space<vmem>>, vector<1x16x16xf32>
    %503 = vector.shape_cast %502 : vector<1x16x16xf32> to vector<16x16xf32>
    %504 = vector.shape_cast %501 : vector<16x16xf32> to vector<1x16x16xf32>
    tpu.vector_store %arg13[%c2_192, %c0_193, %c0_194], %504 {strides = array<i32>} : memref<8x16x16xf32, #tpu.memory_space<vmem>>, vector<1x16x16xf32>,
    %cst_195 = arith.constant dense<0.000000e+00> : vector<16x8xf32>
    %505 = tpu.matmul %501, %490, %cst_195 {dimension_numbers = #tpu.dot_dimension_numbers<[1], [0], [0], [1], [0, 0, 1, 1], [], []>} : vector<16x16xf32>, vector<16x8xf32>, vector<16x8xf32> -> vector<16x8xf32>
    %506 = vector.extract_strided_slice %446 {offsets = [16, 0], sizes = [8, 32], strides = [1, 1]} : vector<32x32xf32> to vector<8x32xf32>
    %cst_196 = arith.constant dense<0.000000e+00> : vector<16x32xf32>
    %507 = tpu.matmul %505, %506, %cst_196 {dimension_numbers = #tpu.dot_dimension_numbers<[1], [0], [0], [1], [0, 0, 1, 1], [], []>} : vector<16x8xf32>, vector<8x32xf32>, vector<16x32xf32> -> vector<16x32xf32>
    %508 = arith.addf %487, %507 : vector<16x32xf32>
    %509 = vector.extract_strided_slice %441 {offsets = [0, 24], sizes = [16, 8], strides = [1, 1]} : vector<16x32xf32> to vector<16x8xf32>
    %510 = vector.extract_strided_slice %444 {offsets = [0, 24], sizes = [16, 8], strides = [1, 1]} : vector<16x32xf32> to vector<16x8xf32>
    %511 = vector.extract_strided_slice %445 {offsets = [0, 24], sizes = [16, 8], strides = [1, 1]} : vector<16x32xf32> to vector<16x8xf32>
    %cst_197 = arith.constant dense<0.000000e+00> : vector<16x16xf32>
    %512 = tpu.matmul %509, %510, %cst_197 {dimension_numbers = #tpu.dot_dimension_numbers<[1], [1], [0], [0], [0, 0, 1, 0], [], []>} : vector<16x8xf32>, vector<16x8xf32>, vector<16x16xf32> -> vector<16x16xf32>
    %513 = arith.addf %512, %319 : vector<16x16xf32>
    %cst_198 = arith.constant dense<0xFF800000> : vector<16xf32>
    %514 = vector.multi_reduction <maximumf>, %513, %cst_198 [1] : vector<16x16xf32> to vector<16xf32>
    %515 = vector.shape_cast %514 : vector<16xf32> to vector<16x1xf32>
    %516 = vector.broadcast %515 : vector<16x1xf32> to vector<16x16xf32>
    %517 = arith.subf %513, %516 : vector<16x16xf32>
    %518 = math.exp %517 : vector<16x16xf32>
    %cst_199 = arith.constant dense<0.000000e+00> : vector<16xf32>
    %519 = vector.multi_reduction <add>, %518, %cst_199 [1] : vector<16x16xf32> to vector<16xf32>
    %520 = vector.shape_cast %519 : vector<16xf32> to vector<16x1xf32>
    %521 = vector.broadcast %520 : vector<16x1xf32> to vector<16x16xf32>
    %522 = arith.divf %518, %521 : vector<16x16xf32>
    %c3_200 = arith.constant 3 : index
    %c0_201 = arith.constant 0 : index
    %c0_202 = arith.constant 0 : index
    %523 = vector.load %arg13[%c3_200, %c0_201, %c0_202] : memref<8x16x16xf32, #tpu.memory_space<vmem>>, vector<1x16x16xf32>
    %524 = vector.shape_cast %523 : vector<1x16x16xf32> to vector<16x16xf32>
    %525 = vector.shape_cast %522 : vector<16x16xf32> to vector<1x16x16xf32>
    tpu.vector_store %arg13[%c3_200, %c0_201, %c0_202], %525 {strides = array<i32>} : memref<8x16x16xf32, #tpu.memory_space<vmem>>, vector<1x16x16xf32>,
    %cst_203 = arith.constant dense<0.000000e+00> : vector<16x8xf32>
    %526 = tpu.matmul %522, %511, %cst_203 {dimension_numbers = #tpu.dot_dimension_numbers<[1], [0], [0], [1], [0, 0, 1, 1], [], []>} : vector<16x16xf32>, vector<16x8xf32>, vector<16x8xf32> -> vector<16x8xf32>
    %527 = vector.extract_strided_slice %446 {offsets = [24, 0], sizes = [8, 32], strides = [1, 1]} : vector<32x32xf32> to vector<8x32xf32>
    %cst_204 = arith.constant dense<0.000000e+00> : vector<16x32xf32>
    %528 = tpu.matmul %526, %527, %cst_204 {dimension_numbers = #tpu.dot_dimension_numbers<[1], [0], [0], [1], [0, 0, 1, 1], [], []>} : vector<16x8xf32>, vector<8x32xf32>, vector<16x32xf32> -> vector<16x32xf32>
    %529 = arith.addf %508, %528 : vector<16x32xf32>
    %c6_205 = arith.constant 6 : index
    %c0_206 = arith.constant 0 : index
    %c0_207 = arith.constant 0 : index
    %530 = vector.load %arg9[%c6_205, %c0_206, %c0_207] : memref<10x1x64xf32, #tpu.memory_space<vmem>>, vector<1x1x64xf32>
    %531 = vector.shape_cast %530 : vector<1x1x64xf32> to vector<1x64xf32>
    %532 = vector.extract_strided_slice %531 {offsets = [0, 0], sizes = [1, 32], strides = [1, 1]} : vector<1x64xf32> to vector<1x32xf32>
    %533 = vector.extract_strided_slice %531 {offsets = [0, 32], sizes = [1, 32], strides = [1, 1]} : vector<1x64xf32> to vector<1x32xf32>
    %534 = arith.addf %529, %437 : vector<16x32xf32>
    %cst_208 = arith.constant dense<0.000000e+00> : vector<16xf32>
    %535 = vector.multi_reduction <add>, %534, %cst_208 [1] : vector<16x32xf32> to vector<16xf32>
    %536 = vector.shape_cast %535 : vector<16xf32> to vector<16x1xf32>
    %cst_209 = arith.constant 3.200000e+01 : f32
    %537 = vector.broadcast %cst_209 : f32 to vector<16x1xf32>
    %538 = arith.divf %536, %537 : vector<16x1xf32>
    %539 = vector.broadcast %538 : vector<16x1xf32> to vector<16x32xf32>
    %540 = arith.subf %534, %539 : vector<16x32xf32>
    %541 = arith.mulf %540, %540 : vector<16x32xf32>
    %cst_210 = arith.constant dense<0.000000e+00> : vector<16xf32>
    %542 = vector.multi_reduction <add>, %541, %cst_210 [1] : vector<16x32xf32> to vector<16xf32>
    %543 = vector.shape_cast %542 : vector<16xf32> to vector<16x1xf32>
    %cst_211 = arith.constant 3.200000e+01 : f32
    %544 = vector.broadcast %cst_211 : f32 to vector<16x1xf32>
    %545 = arith.divf %543, %544 : vector<16x1xf32>
    %546 = vector.broadcast %538 : vector<16x1xf32> to vector<16x32xf32>
    %547 = arith.subf %534, %546 : vector<16x32xf32>
    %cst_212 = arith.constant 9.99999974E-6 : f32
    %548 = vector.broadcast %cst_212 : f32 to vector<16x1xf32>
    %549 = arith.addf %545, %548 : vector<16x1xf32>
    %550 = math.rsqrt %549 : vector<16x1xf32>
    %551 = vector.broadcast %550 : vector<16x1xf32> to vector<16x32xf32>
    %552 = arith.mulf %547, %551 : vector<16x32xf32>
    %553 = vector.broadcast %532 : vector<1x32xf32> to vector<16x32xf32>
    %554 = arith.mulf %552, %553 : vector<16x32xf32>
    %555 = vector.broadcast %533 : vector<1x32xf32> to vector<16x32xf32>
    %556 = arith.addf %554, %555 : vector<16x32xf32>
    %c2_213 = arith.constant 2 : index
    %c0_214 = arith.constant 0 : index
    %c0_215 = arith.constant 0 : index
    %557 = vector.load %arg8[%c2_213, %c0_214, %c0_215] : memref<4x64x96xf32, #tpu.memory_space<vmem>>, vector<1x64x96xf32>
    %558 = vector.shape_cast %557 : vector<1x64x96xf32> to vector<64x96xf32>
    %559 = vector.extract_strided_slice %558 {offsets = [0, 0], sizes = [32, 64], strides = [1, 1]} : vector<64x96xf32> to vector<32x64xf32>
    %560 = vector.extract_strided_slice %558 {offsets = [0, 64], sizes = [64, 32], strides = [1, 1]} : vector<64x96xf32> to vector<64x32xf32>
    %cst_216 = arith.constant dense<0.000000e+00> : vector<16x64xf32>
    %561 = tpu.matmul %556, %559, %cst_216 {dimension_numbers = #tpu.dot_dimension_numbers<[1], [0], [0], [1], [0, 0, 1, 1], [], []>} : vector<16x32xf32>, vector<32x64xf32>, vector<16x64xf32> -> vector<16x64xf32>
    %cst_217 = arith.constant 0.000000e+00 : f32
    %562 = vector.broadcast %cst_217 : f32 to vector<16x64xf32>
    %563 = arith.maximumf %561, %562 : vector<16x64xf32>
    %cst_218 = arith.constant dense<0.000000e+00> : vector<16x32xf32>
    %564 = tpu.matmul %563, %560, %cst_218 {dimension_numbers = #tpu.dot_dimension_numbers<[1], [0], [0], [1], [0, 0, 1, 1], [], []>} : vector<16x64xf32>, vector<64x32xf32>, vector<16x32xf32> -> vector<16x32xf32>
    %c8 = arith.constant 8 : index
    %c0_219 = arith.constant 0 : index
    %c0_220 = arith.constant 0 : index
    %565 = vector.load %arg9[%c8, %c0_219, %c0_220] : memref<10x1x64xf32, #tpu.memory_space<vmem>>, vector<1x1x64xf32>
    %566 = vector.shape_cast %565 : vector<1x1x64xf32> to vector<1x64xf32>
    %567 = vector.extract_strided_slice %566 {offsets = [0, 0], sizes = [1, 32], strides = [1, 1]} : vector<1x64xf32> to vector<1x32xf32>
    %568 = vector.extract_strided_slice %566 {offsets = [0, 32], sizes = [1, 32], strides = [1, 1]} : vector<1x64xf32> to vector<1x32xf32>
    %569 = arith.addf %564, %556 : vector<16x32xf32>
    %cst_221 = arith.constant dense<0.000000e+00> : vector<16xf32>
    %570 = vector.multi_reduction <add>, %569, %cst_221 [1] : vector<16x32xf32> to vector<16xf32>
    %571 = vector.shape_cast %570 : vector<16xf32> to vector<16x1xf32>
    %cst_222 = arith.constant 3.200000e+01 : f32
    %572 = vector.broadcast %cst_222 : f32 to vector<16x1xf32>
    %573 = arith.divf %571, %572 : vector<16x1xf32>
    %574 = vector.broadcast %573 : vector<16x1xf32> to vector<16x32xf32>
    %575 = arith.subf %569, %574 : vector<16x32xf32>
    %576 = arith.mulf %575, %575 : vector<16x32xf32>
    %cst_223 = arith.constant dense<0.000000e+00> : vector<16xf32>
    %577 = vector.multi_reduction <add>, %576, %cst_223 [1] : vector<16x32xf32> to vector<16xf32>
    %578 = vector.shape_cast %577 : vector<16xf32> to vector<16x1xf32>
    %cst_224 = arith.constant 3.200000e+01 : f32
    %579 = vector.broadcast %cst_224 : f32 to vector<16x1xf32>
    %580 = arith.divf %578, %579 : vector<16x1xf32>
    %581 = vector.broadcast %573 : vector<16x1xf32> to vector<16x32xf32>
    %582 = arith.subf %569, %581 : vector<16x32xf32>
    %cst_225 = arith.constant 9.99999974E-6 : f32
    %583 = vector.broadcast %cst_225 : f32 to vector<16x1xf32>
    %584 = arith.addf %580, %583 : vector<16x1xf32>
    %585 = math.rsqrt %584 : vector<16x1xf32>
    %586 = vector.broadcast %585 : vector<16x1xf32> to vector<16x32xf32>
    %587 = arith.mulf %582, %586 : vector<16x32xf32>
    %588 = vector.broadcast %567 : vector<1x32xf32> to vector<16x32xf32>
    %589 = arith.mulf %587, %588 : vector<16x32xf32>
    %590 = vector.broadcast %568 : vector<1x32xf32> to vector<16x32xf32>
    %591 = arith.addf %589, %590 : vector<16x32xf32>
    %c3_226 = arith.constant 3 : index
    %c0_227 = arith.constant 0 : index
    %c0_228 = arith.constant 0 : index
    %592 = vector.load %arg7[%c3_226, %c0_227, %c0_228] : memref<7x32x128xf32, #tpu.memory_space<vmem>>, vector<1x32x128xf32>
    %593 = vector.shape_cast %592 : vector<1x32x128xf32> to vector<32x128xf32>
    %594 = vector.extract_strided_slice %593 {offsets = [0, 0], sizes = [32, 96], strides = [1, 1]} : vector<32x128xf32> to vector<32x96xf32>
    %cst_229 = arith.constant dense<0.000000e+00> : vector<16x96xf32>
    %595 = tpu.matmul %591, %594, %cst_229 {dimension_numbers = #tpu.dot_dimension_numbers<[1], [0], [0], [1], [0, 0, 1, 1], [], []>} : vector<16x32xf32>, vector<32x96xf32>, vector<16x96xf32> -> vector<16x96xf32>
    %596 = vector.extract_strided_slice %595 {offsets = [0, 0], sizes = [16, 32], strides = [1, 1]} : vector<16x96xf32> to vector<16x32xf32>
    %597 = vector.extract_strided_slice %595 {offsets = [0, 32], sizes = [16, 32], strides = [1, 1]} : vector<16x96xf32> to vector<16x32xf32>
    %598 = vector.extract_strided_slice %595 {offsets = [0, 64], sizes = [16, 32], strides = [1, 1]} : vector<16x96xf32> to vector<16x32xf32>
    %599 = vector.extract_strided_slice %593 {offsets = [0, 96], sizes = [32, 32], strides = [1, 1]} : vector<32x128xf32> to vector<32x32xf32>
    %600 = vector.extract_strided_slice %596 {offsets = [0, 0], sizes = [16, 8], strides = [1, 1]} : vector<16x32xf32> to vector<16x8xf32>
    %601 = vector.extract_strided_slice %597 {offsets = [0, 0], sizes = [16, 8], strides = [1, 1]} : vector<16x32xf32> to vector<16x8xf32>
    %602 = vector.extract_strided_slice %598 {offsets = [0, 0], sizes = [16, 8], strides = [1, 1]} : vector<16x32xf32> to vector<16x8xf32>
    %cst_230 = arith.constant dense<0.000000e+00> : vector<16x16xf32>
    %603 = tpu.matmul %600, %601, %cst_230 {dimension_numbers = #tpu.dot_dimension_numbers<[1], [1], [0], [0], [0, 0, 1, 0], [], []>} : vector<16x8xf32>, vector<16x8xf32>, vector<16x16xf32> -> vector<16x16xf32>
    %604 = arith.addf %603, %318 : vector<16x16xf32>
    %cst_231 = arith.constant dense<0xFF800000> : vector<16xf32>
    %605 = vector.multi_reduction <maximumf>, %604, %cst_231 [1] : vector<16x16xf32> to vector<16xf32>
    %606 = vector.shape_cast %605 : vector<16xf32> to vector<16x1xf32>
    %607 = vector.broadcast %606 : vector<16x1xf32> to vector<16x16xf32>
    %608 = arith.subf %604, %607 : vector<16x16xf32>
    %609 = math.exp %608 : vector<16x16xf32>
    %cst_232 = arith.constant dense<0.000000e+00> : vector<16xf32>
    %610 = vector.multi_reduction <add>, %609, %cst_232 [1] : vector<16x16xf32> to vector<16xf32>
    %611 = vector.shape_cast %610 : vector<16xf32> to vector<16x1xf32>
    %612 = vector.broadcast %611 : vector<16x1xf32> to vector<16x16xf32>
    %613 = arith.divf %609, %612 : vector<16x16xf32>
    %c4_233 = arith.constant 4 : index
    %c0_234 = arith.constant 0 : index
    %c0_235 = arith.constant 0 : index
    %614 = vector.load %arg12[%c4_233, %c0_234, %c0_235] : memref<8x16x16xf32, #tpu.memory_space<vmem>>, vector<1x16x16xf32>
    %615 = vector.shape_cast %614 : vector<1x16x16xf32> to vector<16x16xf32>
    %616 = vector.shape_cast %613 : vector<16x16xf32> to vector<1x16x16xf32>
    tpu.vector_store %arg12[%c4_233, %c0_234, %c0_235], %616 {strides = array<i32>} : memref<8x16x16xf32, #tpu.memory_space<vmem>>, vector<1x16x16xf32>,
    %cst_236 = arith.constant dense<0.000000e+00> : vector<16x8xf32>
    %617 = tpu.matmul %613, %602, %cst_236 {dimension_numbers = #tpu.dot_dimension_numbers<[1], [0], [0], [1], [0, 0, 1, 1], [], []>} : vector<16x16xf32>, vector<16x8xf32>, vector<16x8xf32> -> vector<16x8xf32>
    %618 = vector.extract_strided_slice %599 {offsets = [0, 0], sizes = [8, 32], strides = [1, 1]} : vector<32x32xf32> to vector<8x32xf32>
    %cst_237 = arith.constant dense<0.000000e+00> : vector<16x32xf32>
    %619 = tpu.matmul %617, %618, %cst_237 {dimension_numbers = #tpu.dot_dimension_numbers<[1], [0], [0], [1], [0, 0, 1, 1], [], []>} : vector<16x8xf32>, vector<8x32xf32>, vector<16x32xf32> -> vector<16x32xf32>
    %620 = vector.extract_strided_slice %596 {offsets = [0, 8], sizes = [16, 8], strides = [1, 1]} : vector<16x32xf32> to vector<16x8xf32>
    %621 = vector.extract_strided_slice %597 {offsets = [0, 8], sizes = [16, 8], strides = [1, 1]} : vector<16x32xf32> to vector<16x8xf32>
    %622 = vector.extract_strided_slice %598 {offsets = [0, 8], sizes = [16, 8], strides = [1, 1]} : vector<16x32xf32> to vector<16x8xf32>
    %cst_238 = arith.constant dense<0.000000e+00> : vector<16x16xf32>
    %623 = tpu.matmul %620, %621, %cst_238 {dimension_numbers = #tpu.dot_dimension_numbers<[1], [1], [0], [0], [0, 0, 1, 0], [], []>} : vector<16x8xf32>, vector<16x8xf32>, vector<16x16xf32> -> vector<16x16xf32>
    %624 = arith.addf %623, %318 : vector<16x16xf32>
    %cst_239 = arith.constant dense<0xFF800000> : vector<16xf32>
    %625 = vector.multi_reduction <maximumf>, %624, %cst_239 [1] : vector<16x16xf32> to vector<16xf32>
    %626 = vector.shape_cast %625 : vector<16xf32> to vector<16x1xf32>
    %627 = vector.broadcast %626 : vector<16x1xf32> to vector<16x16xf32>
    %628 = arith.subf %624, %627 : vector<16x16xf32>
    %629 = math.exp %628 : vector<16x16xf32>
    %cst_240 = arith.constant dense<0.000000e+00> : vector<16xf32>
    %630 = vector.multi_reduction <add>, %629, %cst_240 [1] : vector<16x16xf32> to vector<16xf32>
    %631 = vector.shape_cast %630 : vector<16xf32> to vector<16x1xf32>
    %632 = vector.broadcast %631 : vector<16x1xf32> to vector<16x16xf32>
    %633 = arith.divf %629, %632 : vector<16x16xf32>
    %c5_241 = arith.constant 5 : index
    %c0_242 = arith.constant 0 : index
    %c0_243 = arith.constant 0 : index
    %634 = vector.load %arg12[%c5_241, %c0_242, %c0_243] : memref<8x16x16xf32, #tpu.memory_space<vmem>>, vector<1x16x16xf32>
    %635 = vector.shape_cast %634 : vector<1x16x16xf32> to vector<16x16xf32>
    %636 = vector.shape_cast %633 : vector<16x16xf32> to vector<1x16x16xf32>
    tpu.vector_store %arg12[%c5_241, %c0_242, %c0_243], %636 {strides = array<i32>} : memref<8x16x16xf32, #tpu.memory_space<vmem>>, vector<1x16x16xf32>,
    %cst_244 = arith.constant dense<0.000000e+00> : vector<16x8xf32>
    %637 = tpu.matmul %633, %622, %cst_244 {dimension_numbers = #tpu.dot_dimension_numbers<[1], [0], [0], [1], [0, 0, 1, 1], [], []>} : vector<16x16xf32>, vector<16x8xf32>, vector<16x8xf32> -> vector<16x8xf32>
    %638 = vector.extract_strided_slice %599 {offsets = [8, 0], sizes = [8, 32], strides = [1, 1]} : vector<32x32xf32> to vector<8x32xf32>
    %cst_245 = arith.constant dense<0.000000e+00> : vector<16x32xf32>
    %639 = tpu.matmul %637, %638, %cst_245 {dimension_numbers = #tpu.dot_dimension_numbers<[1], [0], [0], [1], [0, 0, 1, 1], [], []>} : vector<16x8xf32>, vector<8x32xf32>, vector<16x32xf32> -> vector<16x32xf32>
    %640 = arith.addf %619, %639 : vector<16x32xf32>
    %641 = vector.extract_strided_slice %596 {offsets = [0, 16], sizes = [16, 8], strides = [1, 1]} : vector<16x32xf32> to vector<16x8xf32>
    %642 = vector.extract_strided_slice %597 {offsets = [0, 16], sizes = [16, 8], strides = [1, 1]} : vector<16x32xf32> to vector<16x8xf32>
    %643 = vector.extract_strided_slice %598 {offsets = [0, 16], sizes = [16, 8], strides = [1, 1]} : vector<16x32xf32> to vector<16x8xf32>
    %cst_246 = arith.constant dense<0.000000e+00> : vector<16x16xf32>
    %644 = tpu.matmul %641, %642, %cst_246 {dimension_numbers = #tpu.dot_dimension_numbers<[1], [1], [0], [0], [0, 0, 1, 0], [], []>} : vector<16x8xf32>, vector<16x8xf32>, vector<16x16xf32> -> vector<16x16xf32>
    %645 = arith.addf %644, %318 : vector<16x16xf32>
    %cst_247 = arith.constant dense<0xFF800000> : vector<16xf32>
    %646 = vector.multi_reduction <maximumf>, %645, %cst_247 [1] : vector<16x16xf32> to vector<16xf32>
    %647 = vector.shape_cast %646 : vector<16xf32> to vector<16x1xf32>
    %648 = vector.broadcast %647 : vector<16x1xf32> to vector<16x16xf32>
    %649 = arith.subf %645, %648 : vector<16x16xf32>
    %650 = math.exp %649 : vector<16x16xf32>
    %cst_248 = arith.constant dense<0.000000e+00> : vector<16xf32>
    %651 = vector.multi_reduction <add>, %650, %cst_248 [1] : vector<16x16xf32> to vector<16xf32>
    %652 = vector.shape_cast %651 : vector<16xf32> to vector<16x1xf32>
    %653 = vector.broadcast %652 : vector<16x1xf32> to vector<16x16xf32>
    %654 = arith.divf %650, %653 : vector<16x16xf32>
    %c6_249 = arith.constant 6 : index
    %c0_250 = arith.constant 0 : index
    %c0_251 = arith.constant 0 : index
    %655 = vector.load %arg12[%c6_249, %c0_250, %c0_251] : memref<8x16x16xf32, #tpu.memory_space<vmem>>, vector<1x16x16xf32>
    %656 = vector.shape_cast %655 : vector<1x16x16xf32> to vector<16x16xf32>
    %657 = vector.shape_cast %654 : vector<16x16xf32> to vector<1x16x16xf32>
    tpu.vector_store %arg12[%c6_249, %c0_250, %c0_251], %657 {strides = array<i32>} : memref<8x16x16xf32, #tpu.memory_space<vmem>>, vector<1x16x16xf32>,
    %cst_252 = arith.constant dense<0.000000e+00> : vector<16x8xf32>
    %658 = tpu.matmul %654, %643, %cst_252 {dimension_numbers = #tpu.dot_dimension_numbers<[1], [0], [0], [1], [0, 0, 1, 1], [], []>} : vector<16x16xf32>, vector<16x8xf32>, vector<16x8xf32> -> vector<16x8xf32>
    %659 = vector.extract_strided_slice %599 {offsets = [16, 0], sizes = [8, 32], strides = [1, 1]} : vector<32x32xf32> to vector<8x32xf32>
    %cst_253 = arith.constant dense<0.000000e+00> : vector<16x32xf32>
    %660 = tpu.matmul %658, %659, %cst_253 {dimension_numbers = #tpu.dot_dimension_numbers<[1], [0], [0], [1], [0, 0, 1, 1], [], []>} : vector<16x8xf32>, vector<8x32xf32>, vector<16x32xf32> -> vector<16x32xf32>
    %661 = arith.addf %640, %660 : vector<16x32xf32>
    %662 = vector.extract_strided_slice %596 {offsets = [0, 24], sizes = [16, 8], strides = [1, 1]} : vector<16x32xf32> to vector<16x8xf32>
    %663 = vector.extract_strided_slice %597 {offsets = [0, 24], sizes = [16, 8], strides = [1, 1]} : vector<16x32xf32> to vector<16x8xf32>
    %664 = vector.extract_strided_slice %598 {offsets = [0, 24], sizes = [16, 8], strides = [1, 1]} : vector<16x32xf32> to vector<16x8xf32>
    %cst_254 = arith.constant dense<0.000000e+00> : vector<16x16xf32>
    %665 = tpu.matmul %662, %663, %cst_254 {dimension_numbers = #tpu.dot_dimension_numbers<[1], [1], [0], [0], [0, 0, 1, 0], [], []>} : vector<16x8xf32>, vector<16x8xf32>, vector<16x16xf32> -> vector<16x16xf32>
    %666 = arith.addf %665, %318 : vector<16x16xf32>
    %cst_255 = arith.constant dense<0xFF800000> : vector<16xf32>
    %667 = vector.multi_reduction <maximumf>, %666, %cst_255 [1] : vector<16x16xf32> to vector<16xf32>
    %668 = vector.shape_cast %667 : vector<16xf32> to vector<16x1xf32>
    %669 = vector.broadcast %668 : vector<16x1xf32> to vector<16x16xf32>
    %670 = arith.subf %666, %669 : vector<16x16xf32>
    %671 = math.exp %670 : vector<16x16xf32>
    %cst_256 = arith.constant dense<0.000000e+00> : vector<16xf32>
    %672 = vector.multi_reduction <add>, %671, %cst_256 [1] : vector<16x16xf32> to vector<16xf32>
    %673 = vector.shape_cast %672 : vector<16xf32> to vector<16x1xf32>
    %674 = vector.broadcast %673 : vector<16x1xf32> to vector<16x16xf32>
    %675 = arith.divf %671, %674 : vector<16x16xf32>
    %c7_257 = arith.constant 7 : index
    %c0_258 = arith.constant 0 : index
    %c0_259 = arith.constant 0 : index
    %676 = vector.load %arg12[%c7_257, %c0_258, %c0_259] : memref<8x16x16xf32, #tpu.memory_space<vmem>>, vector<1x16x16xf32>
    %677 = vector.shape_cast %676 : vector<1x16x16xf32> to vector<16x16xf32>
    %678 = vector.shape_cast %675 : vector<16x16xf32> to vector<1x16x16xf32>
    tpu.vector_store %arg12[%c7_257, %c0_258, %c0_259], %678 {strides = array<i32>} : memref<8x16x16xf32, #tpu.memory_space<vmem>>, vector<1x16x16xf32>,
    %cst_260 = arith.constant dense<0.000000e+00> : vector<16x8xf32>
    %679 = tpu.matmul %675, %664, %cst_260 {dimension_numbers = #tpu.dot_dimension_numbers<[1], [0], [0], [1], [0, 0, 1, 1], [], []>} : vector<16x16xf32>, vector<16x8xf32>, vector<16x8xf32> -> vector<16x8xf32>
    %680 = vector.extract_strided_slice %599 {offsets = [24, 0], sizes = [8, 32], strides = [1, 1]} : vector<32x32xf32> to vector<8x32xf32>
    %cst_261 = arith.constant dense<0.000000e+00> : vector<16x32xf32>
    %681 = tpu.matmul %679, %680, %cst_261 {dimension_numbers = #tpu.dot_dimension_numbers<[1], [0], [0], [1], [0, 0, 1, 1], [], []>} : vector<16x8xf32>, vector<8x32xf32>, vector<16x32xf32> -> vector<16x32xf32>
    %682 = arith.addf %661, %681 : vector<16x32xf32>
    %c5_262 = arith.constant 5 : index
    %c0_263 = arith.constant 0 : index
    %c0_264 = arith.constant 0 : index
    %683 = vector.load %arg9[%c5_262, %c0_263, %c0_264] : memref<10x1x64xf32, #tpu.memory_space<vmem>>, vector<1x1x64xf32>
    %684 = vector.shape_cast %683 : vector<1x1x64xf32> to vector<1x64xf32>
    %685 = vector.extract_strided_slice %684 {offsets = [0, 0], sizes = [1, 32], strides = [1, 1]} : vector<1x64xf32> to vector<1x32xf32>
    %686 = vector.extract_strided_slice %684 {offsets = [0, 32], sizes = [1, 32], strides = [1, 1]} : vector<1x64xf32> to vector<1x32xf32>
    %687 = arith.addf %682, %591 : vector<16x32xf32>
    %cst_265 = arith.constant dense<0.000000e+00> : vector<16xf32>
    %688 = vector.multi_reduction <add>, %687, %cst_265 [1] : vector<16x32xf32> to vector<16xf32>
    %689 = vector.shape_cast %688 : vector<16xf32> to vector<16x1xf32>
    %cst_266 = arith.constant 3.200000e+01 : f32
    %690 = vector.broadcast %cst_266 : f32 to vector<16x1xf32>
    %691 = arith.divf %689, %690 : vector<16x1xf32>
    %692 = vector.broadcast %691 : vector<16x1xf32> to vector<16x32xf32>
    %693 = arith.subf %687, %692 : vector<16x32xf32>
    %694 = arith.mulf %693, %693 : vector<16x32xf32>
    %cst_267 = arith.constant dense<0.000000e+00> : vector<16xf32>
    %695 = vector.multi_reduction <add>, %694, %cst_267 [1] : vector<16x32xf32> to vector<16xf32>
    %696 = vector.shape_cast %695 : vector<16xf32> to vector<16x1xf32>
    %cst_268 = arith.constant 3.200000e+01 : f32
    %697 = vector.broadcast %cst_268 : f32 to vector<16x1xf32>
    %698 = arith.divf %696, %697 : vector<16x1xf32>
    %699 = vector.broadcast %691 : vector<16x1xf32> to vector<16x32xf32>
    %700 = arith.subf %687, %699 : vector<16x32xf32>
    %cst_269 = arith.constant 9.99999974E-6 : f32
    %701 = vector.broadcast %cst_269 : f32 to vector<16x1xf32>
    %702 = arith.addf %698, %701 : vector<16x1xf32>
    %703 = math.rsqrt %702 : vector<16x1xf32>
    %704 = vector.broadcast %703 : vector<16x1xf32> to vector<16x32xf32>
    %705 = arith.mulf %700, %704 : vector<16x32xf32>
    %706 = vector.broadcast %685 : vector<1x32xf32> to vector<16x32xf32>
    %707 = arith.mulf %705, %706 : vector<16x32xf32>
    %708 = vector.broadcast %686 : vector<1x32xf32> to vector<16x32xf32>
    %709 = arith.addf %707, %708 : vector<16x32xf32>
    %c5_270 = arith.constant 5 : index
    %c0_271 = arith.constant 0 : index
    %c0_272 = arith.constant 0 : index
    %710 = vector.load %arg7[%c5_270, %c0_271, %c0_272] : memref<7x32x128xf32, #tpu.memory_space<vmem>>, vector<1x32x128xf32>
    %711 = vector.shape_cast %710 : vector<1x32x128xf32> to vector<32x128xf32>
    %712 = vector.extract_strided_slice %711 {offsets = [0, 0], sizes = [32, 32], strides = [1, 1]} : vector<32x128xf32> to vector<32x32xf32>
    %cst_273 = arith.constant dense<0.000000e+00> : vector<16x32xf32>
    %713 = tpu.matmul %709, %712, %cst_273 {dimension_numbers = #tpu.dot_dimension_numbers<[1], [0], [0], [1], [0, 0, 1, 1], [], []>} : vector<16x32xf32>, vector<32x32xf32>, vector<16x32xf32> -> vector<16x32xf32>
    %714 = vector.extract_strided_slice %711 {offsets = [0, 32], sizes = [32, 64], strides = [1, 1]} : vector<32x128xf32> to vector<32x64xf32>
    %cst_274 = arith.constant dense<0.000000e+00> : vector<16x64xf32>
    %715 = tpu.matmul %316, %714, %cst_274 {dimension_numbers = #tpu.dot_dimension_numbers<[1], [0], [0], [1], [0, 0, 1, 1], [], []>} : vector<16x32xf32>, vector<32x64xf32>, vector<16x64xf32> -> vector<16x64xf32>
    %716 = vector.extract_strided_slice %715 {offsets = [0, 0], sizes = [16, 32], strides = [1, 1]} : vector<16x64xf32> to vector<16x32xf32>
    %717 = vector.extract_strided_slice %715 {offsets = [0, 32], sizes = [16, 32], strides = [1, 1]} : vector<16x64xf32> to vector<16x32xf32>
    %718 = vector.extract_strided_slice %711 {offsets = [0, 96], sizes = [32, 32], strides = [1, 1]} : vector<32x128xf32> to vector<32x32xf32>
    %719 = vector.extract_strided_slice %713 {offsets = [0, 0], sizes = [16, 8], strides = [1, 1]} : vector<16x32xf32> to vector<16x8xf32>
    %720 = vector.extract_strided_slice %716 {offsets = [0, 0], sizes = [16, 8], strides = [1, 1]} : vector<16x32xf32> to vector<16x8xf32>
    %721 = vector.extract_strided_slice %717 {offsets = [0, 0], sizes = [16, 8], strides = [1, 1]} : vector<16x32xf32> to vector<16x8xf32>
    %cst_275 = arith.constant dense<0.000000e+00> : vector<16x16xf32>
    %722 = tpu.matmul %719, %720, %cst_275 {dimension_numbers = #tpu.dot_dimension_numbers<[1], [1], [0], [0], [0, 0, 1, 0], [], []>} : vector<16x8xf32>, vector<16x8xf32>, vector<16x16xf32> -> vector<16x16xf32>
    %723 = arith.addf %722, %319 : vector<16x16xf32>
    %cst_276 = arith.constant dense<0xFF800000> : vector<16xf32>
    %724 = vector.multi_reduction <maximumf>, %723, %cst_276 [1] : vector<16x16xf32> to vector<16xf32>
    %725 = vector.shape_cast %724 : vector<16xf32> to vector<16x1xf32>
    %726 = vector.broadcast %725 : vector<16x1xf32> to vector<16x16xf32>
    %727 = arith.subf %723, %726 : vector<16x16xf32>
    %728 = math.exp %727 : vector<16x16xf32>
    %cst_277 = arith.constant dense<0.000000e+00> : vector<16xf32>
    %729 = vector.multi_reduction <add>, %728, %cst_277 [1] : vector<16x16xf32> to vector<16xf32>
    %730 = vector.shape_cast %729 : vector<16xf32> to vector<16x1xf32>
    %731 = vector.broadcast %730 : vector<16x1xf32> to vector<16x16xf32>
    %732 = arith.divf %728, %731 : vector<16x16xf32>
    %c4_278 = arith.constant 4 : index
    %c0_279 = arith.constant 0 : index
    %c0_280 = arith.constant 0 : index
    %733 = vector.load %arg13[%c4_278, %c0_279, %c0_280] : memref<8x16x16xf32, #tpu.memory_space<vmem>>, vector<1x16x16xf32>
    %734 = vector.shape_cast %733 : vector<1x16x16xf32> to vector<16x16xf32>
    %735 = vector.shape_cast %732 : vector<16x16xf32> to vector<1x16x16xf32>
    tpu.vector_store %arg13[%c4_278, %c0_279, %c0_280], %735 {strides = array<i32>} : memref<8x16x16xf32, #tpu.memory_space<vmem>>, vector<1x16x16xf32>,
    %cst_281 = arith.constant dense<0.000000e+00> : vector<16x8xf32>
    %736 = tpu.matmul %732, %721, %cst_281 {dimension_numbers = #tpu.dot_dimension_numbers<[1], [0], [0], [1], [0, 0, 1, 1], [], []>} : vector<16x16xf32>, vector<16x8xf32>, vector<16x8xf32> -> vector<16x8xf32>
    %737 = vector.extract_strided_slice %718 {offsets = [0, 0], sizes = [8, 32], strides = [1, 1]} : vector<32x32xf32> to vector<8x32xf32>
    %cst_282 = arith.constant dense<0.000000e+00> : vector<16x32xf32>
    %738 = tpu.matmul %736, %737, %cst_282 {dimension_numbers = #tpu.dot_dimension_numbers<[1], [0], [0], [1], [0, 0, 1, 1], [], []>} : vector<16x8xf32>, vector<8x32xf32>, vector<16x32xf32> -> vector<16x32xf32>
    %739 = vector.extract_strided_slice %713 {offsets = [0, 8], sizes = [16, 8], strides = [1, 1]} : vector<16x32xf32> to vector<16x8xf32>
    %740 = vector.extract_strided_slice %716 {offsets = [0, 8], sizes = [16, 8], strides = [1, 1]} : vector<16x32xf32> to vector<16x8xf32>
    %741 = vector.extract_strided_slice %717 {offsets = [0, 8], sizes = [16, 8], strides = [1, 1]} : vector<16x32xf32> to vector<16x8xf32>
    %cst_283 = arith.constant dense<0.000000e+00> : vector<16x16xf32>
    %742 = tpu.matmul %739, %740, %cst_283 {dimension_numbers = #tpu.dot_dimension_numbers<[1], [1], [0], [0], [0, 0, 1, 0], [], []>} : vector<16x8xf32>, vector<16x8xf32>, vector<16x16xf32> -> vector<16x16xf32>
    %743 = arith.addf %742, %319 : vector<16x16xf32>
    %cst_284 = arith.constant dense<0xFF800000> : vector<16xf32>
    %744 = vector.multi_reduction <maximumf>, %743, %cst_284 [1] : vector<16x16xf32> to vector<16xf32>
    %745 = vector.shape_cast %744 : vector<16xf32> to vector<16x1xf32>
    %746 = vector.broadcast %745 : vector<16x1xf32> to vector<16x16xf32>
    %747 = arith.subf %743, %746 : vector<16x16xf32>
    %748 = math.exp %747 : vector<16x16xf32>
    %cst_285 = arith.constant dense<0.000000e+00> : vector<16xf32>
    %749 = vector.multi_reduction <add>, %748, %cst_285 [1] : vector<16x16xf32> to vector<16xf32>
    %750 = vector.shape_cast %749 : vector<16xf32> to vector<16x1xf32>
    %751 = vector.broadcast %750 : vector<16x1xf32> to vector<16x16xf32>
    %752 = arith.divf %748, %751 : vector<16x16xf32>
    %c5_286 = arith.constant 5 : index
    %c0_287 = arith.constant 0 : index
    %c0_288 = arith.constant 0 : index
    %753 = vector.load %arg13[%c5_286, %c0_287, %c0_288] : memref<8x16x16xf32, #tpu.memory_space<vmem>>, vector<1x16x16xf32>
    %754 = vector.shape_cast %753 : vector<1x16x16xf32> to vector<16x16xf32>
    %755 = vector.shape_cast %752 : vector<16x16xf32> to vector<1x16x16xf32>
    tpu.vector_store %arg13[%c5_286, %c0_287, %c0_288], %755 {strides = array<i32>} : memref<8x16x16xf32, #tpu.memory_space<vmem>>, vector<1x16x16xf32>,
    %cst_289 = arith.constant dense<0.000000e+00> : vector<16x8xf32>
    %756 = tpu.matmul %752, %741, %cst_289 {dimension_numbers = #tpu.dot_dimension_numbers<[1], [0], [0], [1], [0, 0, 1, 1], [], []>} : vector<16x16xf32>, vector<16x8xf32>, vector<16x8xf32> -> vector<16x8xf32>
    %757 = vector.extract_strided_slice %718 {offsets = [8, 0], sizes = [8, 32], strides = [1, 1]} : vector<32x32xf32> to vector<8x32xf32>
    %cst_290 = arith.constant dense<0.000000e+00> : vector<16x32xf32>
    %758 = tpu.matmul %756, %757, %cst_290 {dimension_numbers = #tpu.dot_dimension_numbers<[1], [0], [0], [1], [0, 0, 1, 1], [], []>} : vector<16x8xf32>, vector<8x32xf32>, vector<16x32xf32> -> vector<16x32xf32>
    %759 = arith.addf %738, %758 : vector<16x32xf32>
    %760 = vector.extract_strided_slice %713 {offsets = [0, 16], sizes = [16, 8], strides = [1, 1]} : vector<16x32xf32> to vector<16x8xf32>
    %761 = vector.extract_strided_slice %716 {offsets = [0, 16], sizes = [16, 8], strides = [1, 1]} : vector<16x32xf32> to vector<16x8xf32>
    %762 = vector.extract_strided_slice %717 {offsets = [0, 16], sizes = [16, 8], strides = [1, 1]} : vector<16x32xf32> to vector<16x8xf32>
    %cst_291 = arith.constant dense<0.000000e+00> : vector<16x16xf32>
    %763 = tpu.matmul %760, %761, %cst_291 {dimension_numbers = #tpu.dot_dimension_numbers<[1], [1], [0], [0], [0, 0, 1, 0], [], []>} : vector<16x8xf32>, vector<16x8xf32>, vector<16x16xf32> -> vector<16x16xf32>
    %764 = arith.addf %763, %319 : vector<16x16xf32>
    %cst_292 = arith.constant dense<0xFF800000> : vector<16xf32>
    %765 = vector.multi_reduction <maximumf>, %764, %cst_292 [1] : vector<16x16xf32> to vector<16xf32>
    %766 = vector.shape_cast %765 : vector<16xf32> to vector<16x1xf32>
    %767 = vector.broadcast %766 : vector<16x1xf32> to vector<16x16xf32>
    %768 = arith.subf %764, %767 : vector<16x16xf32>
    %769 = math.exp %768 : vector<16x16xf32>
    %cst_293 = arith.constant dense<0.000000e+00> : vector<16xf32>
    %770 = vector.multi_reduction <add>, %769, %cst_293 [1] : vector<16x16xf32> to vector<16xf32>
    %771 = vector.shape_cast %770 : vector<16xf32> to vector<16x1xf32>
    %772 = vector.broadcast %771 : vector<16x1xf32> to vector<16x16xf32>
    %773 = arith.divf %769, %772 : vector<16x16xf32>
    %c6_294 = arith.constant 6 : index
    %c0_295 = arith.constant 0 : index
    %c0_296 = arith.constant 0 : index
    %774 = vector.load %arg13[%c6_294, %c0_295, %c0_296] : memref<8x16x16xf32, #tpu.memory_space<vmem>>, vector<1x16x16xf32>
    %775 = vector.shape_cast %774 : vector<1x16x16xf32> to vector<16x16xf32>
    %776 = vector.shape_cast %773 : vector<16x16xf32> to vector<1x16x16xf32>
    tpu.vector_store %arg13[%c6_294, %c0_295, %c0_296], %776 {strides = array<i32>} : memref<8x16x16xf32, #tpu.memory_space<vmem>>, vector<1x16x16xf32>,
    %cst_297 = arith.constant dense<0.000000e+00> : vector<16x8xf32>
    %777 = tpu.matmul %773, %762, %cst_297 {dimension_numbers = #tpu.dot_dimension_numbers<[1], [0], [0], [1], [0, 0, 1, 1], [], []>} : vector<16x16xf32>, vector<16x8xf32>, vector<16x8xf32> -> vector<16x8xf32>
    %778 = vector.extract_strided_slice %718 {offsets = [16, 0], sizes = [8, 32], strides = [1, 1]} : vector<32x32xf32> to vector<8x32xf32>
    %cst_298 = arith.constant dense<0.000000e+00> : vector<16x32xf32>
    %779 = tpu.matmul %777, %778, %cst_298 {dimension_numbers = #tpu.dot_dimension_numbers<[1], [0], [0], [1], [0, 0, 1, 1], [], []>} : vector<16x8xf32>, vector<8x32xf32>, vector<16x32xf32> -> vector<16x32xf32>
    %780 = arith.addf %759, %779 : vector<16x32xf32>
    %781 = vector.extract_strided_slice %713 {offsets = [0, 24], sizes = [16, 8], strides = [1, 1]} : vector<16x32xf32> to vector<16x8xf32>
    %782 = vector.extract_strided_slice %716 {offsets = [0, 24], sizes = [16, 8], strides = [1, 1]} : vector<16x32xf32> to vector<16x8xf32>
    %783 = vector.extract_strided_slice %717 {offsets = [0, 24], sizes = [16, 8], strides = [1, 1]} : vector<16x32xf32> to vector<16x8xf32>
    %cst_299 = arith.constant dense<0.000000e+00> : vector<16x16xf32>
    %784 = tpu.matmul %781, %782, %cst_299 {dimension_numbers = #tpu.dot_dimension_numbers<[1], [1], [0], [0], [0, 0, 1, 0], [], []>} : vector<16x8xf32>, vector<16x8xf32>, vector<16x16xf32> -> vector<16x16xf32>
    %785 = arith.addf %784, %319 : vector<16x16xf32>
    %cst_300 = arith.constant dense<0xFF800000> : vector<16xf32>
    %786 = vector.multi_reduction <maximumf>, %785, %cst_300 [1] : vector<16x16xf32> to vector<16xf32>
    %787 = vector.shape_cast %786 : vector<16xf32> to vector<16x1xf32>
    %788 = vector.broadcast %787 : vector<16x1xf32> to vector<16x16xf32>
    %789 = arith.subf %785, %788 : vector<16x16xf32>
    %790 = math.exp %789 : vector<16x16xf32>
    %cst_301 = arith.constant dense<0.000000e+00> : vector<16xf32>
    %791 = vector.multi_reduction <add>, %790, %cst_301 [1] : vector<16x16xf32> to vector<16xf32>
    %792 = vector.shape_cast %791 : vector<16xf32> to vector<16x1xf32>
    %793 = vector.broadcast %792 : vector<16x1xf32> to vector<16x16xf32>
    %794 = arith.divf %790, %793 : vector<16x16xf32>
    %c7_302 = arith.constant 7 : index
    %c0_303 = arith.constant 0 : index
    %c0_304 = arith.constant 0 : index
    %795 = vector.load %arg13[%c7_302, %c0_303, %c0_304] : memref<8x16x16xf32, #tpu.memory_space<vmem>>, vector<1x16x16xf32>
    %796 = vector.shape_cast %795 : vector<1x16x16xf32> to vector<16x16xf32>
    %797 = vector.shape_cast %794 : vector<16x16xf32> to vector<1x16x16xf32>
    tpu.vector_store %arg13[%c7_302, %c0_303, %c0_304], %797 {strides = array<i32>} : memref<8x16x16xf32, #tpu.memory_space<vmem>>, vector<1x16x16xf32>,
    %cst_305 = arith.constant dense<0.000000e+00> : vector<16x8xf32>
    %798 = tpu.matmul %794, %783, %cst_305 {dimension_numbers = #tpu.dot_dimension_numbers<[1], [0], [0], [1], [0, 0, 1, 1], [], []>} : vector<16x16xf32>, vector<16x8xf32>, vector<16x8xf32> -> vector<16x8xf32>
    %799 = vector.extract_strided_slice %718 {offsets = [24, 0], sizes = [8, 32], strides = [1, 1]} : vector<32x32xf32> to vector<8x32xf32>
    %cst_306 = arith.constant dense<0.000000e+00> : vector<16x32xf32>
    %800 = tpu.matmul %798, %799, %cst_306 {dimension_numbers = #tpu.dot_dimension_numbers<[1], [0], [0], [1], [0, 0, 1, 1], [], []>} : vector<16x8xf32>, vector<8x32xf32>, vector<16x32xf32> -> vector<16x32xf32>
    %801 = arith.addf %780, %800 : vector<16x32xf32>
    %c7_307 = arith.constant 7 : index
    %c0_308 = arith.constant 0 : index
    %c0_309 = arith.constant 0 : index
    %802 = vector.load %arg9[%c7_307, %c0_308, %c0_309] : memref<10x1x64xf32, #tpu.memory_space<vmem>>, vector<1x1x64xf32>
    %803 = vector.shape_cast %802 : vector<1x1x64xf32> to vector<1x64xf32>
    %804 = vector.extract_strided_slice %803 {offsets = [0, 0], sizes = [1, 32], strides = [1, 1]} : vector<1x64xf32> to vector<1x32xf32>
    %805 = vector.extract_strided_slice %803 {offsets = [0, 32], sizes = [1, 32], strides = [1, 1]} : vector<1x64xf32> to vector<1x32xf32>
    %806 = arith.addf %801, %709 : vector<16x32xf32>
    %cst_310 = arith.constant dense<0.000000e+00> : vector<16xf32>
    %807 = vector.multi_reduction <add>, %806, %cst_310 [1] : vector<16x32xf32> to vector<16xf32>
    %808 = vector.shape_cast %807 : vector<16xf32> to vector<16x1xf32>
    %cst_311 = arith.constant 3.200000e+01 : f32
    %809 = vector.broadcast %cst_311 : f32 to vector<16x1xf32>
    %810 = arith.divf %808, %809 : vector<16x1xf32>
    %811 = vector.broadcast %810 : vector<16x1xf32> to vector<16x32xf32>
    %812 = arith.subf %806, %811 : vector<16x32xf32>
    %813 = arith.mulf %812, %812 : vector<16x32xf32>
    %cst_312 = arith.constant dense<0.000000e+00> : vector<16xf32>
    %814 = vector.multi_reduction <add>, %813, %cst_312 [1] : vector<16x32xf32> to vector<16xf32>
    %815 = vector.shape_cast %814 : vector<16xf32> to vector<16x1xf32>
    %cst_313 = arith.constant 3.200000e+01 : f32
    %816 = vector.broadcast %cst_313 : f32 to vector<16x1xf32>
    %817 = arith.divf %815, %816 : vector<16x1xf32>
    %818 = vector.broadcast %810 : vector<16x1xf32> to vector<16x32xf32>
    %819 = arith.subf %806, %818 : vector<16x32xf32>
    %cst_314 = arith.constant 9.99999974E-6 : f32
    %820 = vector.broadcast %cst_314 : f32 to vector<16x1xf32>
    %821 = arith.addf %817, %820 : vector<16x1xf32>
    %822 = math.rsqrt %821 : vector<16x1xf32>
    %823 = vector.broadcast %822 : vector<16x1xf32> to vector<16x32xf32>
    %824 = arith.mulf %819, %823 : vector<16x32xf32>
    %825 = vector.broadcast %804 : vector<1x32xf32> to vector<16x32xf32>
    %826 = arith.mulf %824, %825 : vector<16x32xf32>
    %827 = vector.broadcast %805 : vector<1x32xf32> to vector<16x32xf32>
    %828 = arith.addf %826, %827 : vector<16x32xf32>
    %c3_315 = arith.constant 3 : index
    %c0_316 = arith.constant 0 : index
    %c0_317 = arith.constant 0 : index
    %829 = vector.load %arg8[%c3_315, %c0_316, %c0_317] : memref<4x64x96xf32, #tpu.memory_space<vmem>>, vector<1x64x96xf32>
    %830 = vector.shape_cast %829 : vector<1x64x96xf32> to vector<64x96xf32>
    %831 = vector.extract_strided_slice %830 {offsets = [0, 0], sizes = [32, 64], strides = [1, 1]} : vector<64x96xf32> to vector<32x64xf32>
    %832 = vector.extract_strided_slice %830 {offsets = [0, 64], sizes = [64, 32], strides = [1, 1]} : vector<64x96xf32> to vector<64x32xf32>
    %cst_318 = arith.constant dense<0.000000e+00> : vector<16x64xf32>
    %833 = tpu.matmul %828, %831, %cst_318 {dimension_numbers = #tpu.dot_dimension_numbers<[1], [0], [0], [1], [0, 0, 1, 1], [], []>} : vector<16x32xf32>, vector<32x64xf32>, vector<16x64xf32> -> vector<16x64xf32>
    %cst_319 = arith.constant 0.000000e+00 : f32
    %834 = vector.broadcast %cst_319 : f32 to vector<16x64xf32>
    %835 = arith.maximumf %833, %834 : vector<16x64xf32>
    %cst_320 = arith.constant dense<0.000000e+00> : vector<16x32xf32>
    %836 = tpu.matmul %835, %832, %cst_320 {dimension_numbers = #tpu.dot_dimension_numbers<[1], [0], [0], [1], [0, 0, 1, 1], [], []>} : vector<16x64xf32>, vector<64x32xf32>, vector<16x32xf32> -> vector<16x32xf32>
    %c9 = arith.constant 9 : index
    %c0_321 = arith.constant 0 : index
    %c0_322 = arith.constant 0 : index
    %837 = vector.load %arg9[%c9, %c0_321, %c0_322] : memref<10x1x64xf32, #tpu.memory_space<vmem>>, vector<1x1x64xf32>
    %838 = vector.shape_cast %837 : vector<1x1x64xf32> to vector<1x64xf32>
    %839 = vector.extract_strided_slice %838 {offsets = [0, 0], sizes = [1, 32], strides = [1, 1]} : vector<1x64xf32> to vector<1x32xf32>
    %840 = vector.extract_strided_slice %838 {offsets = [0, 32], sizes = [1, 32], strides = [1, 1]} : vector<1x64xf32> to vector<1x32xf32>
    %841 = arith.addf %836, %828 : vector<16x32xf32>
    %cst_323 = arith.constant dense<0.000000e+00> : vector<16xf32>
    %842 = vector.multi_reduction <add>, %841, %cst_323 [1] : vector<16x32xf32> to vector<16xf32>
    %843 = vector.shape_cast %842 : vector<16xf32> to vector<16x1xf32>
    %cst_324 = arith.constant 3.200000e+01 : f32
    %844 = vector.broadcast %cst_324 : f32 to vector<16x1xf32>
    %845 = arith.divf %843, %844 : vector<16x1xf32>
    %846 = vector.broadcast %845 : vector<16x1xf32> to vector<16x32xf32>
    %847 = arith.subf %841, %846 : vector<16x32xf32>
    %848 = arith.mulf %847, %847 : vector<16x32xf32>
    %cst_325 = arith.constant dense<0.000000e+00> : vector<16xf32>
    %849 = vector.multi_reduction <add>, %848, %cst_325 [1] : vector<16x32xf32> to vector<16xf32>
    %850 = vector.shape_cast %849 : vector<16xf32> to vector<16x1xf32>
    %cst_326 = arith.constant 3.200000e+01 : f32
    %851 = vector.broadcast %cst_326 : f32 to vector<16x1xf32>
    %852 = arith.divf %850, %851 : vector<16x1xf32>
    %853 = vector.broadcast %845 : vector<16x1xf32> to vector<16x32xf32>
    %854 = arith.subf %841, %853 : vector<16x32xf32>
    %cst_327 = arith.constant 9.99999974E-6 : f32
    %855 = vector.broadcast %cst_327 : f32 to vector<16x1xf32>
    %856 = arith.addf %852, %855 : vector<16x1xf32>
    %857 = math.rsqrt %856 : vector<16x1xf32>
    %858 = vector.broadcast %857 : vector<16x1xf32> to vector<16x32xf32>
    %859 = arith.mulf %854, %858 : vector<16x32xf32>
    %860 = vector.broadcast %839 : vector<1x32xf32> to vector<16x32xf32>
    %861 = arith.mulf %859, %860 : vector<16x32xf32>
    %862 = vector.broadcast %840 : vector<1x32xf32> to vector<16x32xf32>
    %863 = arith.addf %861, %862 : vector<16x32xf32>
    %c6_328 = arith.constant 6 : index
    %c0_329 = arith.constant 0 : index
    %c0_330 = arith.constant 0 : index
    %864 = vector.load %arg7[%c6_328, %c0_329, %c0_330] : memref<7x32x128xf32, #tpu.memory_space<vmem>>, vector<1x32x128xf32>
    %865 = vector.shape_cast %864 : vector<1x32x128xf32> to vector<32x128xf32>
    %cst_331 = arith.constant dense<0.000000e+00> : vector<16x128xf32>
    %866 = tpu.matmul %863, %865, %cst_331 {dimension_numbers = #tpu.dot_dimension_numbers<[1], [0], [0], [1], [0, 0, 1, 1], [], []>} : vector<16x32xf32>, vector<32x128xf32>, vector<16x128xf32> -> vector<16x128xf32>
    %c0_332 = arith.constant 0 : index
    %c0_333 = arith.constant 0 : index
    %867 = vector.load %arg10[%c0_332, %c0_333] : memref<16x128xf32, #tpu.memory_space<vmem>>, vector<16x128xf32>
    tpu.vector_store %arg10[%c0_332, %c0_333], %866 {strides = array<i32>} : memref<16x128xf32, #tpu.memory_space<vmem>>, vector<16x128xf32>,
    return
  }
}

</mosaic_0001>

<llo_original>
// kernel: transformer_forward.1
$region0: #{transformer_forward.1}
  #allocation0 [shape = 'u32[]', space=smem, size = 0x4, offset = 0x4, fixed_abs, tag = 'smem constant byte address 0x4 - core index']
  #allocation1 [shape = 'u32[144,128]{1,0:T(1,128)}', space=vmem, size = 0x12000, scoped, tag = 'internal scratch']
  %s0 = inlined_call_operand.vmem [shape: f32[16,40], index: 0, kind: input, shape index: {}]
  %s1 = inlined_call_operand.vmem [shape: f32[40,32], index: 1, kind: input, shape index: {}]
  %s2 = inlined_call_operand.vmem [shape: f32[16,32], index: 2, kind: input, shape index: {}]
  %s3 = inlined_call_operand.vmem [shape: f32[16,32], index: 3, kind: input, shape index: {}]
  %s4 = inlined_call_operand.vmem [shape: f32[16,16], index: 4, kind: input, shape index: {}, may-alias: {4,6}]
  %s5 = inlined_call_operand.vmem [shape: f32[16,16], index: 5, kind: input, shape index: {}]
  %s6 = inlined_call_operand.vmem [shape: f32[16,16], index: 6, kind: input, shape index: {}, may-alias: {4,6}]
  %s7 = inlined_call_operand.vmem [shape: f32[7,32,128], index: 7, kind: input, shape index: {}]
  %s8 = inlined_call_operand.vmem [shape: f32[4,64,96], index: 8, kind: input, shape index: {}]
  %s9 = inlined_call_operand.vmem [shape: f32[10,1,64], index: 9, kind: input, shape index: {}]
  %s10 = inlined_call_operand.vmem [shape: f32[16,128], index: 10, kind: output, shape index: {0}]
  %s11 = inlined_call_operand.vmem [shape: f32[8,16,16], index: 11, kind: output, shape index: {1}]
  %s12 = inlined_call_operand.vmem [shape: f32[8,16,16], index: 12, kind: output, shape index: {2}]
  %s13 = inlined_call_operand.vmem [shape: f32[8,16,16], index: 13, kind: output, shape index: {3}]
  %14 = xla_tuple %s10, %s11, %s12, %s13
  %s15 = sld [smem:[#allocation0]]
  $region74: #{transformer_forward.1} parent=0
    _
  %s17 = ssub.s32 1, %s15
  %s18 = scalar_select 0, %s17, %s15
  // Predicated region
  $region2: #{transformer_forward.1} parent=0 // pred_check
    _
  $region3: #{transformer_forward.1} parent=0 // pred_check_branch
    %20 = sbr.rel (0) target = $region5
  $region4: #{transformer_forward.1} parent=0 // pred_region
    _
  $region5: #{transformer_forward.1} parent=0 // pred_fallthru
    _
  // Predicated region
  $region6: #{transformer_forward.1} parent=0 // pred_check
    _
  $region7: #{transformer_forward.1} parent=0 // pred_check_branch
    %22 = sbr.rel (0) target = $region9
  $region8: #{transformer_forward.1} parent=0 // pred_region
    _
  $region9: #{transformer_forward.1} parent=0 // pred_fallthru
    _
  // Predicated region
  $region10: #{transformer_forward.1} parent=0 // pred_check
    _
  $region11: #{transformer_forward.1} parent=0 // pred_check_branch
    %24 = sbr.rel (0) target = $region13
  $region12: #{transformer_forward.1} parent=0 // pred_region
    _
  $region13: #{transformer_forward.1} parent=0 // pred_fallthru
    _
  // Predicated region
  $region14: #{transformer_forward.1} parent=0 // pred_check
    _
  $region15: #{transformer_forward.1} parent=0 // pred_check_branch
    %26 = sbr.rel (0) target = $region17
  $region16: #{transformer_forward.1} parent=0 // pred_region
    _
  $region17: #{transformer_forward.1} parent=0 // pred_fallthru
    _
  // Predicated region
  $region18: #{transformer_forward.1} parent=0 // pred_check
    _
  $region19: #{transformer_forward.1} parent=0 // pred_check_branch
    %28 = sbr.rel (0) target = $region21
  $region20: #{transformer_forward.1} parent=0 // pred_region
    _
  $region21: #{transformer_forward.1} parent=0 // pred_fallthru
    _
  // Predicated region
  $region22: #{transformer_forward.1} parent=0 // pred_check
    _
  $region23: #{transformer_forward.1} parent=0 // pred_check_branch
    %30 = sbr.rel (0) target = $region25
  $region24: #{transformer_forward.1} parent=0 // pred_region
    _
  $region25: #{transformer_forward.1} parent=0 // pred_fallthru
    _
  // Predicated region
  $region26: #{transformer_forward.1} parent=0 // pred_check
    _
  $region27: #{transformer_forward.1} parent=0 // pred_check_branch
    %32 = sbr.rel (0) target = $region29
  $region28: #{transformer_forward.1} parent=0 // pred_region
    _
  $region29: #{transformer_forward.1} parent=0 // pred_fallthru
    _
  // Predicated region
  $region30: #{transformer_forward.1} parent=0 // pred_check
    _
  $region31: #{transformer_forward.1} parent=0 // pred_check_branch
    %34 = sbr.rel (0) target = $region33
  $region32: #{transformer_forward.1} parent=0 // pred_region
    _
  $region33: #{transformer_forward.1} parent=0 // pred_fallthru
    _
  // Predicated region
  $region34: #{transformer_forward.1} parent=0 // pred_check
    _
  $region35: #{transformer_forward.1} parent=0 // pred_check_branch
    %36 = sbr.rel (0) target = $region37
  $region36: #{transformer_forward.1} parent=0 // pred_region
    _
  $region37: #{transformer_forward.1} parent=0 // pred_fallthru
    _
  // Predicated region
  $region38: #{transformer_forward.1} parent=0 // pred_check
    _
  $region39: #{transformer_forward.1} parent=0 // pred_check_branch
    %38 = sbr.rel (0) target = $region41
  $region40: #{transformer_forward.1} parent=0 // pred_region
    _
  $region41: #{transformer_forward.1} parent=0 // pred_fallthru
    _
  %v39 = vld [vmem:[%s0] sm:$0xff]
  %v40 = vld [vmem:[%s0 + $0x8] sm:$0xff]
  %v41 = vld [vmem:[%s1] sm:$0xff]
  %v42 = vld [vmem:[%s1 + $0x8] sm:$0xff]
  %v43 = vld [vmem:[%s1 + $0x10] sm:$0xff]
  %v44 = vld [vmem:[%s1 + $0x18] sm:$0xff]
  %v45 = vld [vmem:[%s1 + $0x20] sm:$0xff]
  %vm46 = vcmask 326656
  %v48 = vsel %vm46, %v39, 0
  %v51 = vsel %vm46, %v40, 0
  %53 = vmatprep.subr.mxu0 0.0
  %54 = vmatpush1.msra.mxu0 %v41
  %55 = vmatprep.subr.mxu0 0.0
  %56 = vmatpush1.msra.mxu0 %v42
  %57 = vmatprep.subr.mxu0 0.0
  %58 = vmatpush1.msra.mxu0 %v43
  %59 = vmatprep.subr.mxu0 0.0
  %60 = vmatpush1.msra.mxu0 %v44
  %61 = vmatprep.subr.mxu0 0.0
  %62 = vmatpush1.msra.mxu0 %v45
  %63 = vmatprep.subr.mxu0 0.0
  %64 = vmatpush1.msra.mxu0 0.0
  %65 = vmatprep.subr.mxu0 0.0
  %66 = vmatpush1.msra.mxu0 0.0
  %67 = vmatprep.subr.mxu0 0.0
  %68 = vmatpush1.msra.mxu0 0.0
  %69 = vmatprep.subr.mxu0 0.0
  %70 = vmatpush1.msra.mxu0 0.0
  %71 = vmatprep.subr.mxu0 0.0
  %72 = vmatpush1.msra.mxu0 0.0
  %73 = vmatprep.subr.mxu0 0.0
  %74 = vmatpush1.msra.mxu0 0.0
  %75 = vmatprep.subr.mxu0 0.0
  %76 = vmatpush1.msra.mxu0 0.0
  %77 = vmatprep.subr.mxu0 0.0
  %78 = vmatpush1.msra.mxu0 0.0
  %79 = vmatprep.subr.mxu0 0.0
  %80 = vmatpush1.msra.mxu0 0.0
  %81 = vmatprep.subr.mxu0 0.0
  %82 = vmatpush1.msra.mxu0 0.0
  %83 = vmatprep.subr.mxu0 0.0
  %84 = vmatpush1.msra.mxu0 0.0
  %85 = vmatprep.subr.mxu0 0.0
  %86 = vmatpush1.msra.mxu0 0.0
  %87 = vmatprep.subr.mxu0 0.0
  %88 = vmatpush1.msra.mxu0 0.0
  %89 = vmatprep.subr.mxu0 0.0
  %90 = vmatpush1.msra.mxu0 0.0
  %91 = vmatprep.subr.mxu0 0.0
  %92 = vmatpush1.msra.mxu0 0.0
  %93 = vmatprep.subr.mxu0 0.0
  %94 = vmatpush1.msra.mxu0 0.0
  %95 = vmatprep.subr.mxu0 0.0
  %96 = vmatpush1.msra.mxu0 0.0
  %97 = vmatprep.subr.mxu0 0.0
  %98 = vmatpush1.msra.mxu0 0.0
  %99 = vmatprep.subr.mxu0 0.0
  %100 = vmatpush1.msra.mxu0 0.0
  %101 = vmatprep.subr.mxu0 0.0
  %102 = vmatpush1.msra.mxu0 0.0
  %103 = vmatprep.subr.mxu0 0.0
  %104 = vmatpush1.msra.mxu0 0.0
  %105 = vmatprep.subr.mxu0 0.0
  %106 = vmatpush1.msra.mxu0 0.0
  %107 = vmatprep.subr.mxu0 0.0
  %108 = vmatpush1.msra.mxu0 0.0
  %109 = vmatprep.subr.mxu0 0.0
  %110 = vmatpush1.msra.mxu0 0.0
  %111 = vmatprep.subr.mxu0 0.0
  %112 = vmatpush1.msra.mxu0 0.0
  %113 = vmatprep.subr.mxu0 0.0
  %114 = vmatpush1.msra.mxu0 0.0
  %115 = vmatprep.subr.mxu0 0.0
  %116 = vmatpush1.msra.mxu0 0.0
  %117 = vmatprep.mubr.f32.mxu0 0.0
  %118 = vmatmul.mubr.f32.gmra.mrb[0].mxu0 %v48
  %v119 = vpop.f32.mrb[0].mxu0
  %v120 = vadd.f32 0.0, %v119
  %v121 = vpop.f32.mrb[0].mxu0
  %122 = vmatprep.mubr.f32.mxu0 0.0
  %123 = vmatmul.mubr.f32.gmra.mrb[0].mxu0 %v51
  %v124 = vpop.f32.mrb[0].mxu0
  %v125 = vadd.f32 0.0, %v124
  %v126 = vpop.f32.mrb[0].mxu0
  %127 = vdwg.mxu0
  %vm128 = vcmp.le.f32.partialorder %v120, 0.0
  %vm129 = vcmp.le.f32.partialorder %v125, 0.0
  %v130 = vsel %vm128, 1e-05, %v120
  %v131 = vsel %vm129, 1e-05, %v125
  %v132 = vlog2.pop %v130
  %v133 = vmul.f32 %v132, 0.6931472
  %v134 = vlog2.pop %v131
  %v135 = vmul.f32 %v134, 0.6931472
  %v136 = vld [vmem:[%s2] sm:$0xff]
  %v137 = vld [vmem:[%s2 + $0x8] sm:$0xff]
  %v138 = vadd.f32 %v133, %v136
  %v139 = vadd.f32 %v135, %v137
  %v140 = vld [vmem:[%s4] sm:$0xff]
  %v141 = vld [vmem:[%s4 + $0x8] sm:$0xff]
  %v142 = vld [vmem:[%s7] sm:$0xff]
  %v143 = vld [vmem:[%s7 + $0x8] sm:$0xff]
  %v144 = vld [vmem:[%s7 + $0x10] sm:$0xff]
  %v145 = vld [vmem:[%s7 + $0x18] sm:$0xff]
  %vm146 = vcmask 261120
  %v148 = vsel %vm146, %v138, 0
  %v151 = vsel %vm146, %v139, 0
  %153 = vmatprep.subr.mxu0 0.0
  %154 = vmatpush1.msra.mxu0 %v142
  %155 = vmatprep.subr.mxu0 0.0
  %156 = vmatpush1.msra.mxu0 %v143
  %157 = vmatprep.subr.mxu0 0.0
  %158 = vmatpush1.msra.mxu0 %v144
  %159 = vmatprep.subr.mxu0 0.0
  %160 = vmatpush1.msra.mxu0 %v145
  %161 = vmatprep.subr.mxu0 0.0
  %162 = vmatpush1.msra.mxu0 0.0
  %163 = vmatprep.subr.mxu0 0.0
  %164 = vmatpush1.msra.mxu0 0.0
  %165 = vmatprep.subr.mxu0 0.0
  %166 = vmatpush1.msra.mxu0 0.0
  %167 = vmatprep.subr.mxu0 0.0
  %168 = vmatpush1.msra.mxu0 0.0
  %169 = vmatprep.subr.mxu0 0.0
  %170 = vmatpush1.msra.mxu0 0.0
  %171 = vmatprep.subr.mxu0 0.0
  %172 = vmatpush1.msra.mxu0 0.0
  %173 = vmatprep.subr.mxu0 0.0
  %174 = vmatpush1.msra.mxu0 0.0
  %175 = vmatprep.subr.mxu0 0.0
  %176 = vmatpush1.msra.mxu0 0.0
  %177 = vmatprep.subr.mxu0 0.0
  %178 = vmatpush1.msra.mxu0 0.0
  %179 = vmatprep.subr.mxu0 0.0
  %180 = vmatpush1.msra.mxu0 0.0
  %181 = vmatprep.subr.mxu0 0.0
  %182 = vmatpush1.msra.mxu0 0.0
  %183 = vmatprep.subr.mxu0 0.0
  %184 = vmatpush1.msra.mxu0 0.0
  %185 = vmatprep.subr.mxu0 0.0
  %186 = vmatpush1.msra.mxu0 0.0
  %187 = vmatprep.subr.mxu0 0.0
  %188 = vmatpush1.msra.mxu0 0.0
  %189 = vmatprep.subr.mxu0 0.0
  %190 = vmatpush1.msra.mxu0 0.0
  %191 = vmatprep.subr.mxu0 0.0
  %192 = vmatpush1.msra.mxu0 0.0
  %193 = vmatprep.subr.mxu0 0.0
  %194 = vmatpush1.msra.mxu0 0.0
  %195 = vmatprep.subr.mxu0 0.0
  %196 = vmatpush1.msra.mxu0 0.0
  %197 = vmatprep.subr.mxu0 0.0
  %198 = vmatpush1.msra.mxu0 0.0
  %199 = vmatprep.subr.mxu0 0.0
  %200 = vmatpush1.msra.mxu0 0.0
  %201 = vmatprep.subr.mxu0 0.0
  %202 = vmatpush1.msra.mxu0 0.0
  %203 = vmatprep.subr.mxu0 0.0
  %204 = vmatpush1.msra.mxu0 0.0
  %205 = vmatprep.subr.mxu0 0.0
  %206 = vmatpush1.msra.mxu0 0.0
  %207 = vmatprep.subr.mxu0 0.0
  %208 = vmatpush1.msra.mxu0 0.0
  %209 = vmatprep.subr.mxu0 0.0
  %210 = vmatpush1.msra.mxu0 0.0
  %211 = vmatprep.subr.mxu0 0.0
  %212 = vmatpush1.msra.mxu0 0.0
  %213 = vmatprep.subr.mxu0 0.0
  %214 = vmatpush1.msra.mxu0 0.0
  %215 = vmatprep.subr.mxu0 0.0
  %216 = vmatpush1.msra.mxu0 0.0
  %217 = vmatprep.mubr.f32.mxu0 0.0
  %218 = vmatmul.mubr.f32.gmra.mrb[0].mxu0 %v148
  %v219 = vpop.f32.mrb[0].mxu0
  %v220 = vadd.f32 0.0, %v219
  %v221 = vpop.f32.mrb[0].mxu0
  %222 = vmatprep.mubr.f32.mxu0 0.0
  %223 = vmatmul.mubr.f32.gmra.mrb[0].mxu0 %v151
  %v224 = vpop.f32.mrb[0].mxu0
  %v225 = vadd.f32 0.0, %v224
  %v226 = vpop.f32.mrb[0].mxu0
  %227 = vdwg.mxu0
  %230 = vrot.lane.b32.xlu0 %v220, 96
  %v231 = vpop.permute.xlu0 %230
  %232 = vrot.lane.b32.xlu0 %v225, 96
  %v233 = vpop.permute.xlu0 %232
  %vm234 = vcmask 64512
  %v235 = vsel %vm234, %v220, 0
  %v237 = vsel %vm234, %v225, 0
  %v239 = vsel %vm234, %v231, 0
  %v241 = vsel %vm234, %v233, 0
  %243 = vmatprep.subr.mxu0 0.0
  %244 = vmatpush1.xpose.msra.mxu0 %v239
  %245 = vmatprep.subr.mxu0 0.0
  %246 = vmatpush1.xpose.msra.mxu0 %v241
  %247 = vmatprep.subr.mxu0 0.0
  %248 = vmatpush1.xpose.msra.mxu0 0.0
  %249 = vmatprep.subr.mxu0 0.0
  %250 = vmatpush1.xpose.msra.mxu0 0.0
  %251 = vmatprep.subr.mxu0 0.0
  %252 = vmatpush1.xpose.msra.mxu0 0.0
  %253 = vmatprep.subr.mxu0 0.0
  %254 = vmatpush1.xpose.msra.mxu0 0.0
  %255 = vmatprep.subr.mxu0 0.0
  %256 = vmatpush1.xpose.msra.mxu0 0.0
  %257 = vmatprep.subr.mxu0 0.0
  %258 = vmatpush1.xpose.msra.mxu0 0.0
  %259 = vmatprep.subr.mxu0 0.0
  %260 = vmatpush1.xpose.msra.mxu0 0.0
  %261 = vmatprep.subr.mxu0 0.0
  %262 = vmatpush1.xpose.msra.mxu0 0.0
  %263 = vmatprep.subr.mxu0 0.0
  %264 = vmatpush1.xpose.msra.mxu0 0.0
  %265 = vmatprep.subr.mxu0 0.0
  %266 = vmatpush1.xpose.msra.mxu0 0.0
  %267 = vmatprep.subr.mxu0 0.0
  %268 = vmatpush1.xpose.msra.mxu0 0.0
  %269 = vmatprep.subr.mxu0 0.0
  %270 = vmatpush1.xpose.msra.mxu0 0.0
  %271 = vmatprep.subr.mxu0 0.0
  %272 = vmatpush1.xpose.msra.mxu0 0.0
  %273 = vmatprep.subr.mxu0 0.0
  %274 = vmatpush1.xpose.msra.mxu0 0.0
  %275 = vmatprep.subr.mxu0 0.0
  %276 = vmatpush1.xpose.msra.mxu0 0.0
  %277 = vmatprep.subr.mxu0 0.0
  %278 = vmatpush1.xpose.msra.mxu0 0.0
  %279 = vmatprep.subr.mxu0 0.0
  %280 = vmatpush1.xpose.msra.mxu0 0.0
  %281 = vmatprep.subr.mxu0 0.0
  %282 = vmatpush1.xpose.msra.mxu0 0.0
  %283 = vmatprep.subr.mxu0 0.0
  %284 = vmatpush1.xpose.msra.mxu0 0.0
  %285 = vmatprep.subr.mxu0 0.0
  %286 = vmatpush1.xpose.msra.mxu0 0.0
  %287 = vmatprep.subr.mxu0 0.0
  %288 = vmatpush1.xpose.msra.mxu0 0.0
  %289 = vmatprep.subr.mxu0 0.0
  %290 = vmatpush1.xpose.msra.mxu0 0.0
  %291 = vmatprep.subr.mxu0 0.0
  %292 = vmatpush1.xpose.msra.mxu0 0.0
  %293 = vmatprep.subr.mxu0 0.0
  %294 = vmatpush1.xpose.msra.mxu0 0.0
  %295 = vmatprep.subr.mxu0 0.0
  %296 = vmatpush1.xpose.msra.mxu0 0.0
  %297 = vmatprep.subr.mxu0 0.0
  %298 = vmatpush1.xpose.msra.mxu0 0.0
  %299 = vmatprep.subr.mxu0 0.0
  %300 = vmatpush1.xpose.msra.mxu0 0.0
  %301 = vmatprep.subr.mxu0 0.0
  %302 = vmatpush1.xpose.msra.mxu0 0.0
  %303 = vmatprep.subr.mxu0 0.0
  %304 = vmatpush1.xpose.msra.mxu0 0.0
  %305 = vmatprep.subr.mxu0 0.0
  %306 = vmatpush1.xpose.msra.mxu0 0.0
  %307 = vmatprep.mubr.f32.mxu0 0.0
  %308 = vmatmul.mubr.f32.gmra.mrb[0].mxu0 %v235
  %v309 = vpop.f32.mrb[0].mxu0
  %v310 = vadd.f32 %v140, %v309
  %v311 = vpop.f32.mrb[0].mxu0
  %312 = vmatprep.mubr.f32.mxu0 0.0
  %313 = vmatmul.mubr.f32.gmra.mrb[0].mxu0 %v237
  %v314 = vpop.f32.mrb[0].mxu0
  %v315 = vadd.f32 %v141, %v314
  %v316 = vpop.f32.mrb[0].mxu0
  %317 = vdwg.mxu0
  %vm318 = vcmask 130048
  %v319 = vsel %vm318, %v310, -inf
  %320 = vmax.xlane.f32.xlu0 %v319
  %v321 = vpop.xlane.xlu0 %320
  %v322 = vsel %vm318, %v315, -inf
  %323 = vmax.xlane.f32.xlu0 %v322
  %v324 = vpop.xlane.xlu0 %323
  %v325 = vsub.f32 %v310, %v321
  %v326 = vsub.f32 %v315, %v324
  %v327 = vmul.f32 %v325, 1.442695
  %v328 = vpow.pop %v327
  %v329 = vmul.f32 %v326, 1.442695
  %v330 = vpow.pop %v329
  %v331 = vsel %vm318, %v328, 0.0
  %332 = vadd.xlane.f32.xlu0 %v331
  %v333 = vpop.xlane.xlu0 %332
  %v334 = vsel %vm318, %v330, 0.0
  %335 = vadd.xlane.f32.xlu0 %v334
  %v336 = vpop.xlane.xlu0 %335
  %v337 = vrcp.pop %v333
  %v338 = vmul.f32 %v328, %v337
  %v339 = vrcp.pop %v336
  %v340 = vmul.f32 %v330, %v339
  %341 = vst.msk [vmem:[%s11] sm:$0xff] %vm318, %v338
  %342 = vst.msk [vmem:[%s11 + $0x8] sm:$0xff] %vm318, %v340
  %343 = vrot.lane.b32.xlu0 %v220, 64
  %v344 = vpop.permute.xlu0 %343
  %345 = vrot.lane.b32.xlu0 %v225, 64
  %v346 = vpop.permute.xlu0 %345
  %v350 = vsel %vm318, %v338, 0
  %v353 = vsel %vm318, %v340, 0
  %355 = vmatprep.subr.mxu0 0.0
  %356 = vmatpush1.msra.mxu0 %v344
  %357 = vmatprep.subr.mxu0 0.0
  %358 = vmatpush1.msra.mxu0 %v346
  %359 = vmatprep.subr.mxu0 0.0
  %360 = vmatpush1.msra.mxu0 0.0
  %361 = vmatprep.subr.mxu0 0.0
  %362 = vmatpush1.msra.mxu0 0.0
  %363 = vmatprep.subr.mxu0 0.0
  %364 = vmatpush1.msra.mxu0 0.0
  %365 = vmatprep.subr.mxu0 0.0
  %366 = vmatpush1.msra.mxu0 0.0
  %367 = vmatprep.subr.mxu0 0.0
  %368 = vmatpush1.msra.mxu0 0.0
  %369 = vmatprep.subr.mxu0 0.0
  %370 = vmatpush1.msra.mxu0 0.0
  %371 = vmatprep.subr.mxu0 0.0
  %372 = vmatpush1.msra.mxu0 0.0
  %373 = vmatprep.subr.mxu0 0.0
  %374 = vmatpush1.msra.mxu0 0.0
  %375 = vmatprep.subr.mxu0 0.0
  %376 = vmatpush1.msra.mxu0 0.0
  %377 = vmatprep.subr.mxu0 0.0
  %378 = vmatpush1.msra.mxu0 0.0
  %379 = vmatprep.subr.mxu0 0.0
  %380 = vmatpush1.msra.mxu0 0.0
  %381 = vmatprep.subr.mxu0 0.0
  %382 = vmatpush1.msra.mxu0 0.0
  %383 = vmatprep.subr.mxu0 0.0
  %384 = vmatpush1.msra.mxu0 0.0
  %385 = vmatprep.subr.mxu0 0.0
  %386 = vmatpush1.msra.mxu0 0.0
  %387 = vmatprep.subr.mxu0 0.0
  %388 = vmatpush1.msra.mxu0 0.0
  %389 = vmatprep.subr.mxu0 0.0
  %390 = vmatpush1.msra.mxu0 0.0
  %391 = vmatprep.subr.mxu0 0.0
  %392 = vmatpush1.msra.mxu0 0.0
  %393 = vmatprep.subr.mxu0 0.0
  %394 = vmatpush1.msra.mxu0 0.0
  %395 = vmatprep.subr.mxu0 0.0
  %396 = vmatpush1.msra.mxu0 0.0
  %397 = vmatprep.subr.mxu0 0.0
  %398 = vmatpush1.msra.mxu0 0.0
  %399 = vmatprep.subr.mxu0 0.0
  %400 = vmatpush1.msra.mxu0 0.0
  %401 = vmatprep.subr.mxu0 0.0
  %402 = vmatpush1.msra.mxu0 0.0
  %403 = vmatprep.subr.mxu0 0.0
  %404 = vmatpush1.msra.mxu0 0.0
  %405 = vmatprep.subr.mxu0 0.0
  %406 = vmatpush1.msra.mxu0 0.0
  %407 = vmatprep.subr.mxu0 0.0
  %408 = vmatpush1.msra.mxu0 0.0
  %409 = vmatprep.subr.mxu0 0.0
  %410 = vmatpush1.msra.mxu0 0.0
  %411 = vmatprep.subr.mxu0 0.0
  %412 = vmatpush1.msra.mxu0 0.0
  %413 = vmatprep.subr.mxu0 0.0
  %414 = vmatpush1.msra.mxu0 0.0
  %415 = vmatprep.subr.mxu0 0.0
  %416 = vmatpush1.msra.mxu0 0.0
  %417 = vmatprep.subr.mxu0 0.0
  %418 = vmatpush1.msra.mxu0 0.0
  %419 = vmatprep.mubr.f32.mxu0 0.0
  %420 = vmatmul.mubr.f32.gmra.mrb[0].mxu0 %v350
  %v421 = vpop.f32.mrb[0].mxu0
  %v422 = vadd.f32 0.0, %v421
  %v423 = vpop.f32.mrb[0].mxu0
  %424 = vmatprep.mubr.f32.mxu0 0.0
  %425 = vmatmul.mubr.f32.gmra.mrb[0].mxu0 %v353
  %v426 = vpop.f32.mrb[0].mxu0
  %v427 = vadd.f32 0.0, %v426
  %v428 = vpop.f32.mrb[0].mxu0
  %429 = vdwg.mxu0
  %430 = vrot.lane.b32.xlu0 %v220, 120
  %v431 = vpop.permute.xlu0 %430
  %432 = vrot.lane.b32.xlu0 %v225, 120
  %v433 = vpop.permute.xlu0 %432
  %434 = vrot.lane.b32.xlu0 %v220, 88
  %v435 = vpop.permute.xlu0 %434
  %436 = vrot.lane.b32.xlu0 %v225, 88
  %v437 = vpop.permute.xlu0 %436
  %v438 = vsel %vm234, %v431, 0
  %v440 = vsel %vm234, %v433, 0
  %v442 = vsel %vm234, %v435, 0
  %v444 = vsel %vm234, %v437, 0
  %446 = vmatprep.subr.mxu0 0.0
  %447 = vmatpush1.xpose.msra.mxu0 %v442
  %448 = vmatprep.subr.mxu0 0.0
  %449 = vmatpush1.xpose.msra.mxu0 %v444
  %450 = vmatprep.subr.mxu0 0.0
  %451 = vmatpush1.xpose.msra.mxu0 0.0
  %452 = vmatprep.subr.mxu0 0.0
  %453 = vmatpush1.xpose.msra.mxu0 0.0
  %454 = vmatprep.subr.mxu0 0.0
  %455 = vmatpush1.xpose.msra.mxu0 0.0
  %456 = vmatprep.subr.mxu0 0.0
  %457 = vmatpush1.xpose.msra.mxu0 0.0
  %458 = vmatprep.subr.mxu0 0.0
  %459 = vmatpush1.xpose.msra.mxu0 0.0
  %460 = vmatprep.subr.mxu0 0.0
  %461 = vmatpush1.xpose.msra.mxu0 0.0
  %462 = vmatprep.subr.mxu0 0.0
  %463 = vmatpush1.xpose.msra.mxu0 0.0
  %464 = vmatprep.subr.mxu0 0.0
  %465 = vmatpush1.xpose.msra.mxu0 0.0
  %466 = vmatprep.subr.mxu0 0.0
  %467 = vmatpush1.xpose.msra.mxu0 0.0
  %468 = vmatprep.subr.mxu0 0.0
  %469 = vmatpush1.xpose.msra.mxu0 0.0
  %470 = vmatprep.subr.mxu0 0.0
  %471 = vmatpush1.xpose.msra.mxu0 0.0
  %472 = vmatprep.subr.mxu0 0.0
  %473 = vmatpush1.xpose.msra.mxu0 0.0
  %474 = vmatprep.subr.mxu0 0.0
  %475 = vmatpush1.xpose.msra.mxu0 0.0
  %476 = vmatprep.subr.mxu0 0.0
  %477 = vmatpush1.xpose.msra.mxu0 0.0
  %478 = vmatprep.subr.mxu0 0.0
  %479 = vmatpush1.xpose.msra.mxu0 0.0
  %480 = vmatprep.subr.mxu0 0.0
  %481 = vmatpush1.xpose.msra.mxu0 0.0
  %482 = vmatprep.subr.mxu0 0.0
  %483 = vmatpush1.xpose.msra.mxu0 0.0
  %484 = vmatprep.subr.mxu0 0.0
  %485 = vmatpush1.xpose.msra.mxu0 0.0
  %486 = vmatprep.subr.mxu0 0.0
  %487 = vmatpush1.xpose.msra.mxu0 0.0
  %488 = vmatprep.subr.mxu0 0.0
  %489 = vmatpush1.xpose.msra.mxu0 0.0
  %490 = vmatprep.subr.mxu0 0.0
  %491 = vmatpush1.xpose.msra.mxu0 0.0
  %492 = vmatprep.subr.mxu0 0.0
  %493 = vmatpush1.xpose.msra.mxu0 0.0
  %494 = vmatprep.subr.mxu0 0.0
  %495 = vmatpush1.xpose.msra.mxu0 0.0
  %496 = vmatprep.subr.mxu0 0.0
  %497 = vmatpush1.xpose.msra.mxu0 0.0
  %498 = vmatprep.subr.mxu0 0.0
  %499 = vmatpush1.xpose.msra.mxu0 0.0
  %500 = vmatprep.subr.mxu0 0.0
  %501 = vmatpush1.xpose.msra.mxu0 0.0
  %502 = vmatprep.subr.mxu0 0.0
  %503 = vmatpush1.xpose.msra.mxu0 0.0
  %504 = vmatprep.subr.mxu0 0.0
  %505 = vmatpush1.xpose.msra.mxu0 0.0
  %506 = vmatprep.subr.mxu0 0.0
  %507 = vmatpush1.xpose.msra.mxu0 0.0
  %508 = vmatprep.subr.mxu0 0.0
  %509 = vmatpush1.xpose.msra.mxu0 0.0
  %510 = vmatprep.mubr.f32.mxu0 0.0
  %511 = vmatmul.mubr.f32.gmra.mrb[0].mxu0 %v438
  %v512 = vpop.f32.mrb[0].mxu0
  %v513 = vadd.f32 %v140, %v512
  %v514 = vpop.f32.mrb[0].mxu0
  %515 = vmatprep.mubr.f32.mxu0 0.0
  %516 = vmatmul.mubr.f32.gmra.mrb[0].mxu0 %v440
  %v517 = vpop.f32.mrb[0].mxu0
  %v518 = vadd.f32 %v141, %v517
  %v519 = vpop.f32.mrb[0].mxu0
  %520 = vdwg.mxu0
  %v521 = vsel %vm318, %v513, -inf
  %522 = vmax.xlane.f32.xlu0 %v521
  %v523 = vpop.xlane.xlu0 %522
  %v524 = vsel %vm318, %v518, -inf
  %525 = vmax.xlane.f32.xlu0 %v524
  %v526 = vpop.xlane.xlu0 %525
  %v527 = vsub.f32 %v513, %v523
  %v528 = vsub.f32 %v518, %v526
  %v529 = vmul.f32 %v527, 1.442695
  %v530 = vpow.pop %v529
  %v531 = vmul.f32 %v528, 1.442695
  %v532 = vpow.pop %v531
  %v533 = vsel %vm318, %v530, 0.0
  %534 = vadd.xlane.f32.xlu0 %v533
  %v535 = vpop.xlane.xlu0 %534
  %v536 = vsel %vm318, %v532, 0.0
  %537 = vadd.xlane.f32.xlu0 %v536
  %v538 = vpop.xlane.xlu0 %537
  %v539 = vrcp.pop %v535
  %v540 = vmul.f32 %v530, %v539
  %v541 = vrcp.pop %v538
  %v542 = vmul.f32 %v532, %v541
  %s543 = scalar_lea.vmem %s11, 16
  %544 = vst.msk [vmem:[%s543] sm:$0xff] %vm318, %v540
  %545 = vst.msk [vmem:[%s543 + $0x8] sm:$0xff] %vm318, %v542
  %546 = vrot.lane.b32.xlu0 %v220, 56
  %v547 = vpop.permute.xlu0 %546
  %548 = vrot.lane.b32.xlu0 %v225, 56
  %v549 = vpop.permute.xlu0 %548
  %v553 = vsel %vm318, %v540, 0
  %v556 = vsel %vm318, %v542, 0
  %558 = vmatprep.subr.mxu0 0.0
  %559 = vmatpush1.msra.mxu0 %v547
  %560 = vmatprep.subr.mxu0 0.0
  %561 = vmatpush1.msra.mxu0 %v549
  %562 = vmatprep.subr.mxu0 0.0
  %563 = vmatpush1.msra.mxu0 0.0
  %564 = vmatprep.subr.mxu0 0.0
  %565 = vmatpush1.msra.mxu0 0.0
  %566 = vmatprep.subr.mxu0 0.0
  %567 = vmatpush1.msra.mxu0 0.0
  %568 = vmatprep.subr.mxu0 0.0
  %569 = vmatpush1.msra.mxu0 0.0
  %570 = vmatprep.subr.mxu0 0.0
  %571 = vmatpush1.msra.mxu0 0.0
  %572 = vmatprep.subr.mxu0 0.0
  %573 = vmatpush1.msra.mxu0 0.0
  %574 = vmatprep.subr.mxu0 0.0
  %575 = vmatpush1.msra.mxu0 0.0
  %576 = vmatprep.subr.mxu0 0.0
  %577 = vmatpush1.msra.mxu0 0.0
  %578 = vmatprep.subr.mxu0 0.0
  %579 = vmatpush1.msra.mxu0 0.0
  %580 = vmatprep.subr.mxu0 0.0
  %581 = vmatpush1.msra.mxu0 0.0
  %582 = vmatprep.subr.mxu0 0.0
  %583 = vmatpush1.msra.mxu0 0.0
  %584 = vmatprep.subr.mxu0 0.0
  %585 = vmatpush1.msra.mxu0 0.0
  %586 = vmatprep.subr.mxu0 0.0
  %587 = vmatpush1.msra.mxu0 0.0
  %588 = vmatprep.subr.mxu0 0.0
  %589 = vmatpush1.msra.mxu0 0.0
  %590 = vmatprep.subr.mxu0 0.0
  %591 = vmatpush1.msra.mxu0 0.0
  %592 = vmatprep.subr.mxu0 0.0
  %593 = vmatpush1.msra.mxu0 0.0
  %594 = vmatprep.subr.mxu0 0.0
  %595 = vmatpush1.msra.mxu0 0.0
  %596 = vmatprep.subr.mxu0 0.0
  %597 = vmatpush1.msra.mxu0 0.0
  %598 = vmatprep.subr.mxu0 0.0
  %599 = vmatpush1.msra.mxu0 0.0
  %600 = vmatprep.subr.mxu0 0.0
  %601 = vmatpush1.msra.mxu0 0.0
  %602 = vmatprep.subr.mxu0 0.0
  %603 = vmatpush1.msra.mxu0 0.0
  %604 = vmatprep.subr.mxu0 0.0
  %605 = vmatpush1.msra.mxu0 0.0
  %606 = vmatprep.subr.mxu0 0.0
  %607 = vmatpush1.msra.mxu0 0.0
  %608 = vmatprep.subr.mxu0 0.0
  %609 = vmatpush1.msra.mxu0 0.0
  %610 = vmatprep.subr.mxu0 0.0
  %611 = vmatpush1.msra.mxu0 0.0
  %612 = vmatprep.subr.mxu0 0.0
  %613 = vmatpush1.msra.mxu0 0.0
  %614 = vmatprep.subr.mxu0 0.0
  %615 = vmatpush1.msra.mxu0 0.0
  %616 = vmatprep.subr.mxu0 0.0
  %617 = vmatpush1.msra.mxu0 0.0
  %618 = vmatprep.subr.mxu0 0.0
  %619 = vmatpush1.msra.mxu0 0.0
  %620 = vmatprep.subr.mxu0 0.0
  %621 = vmatpush1.msra.mxu0 0.0
  %622 = vmatprep.mubr.f32.mxu0 0.0
  %623 = vmatmul.mubr.f32.gmra.mrb[0].mxu0 %v553
  %v624 = vpop.f32.mrb[0].mxu0
  %v625 = vadd.f32 0.0, %v624
  %v626 = vpop.f32.mrb[0].mxu0
  %627 = vmatprep.mubr.f32.mxu0 0.0
  %628 = vmatmul.mubr.f32.gmra.mrb[0].mxu0 %v556
  %v629 = vpop.f32.mrb[0].mxu0
  %v630 = vadd.f32 0.0, %v629
  %v631 = vpop.f32.mrb[0].mxu0
  %632 = vdwg.mxu0
  %634 = vrot.lane.b32.xlu0 %v143, 32
  %v635 = vpop.permute.xlu0 %634
  %v638 = vsel %vm234, %v625, 0
  %v641 = vsel %vm234, %v630, 0
  %643 = vmatprep.subr.mxu0 0.0
  %644 = vmatpush1.msra.mxu0 %v635
  %645 = vmatprep.subr.mxu0 0.0
  %646 = vmatpush1.msra.mxu0 0.0
  %647 = vmatprep.subr.mxu0 0.0
  %648 = vmatpush1.msra.mxu0 0.0
  %649 = vmatprep.subr.mxu0 0.0
  %650 = vmatpush1.msra.mxu0 0.0
  %651 = vmatprep.subr.mxu0 0.0
  %652 = vmatpush1.msra.mxu0 0.0
  %653 = vmatprep.subr.mxu0 0.0
  %654 = vmatpush1.msra.mxu0 0.0
  %655 = vmatprep.subr.mxu0 0.0
  %656 = vmatpush1.msra.mxu0 0.0
  %657 = vmatprep.subr.mxu0 0.0
  %658 = vmatpush1.msra.mxu0 0.0
  %659 = vmatprep.subr.mxu0 0.0
  %660 = vmatpush1.msra.mxu0 0.0
  %661 = vmatprep.subr.mxu0 0.0
  %662 = vmatpush1.msra.mxu0 0.0
  %663 = vmatprep.subr.mxu0 0.0
  %664 = vmatpush1.msra.mxu0 0.0
  %665 = vmatprep.subr.mxu0 0.0
  %666 = vmatpush1.msra.mxu0 0.0
  %667 = vmatprep.subr.mxu0 0.0
  %668 = vmatpush1.msra.mxu0 0.0
  %669 = vmatprep.subr.mxu0 0.0
  %670 = vmatpush1.msra.mxu0 0.0
  %671 = vmatprep.subr.mxu0 0.0
  %672 = vmatpush1.msra.mxu0 0.0
  %673 = vmatprep.subr.mxu0 0.0
  %674 = vmatpush1.msra.mxu0 0.0
  %675 = vmatprep.subr.mxu0 0.0
  %676 = vmatpush1.msra.mxu0 0.0
  %677 = vmatprep.subr.mxu0 0.0
  %678 = vmatpush1.msra.mxu0 0.0
  %679 = vmatprep.subr.mxu0 0.0
  %680 = vmatpush1.msra.mxu0 0.0
  %681 = vmatprep.subr.mxu0 0.0
  %682 = vmatpush1.msra.mxu0 0.0
  %683 = vmatprep.subr.mxu0 0.0
  %684 = vmatpush1.msra.mxu0 0.0
  %685 = vmatprep.subr.mxu0 0.0
  %686 = vmatpush1.msra.mxu0 0.0
  %687 = vmatprep.subr.mxu0 0.0
  %688 = vmatpush1.msra.mxu0 0.0
  %689 = vmatprep.subr.mxu0 0.0
  %690 = vmatpush1.msra.mxu0 0.0
  %691 = vmatprep.subr.mxu0 0.0
  %692 = vmatpush1.msra.mxu0 0.0
  %693 = vmatprep.subr.mxu0 0.0
  %694 = vmatpush1.msra.mxu0 0.0
  %695 = vmatprep.subr.mxu0 0.0
  %696 = vmatpush1.msra.mxu0 0.0
  %697 = vmatprep.subr.mxu0 0.0
  %698 = vmatpush1.msra.mxu0 0.0
  %699 = vmatprep.subr.mxu0 0.0
  %700 = vmatpush1.msra.mxu0 0.0
  %701 = vmatprep.subr.mxu0 0.0
  %702 = vmatpush1.msra.mxu0 0.0
  %703 = vmatprep.subr.mxu0 0.0
  %704 = vmatpush1.msra.mxu0 0.0
  %705 = vmatprep.subr.mxu0 0.0
  %706 = vmatpush1.msra.mxu0 0.0
  %707 = vmatprep.mubr.f32.mxu0 0.0
  %708 = vmatmul.mubr.f32.gmra.mrb[0].mxu0 %v638
  %v709 = vpop.f32.mrb[0].mxu0
  %v710 = vadd.f32 0.0, %v709
  %v711 = vpop.f32.mrb[0].mxu0
  %712 = vmatprep.mubr.f32.mxu0 0.0
  %713 = vmatmul.mubr.f32.gmra.mrb[0].mxu0 %v641
  %v714 = vpop.f32.mrb[0].mxu0
  %v715 = vadd.f32 0.0, %v714
  %v716 = vpop.f32.mrb[0].mxu0
  %717 = vdwg.mxu0
  %719 = vrot.lane.b32.xlu0 %v142, 32
  %v720 = vpop.permute.xlu0 %719
  %v723 = vsel %vm234, %v422, 0
  %v726 = vsel %vm234, %v427, 0
  %728 = vmatprep.subr.mxu0 0.0
  %729 = vmatpush1.msra.mxu0 %v720
  %730 = vmatprep.subr.mxu0 0.0
  %731 = vmatpush1.msra.mxu0 0.0
  %732 = vmatprep.subr.mxu0 0.0
  %733 = vmatpush1.msra.mxu0 0.0
  %734 = vmatprep.subr.mxu0 0.0
  %735 = vmatpush1.msra.mxu0 0.0
  %736 = vmatprep.subr.mxu0 0.0
  %737 = vmatpush1.msra.mxu0 0.0
  %738 = vmatprep.subr.mxu0 0.0
  %739 = vmatpush1.msra.mxu0 0.0
  %740 = vmatprep.subr.mxu0 0.0
  %741 = vmatpush1.msra.mxu0 0.0
  %742 = vmatprep.subr.mxu0 0.0
  %743 = vmatpush1.msra.mxu0 0.0
  %744 = vmatprep.subr.mxu0 0.0
  %745 = vmatpush1.msra.mxu0 0.0
  %746 = vmatprep.subr.mxu0 0.0
  %747 = vmatpush1.msra.mxu0 0.0
  %748 = vmatprep.subr.mxu0 0.0
  %749 = vmatpush1.msra.mxu0 0.0
  %750 = vmatprep.subr.mxu0 0.0
  %751 = vmatpush1.msra.mxu0 0.0
  %752 = vmatprep.subr.mxu0 0.0
  %753 = vmatpush1.msra.mxu0 0.0
  %754 = vmatprep.subr.mxu0 0.0
  %755 = vmatpush1.msra.mxu0 0.0
  %756 = vmatprep.subr.mxu0 0.0
  %757 = vmatpush1.msra.mxu0 0.0
  %758 = vmatprep.subr.mxu0 0.0
  %759 = vmatpush1.msra.mxu0 0.0
  %760 = vmatprep.subr.mxu0 0.0
  %761 = vmatpush1.msra.mxu0 0.0
  %762 = vmatprep.subr.mxu0 0.0
  %763 = vmatpush1.msra.mxu0 0.0
  %764 = vmatprep.subr.mxu0 0.0
  %765 = vmatpush1.msra.mxu0 0.0
  %766 = vmatprep.subr.mxu0 0.0
  %767 = vmatpush1.msra.mxu0 0.0
  %768 = vmatprep.subr.mxu0 0.0
  %769 = vmatpush1.msra.mxu0 0.0
  %770 = vmatprep.subr.mxu0 0.0
  %771 = vmatpush1.msra.mxu0 0.0
  %772 = vmatprep.subr.mxu0 0.0
  %773 = vmatpush1.msra.mxu0 0.0
  %774 = vmatprep.subr.mxu0 0.0
  %775 = vmatpush1.msra.mxu0 0.0
  %776 = vmatprep.subr.mxu0 0.0
  %777 = vmatpush1.msra.mxu0 0.0
  %778 = vmatprep.subr.mxu0 0.0
  %779 = vmatpush1.msra.mxu0 0.0
  %780 = vmatprep.subr.mxu0 0.0
  %781 = vmatpush1.msra.mxu0 0.0
  %782 = vmatprep.subr.mxu0 0.0
  %783 = vmatpush1.msra.mxu0 0.0
  %784 = vmatprep.subr.mxu0 0.0
  %785 = vmatpush1.msra.mxu0 0.0
  %786 = vmatprep.subr.mxu0 0.0
  %787 = vmatpush1.msra.mxu0 0.0
  %788 = vmatprep.subr.mxu0 0.0
  %789 = vmatpush1.msra.mxu0 0.0
  %790 = vmatprep.subr.mxu0 0.0
  %791 = vmatpush1.msra.mxu0 0.0
  %792 = vmatprep.mubr.f32.mxu0 0.0
  %793 = vmatmul.mubr.f32.gmra.mrb[0].mxu0 %v723
  %v794 = vpop.f32.mrb[0].mxu0
  %v795 = vadd.f32 %v710, %v794
  %v796 = vpop.f32.mrb[0].mxu0
  %797 = vmatprep.mubr.f32.mxu0 0.0
  %798 = vmatmul.mubr.f32.gmra.mrb[0].mxu0 %v726
  %v799 = vpop.f32.mrb[0].mxu0
  %v800 = vadd.f32 %v715, %v799
  %v801 = vpop.f32.mrb[0].mxu0
  %802 = vdwg.mxu0
  %803 = vrot.lane.b32.xlu0 %v220, 112
  %v804 = vpop.permute.xlu0 %803
  %805 = vrot.lane.b32.xlu0 %v225, 112
  %v806 = vpop.permute.xlu0 %805
  %807 = vrot.lane.b32.xlu0 %v220, 80
  %v808 = vpop.permute.xlu0 %807
  %809 = vrot.lane.b32.xlu0 %v225, 80
  %v810 = vpop.permute.xlu0 %809
  %v811 = vsel %vm234, %v804, 0
  %v813 = vsel %vm234, %v806, 0
  %v815 = vsel %vm234, %v808, 0
  %v817 = vsel %vm234, %v810, 0
  %819 = vmatprep.subr.mxu0 0.0
  %820 = vmatpush1.xpose.msra.mxu0 %v815
  %821 = vmatprep.subr.mxu0 0.0
  %822 = vmatpush1.xpose.msra.mxu0 %v817
  %823 = vmatprep.subr.mxu0 0.0
  %824 = vmatpush1.xpose.msra.mxu0 0.0
  %825 = vmatprep.subr.mxu0 0.0
  %826 = vmatpush1.xpose.msra.mxu0 0.0
  %827 = vmatprep.subr.mxu0 0.0
  %828 = vmatpush1.xpose.msra.mxu0 0.0
  %829 = vmatprep.subr.mxu0 0.0
  %830 = vmatpush1.xpose.msra.mxu0 0.0
  %831 = vmatprep.subr.mxu0 0.0
  %832 = vmatpush1.xpose.msra.mxu0 0.0
  %833 = vmatprep.subr.mxu0 0.0
  %834 = vmatpush1.xpose.msra.mxu0 0.0
  %835 = vmatprep.subr.mxu0 0.0
  %836 = vmatpush1.xpose.msra.mxu0 0.0
  %837 = vmatprep.subr.mxu0 0.0
  %838 = vmatpush1.xpose.msra.mxu0 0.0
  %839 = vmatprep.subr.mxu0 0.0
  %840 = vmatpush1.xpose.msra.mxu0 0.0
  %841 = vmatprep.subr.mxu0 0.0
  %842 = vmatpush1.xpose.msra.mxu0 0.0
  %843 = vmatprep.subr.mxu0 0.0
  %844 = vmatpush1.xpose.msra.mxu0 0.0
  %845 = vmatprep.subr.mxu0 0.0
  %846 = vmatpush1.xpose.msra.mxu0 0.0
  %847 = vmatprep.subr.mxu0 0.0
  %848 = vmatpush1.xpose.msra.mxu0 0.0
  %849 = vmatprep.subr.mxu0 0.0
  %850 = vmatpush1.xpose.msra.mxu0 0.0
  %851 = vmatprep.subr.mxu0 0.0
  %852 = vmatpush1.xpose.msra.mxu0 0.0
  %853 = vmatprep.subr.mxu0 0.0
  %854 = vmatpush1.xpose.msra.mxu0 0.0
  %855 = vmatprep.subr.mxu0 0.0
  %856 = vmatpush1.xpose.msra.mxu0 0.0
  %857 = vmatprep.subr.mxu0 0.0
  %858 = vmatpush1.xpose.msra.mxu0 0.0
  %859 = vmatprep.subr.mxu0 0.0
  %860 = vmatpush1.xpose.msra.mxu0 0.0
  %861 = vmatprep.subr.mxu0 0.0
  %862 = vmatpush1.xpose.msra.mxu0 0.0
  %863 = vmatprep.subr.mxu0 0.0
  %864 = vmatpush1.xpose.msra.mxu0 0.0
  %865 = vmatprep.subr.mxu0 0.0
  %866 = vmatpush1.xpose.msra.mxu0 0.0
  %867 = vmatprep.subr.mxu0 0.0
  %868 = vmatpush1.xpose.msra.mxu0 0.0
  %869 = vmatprep.subr.mxu0 0.0
  %870 = vmatpush1.xpose.msra.mxu0 0.0
  %871 = vmatprep.subr.mxu0 0.0
  %872 = vmatpush1.xpose.msra.mxu0 0.0
  %873 = vmatprep.subr.mxu0 0.0
  %874 = vmatpush1.xpose.msra.mxu0 0.0
  %875 = vmatprep.subr.mxu0 0.0
  %876 = vmatpush1.xpose.msra.mxu0 0.0
  %877 = vmatprep.subr.mxu0 0.0
  %878 = vmatpush1.xpose.msra.mxu0 0.0
  %879 = vmatprep.subr.mxu0 0.0
  %880 = vmatpush1.xpose.msra.mxu0 0.0
  %881 = vmatprep.subr.mxu0 0.0
  %882 = vmatpush1.xpose.msra.mxu0 0.0
  %883 = vmatprep.mubr.f32.mxu0 0.0
  %884 = vmatmul.mubr.f32.gmra.mrb[0].mxu0 %v811
  %v885 = vpop.f32.mrb[0].mxu0
  %v886 = vadd.f32 %v140, %v885
  %v887 = vpop.f32.mrb[0].mxu0
  %888 = vmatprep.mubr.f32.mxu0 0.0
  %889 = vmatmul.mubr.f32.gmra.mrb[0].mxu0 %v813
  %v890 = vpop.f32.mrb[0].mxu0
  %v891 = vadd.f32 %v141, %v890
  %v892 = vpop.f32.mrb[0].mxu0
  %893 = vdwg.mxu0
  %v894 = vsel %vm318, %v886, -inf
  %895 = vmax.xlane.f32.xlu0 %v894
  %v896 = vpop.xlane.xlu0 %895
  %v897 = vsel %vm318, %v891, -inf
  %898 = vmax.xlane.f32.xlu0 %v897
  %v899 = vpop.xlane.xlu0 %898
  %v900 = vsub.f32 %v886, %v896
  %v901 = vsub.f32 %v891, %v899
  %v902 = vmul.f32 %v900, 1.442695
  %v903 = vpow.pop %v902
  %v904 = vmul.f32 %v901, 1.442695
  %v905 = vpow.pop %v904
  %v906 = vsel %vm318, %v903, 0.0
  %907 = vadd.xlane.f32.xlu0 %v906
  %v908 = vpop.xlane.xlu0 %907
  %v909 = vsel %vm318, %v905, 0.0
  %910 = vadd.xlane.f32.xlu0 %v909
  %v911 = vpop.xlane.xlu0 %910
  %v912 = vrcp.pop %v908
  %v913 = vmul.f32 %v903, %v912
  %v914 = vrcp.pop %v911
  %v915 = vmul.f32 %v905, %v914
  %s916 = scalar_lea.vmem %s11, 32
  %917 = vst.msk [vmem:[%s916] sm:$0xff] %vm318, %v913
  %918 = vst.msk [vmem:[%s916 + $0x8] sm:$0xff] %vm318, %v915
  %919 = vrot.lane.b32.xlu0 %v220, 48
  %v920 = vpop.permute.xlu0 %919
  %921 = vrot.lane.b32.xlu0 %v225, 48
  %v922 = vpop.permute.xlu0 %921
  %v926 = vsel %vm318, %v913, 0
  %v929 = vsel %vm318, %v915, 0
  %931 = vmatprep.subr.mxu0 0.0
  %932 = vmatpush1.msra.mxu0 %v920
  %933 = vmatprep.subr.mxu0 0.0
  %934 = vmatpush1.msra.mxu0 %v922
  %935 = vmatprep.subr.mxu0 0.0
  %936 = vmatpush1.msra.mxu0 0.0
  %937 = vmatprep.subr.mxu0 0.0
  %938 = vmatpush1.msra.mxu0 0.0
  %939 = vmatprep.subr.mxu0 0.0
  %940 = vmatpush1.msra.mxu0 0.0
  %941 = vmatprep.subr.mxu0 0.0
  %942 = vmatpush1.msra.mxu0 0.0
  %943 = vmatprep.subr.mxu0 0.0
  %944 = vmatpush1.msra.mxu0 0.0
  %945 = vmatprep.subr.mxu0 0.0
  %946 = vmatpush1.msra.mxu0 0.0
  %947 = vmatprep.subr.mxu0 0.0
  %948 = vmatpush1.msra.mxu0 0.0
  %949 = vmatprep.subr.mxu0 0.0
  %950 = vmatpush1.msra.mxu0 0.0
  %951 = vmatprep.subr.mxu0 0.0
  %952 = vmatpush1.msra.mxu0 0.0
  %953 = vmatprep.subr.mxu0 0.0
  %954 = vmatpush1.msra.mxu0 0.0
  %955 = vmatprep.subr.mxu0 0.0
  %956 = vmatpush1.msra.mxu0 0.0
  %957 = vmatprep.subr.mxu0 0.0
  %958 = vmatpush1.msra.mxu0 0.0
  %959 = vmatprep.subr.mxu0 0.0
  %960 = vmatpush1.msra.mxu0 0.0
  %961 = vmatprep.subr.mxu0 0.0
  %962 = vmatpush1.msra.mxu0 0.0
  %963 = vmatprep.subr.mxu0 0.0
  %964 = vmatpush1.msra.mxu0 0.0
  %965 = vmatprep.subr.mxu0 0.0
  %966 = vmatpush1.msra.mxu0 0.0
  %967 = vmatprep.subr.mxu0 0.0
  %968 = vmatpush1.msra.mxu0 0.0
  %969 = vmatprep.subr.mxu0 0.0
  %970 = vmatpush1.msra.mxu0 0.0
  %971 = vmatprep.subr.mxu0 0.0
  %972 = vmatpush1.msra.mxu0 0.0
  %973 = vmatprep.subr.mxu0 0.0
  %974 = vmatpush1.msra.mxu0 0.0
  %975 = vmatprep.subr.mxu0 0.0
  %976 = vmatpush1.msra.mxu0 0.0
  %977 = vmatprep.subr.mxu0 0.0
  %978 = vmatpush1.msra.mxu0 0.0
  %979 = vmatprep.subr.mxu0 0.0
  %980 = vmatpush1.msra.mxu0 0.0
  %981 = vmatprep.subr.mxu0 0.0
  %982 = vmatpush1.msra.mxu0 0.0
  %983 = vmatprep.subr.mxu0 0.0
  %984 = vmatpush1.msra.mxu0 0.0
  %985 = vmatprep.subr.mxu0 0.0
  %986 = vmatpush1.msra.mxu0 0.0
  %987 = vmatprep.subr.mxu0 0.0
  %988 = vmatpush1.msra.mxu0 0.0
  %989 = vmatprep.subr.mxu0 0.0
  %990 = vmatpush1.msra.mxu0 0.0
  %991 = vmatprep.subr.mxu0 0.0
  %992 = vmatpush1.msra.mxu0 0.0
  %993 = vmatprep.subr.mxu0 0.0
  %994 = vmatpush1.msra.mxu0 0.0
  %995 = vmatprep.mubr.f32.mxu0 0.0
  %996 = vmatmul.mubr.f32.gmra.mrb[0].mxu0 %v926
  %v997 = vpop.f32.mrb[0].mxu0
  %v998 = vadd.f32 0.0, %v997
  %v999 = vpop.f32.mrb[0].mxu0
  %1000 = vmatprep.mubr.f32.mxu0 0.0
  %1001 = vmatmul.mubr.f32.gmra.mrb[0].mxu0 %v929
  %v1002 = vpop.f32.mrb[0].mxu0
  %v1003 = vadd.f32 0.0, %v1002
  %v1004 = vpop.f32.mrb[0].mxu0
  %1005 = vdwg.mxu0
  %1007 = vrot.lane.b32.xlu0 %v144, 32
  %v1008 = vpop.permute.xlu0 %1007
  %v1011 = vsel %vm234, %v998, 0
  %v1014 = vsel %vm234, %v1003, 0
  %1016 = vmatprep.subr.mxu0 0.0
  %1017 = vmatpush1.msra.mxu0 %v1008
  %1018 = vmatprep.subr.mxu0 0.0
  %1019 = vmatpush1.msra.mxu0 0.0
  %1020 = vmatprep.subr.mxu0 0.0
  %1021 = vmatpush1.msra.mxu0 0.0
  %1022 = vmatprep.subr.mxu0 0.0
  %1023 = vmatpush1.msra.mxu0 0.0
  %1024 = vmatprep.subr.mxu0 0.0
  %1025 = vmatpush1.msra.mxu0 0.0
  %1026 = vmatprep.subr.mxu0 0.0
  %1027 = vmatpush1.msra.mxu0 0.0
  %1028 = vmatprep.subr.mxu0 0.0
  %1029 = vmatpush1.msra.mxu0 0.0
  %1030 = vmatprep.subr.mxu0 0.0
  %1031 = vmatpush1.msra.mxu0 0.0
  %1032 = vmatprep.subr.mxu0 0.0
  %1033 = vmatpush1.msra.mxu0 0.0
  %1034 = vmatprep.subr.mxu0 0.0
  %1035 = vmatpush1.msra.mxu0 0.0
  %1036 = vmatprep.subr.mxu0 0.0
  %1037 = vmatpush1.msra.mxu0 0.0
  %1038 = vmatprep.subr.mxu0 0.0
  %1039 = vmatpush1.msra.mxu0 0.0
  %1040 = vmatprep.subr.mxu0 0.0
  %1041 = vmatpush1.msra.mxu0 0.0
  %1042 = vmatprep.subr.mxu0 0.0
  %1043 = vmatpush1.msra.mxu0 0.0
  %1044 = vmatprep.subr.mxu0 0.0
  %1045 = vmatpush1.msra.mxu0 0.0
  %1046 = vmatprep.subr.mxu0 0.0
  %1047 = vmatpush1.msra.mxu0 0.0
  %1048 = vmatprep.subr.mxu0 0.0
  %1049 = vmatpush1.msra.mxu0 0.0
  %1050 = vmatprep.subr.mxu0 0.0
  %1051 = vmatpush1.msra.mxu0 0.0
  %1052 = vmatprep.subr.mxu0 0.0
  %1053 = vmatpush1.msra.mxu0 0.0
  %1054 = vmatprep.subr.mxu0 0.0
  %1055 = vmatpush1.msra.mxu0 0.0
  %1056 = vmatprep.subr.mxu0 0.0
  %1057 = vmatpush1.msra.mxu0 0.0
  %1058 = vmatprep.subr.mxu0 0.0
  %1059 = vmatpush1.msra.mxu0 0.0
  %1060 = vmatprep.subr.mxu0 0.0
  %1061 = vmatpush1.msra.mxu0 0.0
  %1062 = vmatprep.subr.mxu0 0.0
  %1063 = vmatpush1.msra.mxu0 0.0
  %1064 = vmatprep.subr.mxu0 0.0
  %1065 = vmatpush1.msra.mxu0 0.0
  %1066 = vmatprep.subr.mxu0 0.0
  %1067 = vmatpush1.msra.mxu0 0.0
  %1068 = vmatprep.subr.mxu0 0.0
  %1069 = vmatpush1.msra.mxu0 0.0
  %1070 = vmatprep.subr.mxu0 0.0
  %1071 = vmatpush1.msra.mxu0 0.0
  %1072 = vmatprep.subr.mxu0 0.0
  %1073 = vmatpush1.msra.mxu0 0.0
  %1074 = vmatprep.subr.mxu0 0.0
  %1075 = vmatpush1.msra.mxu0 0.0
  %1076 = vmatprep.subr.mxu0 0.0
  %1077 = vmatpush1.msra.mxu0 0.0
  %1078 = vmatprep.subr.mxu0 0.0
  %1079 = vmatpush1.msra.mxu0 0.0
  %1080 = vmatprep.mubr.f32.mxu0 0.0
  %1081 = vmatmul.mubr.f32.gmra.mrb[0].mxu0 %v1011
  %v1082 = vpop.f32.mrb[0].mxu0
  %v1083 = vadd.f32 0.0, %v1082
  %v1084 = vpop.f32.mrb[0].mxu0
  %1085 = vmatprep.mubr.f32.mxu0 0.0
  %1086 = vmatmul.mubr.f32.gmra.mrb[0].mxu0 %v1014
  %v1087 = vpop.f32.mrb[0].mxu0
  %v1088 = vadd.f32 0.0, %v1087
  %v1089 = vpop.f32.mrb[0].mxu0
  %1090 = vdwg.mxu0
  %v1091 = vadd.f32 %v795, %v1083
  %v1092 = vadd.f32 %v800, %v1088
  %1093 = vrot.lane.b32.xlu0 %v220, 104
  %v1094 = vpop.permute.xlu0 %1093
  %1095 = vrot.lane.b32.xlu0 %v225, 104
  %v1096 = vpop.permute.xlu0 %1095
  %1097 = vrot.lane.b32.xlu0 %v220, 72
  %v1098 = vpop.permute.xlu0 %1097
  %1099 = vrot.lane.b32.xlu0 %v225, 72
  %v1100 = vpop.permute.xlu0 %1099
  %v1101 = vsel %vm234, %v1094, 0
  %v1103 = vsel %vm234, %v1096, 0
  %v1105 = vsel %vm234, %v1098, 0
  %v1107 = vsel %vm234, %v1100, 0
  %1109 = vmatprep.subr.mxu0 0.0
  %1110 = vmatpush1.xpose.msra.mxu0 %v1105
  %1111 = vmatprep.subr.mxu0 0.0
  %1112 = vmatpush1.xpose.msra.mxu0 %v1107
  %1113 = vmatprep.subr.mxu0 0.0
  %1114 = vmatpush1.xpose.msra.mxu0 0.0
  %1115 = vmatprep.subr.mxu0 0.0
  %1116 = vmatpush1.xpose.msra.mxu0 0.0
  %1117 = vmatprep.subr.mxu0 0.0
  %1118 = vmatpush1.xpose.msra.mxu0 0.0
  %1119 = vmatprep.subr.mxu0 0.0
  %1120 = vmatpush1.xpose.msra.mxu0 0.0
  %1121 = vmatprep.subr.mxu0 0.0
  %1122 = vmatpush1.xpose.msra.mxu0 0.0
  %1123 = vmatprep.subr.mxu0 0.0
  %1124 = vmatpush1.xpose.msra.mxu0 0.0
  %1125 = vmatprep.subr.mxu0 0.0
  %1126 = vmatpush1.xpose.msra.mxu0 0.0
  %1127 = vmatprep.subr.mxu0 0.0
  %1128 = vmatpush1.xpose.msra.mxu0 0.0
  %1129 = vmatprep.subr.mxu0 0.0
  %1130 = vmatpush1.xpose.msra.mxu0 0.0
  %1131 = vmatprep.subr.mxu0 0.0
  %1132 = vmatpush1.xpose.msra.mxu0 0.0
  %1133 = vmatprep.subr.mxu0 0.0
  %1134 = vmatpush1.xpose.msra.mxu0 0.0
  %1135 = vmatprep.subr.mxu0 0.0
  %1136 = vmatpush1.xpose.msra.mxu0 0.0
  %1137 = vmatprep.subr.mxu0 0.0
  %1138 = vmatpush1.xpose.msra.mxu0 0.0
  %1139 = vmatprep.subr.mxu0 0.0
  %1140 = vmatpush1.xpose.msra.mxu0 0.0
  %1141 = vmatprep.subr.mxu0 0.0
  %1142 = vmatpush1.xpose.msra.mxu0 0.0
  %1143 = vmatprep.subr.mxu0 0.0
  %1144 = vmatpush1.xpose.msra.mxu0 0.0
  %1145 = vmatprep.subr.mxu0 0.0
  %1146 = vmatpush1.xpose.msra.mxu0 0.0
  %1147 = vmatprep.subr.mxu0 0.0
  %1148 = vmatpush1.xpose.msra.mxu0 0.0
  %1149 = vmatprep.subr.mxu0 0.0
  %1150 = vmatpush1.xpose.msra.mxu0 0.0
  %1151 = vmatprep.subr.mxu0 0.0
  %1152 = vmatpush1.xpose.msra.mxu0 0.0
  %1153 = vmatprep.subr.mxu0 0.0
  %1154 = vmatpush1.xpose.msra.mxu0 0.0
  %1155 = vmatprep.subr.mxu0 0.0
  %1156 = vmatpush1.xpose.msra.mxu0 0.0
  %1157 = vmatprep.subr.mxu0 0.0
  %1158 = vmatpush1.xpose.msra.mxu0 0.0
  %1159 = vmatprep.subr.mxu0 0.0
  %1160 = vmatpush1.xpose.msra.mxu0 0.0
  %1161 = vmatprep.subr.mxu0 0.0
  %1162 = vmatpush1.xpose.msra.mxu0 0.0
  %1163 = vmatprep.subr.mxu0 0.0
  %1164 = vmatpush1.xpose.msra.mxu0 0.0
  %1165 = vmatprep.subr.mxu0 0.0
  %1166 = vmatpush1.xpose.msra.mxu0 0.0
  %1167 = vmatprep.subr.mxu0 0.0
  %1168 = vmatpush1.xpose.msra.mxu0 0.0
  %1169 = vmatprep.subr.mxu0 0.0
  %1170 = vmatpush1.xpose.msra.mxu0 0.0
  %1171 = vmatprep.subr.mxu0 0.0
  %1172 = vmatpush1.xpose.msra.mxu0 0.0
  %1173 = vmatprep.mubr.f32.mxu0 0.0
  %1174 = vmatmul.mubr.f32.gmra.mrb[0].mxu0 %v1101
  %v1175 = vpop.f32.mrb[0].mxu0
  %v1176 = vadd.f32 %v140, %v1175
  %v1177 = vpop.f32.mrb[0].mxu0
  %1178 = vmatprep.mubr.f32.mxu0 0.0
  %1179 = vmatmul.mubr.f32.gmra.mrb[0].mxu0 %v1103
  %v1180 = vpop.f32.mrb[0].mxu0
  %v1181 = vadd.f32 %v141, %v1180
  %v1182 = vpop.f32.mrb[0].mxu0
  %1183 = vdwg.mxu0
  %v1184 = vsel %vm318, %v1176, -inf
  %1185 = vmax.xlane.f32.xlu0 %v1184
  %v1186 = vpop.xlane.xlu0 %1185
  %v1187 = vsel %vm318, %v1181, -inf
  %1188 = vmax.xlane.f32.xlu0 %v1187
  %v1189 = vpop.xlane.xlu0 %1188
  %v1190 = vsub.f32 %v1176, %v1186
  %v1191 = vsub.f32 %v1181, %v1189
  %v1192 = vmul.f32 %v1190, 1.442695
  %v1193 = vpow.pop %v1192
  %v1194 = vmul.f32 %v1191, 1.442695
  %v1195 = vpow.pop %v1194
  %v1196 = vsel %vm318, %v1193, 0.0
  %1197 = vadd.xlane.f32.xlu0 %v1196
  %v1198 = vpop.xlane.xlu0 %1197
  %v1199 = vsel %vm318, %v1195, 0.0
  %1200 = vadd.xlane.f32.xlu0 %v1199
  %v1201 = vpop.xlane.xlu0 %1200
  %v1202 = vrcp.pop %v1198
  %v1203 = vmul.f32 %v1193, %v1202
  %v1204 = vrcp.pop %v1201
  %v1205 = vmul.f32 %v1195, %v1204
  %s1206 = scalar_lea.vmem %s11, 48
  %1207 = vst.msk [vmem:[%s1206] sm:$0xff] %vm318, %v1203
  %1208 = vst.msk [vmem:[%s1206 + $0x8] sm:$0xff] %vm318, %v1205
  %1209 = vrot.lane.b32.xlu0 %v220, 40
  %v1210 = vpop.permute.xlu0 %1209
  %1211 = vrot.lane.b32.xlu0 %v225, 40
  %v1212 = vpop.permute.xlu0 %1211
  %v1216 = vsel %vm318, %v1203, 0
  %v1219 = vsel %vm318, %v1205, 0
  %1221 = vmatprep.subr.mxu0 0.0
  %1222 = vmatpush1.msra.mxu0 %v1210
  %1223 = vmatprep.subr.mxu0 0.0
  %1224 = vmatpush1.msra.mxu0 %v1212
  %1225 = vmatprep.subr.mxu0 0.0
  %1226 = vmatpush1.msra.mxu0 0.0
  %1227 = vmatprep.subr.mxu0 0.0
  %1228 = vmatpush1.msra.mxu0 0.0
  %1229 = vmatprep.subr.mxu0 0.0
  %1230 = vmatpush1.msra.mxu0 0.0
  %1231 = vmatprep.subr.mxu0 0.0
  %1232 = vmatpush1.msra.mxu0 0.0
  %1233 = vmatprep.subr.mxu0 0.0
  %1234 = vmatpush1.msra.mxu0 0.0
  %1235 = vmatprep.subr.mxu0 0.0
  %1236 = vmatpush1.msra.mxu0 0.0
  %1237 = vmatprep.subr.mxu0 0.0
  %1238 = vmatpush1.msra.mxu0 0.0
  %1239 = vmatprep.subr.mxu0 0.0
  %1240 = vmatpush1.msra.mxu0 0.0
  %1241 = vmatprep.subr.mxu0 0.0
  %1242 = vmatpush1.msra.mxu0 0.0
  %1243 = vmatprep.subr.mxu0 0.0
  %1244 = vmatpush1.msra.mxu0 0.0
  %1245 = vmatprep.subr.mxu0 0.0
  %1246 = vmatpush1.msra.mxu0 0.0
  %1247 = vmatprep.subr.mxu0 0.0
  %1248 = vmatpush1.msra.mxu0 0.0
  %1249 = vmatprep.subr.mxu0 0.0
  %1250 = vmatpush1.msra.mxu0 0.0
  %1251 = vmatprep.subr.mxu0 0.0
  %1252 = vmatpush1.msra.mxu0 0.0
  %1253 = vmatprep.subr.mxu0 0.0
  %1254 = vmatpush1.msra.mxu0 0.0
  %1255 = vmatprep.subr.mxu0 0.0
  %1256 = vmatpush1.msra.mxu0 0.0
  %1257 = vmatprep.subr.mxu0 0.0
  %1258 = vmatpush1.msra.mxu0 0.0
  %1259 = vmatprep.subr.mxu0 0.0
  %1260 = vmatpush1.msra.mxu0 0.0
  %1261 = vmatprep.subr.mxu0 0.0
  %1262 = vmatpush1.msra.mxu0 0.0
  %1263 = vmatprep.subr.mxu0 0.0
  %1264 = vmatpush1.msra.mxu0 0.0
  %1265 = vmatprep.subr.mxu0 0.0
  %1266 = vmatpush1.msra.mxu0 0.0
  %1267 = vmatprep.subr.mxu0 0.0
  %1268 = vmatpush1.msra.mxu0 0.0
  %1269 = vmatprep.subr.mxu0 0.0
  %1270 = vmatpush1.msra.mxu0 0.0
  %1271 = vmatprep.subr.mxu0 0.0
  %1272 = vmatpush1.msra.mxu0 0.0
  %1273 = vmatprep.subr.mxu0 0.0
  %1274 = vmatpush1.msra.mxu0 0.0
  %1275 = vmatprep.subr.mxu0 0.0
  %1276 = vmatpush1.msra.mxu0 0.0
  %1277 = vmatprep.subr.mxu0 0.0
  %1278 = vmatpush1.msra.mxu0 0.0
  %1279 = vmatprep.subr.mxu0 0.0
  %1280 = vmatpush1.msra.mxu0 0.0
  %1281 = vmatprep.subr.mxu0 0.0
  %1282 = vmatpush1.msra.mxu0 0.0
  %1283 = vmatprep.subr.mxu0 0.0
  %1284 = vmatpush1.msra.mxu0 0.0
  %1285 = vmatprep.mubr.f32.mxu0 0.0
  %1286 = vmatmul.mubr.f32.gmra.mrb[0].mxu0 %v1216
  %v1287 = vpop.f32.mrb[0].mxu0
  %v1288 = vadd.f32 0.0, %v1287
  %v1289 = vpop.f32.mrb[0].mxu0
  %1290 = vmatprep.mubr.f32.mxu0 0.0
  %1291 = vmatmul.mubr.f32.gmra.mrb[0].mxu0 %v1219
  %v1292 = vpop.f32.mrb[0].mxu0
  %v1293 = vadd.f32 0.0, %v1292
  %v1294 = vpop.f32.mrb[0].mxu0
  %1295 = vdwg.mxu0
  %1297 = vrot.lane.b32.xlu0 %v145, 32
  %v1298 = vpop.permute.xlu0 %1297
  %v1301 = vsel %vm234, %v1288, 0
  %v1304 = vsel %vm234, %v1293, 0
  %1306 = vmatprep.subr.mxu0 0.0
  %1307 = vmatpush1.msra.mxu0 %v1298
  %1308 = vmatprep.subr.mxu0 0.0
  %1309 = vmatpush1.msra.mxu0 0.0
  %1310 = vmatprep.subr.mxu0 0.0
  %1311 = vmatpush1.msra.mxu0 0.0
  %1312 = vmatprep.subr.mxu0 0.0
  %1313 = vmatpush1.msra.mxu0 0.0
  %1314 = vmatprep.subr.mxu0 0.0
  %1315 = vmatpush1.msra.mxu0 0.0
  %1316 = vmatprep.subr.mxu0 0.0
  %1317 = vmatpush1.msra.mxu0 0.0
  %1318 = vmatprep.subr.mxu0 0.0
  %1319 = vmatpush1.msra.mxu0 0.0
  %1320 = vmatprep.subr.mxu0 0.0
  %1321 = vmatpush1.msra.mxu0 0.0
  %1322 = vmatprep.subr.mxu0 0.0
  %1323 = vmatpush1.msra.mxu0 0.0
  %1324 = vmatprep.subr.mxu0 0.0
  %1325 = vmatpush1.msra.mxu0 0.0
  %1326 = vmatprep.subr.mxu0 0.0
  %1327 = vmatpush1.msra.mxu0 0.0
  %1328 = vmatprep.subr.mxu0 0.0
  %1329 = vmatpush1.msra.mxu0 0.0
  %1330 = vmatprep.subr.mxu0 0.0
  %1331 = vmatpush1.msra.mxu0 0.0
  %1332 = vmatprep.subr.mxu0 0.0
  %1333 = vmatpush1.msra.mxu0 0.0
  %1334 = vmatprep.subr.mxu0 0.0
  %1335 = vmatpush1.msra.mxu0 0.0
  %1336 = vmatprep.subr.mxu0 0.0
  %1337 = vmatpush1.msra.mxu0 0.0
  %1338 = vmatprep.subr.mxu0 0.0
  %1339 = vmatpush1.msra.mxu0 0.0
  %1340 = vmatprep.subr.mxu0 0.0
  %1341 = vmatpush1.msra.mxu0 0.0
  %1342 = vmatprep.subr.mxu0 0.0
  %1343 = vmatpush1.msra.mxu0 0.0
  %1344 = vmatprep.subr.mxu0 0.0
  %1345 = vmatpush1.msra.mxu0 0.0
  %1346 = vmatprep.subr.mxu0 0.0
  %1347 = vmatpush1.msra.mxu0 0.0
  %1348 = vmatprep.subr.mxu0 0.0
  %1349 = vmatpush1.msra.mxu0 0.0
  %1350 = vmatprep.subr.mxu0 0.0
  %1351 = vmatpush1.msra.mxu0 0.0
  %1352 = vmatprep.subr.mxu0 0.0
  %1353 = vmatpush1.msra.mxu0 0.0
  %1354 = vmatprep.subr.mxu0 0.0
  %1355 = vmatpush1.msra.mxu0 0.0
  %1356 = vmatprep.subr.mxu0 0.0
  %1357 = vmatpush1.msra.mxu0 0.0
  %1358 = vmatprep.subr.mxu0 0.0
  %1359 = vmatpush1.msra.mxu0 0.0
  %1360 = vmatprep.subr.mxu0 0.0
  %1361 = vmatpush1.msra.mxu0 0.0
  %1362 = vmatprep.subr.mxu0 0.0
  %1363 = vmatpush1.msra.mxu0 0.0
  %1364 = vmatprep.subr.mxu0 0.0
  %1365 = vmatpush1.msra.mxu0 0.0
  %1366 = vmatprep.subr.mxu0 0.0
  %1367 = vmatpush1.msra.mxu0 0.0
  %1368 = vmatprep.subr.mxu0 0.0
  %1369 = vmatpush1.msra.mxu0 0.0
  %1370 = vmatprep.mubr.f32.mxu0 0.0
  %1371 = vmatmul.mubr.f32.gmra.mrb[0].mxu0 %v1301
  %v1372 = vpop.f32.mrb[0].mxu0
  %v1373 = vadd.f32 0.0, %v1372
  %v1374 = vpop.f32.mrb[0].mxu0
  %1375 = vmatprep.mubr.f32.mxu0 0.0
  %1376 = vmatmul.mubr.f32.gmra.mrb[0].mxu0 %v1304
  %v1377 = vpop.f32.mrb[0].mxu0
  %v1378 = vadd.f32 0.0, %v1377
  %v1379 = vpop.f32.mrb[0].mxu0
  %1380 = vdwg.mxu0
  %v1381 = vadd.f32 %v1091, %v1373
  %v1382 = vadd.f32 %v1092, %v1378
  %v1383 = vld [vmem:[%s9] sm:$0x1]
  %v1384 = vadd.f32 %v1381, %v138
  %v1385 = vadd.f32 %v1382, %v139
  %v1386 = vsel %vm146, %v1384, 0.0
  %1387 = vadd.xlane.f32.xlu0 %v1386
  %v1388 = vpop.xlane.xlu0 %1387
  %v1389 = vsel %vm146, %v1385, 0.0
  %1390 = vadd.xlane.f32.xlu0 %v1389
  %v1391 = vpop.xlane.xlu0 %1390
  %v1392 = vrcp.pop 32.0
  %v1393 = vmul.f32 %v1388, %v1392
  %v1394 = vmul.f32 %v1391, %v1392
  %v1395 = vsub.f32 %v1384, %v1393
  %v1396 = vsub.f32 %v1385, %v1394
  %v1397 = vmul.f32 %v1395, %v1395
  %v1398 = vmul.f32 %v1396, %v1396
  %v1399 = vsel %vm146, %v1397, 0.0
  %1400 = vadd.xlane.f32.xlu0 %v1399
  %v1401 = vpop.xlane.xlu0 %1400
  %v1402 = vsel %vm146, %v1398, 0.0
  %1403 = vadd.xlane.f32.xlu0 %v1402
  %v1404 = vpop.xlane.xlu0 %1403
  %v1405 = vmul.f32 %v1401, %v1392
  %v1406 = vmul.f32 %v1404, %v1392
  %v1407 = vadd.f32 %v1405, 1e-05
  %v1408 = vadd.f32 %v1406, 1e-05
  %v1409 = vrsqrt.pop %v1407
  %v1410 = vrsqrt.pop %v1408
  %v1411 = vmul.f32 %v1395, %v1409
  %v1412 = vmul.f32 %v1396, %v1410
  %v1414 = vlaneseq
  %v1415 = vshrl.u32 %v1414, 7
  %v1416 = vsub.s32 0, %v1415
  %v1417 = vrot.slane %v1383, %v1416
  %v1419 = vmul.f32 %v1411, %v1417
  %v1420 = vmul.f32 %v1412, %v1417
  %1421 = vrot.lane.b32.xlu0 %v1417, 96
  %v1422 = vpop.permute.xlu0 %1421
  %v1424 = vadd.f32 %v1419, %v1422
  %v1425 = vadd.f32 %v1420, %v1422
  %v1426 = vld [vmem:[%s8] sm:$0xff]
  %v1427 = vld [vmem:[%s8 + $0x8] sm:$0xff]
  %v1428 = vld [vmem:[%s8 + $0x10] sm:$0xff]
  %v1429 = vld [vmem:[%s8 + $0x18] sm:$0xff]
  %v1430 = vld [vmem:[%s8 + $0x20] sm:$0xff]
  %v1431 = vld [vmem:[%s8 + $0x28] sm:$0xff]
  %v1432 = vld [vmem:[%s8 + $0x30] sm:$0xff]
  %v1433 = vld [vmem:[%s8 + $0x38] sm:$0xff]
  %v1435 = vsel %vm146, %v1424, 0
  %v1438 = vsel %vm146, %v1425, 0
  %1440 = vmatprep.subr.mxu0 0.0
  %1441 = vmatpush1.msra.mxu0 %v1426
  %1442 = vmatprep.subr.mxu0 0.0
  %1443 = vmatpush1.msra.mxu0 %v1427
  %1444 = vmatprep.subr.mxu0 0.0
  %1445 = vmatpush1.msra.mxu0 %v1428
  %1446 = vmatprep.subr.mxu0 0.0
  %1447 = vmatpush1.msra.mxu0 %v1429
  %1448 = vmatprep.subr.mxu0 0.0
  %1449 = vmatpush1.msra.mxu0 0.0
  %1450 = vmatprep.subr.mxu0 0.0
  %1451 = vmatpush1.msra.mxu0 0.0
  %1452 = vmatprep.subr.mxu0 0.0
  %1453 = vmatpush1.msra.mxu0 0.0
  %1454 = vmatprep.subr.mxu0 0.0
  %1455 = vmatpush1.msra.mxu0 0.0
  %1456 = vmatprep.subr.mxu0 0.0
  %1457 = vmatpush1.msra.mxu0 0.0
  %1458 = vmatprep.subr.mxu0 0.0
  %1459 = vmatpush1.msra.mxu0 0.0
  %1460 = vmatprep.subr.mxu0 0.0
  %1461 = vmatpush1.msra.mxu0 0.0
  %1462 = vmatprep.subr.mxu0 0.0
  %1463 = vmatpush1.msra.mxu0 0.0
  %1464 = vmatprep.subr.mxu0 0.0
  %1465 = vmatpush1.msra.mxu0 0.0
  %1466 = vmatprep.subr.mxu0 0.0
  %1467 = vmatpush1.msra.mxu0 0.0
  %1468 = vmatprep.subr.mxu0 0.0
  %1469 = vmatpush1.msra.mxu0 0.0
  %1470 = vmatprep.subr.mxu0 0.0
  %1471 = vmatpush1.msra.mxu0 0.0
  %1472 = vmatprep.subr.mxu0 0.0
  %1473 = vmatpush1.msra.mxu0 0.0
  %1474 = vmatprep.subr.mxu0 0.0
  %1475 = vmatpush1.msra.mxu0 0.0
  %1476 = vmatprep.subr.mxu0 0.0
  %1477 = vmatpush1.msra.mxu0 0.0
  %1478 = vmatprep.subr.mxu0 0.0
  %1479 = vmatpush1.msra.mxu0 0.0
  %1480 = vmatprep.subr.mxu0 0.0
  %1481 = vmatpush1.msra.mxu0 0.0
  %1482 = vmatprep.subr.mxu0 0.0
  %1483 = vmatpush1.msra.mxu0 0.0
  %1484 = vmatprep.subr.mxu0 0.0
  %1485 = vmatpush1.msra.mxu0 0.0
  %1486 = vmatprep.subr.mxu0 0.0
  %1487 = vmatpush1.msra.mxu0 0.0
  %1488 = vmatprep.subr.mxu0 0.0
  %1489 = vmatpush1.msra.mxu0 0.0
  %1490 = vmatprep.subr.mxu0 0.0
  %1491 = vmatpush1.msra.mxu0 0.0
  %1492 = vmatprep.subr.mxu0 0.0
  %1493 = vmatpush1.msra.mxu0 0.0
  %1494 = vmatprep.subr.mxu0 0.0
  %1495 = vmatpush1.msra.mxu0 0.0
  %1496 = vmatprep.subr.mxu0 0.0
  %1497 = vmatpush1.msra.mxu0 0.0
  %1498 = vmatprep.subr.mxu0 0.0
  %1499 = vmatpush1.msra.mxu0 0.0
  %1500 = vmatprep.subr.mxu0 0.0
  %1501 = vmatpush1.msra.mxu0 0.0
  %1502 = vmatprep.subr.mxu0 0.0
  %1503 = vmatpush1.msra.mxu0 0.0
  %1504 = vmatprep.mubr.f32.mxu0 0.0
  %1505 = vmatmul.mubr.f32.gmra.mrb[0].mxu0 %v1435
  %v1506 = vpop.f32.mrb[0].mxu0
  %v1507 = vadd.f32 0.0, %v1506
  %v1508 = vpop.f32.mrb[0].mxu0
  %1509 = vmatprep.mubr.f32.mxu0 0.0
  %1510 = vmatmul.mubr.f32.gmra.mrb[0].mxu0 %v1438
  %v1511 = vpop.f32.mrb[0].mxu0
  %v1512 = vadd.f32 0.0, %v1511
  %v1513 = vpop.f32.mrb[0].mxu0
  %1514 = vdwg.mxu0
  %v1515 = vmax.f32 %v1507, 0.0
  %v1516 = vmax.f32 %v1512, 0.0
  %s1517 = scalar_lea.vmem %s9, 2
  %v1518 = vld [vmem:[%s1517] sm:$0x1]
  %1527 = vrot.lane.b32.xlu0 %v1426, 64
  %v1528 = vpop.permute.xlu0 %1527
  %1529 = vrot.lane.b32.xlu0 %v1427, 64
  %v1530 = vpop.permute.xlu0 %1529
  %1531 = vrot.lane.b32.xlu0 %v1428, 64
  %v1532 = vpop.permute.xlu0 %1531
  %1533 = vrot.lane.b32.xlu0 %v1429, 64
  %v1534 = vpop.permute.xlu0 %1533
  %1535 = vrot.lane.b32.xlu0 %v1430, 64
  %v1536 = vpop.permute.xlu0 %1535
  %1537 = vrot.lane.b32.xlu0 %v1431, 64
  %v1538 = vpop.permute.xlu0 %1537
  %1539 = vrot.lane.b32.xlu0 %v1432, 64
  %v1540 = vpop.permute.xlu0 %1539
  %1541 = vrot.lane.b32.xlu0 %v1433, 64
  %v1542 = vpop.permute.xlu0 %1541
  %vm1551 = vcmask 523264
  %v1553 = vsel %vm1551, %v1515, 0
  %v1556 = vsel %vm1551, %v1516, 0
  %1558 = vmatprep.subr.mxu0 0.0
  %1559 = vmatpush1.msra.mxu0 %v1528
  %1560 = vmatprep.subr.mxu0 0.0
  %1561 = vmatpush1.msra.mxu0 %v1530
  %1562 = vmatprep.subr.mxu0 0.0
  %1563 = vmatpush1.msra.mxu0 %v1532
  %1564 = vmatprep.subr.mxu0 0.0
  %1565 = vmatpush1.msra.mxu0 %v1534
  %1566 = vmatprep.subr.mxu0 0.0
  %1567 = vmatpush1.msra.mxu0 %v1536
  %1568 = vmatprep.subr.mxu0 0.0
  %1569 = vmatpush1.msra.mxu0 %v1538
  %1570 = vmatprep.subr.mxu0 0.0
  %1571 = vmatpush1.msra.mxu0 %v1540
  %1572 = vmatprep.subr.mxu0 0.0
  %1573 = vmatpush1.msra.mxu0 %v1542
  %1574 = vmatprep.subr.mxu0 0.0
  %1575 = vmatpush1.msra.mxu0 0.0
  %1576 = vmatprep.subr.mxu0 0.0
  %1577 = vmatpush1.msra.mxu0 0.0
  %1578 = vmatprep.subr.mxu0 0.0
  %1579 = vmatpush1.msra.mxu0 0.0
  %1580 = vmatprep.subr.mxu0 0.0
  %1581 = vmatpush1.msra.mxu0 0.0
  %1582 = vmatprep.subr.mxu0 0.0
  %1583 = vmatpush1.msra.mxu0 0.0
  %1584 = vmatprep.subr.mxu0 0.0
  %1585 = vmatpush1.msra.mxu0 0.0
  %1586 = vmatprep.subr.mxu0 0.0
  %1587 = vmatpush1.msra.mxu0 0.0
  %1588 = vmatprep.subr.mxu0 0.0
  %1589 = vmatpush1.msra.mxu0 0.0
  %1590 = vmatprep.subr.mxu0 0.0
  %1591 = vmatpush1.msra.mxu0 0.0
  %1592 = vmatprep.subr.mxu0 0.0
  %1593 = vmatpush1.msra.mxu0 0.0
  %1594 = vmatprep.subr.mxu0 0.0
  %1595 = vmatpush1.msra.mxu0 0.0
  %1596 = vmatprep.subr.mxu0 0.0
  %1597 = vmatpush1.msra.mxu0 0.0
  %1598 = vmatprep.subr.mxu0 0.0
  %1599 = vmatpush1.msra.mxu0 0.0
  %1600 = vmatprep.subr.mxu0 0.0
  %1601 = vmatpush1.msra.mxu0 0.0
  %1602 = vmatprep.subr.mxu0 0.0
  %1603 = vmatpush1.msra.mxu0 0.0
  %1604 = vmatprep.subr.mxu0 0.0
  %1605 = vmatpush1.msra.mxu0 0.0
  %1606 = vmatprep.subr.mxu0 0.0
  %1607 = vmatpush1.msra.mxu0 0.0
  %1608 = vmatprep.subr.mxu0 0.0
  %1609 = vmatpush1.msra.mxu0 0.0
  %1610 = vmatprep.subr.mxu0 0.0
  %1611 = vmatpush1.msra.mxu0 0.0
  %1612 = vmatprep.subr.mxu0 0.0
  %1613 = vmatpush1.msra.mxu0 0.0
  %1614 = vmatprep.subr.mxu0 0.0
  %1615 = vmatpush1.msra.mxu0 0.0
  %1616 = vmatprep.subr.mxu0 0.0
  %1617 = vmatpush1.msra.mxu0 0.0
  %1618 = vmatprep.subr.mxu0 0.0
  %1619 = vmatpush1.msra.mxu0 0.0
  %1620 = vmatprep.subr.mxu0 0.0
  %1621 = vmatpush1.msra.mxu0 0.0
  %1622 = vmatprep.mubr.f32.mxu0 0.0
  %1623 = vmatmul.mubr.f32.gmra.mrb[0].mxu0 %v1553
  %v1624 = vpop.f32.mrb[0].mxu0
  %v1625 = vadd.f32 %v1424, %v1624
  %v1626 = vpop.f32.mrb[0].mxu0
  %1627 = vmatprep.mubr.f32.mxu0 0.0
  %1628 = vmatmul.mubr.f32.gmra.mrb[0].mxu0 %v1556
  %v1629 = vpop.f32.mrb[0].mxu0
  %v1630 = vadd.f32 %v1425, %v1629
  %v1631 = vpop.f32.mrb[0].mxu0
  %1632 = vdwg.mxu0
  %v1633 = vsel %vm146, %v1625, 0.0
  %1634 = vadd.xlane.f32.xlu0 %v1633
  %v1635 = vpop.xlane.xlu0 %1634
  %v1636 = vsel %vm146, %v1630, 0.0
  %1637 = vadd.xlane.f32.xlu0 %v1636
  %v1638 = vpop.xlane.xlu0 %1637
  %v1639 = vmul.f32 %v1635, %v1392
  %v1640 = vmul.f32 %v1638, %v1392
  %v1641 = vsub.f32 %v1625, %v1639
  %v1642 = vsub.f32 %v1630, %v1640
  %v1643 = vmul.f32 %v1641, %v1641
  %v1644 = vmul.f32 %v1642, %v1642
  %v1645 = vsel %vm146, %v1643, 0.0
  %1646 = vadd.xlane.f32.xlu0 %v1645
  %v1647 = vpop.xlane.xlu0 %1646
  %v1648 = vsel %vm146, %v1644, 0.0
  %1649 = vadd.xlane.f32.xlu0 %v1648
  %v1650 = vpop.xlane.xlu0 %1649
  %v1651 = vmul.f32 %v1647, %v1392
  %v1652 = vmul.f32 %v1650, %v1392
  %v1653 = vadd.f32 %v1651, 1e-05
  %v1654 = vadd.f32 %v1652, 1e-05
  %v1655 = vrsqrt.pop %v1653
  %v1656 = vrsqrt.pop %v1654
  %v1657 = vmul.f32 %v1641, %v1655
  %v1658 = vmul.f32 %v1642, %v1656
  %v1660 = vlaneseq
  %v1661 = vshrl.u32 %v1660, 7
  %v1662 = vsub.s32 0, %v1661
  %v1663 = vrot.slane %v1518, %v1662
  %v1665 = vmul.f32 %v1657, %v1663
  %v1666 = vmul.f32 %v1658, %v1663
  %1667 = vrot.lane.b32.xlu0 %v1663, 96
  %v1668 = vpop.permute.xlu0 %1667
  %v1670 = vadd.f32 %v1665, %v1668
  %v1671 = vadd.f32 %v1666, %v1668
  %s1672 = scalar_lea.vmem %s7, 32
  %v1673 = vld [vmem:[%s1672] sm:$0xff]
  %v1674 = vld [vmem:[%s1672 + $0x8] sm:$0xff]
  %v1675 = vld [vmem:[%s1672 + $0x10] sm:$0xff]
  %v1676 = vld [vmem:[%s1672 + $0x18] sm:$0xff]
  %v1678 = vsel %vm146, %v1670, 0
  %v1681 = vsel %vm146, %v1671, 0
  %1683 = vmatprep.subr.mxu0 0.0
  %1684 = vmatpush1.msra.mxu0 %v1673
  %1685 = vmatprep.subr.mxu0 0.0
  %1686 = vmatpush1.msra.mxu0 %v1674
  %1687 = vmatprep.subr.mxu0 0.0
  %1688 = vmatpush1.msra.mxu0 %v1675
  %1689 = vmatprep.subr.mxu0 0.0
  %1690 = vmatpush1.msra.mxu0 %v1676
  %1691 = vmatprep.subr.mxu0 0.0
  %1692 = vmatpush1.msra.mxu0 0.0
  %1693 = vmatprep.subr.mxu0 0.0
  %1694 = vmatpush1.msra.mxu0 0.0
  %1695 = vmatprep.subr.mxu0 0.0
  %1696 = vmatpush1.msra.mxu0 0.0
  %1697 = vmatprep.subr.mxu0 0.0
  %1698 = vmatpush1.msra.mxu0 0.0
  %1699 = vmatprep.subr.mxu0 0.0
  %1700 = vmatpush1.msra.mxu0 0.0
  %1701 = vmatprep.subr.mxu0 0.0
  %1702 = vmatpush1.msra.mxu0 0.0
  %1703 = vmatprep.subr.mxu0 0.0
  %1704 = vmatpush1.msra.mxu0 0.0
  %1705 = vmatprep.subr.mxu0 0.0
  %1706 = vmatpush1.msra.mxu0 0.0
  %1707 = vmatprep.subr.mxu0 0.0
  %1708 = vmatpush1.msra.mxu0 0.0
  %1709 = vmatprep.subr.mxu0 0.0
  %1710 = vmatpush1.msra.mxu0 0.0
  %1711 = vmatprep.subr.mxu0 0.0
  %1712 = vmatpush1.msra.mxu0 0.0
  %1713 = vmatprep.subr.mxu0 0.0
  %1714 = vmatpush1.msra.mxu0 0.0
  %1715 = vmatprep.subr.mxu0 0.0
  %1716 = vmatpush1.msra.mxu0 0.0
  %1717 = vmatprep.subr.mxu0 0.0
  %1718 = vmatpush1.msra.mxu0 0.0
  %1719 = vmatprep.subr.mxu0 0.0
  %1720 = vmatpush1.msra.mxu0 0.0
  %1721 = vmatprep.subr.mxu0 0.0
  %1722 = vmatpush1.msra.mxu0 0.0
  %1723 = vmatprep.subr.mxu0 0.0
  %1724 = vmatpush1.msra.mxu0 0.0
  %1725 = vmatprep.subr.mxu0 0.0
  %1726 = vmatpush1.msra.mxu0 0.0
  %1727 = vmatprep.subr.mxu0 0.0
  %1728 = vmatpush1.msra.mxu0 0.0
  %1729 = vmatprep.subr.mxu0 0.0
  %1730 = vmatpush1.msra.mxu0 0.0
  %1731 = vmatprep.subr.mxu0 0.0
  %1732 = vmatpush1.msra.mxu0 0.0
  %1733 = vmatprep.subr.mxu0 0.0
  %1734 = vmatpush1.msra.mxu0 0.0
  %1735 = vmatprep.subr.mxu0 0.0
  %1736 = vmatpush1.msra.mxu0 0.0
  %1737 = vmatprep.subr.mxu0 0.0
  %1738 = vmatpush1.msra.mxu0 0.0
  %1739 = vmatprep.subr.mxu0 0.0
  %1740 = vmatpush1.msra.mxu0 0.0
  %1741 = vmatprep.subr.mxu0 0.0
  %1742 = vmatpush1.msra.mxu0 0.0
  %1743 = vmatprep.subr.mxu0 0.0
  %1744 = vmatpush1.msra.mxu0 0.0
  %1745 = vmatprep.subr.mxu0 0.0
  %1746 = vmatpush1.msra.mxu0 0.0
  %1747 = vmatprep.mubr.f32.mxu0 0.0
  %1748 = vmatmul.mubr.f32.gmra.mrb[0].mxu0 %v1678
  %v1749 = vpop.f32.mrb[0].mxu0
  %v1750 = vadd.f32 0.0, %v1749
  %v1751 = vpop.f32.mrb[0].mxu0
  %1752 = vmatprep.mubr.f32.mxu0 0.0
  %1753 = vmatmul.mubr.f32.gmra.mrb[0].mxu0 %v1681
  %v1754 = vpop.f32.mrb[0].mxu0
  %v1755 = vadd.f32 0.0, %v1754
  %v1756 = vpop.f32.mrb[0].mxu0
  %1757 = vdwg.mxu0
  %1760 = vrot.lane.b32.xlu0 %v1750, 96
  %v1761 = vpop.permute.xlu0 %1760
  %1762 = vrot.lane.b32.xlu0 %v1755, 96
  %v1763 = vpop.permute.xlu0 %1762
  %v1764 = vsel %vm234, %v1750, 0
  %v1766 = vsel %vm234, %v1755, 0
  %v1768 = vsel %vm234, %v1761, 0
  %v1770 = vsel %vm234, %v1763, 0
  %1772 = vmatprep.subr.mxu0 0.0
  %1773 = vmatpush1.xpose.msra.mxu0 %v1768
  %1774 = vmatprep.subr.mxu0 0.0
  %1775 = vmatpush1.xpose.msra.mxu0 %v1770
  %1776 = vmatprep.subr.mxu0 0.0
  %1777 = vmatpush1.xpose.msra.mxu0 0.0
  %1778 = vmatprep.subr.mxu0 0.0
  %1779 = vmatpush1.xpose.msra.mxu0 0.0
  %1780 = vmatprep.subr.mxu0 0.0
  %1781 = vmatpush1.xpose.msra.mxu0 0.0
  %1782 = vmatprep.subr.mxu0 0.0
  %1783 = vmatpush1.xpose.msra.mxu0 0.0
  %1784 = vmatprep.subr.mxu0 0.0
  %1785 = vmatpush1.xpose.msra.mxu0 0.0
  %1786 = vmatprep.subr.mxu0 0.0
  %1787 = vmatpush1.xpose.msra.mxu0 0.0
  %1788 = vmatprep.subr.mxu0 0.0
  %1789 = vmatpush1.xpose.msra.mxu0 0.0
  %1790 = vmatprep.subr.mxu0 0.0
  %1791 = vmatpush1.xpose.msra.mxu0 0.0
  %1792 = vmatprep.subr.mxu0 0.0
  %1793 = vmatpush1.xpose.msra.mxu0 0.0
  %1794 = vmatprep.subr.mxu0 0.0
  %1795 = vmatpush1.xpose.msra.mxu0 0.0
  %1796 = vmatprep.subr.mxu0 0.0
  %1797 = vmatpush1.xpose.msra.mxu0 0.0
  %1798 = vmatprep.subr.mxu0 0.0
  %1799 = vmatpush1.xpose.msra.mxu0 0.0
  %1800 = vmatprep.subr.mxu0 0.0
  %1801 = vmatpush1.xpose.msra.mxu0 0.0
  %1802 = vmatprep.subr.mxu0 0.0
  %1803 = vmatpush1.xpose.msra.mxu0 0.0
  %1804 = vmatprep.subr.mxu0 0.0
  %1805 = vmatpush1.xpose.msra.mxu0 0.0
  %1806 = vmatprep.subr.mxu0 0.0
  %1807 = vmatpush1.xpose.msra.mxu0 0.0
  %1808 = vmatprep.subr.mxu0 0.0
  %1809 = vmatpush1.xpose.msra.mxu0 0.0
  %1810 = vmatprep.subr.mxu0 0.0
  %1811 = vmatpush1.xpose.msra.mxu0 0.0
  %1812 = vmatprep.subr.mxu0 0.0
  %1813 = vmatpush1.xpose.msra.mxu0 0.0
  %1814 = vmatprep.subr.mxu0 0.0
  %1815 = vmatpush1.xpose.msra.mxu0 0.0
  %1816 = vmatprep.subr.mxu0 0.0
  %1817 = vmatpush1.xpose.msra.mxu0 0.0
  %1818 = vmatprep.subr.mxu0 0.0
  %1819 = vmatpush1.xpose.msra.mxu0 0.0
  %1820 = vmatprep.subr.mxu0 0.0
  %1821 = vmatpush1.xpose.msra.mxu0 0.0
  %1822 = vmatprep.subr.mxu0 0.0
  %1823 = vmatpush1.xpose.msra.mxu0 0.0
  %1824 = vmatprep.subr.mxu0 0.0
  %1825 = vmatpush1.xpose.msra.mxu0 0.0
  %1826 = vmatprep.subr.mxu0 0.0
  %1827 = vmatpush1.xpose.msra.mxu0 0.0
  %1828 = vmatprep.subr.mxu0 0.0
  %1829 = vmatpush1.xpose.msra.mxu0 0.0
  %1830 = vmatprep.subr.mxu0 0.0
  %1831 = vmatpush1.xpose.msra.mxu0 0.0
  %1832 = vmatprep.subr.mxu0 0.0
  %1833 = vmatpush1.xpose.msra.mxu0 0.0
  %1834 = vmatprep.subr.mxu0 0.0
  %1835 = vmatpush1.xpose.msra.mxu0 0.0
  %1836 = vmatprep.mubr.f32.mxu0 0.0
  %1837 = vmatmul.mubr.f32.gmra.mrb[0].mxu0 %v1764
  %v1838 = vpop.f32.mrb[0].mxu0
  %v1839 = vadd.f32 %v140, %v1838
  %v1840 = vpop.f32.mrb[0].mxu0
  %1841 = vmatprep.mubr.f32.mxu0 0.0
  %1842 = vmatmul.mubr.f32.gmra.mrb[0].mxu0 %v1766
  %v1843 = vpop.f32.mrb[0].mxu0
  %v1844 = vadd.f32 %v141, %v1843
  %v1845 = vpop.f32.mrb[0].mxu0
  %1846 = vdwg.mxu0
  %v1847 = vsel %vm318, %v1839, -inf
  %1848 = vmax.xlane.f32.xlu0 %v1847
  %v1849 = vpop.xlane.xlu0 %1848
  %v1850 = vsel %vm318, %v1844, -inf
  %1851 = vmax.xlane.f32.xlu0 %v1850
  %v1852 = vpop.xlane.xlu0 %1851
  %v1853 = vsub.f32 %v1839, %v1849
  %v1854 = vsub.f32 %v1844, %v1852
  %v1855 = vmul.f32 %v1853, 1.442695
  %v1856 = vpow.pop %v1855
  %v1857 = vmul.f32 %v1854, 1.442695
  %v1858 = vpow.pop %v1857
  %v1859 = vsel %vm318, %v1856, 0.0
  %1860 = vadd.xlane.f32.xlu0 %v1859
  %v1861 = vpop.xlane.xlu0 %1860
  %v1862 = vsel %vm318, %v1858, 0.0
  %1863 = vadd.xlane.f32.xlu0 %v1862
  %v1864 = vpop.xlane.xlu0 %1863
  %v1865 = vrcp.pop %v1861
  %v1866 = vmul.f32 %v1856, %v1865
  %v1867 = vrcp.pop %v1864
  %v1868 = vmul.f32 %v1858, %v1867
  %s1869 = scalar_lea.vmem %s11, 64
  %1870 = vst.msk [vmem:[%s1869] sm:$0xff] %vm318, %v1866
  %1871 = vst.msk [vmem:[%s1869 + $0x8] sm:$0xff] %vm318, %v1868
  %1872 = vrot.lane.b32.xlu0 %v1750, 64
  %v1873 = vpop.permute.xlu0 %1872
  %1874 = vrot.lane.b32.xlu0 %v1755, 64
  %v1875 = vpop.permute.xlu0 %1874
  %v1879 = vsel %vm318, %v1866, 0
  %v1882 = vsel %vm318, %v1868, 0
  %1884 = vmatprep.subr.mxu0 0.0
  %1885 = vmatpush1.msra.mxu0 %v1873
  %1886 = vmatprep.subr.mxu0 0.0
  %1887 = vmatpush1.msra.mxu0 %v1875
  %1888 = vmatprep.subr.mxu0 0.0
  %1889 = vmatpush1.msra.mxu0 0.0
  %1890 = vmatprep.subr.mxu0 0.0
  %1891 = vmatpush1.msra.mxu0 0.0
  %1892 = vmatprep.subr.mxu0 0.0
  %1893 = vmatpush1.msra.mxu0 0.0
  %1894 = vmatprep.subr.mxu0 0.0
  %1895 = vmatpush1.msra.mxu0 0.0
  %1896 = vmatprep.subr.mxu0 0.0
  %1897 = vmatpush1.msra.mxu0 0.0
  %1898 = vmatprep.subr.mxu0 0.0
  %1899 = vmatpush1.msra.mxu0 0.0
  %1900 = vmatprep.subr.mxu0 0.0
  %1901 = vmatpush1.msra.mxu0 0.0
  %1902 = vmatprep.subr.mxu0 0.0
  %1903 = vmatpush1.msra.mxu0 0.0
  %1904 = vmatprep.subr.mxu0 0.0
  %1905 = vmatpush1.msra.mxu0 0.0
  %1906 = vmatprep.subr.mxu0 0.0
  %1907 = vmatpush1.msra.mxu0 0.0
  %1908 = vmatprep.subr.mxu0 0.0
  %1909 = vmatpush1.msra.mxu0 0.0
  %1910 = vmatprep.subr.mxu0 0.0
  %1911 = vmatpush1.msra.mxu0 0.0
  %1912 = vmatprep.subr.mxu0 0.0
  %1913 = vmatpush1.msra.mxu0 0.0
  %1914 = vmatprep.subr.mxu0 0.0
  %1915 = vmatpush1.msra.mxu0 0.0
  %1916 = vmatprep.subr.mxu0 0.0
  %1917 = vmatpush1.msra.mxu0 0.0
  %1918 = vmatprep.subr.mxu0 0.0
  %1919 = vmatpush1.msra.mxu0 0.0
  %1920 = vmatprep.subr.mxu0 0.0
  %1921 = vmatpush1.msra.mxu0 0.0
  %1922 = vmatprep.subr.mxu0 0.0
  %1923 = vmatpush1.msra.mxu0 0.0
  %1924 = vmatprep.subr.mxu0 0.0
  %1925 = vmatpush1.msra.mxu0 0.0
  %1926 = vmatprep.subr.mxu0 0.0
  %1927 = vmatpush1.msra.mxu0 0.0
  %1928 = vmatprep.subr.mxu0 0.0
  %1929 = vmatpush1.msra.mxu0 0.0
  %1930 = vmatprep.subr.mxu0 0.0
  %1931 = vmatpush1.msra.mxu0 0.0
  %1932 = vmatprep.subr.mxu0 0.0
  %1933 = vmatpush1.msra.mxu0 0.0
  %1934 = vmatprep.subr.mxu0 0.0
  %1935 = vmatpush1.msra.mxu0 0.0
  %1936 = vmatprep.subr.mxu0 0.0
  %1937 = vmatpush1.msra.mxu0 0.0
  %1938 = vmatprep.subr.mxu0 0.0
  %1939 = vmatpush1.msra.mxu0 0.0
  %1940 = vmatprep.subr.mxu0 0.0
  %1941 = vmatpush1.msra.mxu0 0.0
  %1942 = vmatprep.subr.mxu0 0.0
  %1943 = vmatpush1.msra.mxu0 0.0
  %1944 = vmatprep.subr.mxu0 0.0
  %1945 = vmatpush1.msra.mxu0 0.0
  %1946 = vmatprep.subr.mxu0 0.0
  %1947 = vmatpush1.msra.mxu0 0.0
  %1948 = vmatprep.mubr.f32.mxu0 0.0
  %1949 = vmatmul.mubr.f32.gmra.mrb[0].mxu0 %v1879
  %v1950 = vpop.f32.mrb[0].mxu0
  %v1951 = vadd.f32 0.0, %v1950
  %v1952 = vpop.f32.mrb[0].mxu0
  %1953 = vmatprep.mubr.f32.mxu0 0.0
  %1954 = vmatmul.mubr.f32.gmra.mrb[0].mxu0 %v1882
  %v1955 = vpop.f32.mrb[0].mxu0
  %v1956 = vadd.f32 0.0, %v1955
  %v1957 = vpop.f32.mrb[0].mxu0
  %1958 = vdwg.mxu0
  %1959 = vrot.lane.b32.xlu0 %v1750, 120
  %v1960 = vpop.permute.xlu0 %1959
  %1961 = vrot.lane.b32.xlu0 %v1755, 120
  %v1962 = vpop.permute.xlu0 %1961
  %1963 = vrot.lane.b32.xlu0 %v1750, 88
  %v1964 = vpop.permute.xlu0 %1963
  %1965 = vrot.lane.b32.xlu0 %v1755, 88
  %v1966 = vpop.permute.xlu0 %1965
  %v1967 = vsel %vm234, %v1960, 0
  %v1969 = vsel %vm234, %v1962, 0
  %v1971 = vsel %vm234, %v1964, 0
  %v1973 = vsel %vm234, %v1966, 0
  %1975 = vmatprep.subr.mxu0 0.0
  %1976 = vmatpush1.xpose.msra.mxu0 %v1971
  %1977 = vmatprep.subr.mxu0 0.0
  %1978 = vmatpush1.xpose.msra.mxu0 %v1973
  %1979 = vmatprep.subr.mxu0 0.0
  %1980 = vmatpush1.xpose.msra.mxu0 0.0
  %1981 = vmatprep.subr.mxu0 0.0
  %1982 = vmatpush1.xpose.msra.mxu0 0.0
  %1983 = vmatprep.subr.mxu0 0.0
  %1984 = vmatpush1.xpose.msra.mxu0 0.0
  %1985 = vmatprep.subr.mxu0 0.0
  %1986 = vmatpush1.xpose.msra.mxu0 0.0
  %1987 = vmatprep.subr.mxu0 0.0
  %1988 = vmatpush1.xpose.msra.mxu0 0.0
  %1989 = vmatprep.subr.mxu0 0.0
  %1990 = vmatpush1.xpose.msra.mxu0 0.0
  %1991 = vmatprep.subr.mxu0 0.0
  %1992 = vmatpush1.xpose.msra.mxu0 0.0
  %1993 = vmatprep.subr.mxu0 0.0
  %1994 = vmatpush1.xpose.msra.mxu0 0.0
  %1995 = vmatprep.subr.mxu0 0.0
  %1996 = vmatpush1.xpose.msra.mxu0 0.0
  %1997 = vmatprep.subr.mxu0 0.0
  %1998 = vmatpush1.xpose.msra.mxu0 0.0
  %1999 = vmatprep.subr.mxu0 0.0
  %2000 = vmatpush1.xpose.msra.mxu0 0.0
  %2001 = vmatprep.subr.mxu0 0.0
  %2002 = vmatpush1.xpose.msra.mxu0 0.0
  %2003 = vmatprep.subr.mxu0 0.0
  %2004 = vmatpush1.xpose.msra.mxu0 0.0
  %2005 = vmatprep.subr.mxu0 0.0
  %2006 = vmatpush1.xpose.msra.mxu0 0.0
  %2007 = vmatprep.subr.mxu0 0.0
  %2008 = vmatpush1.xpose.msra.mxu0 0.0
  %2009 = vmatprep.subr.mxu0 0.0
  %2010 = vmatpush1.xpose.msra.mxu0 0.0
  %2011 = vmatprep.subr.mxu0 0.0
  %2012 = vmatpush1.xpose.msra.mxu0 0.0
  %2013 = vmatprep.subr.mxu0 0.0
  %2014 = vmatpush1.xpose.msra.mxu0 0.0
  %2015 = vmatprep.subr.mxu0 0.0
  %2016 = vmatpush1.xpose.msra.mxu0 0.0
  %2017 = vmatprep.subr.mxu0 0.0
  %2018 = vmatpush1.xpose.msra.mxu0 0.0
  %2019 = vmatprep.subr.mxu0 0.0
  %2020 = vmatpush1.xpose.msra.mxu0 0.0
  %2021 = vmatprep.subr.mxu0 0.0
  %2022 = vmatpush1.xpose.msra.mxu0 0.0
  %2023 = vmatprep.subr.mxu0 0.0
  %2024 = vmatpush1.xpose.msra.mxu0 0.0
  %2025 = vmatprep.subr.mxu0 0.0
  %2026 = vmatpush1.xpose.msra.mxu0 0.0
  %2027 = vmatprep.subr.mxu0 0.0
  %2028 = vmatpush1.xpose.msra.mxu0 0.0
  %2029 = vmatprep.subr.mxu0 0.0
  %2030 = vmatpush1.xpose.msra.mxu0 0.0
  %2031 = vmatprep.subr.mxu0 0.0
  %2032 = vmatpush1.xpose.msra.mxu0 0.0
  %2033 = vmatprep.subr.mxu0 0.0
  %2034 = vmatpush1.xpose.msra.mxu0 0.0
  %2035 = vmatprep.subr.mxu0 0.0
  %2036 = vmatpush1.xpose.msra.mxu0 0.0
  %2037 = vmatprep.subr.mxu0 0.0
  %2038 = vmatpush1.xpose.msra.mxu0 0.0
  %2039 = vmatprep.mubr.f32.mxu0 0.0
  %2040 = vmatmul.mubr.f32.gmra.mrb[0].mxu0 %v1967
  %v2041 = vpop.f32.mrb[0].mxu0
  %v2042 = vadd.f32 %v140, %v2041
  %v2043 = vpop.f32.mrb[0].mxu0
  %2044 = vmatprep.mubr.f32.mxu0 0.0
  %2045 = vmatmul.mubr.f32.gmra.mrb[0].mxu0 %v1969
  %v2046 = vpop.f32.mrb[0].mxu0
  %v2047 = vadd.f32 %v141, %v2046
  %v2048 = vpop.f32.mrb[0].mxu0
  %2049 = vdwg.mxu0
  %v2050 = vsel %vm318, %v2042, -inf
  %2051 = vmax.xlane.f32.xlu0 %v2050
  %v2052 = vpop.xlane.xlu0 %2051
  %v2053 = vsel %vm318, %v2047, -inf
  %2054 = vmax.xlane.f32.xlu0 %v2053
  %v2055 = vpop.xlane.xlu0 %2054
  %v2056 = vsub.f32 %v2042, %v2052
  %v2057 = vsub.f32 %v2047, %v2055
  %v2058 = vmul.f32 %v2056, 1.442695
  %v2059 = vpow.pop %v2058
  %v2060 = vmul.f32 %v2057, 1.442695
  %v2061 = vpow.pop %v2060
  %v2062 = vsel %vm318, %v2059, 0.0
  %2063 = vadd.xlane.f32.xlu0 %v2062
  %v2064 = vpop.xlane.xlu0 %2063
  %v2065 = vsel %vm318, %v2061, 0.0
  %2066 = vadd.xlane.f32.xlu0 %v2065
  %v2067 = vpop.xlane.xlu0 %2066
  %v2068 = vrcp.pop %v2064
  %v2069 = vmul.f32 %v2059, %v2068
  %v2070 = vrcp.pop %v2067
  %v2071 = vmul.f32 %v2061, %v2070
  %s2072 = scalar_lea.vmem %s11, 80
  %2073 = vst.msk [vmem:[%s2072] sm:$0xff] %vm318, %v2069
  %2074 = vst.msk [vmem:[%s2072 + $0x8] sm:$0xff] %vm318, %v2071
  %2075 = vrot.lane.b32.xlu0 %v1750, 56
  %v2076 = vpop.permute.xlu0 %2075
  %2077 = vrot.lane.b32.xlu0 %v1755, 56
  %v2078 = vpop.permute.xlu0 %2077
  %v2082 = vsel %vm318, %v2069, 0
  %v2085 = vsel %vm318, %v2071, 0
  %2087 = vmatprep.subr.mxu0 0.0
  %2088 = vmatpush1.msra.mxu0 %v2076
  %2089 = vmatprep.subr.mxu0 0.0
  %2090 = vmatpush1.msra.mxu0 %v2078
  %2091 = vmatprep.subr.mxu0 0.0
  %2092 = vmatpush1.msra.mxu0 0.0
  %2093 = vmatprep.subr.mxu0 0.0
  %2094 = vmatpush1.msra.mxu0 0.0
  %2095 = vmatprep.subr.mxu0 0.0
  %2096 = vmatpush1.msra.mxu0 0.0
  %2097 = vmatprep.subr.mxu0 0.0
  %2098 = vmatpush1.msra.mxu0 0.0
  %2099 = vmatprep.subr.mxu0 0.0
  %2100 = vmatpush1.msra.mxu0 0.0
  %2101 = vmatprep.subr.mxu0 0.0
  %2102 = vmatpush1.msra.mxu0 0.0
  %2103 = vmatprep.subr.mxu0 0.0
  %2104 = vmatpush1.msra.mxu0 0.0
  %2105 = vmatprep.subr.mxu0 0.0
  %2106 = vmatpush1.msra.mxu0 0.0
  %2107 = vmatprep.subr.mxu0 0.0
  %2108 = vmatpush1.msra.mxu0 0.0
  %2109 = vmatprep.subr.mxu0 0.0
  %2110 = vmatpush1.msra.mxu0 0.0
  %2111 = vmatprep.subr.mxu0 0.0
  %2112 = vmatpush1.msra.mxu0 0.0
  %2113 = vmatprep.subr.mxu0 0.0
  %2114 = vmatpush1.msra.mxu0 0.0
  %2115 = vmatprep.subr.mxu0 0.0
  %2116 = vmatpush1.msra.mxu0 0.0
  %2117 = vmatprep.subr.mxu0 0.0
  %2118 = vmatpush1.msra.mxu0 0.0
  %2119 = vmatprep.subr.mxu0 0.0
  %2120 = vmatpush1.msra.mxu0 0.0
  %2121 = vmatprep.subr.mxu0 0.0
  %2122 = vmatpush1.msra.mxu0 0.0
  %2123 = vmatprep.subr.mxu0 0.0
  %2124 = vmatpush1.msra.mxu0 0.0
  %2125 = vmatprep.subr.mxu0 0.0
  %2126 = vmatpush1.msra.mxu0 0.0
  %2127 = vmatprep.subr.mxu0 0.0
  %2128 = vmatpush1.msra.mxu0 0.0
  %2129 = vmatprep.subr.mxu0 0.0
  %2130 = vmatpush1.msra.mxu0 0.0
  %2131 = vmatprep.subr.mxu0 0.0
  %2132 = vmatpush1.msra.mxu0 0.0
  %2133 = vmatprep.subr.mxu0 0.0
  %2134 = vmatpush1.msra.mxu0 0.0
  %2135 = vmatprep.subr.mxu0 0.0
  %2136 = vmatpush1.msra.mxu0 0.0
  %2137 = vmatprep.subr.mxu0 0.0
  %2138 = vmatpush1.msra.mxu0 0.0
  %2139 = vmatprep.subr.mxu0 0.0
  %2140 = vmatpush1.msra.mxu0 0.0
  %2141 = vmatprep.subr.mxu0 0.0
  %2142 = vmatpush1.msra.mxu0 0.0
  %2143 = vmatprep.subr.mxu0 0.0
  %2144 = vmatpush1.msra.mxu0 0.0
  %2145 = vmatprep.subr.mxu0 0.0
  %2146 = vmatpush1.msra.mxu0 0.0
  %2147 = vmatprep.subr.mxu0 0.0
  %2148 = vmatpush1.msra.mxu0 0.0
  %2149 = vmatprep.subr.mxu0 0.0
  %2150 = vmatpush1.msra.mxu0 0.0
  %2151 = vmatprep.mubr.f32.mxu0 0.0
  %2152 = vmatmul.mubr.f32.gmra.mrb[0].mxu0 %v2082
  %v2153 = vpop.f32.mrb[0].mxu0
  %v2154 = vadd.f32 0.0, %v2153
  %v2155 = vpop.f32.mrb[0].mxu0
  %2156 = vmatprep.mubr.f32.mxu0 0.0
  %2157 = vmatmul.mubr.f32.gmra.mrb[0].mxu0 %v2085
  %v2158 = vpop.f32.mrb[0].mxu0
  %v2159 = vadd.f32 0.0, %v2158
  %v2160 = vpop.f32.mrb[0].mxu0
  %2161 = vdwg.mxu0
  %2163 = vrot.lane.b32.xlu0 %v1674, 32
  %v2164 = vpop.permute.xlu0 %2163
  %v2167 = vsel %vm234, %v2154, 0
  %v2170 = vsel %vm234, %v2159, 0
  %2172 = vmatprep.subr.mxu0 0.0
  %2173 = vmatpush1.msra.mxu0 %v2164
  %2174 = vmatprep.subr.mxu0 0.0
  %2175 = vmatpush1.msra.mxu0 0.0
  %2176 = vmatprep.subr.mxu0 0.0
  %2177 = vmatpush1.msra.mxu0 0.0
  %2178 = vmatprep.subr.mxu0 0.0
  %2179 = vmatpush1.msra.mxu0 0.0
  %2180 = vmatprep.subr.mxu0 0.0
  %2181 = vmatpush1.msra.mxu0 0.0
  %2182 = vmatprep.subr.mxu0 0.0
  %2183 = vmatpush1.msra.mxu0 0.0
  %2184 = vmatprep.subr.mxu0 0.0
  %2185 = vmatpush1.msra.mxu0 0.0
  %2186 = vmatprep.subr.mxu0 0.0
  %2187 = vmatpush1.msra.mxu0 0.0
  %2188 = vmatprep.subr.mxu0 0.0
  %2189 = vmatpush1.msra.mxu0 0.0
  %2190 = vmatprep.subr.mxu0 0.0
  %2191 = vmatpush1.msra.mxu0 0.0
  %2192 = vmatprep.subr.mxu0 0.0
  %2193 = vmatpush1.msra.mxu0 0.0
  %2194 = vmatprep.subr.mxu0 0.0
  %2195 = vmatpush1.msra.mxu0 0.0
  %2196 = vmatprep.subr.mxu0 0.0
  %2197 = vmatpush1.msra.mxu0 0.0
  %2198 = vmatprep.subr.mxu0 0.0
  %2199 = vmatpush1.msra.mxu0 0.0
  %2200 = vmatprep.subr.mxu0 0.0
  %2201 = vmatpush1.msra.mxu0 0.0
  %2202 = vmatprep.subr.mxu0 0.0
  %2203 = vmatpush1.msra.mxu0 0.0
  %2204 = vmatprep.subr.mxu0 0.0
  %2205 = vmatpush1.msra.mxu0 0.0
  %2206 = vmatprep.subr.mxu0 0.0
  %2207 = vmatpush1.msra.mxu0 0.0
  %2208 = vmatprep.subr.mxu0 0.0
  %2209 = vmatpush1.msra.mxu0 0.0
  %2210 = vmatprep.subr.mxu0 0.0
  %2211 = vmatpush1.msra.mxu0 0.0
  %2212 = vmatprep.subr.mxu0 0.0
  %2213 = vmatpush1.msra.mxu0 0.0
  %2214 = vmatprep.subr.mxu0 0.0
  %2215 = vmatpush1.msra.mxu0 0.0
  %2216 = vmatprep.subr.mxu0 0.0
  %2217 = vmatpush1.msra.mxu0 0.0
  %2218 = vmatprep.subr.mxu0 0.0
  %2219 = vmatpush1.msra.mxu0 0.0
  %2220 = vmatprep.subr.mxu0 0.0
  %2221 = vmatpush1.msra.mxu0 0.0
  %2222 = vmatprep.subr.mxu0 0.0
  %2223 = vmatpush1.msra.mxu0 0.0
  %2224 = vmatprep.subr.mxu0 0.0
  %2225 = vmatpush1.msra.mxu0 0.0
  %2226 = vmatprep.subr.mxu0 0.0
  %2227 = vmatpush1.msra.mxu0 0.0
  %2228 = vmatprep.subr.mxu0 0.0
  %2229 = vmatpush1.msra.mxu0 0.0
  %2230 = vmatprep.subr.mxu0 0.0
  %2231 = vmatpush1.msra.mxu0 0.0
  %2232 = vmatprep.subr.mxu0 0.0
  %2233 = vmatpush1.msra.mxu0 0.0
  %2234 = vmatprep.subr.mxu0 0.0
  %2235 = vmatpush1.msra.mxu0 0.0
  %2236 = vmatprep.mubr.f32.mxu0 0.0
  %2237 = vmatmul.mubr.f32.gmra.mrb[0].mxu0 %v2167
  %v2238 = vpop.f32.mrb[0].mxu0
  %v2239 = vadd.f32 0.0, %v2238
  %v2240 = vpop.f32.mrb[0].mxu0
  %2241 = vmatprep.mubr.f32.mxu0 0.0
  %2242 = vmatmul.mubr.f32.gmra.mrb[0].mxu0 %v2170
  %v2243 = vpop.f32.mrb[0].mxu0
  %v2244 = vadd.f32 0.0, %v2243
  %v2245 = vpop.f32.mrb[0].mxu0
  %2246 = vdwg.mxu0
  %2248 = vrot.lane.b32.xlu0 %v1673, 32
  %v2249 = vpop.permute.xlu0 %2248
  %v2252 = vsel %vm234, %v1951, 0
  %v2255 = vsel %vm234, %v1956, 0
  %2257 = vmatprep.subr.mxu0 0.0
  %2258 = vmatpush1.msra.mxu0 %v2249
  %2259 = vmatprep.subr.mxu0 0.0
  %2260 = vmatpush1.msra.mxu0 0.0
  %2261 = vmatprep.subr.mxu0 0.0
  %2262 = vmatpush1.msra.mxu0 0.0
  %2263 = vmatprep.subr.mxu0 0.0
  %2264 = vmatpush1.msra.mxu0 0.0
  %2265 = vmatprep.subr.mxu0 0.0
  %2266 = vmatpush1.msra.mxu0 0.0
  %2267 = vmatprep.subr.mxu0 0.0
  %2268 = vmatpush1.msra.mxu0 0.0
  %2269 = vmatprep.subr.mxu0 0.0
  %2270 = vmatpush1.msra.mxu0 0.0
  %2271 = vmatprep.subr.mxu0 0.0
  %2272 = vmatpush1.msra.mxu0 0.0
  %2273 = vmatprep.subr.mxu0 0.0
  %2274 = vmatpush1.msra.mxu0 0.0
  %2275 = vmatprep.subr.mxu0 0.0
  %2276 = vmatpush1.msra.mxu0 0.0
  %2277 = vmatprep.subr.mxu0 0.0
  %2278 = vmatpush1.msra.mxu0 0.0
  %2279 = vmatprep.subr.mxu0 0.0
  %2280 = vmatpush1.msra.mxu0 0.0
  %2281 = vmatprep.subr.mxu0 0.0
  %2282 = vmatpush1.msra.mxu0 0.0
  %2283 = vmatprep.subr.mxu0 0.0
  %2284 = vmatpush1.msra.mxu0 0.0
  %2285 = vmatprep.subr.mxu0 0.0
  %2286 = vmatpush1.msra.mxu0 0.0
  %2287 = vmatprep.subr.mxu0 0.0
  %2288 = vmatpush1.msra.mxu0 0.0
  %2289 = vmatprep.subr.mxu0 0.0
  %2290 = vmatpush1.msra.mxu0 0.0
  %2291 = vmatprep.subr.mxu0 0.0
  %2292 = vmatpush1.msra.mxu0 0.0
  %2293 = vmatprep.subr.mxu0 0.0
  %2294 = vmatpush1.msra.mxu0 0.0
  %2295 = vmatprep.subr.mxu0 0.0
  %2296 = vmatpush1.msra.mxu0 0.0
  %2297 = vmatprep.subr.mxu0 0.0
  %2298 = vmatpush1.msra.mxu0 0.0
  %2299 = vmatprep.subr.mxu0 0.0
  %2300 = vmatpush1.msra.mxu0 0.0
  %2301 = vmatprep.subr.mxu0 0.0
  %2302 = vmatpush1.msra.mxu0 0.0
  %2303 = vmatprep.subr.mxu0 0.0
  %2304 = vmatpush1.msra.mxu0 0.0
  %2305 = vmatprep.subr.mxu0 0.0
  %2306 = vmatpush1.msra.mxu0 0.0
  %2307 = vmatprep.subr.mxu0 0.0
  %2308 = vmatpush1.msra.mxu0 0.0
  %2309 = vmatprep.subr.mxu0 0.0
  %2310 = vmatpush1.msra.mxu0 0.0
  %2311 = vmatprep.subr.mxu0 0.0
  %2312 = vmatpush1.msra.mxu0 0.0
  %2313 = vmatprep.subr.mxu0 0.0
  %2314 = vmatpush1.msra.mxu0 0.0
  %2315 = vmatprep.subr.mxu0 0.0
  %2316 = vmatpush1.msra.mxu0 0.0
  %2317 = vmatprep.subr.mxu0 0.0
  %2318 = vmatpush1.msra.mxu0 0.0
  %2319 = vmatprep.subr.mxu0 0.0
  %2320 = vmatpush1.msra.mxu0 0.0
  %2321 = vmatprep.mubr.f32.mxu0 0.0
  %2322 = vmatmul.mubr.f32.gmra.mrb[0].mxu0 %v2252
  %v2323 = vpop.f32.mrb[0].mxu0
  %v2324 = vadd.f32 %v2239, %v2323
  %v2325 = vpop.f32.mrb[0].mxu0
  %2326 = vmatprep.mubr.f32.mxu0 0.0
  %2327 = vmatmul.mubr.f32.gmra.mrb[0].mxu0 %v2255
  %v2328 = vpop.f32.mrb[0].mxu0
  %v2329 = vadd.f32 %v2244, %v2328
  %v2330 = vpop.f32.mrb[0].mxu0
  %2331 = vdwg.mxu0
  %2332 = vrot.lane.b32.xlu0 %v1750, 112
  %v2333 = vpop.permute.xlu0 %2332
  %2334 = vrot.lane.b32.xlu0 %v1755, 112
  %v2335 = vpop.permute.xlu0 %2334
  %2336 = vrot.lane.b32.xlu0 %v1750, 80
  %v2337 = vpop.permute.xlu0 %2336
  %2338 = vrot.lane.b32.xlu0 %v1755, 80
  %v2339 = vpop.permute.xlu0 %2338
  %v2340 = vsel %vm234, %v2333, 0
  %v2342 = vsel %vm234, %v2335, 0
  %v2344 = vsel %vm234, %v2337, 0
  %v2346 = vsel %vm234, %v2339, 0
  %2348 = vmatprep.subr.mxu0 0.0
  %2349 = vmatpush1.xpose.msra.mxu0 %v2344
  %2350 = vmatprep.subr.mxu0 0.0
  %2351 = vmatpush1.xpose.msra.mxu0 %v2346
  %2352 = vmatprep.subr.mxu0 0.0
  %2353 = vmatpush1.xpose.msra.mxu0 0.0
  %2354 = vmatprep.subr.mxu0 0.0
  %2355 = vmatpush1.xpose.msra.mxu0 0.0
  %2356 = vmatprep.subr.mxu0 0.0
  %2357 = vmatpush1.xpose.msra.mxu0 0.0
  %2358 = vmatprep.subr.mxu0 0.0
  %2359 = vmatpush1.xpose.msra.mxu0 0.0
  %2360 = vmatprep.subr.mxu0 0.0
  %2361 = vmatpush1.xpose.msra.mxu0 0.0
  %2362 = vmatprep.subr.mxu0 0.0
  %2363 = vmatpush1.xpose.msra.mxu0 0.0
  %2364 = vmatprep.subr.mxu0 0.0
  %2365 = vmatpush1.xpose.msra.mxu0 0.0
  %2366 = vmatprep.subr.mxu0 0.0
  %2367 = vmatpush1.xpose.msra.mxu0 0.0
  %2368 = vmatprep.subr.mxu0 0.0
  %2369 = vmatpush1.xpose.msra.mxu0 0.0
  %2370 = vmatprep.subr.mxu0 0.0
  %2371 = vmatpush1.xpose.msra.mxu0 0.0
  %2372 = vmatprep.subr.mxu0 0.0
  %2373 = vmatpush1.xpose.msra.mxu0 0.0
  %2374 = vmatprep.subr.mxu0 0.0
  %2375 = vmatpush1.xpose.msra.mxu0 0.0
  %2376 = vmatprep.subr.mxu0 0.0
  %2377 = vmatpush1.xpose.msra.mxu0 0.0
  %2378 = vmatprep.subr.mxu0 0.0
  %2379 = vmatpush1.xpose.msra.mxu0 0.0
  %2380 = vmatprep.subr.mxu0 0.0
  %2381 = vmatpush1.xpose.msra.mxu0 0.0
  %2382 = vmatprep.subr.mxu0 0.0
  %2383 = vmatpush1.xpose.msra.mxu0 0.0
  %2384 = vmatprep.subr.mxu0 0.0
  %2385 = vmatpush1.xpose.msra.mxu0 0.0
  %2386 = vmatprep.subr.mxu0 0.0
  %2387 = vmatpush1.xpose.msra.mxu0 0.0
  %2388 = vmatprep.subr.mxu0 0.0
  %2389 = vmatpush1.xpose.msra.mxu0 0.0
  %2390 = vmatprep.subr.mxu0 0.0
  %2391 = vmatpush1.xpose.msra.mxu0 0.0
  %2392 = vmatprep.subr.mxu0 0.0
  %2393 = vmatpush1.xpose.msra.mxu0 0.0
  %2394 = vmatprep.subr.mxu0 0.0
  %2395 = vmatpush1.xpose.msra.mxu0 0.0
  %2396 = vmatprep.subr.mxu0 0.0
  %2397 = vmatpush1.xpose.msra.mxu0 0.0
  %2398 = vmatprep.subr.mxu0 0.0
  %2399 = vmatpush1.xpose.msra.mxu0 0.0
  %2400 = vmatprep.subr.mxu0 0.0
  %2401 = vmatpush1.xpose.msra.mxu0 0.0
  %2402 = vmatprep.subr.mxu0 0.0
  %2403 = vmatpush1.xpose.msra.mxu0 0.0
  %2404 = vmatprep.subr.mxu0 0.0
  %2405 = vmatpush1.xpose.msra.mxu0 0.0
  %2406 = vmatprep.subr.mxu0 0.0
  %2407 = vmatpush1.xpose.msra.mxu0 0.0
  %2408 = vmatprep.subr.mxu0 0.0
  %2409 = vmatpush1.xpose.msra.mxu0 0.0
  %2410 = vmatprep.subr.mxu0 0.0
  %2411 = vmatpush1.xpose.msra.mxu0 0.0
  %2412 = vmatprep.mubr.f32.mxu0 0.0
  %2413 = vmatmul.mubr.f32.gmra.mrb[0].mxu0 %v2340
  %v2414 = vpop.f32.mrb[0].mxu0
  %v2415 = vadd.f32 %v140, %v2414
  %v2416 = vpop.f32.mrb[0].mxu0
  %2417 = vmatprep.mubr.f32.mxu0 0.0
  %2418 = vmatmul.mubr.f32.gmra.mrb[0].mxu0 %v2342
  %v2419 = vpop.f32.mrb[0].mxu0
  %v2420 = vadd.f32 %v141, %v2419
  %v2421 = vpop.f32.mrb[0].mxu0
  %2422 = vdwg.mxu0
  %v2423 = vsel %vm318, %v2415, -inf
  %2424 = vmax.xlane.f32.xlu0 %v2423
  %v2425 = vpop.xlane.xlu0 %2424
  %v2426 = vsel %vm318, %v2420, -inf
  %2427 = vmax.xlane.f32.xlu0 %v2426
  %v2428 = vpop.xlane.xlu0 %2427
  %v2429 = vsub.f32 %v2415, %v2425
  %v2430 = vsub.f32 %v2420, %v2428
  %v2431 = vmul.f32 %v2429, 1.442695
  %v2432 = vpow.pop %v2431
  %v2433 = vmul.f32 %v2430, 1.442695
  %v2434 = vpow.pop %v2433
  %v2435 = vsel %vm318, %v2432, 0.0
  %2436 = vadd.xlane.f32.xlu0 %v2435
  %v2437 = vpop.xlane.xlu0 %2436
  %v2438 = vsel %vm318, %v2434, 0.0
  %2439 = vadd.xlane.f32.xlu0 %v2438
  %v2440 = vpop.xlane.xlu0 %2439
  %v2441 = vrcp.pop %v2437
  %v2442 = vmul.f32 %v2432, %v2441
  %v2443 = vrcp.pop %v2440
  %v2444 = vmul.f32 %v2434, %v2443
  %s2445 = scalar_lea.vmem %s11, 96
  %2446 = vst.msk [vmem:[%s2445] sm:$0xff] %vm318, %v2442
  %2447 = vst.msk [vmem:[%s2445 + $0x8] sm:$0xff] %vm318, %v2444
  %2448 = vrot.lane.b32.xlu0 %v1750, 48
  %v2449 = vpop.permute.xlu0 %2448
  %2450 = vrot.lane.b32.xlu0 %v1755, 48
  %v2451 = vpop.permute.xlu0 %2450
  %v2455 = vsel %vm318, %v2442, 0
  %v2458 = vsel %vm318, %v2444, 0
  %2460 = vmatprep.subr.mxu0 0.0
  %2461 = vmatpush1.msra.mxu0 %v2449
  %2462 = vmatprep.subr.mxu0 0.0
  %2463 = vmatpush1.msra.mxu0 %v2451
  %2464 = vmatprep.subr.mxu0 0.0
  %2465 = vmatpush1.msra.mxu0 0.0
  %2466 = vmatprep.subr.mxu0 0.0
  %2467 = vmatpush1.msra.mxu0 0.0
  %2468 = vmatprep.subr.mxu0 0.0
  %2469 = vmatpush1.msra.mxu0 0.0
  %2470 = vmatprep.subr.mxu0 0.0
  %2471 = vmatpush1.msra.mxu0 0.0
  %2472 = vmatprep.subr.mxu0 0.0
  %2473 = vmatpush1.msra.mxu0 0.0
  %2474 = vmatprep.subr.mxu0 0.0
  %2475 = vmatpush1.msra.mxu0 0.0
  %2476 = vmatprep.subr.mxu0 0.0
  %2477 = vmatpush1.msra.mxu0 0.0
  %2478 = vmatprep.subr.mxu0 0.0
  %2479 = vmatpush1.msra.mxu0 0.0
  %2480 = vmatprep.subr.mxu0 0.0
  %2481 = vmatpush1.msra.mxu0 0.0
  %2482 = vmatprep.subr.mxu0 0.0
  %2483 = vmatpush1.msra.mxu0 0.0
  %2484 = vmatprep.subr.mxu0 0.0
  %2485 = vmatpush1.msra.mxu0 0.0
  %2486 = vmatprep.subr.mxu0 0.0
  %2487 = vmatpush1.msra.mxu0 0.0
  %2488 = vmatprep.subr.mxu0 0.0
  %2489 = vmatpush1.msra.mxu0 0.0
  %2490 = vmatprep.subr.mxu0 0.0
  %2491 = vmatpush1.msra.mxu0 0.0
  %2492 = vmatprep.subr.mxu0 0.0
  %2493 = vmatpush1.msra.mxu0 0.0
  %2494 = vmatprep.subr.mxu0 0.0
  %2495 = vmatpush1.msra.mxu0 0.0
  %2496 = vmatprep.subr.mxu0 0.0
  %2497 = vmatpush1.msra.mxu0 0.0
  %2498 = vmatprep.subr.mxu0 0.0
  %2499 = vmatpush1.msra.mxu0 0.0
  %2500 = vmatprep.subr.mxu0 0.0
  %2501 = vmatpush1.msra.mxu0 0.0
  %2502 = vmatprep.subr.mxu0 0.0
  %2503 = vmatpush1.msra.mxu0 0.0
  %2504 = vmatprep.subr.mxu0 0.0
  %2505 = vmatpush1.msra.mxu0 0.0
  %2506 = vmatprep.subr.mxu0 0.0
  %2507 = vmatpush1.msra.mxu0 0.0
  %2508 = vmatprep.subr.mxu0 0.0
  %2509 = vmatpush1.msra.mxu0 0.0
  %2510 = vmatprep.subr.mxu0 0.0
  %2511 = vmatpush1.msra.mxu0 0.0
  %2512 = vmatprep.subr.mxu0 0.0
  %2513 = vmatpush1.msra.mxu0 0.0
  %2514 = vmatprep.subr.mxu0 0.0
  %2515 = vmatpush1.msra.mxu0 0.0
  %2516 = vmatprep.subr.mxu0 0.0
  %2517 = vmatpush1.msra.mxu0 0.0
  %2518 = vmatprep.subr.mxu0 0.0
  %2519 = vmatpush1.msra.mxu0 0.0
  %2520 = vmatprep.subr.mxu0 0.0
  %2521 = vmatpush1.msra.mxu0 0.0
  %2522 = vmatprep.subr.mxu0 0.0
  %2523 = vmatpush1.msra.mxu0 0.0
  %2524 = vmatprep.mubr.f32.mxu0 0.0
  %2525 = vmatmul.mubr.f32.gmra.mrb[0].mxu0 %v2455
  %v2526 = vpop.f32.mrb[0].mxu0
  %v2527 = vadd.f32 0.0, %v2526
  %v2528 = vpop.f32.mrb[0].mxu0
  %2529 = vmatprep.mubr.f32.mxu0 0.0
  %2530 = vmatmul.mubr.f32.gmra.mrb[0].mxu0 %v2458
  %v2531 = vpop.f32.mrb[0].mxu0
  %v2532 = vadd.f32 0.0, %v2531
  %v2533 = vpop.f32.mrb[0].mxu0
  %2534 = vdwg.mxu0
  %2536 = vrot.lane.b32.xlu0 %v1675, 32
  %v2537 = vpop.permute.xlu0 %2536
  %v2540 = vsel %vm234, %v2527, 0
  %v2543 = vsel %vm234, %v2532, 0
  %2545 = vmatprep.subr.mxu0 0.0
  %2546 = vmatpush1.msra.mxu0 %v2537
  %2547 = vmatprep.subr.mxu0 0.0
  %2548 = vmatpush1.msra.mxu0 0.0
  %2549 = vmatprep.subr.mxu0 0.0
  %2550 = vmatpush1.msra.mxu0 0.0
  %2551 = vmatprep.subr.mxu0 0.0
  %2552 = vmatpush1.msra.mxu0 0.0
  %2553 = vmatprep.subr.mxu0 0.0
  %2554 = vmatpush1.msra.mxu0 0.0
  %2555 = vmatprep.subr.mxu0 0.0
  %2556 = vmatpush1.msra.mxu0 0.0
  %2557 = vmatprep.subr.mxu0 0.0
  %2558 = vmatpush1.msra.mxu0 0.0
  %2559 = vmatprep.subr.mxu0 0.0
  %2560 = vmatpush1.msra.mxu0 0.0
  %2561 = vmatprep.subr.mxu0 0.0
  %2562 = vmatpush1.msra.mxu0 0.0
  %2563 = vmatprep.subr.mxu0 0.0
  %2564 = vmatpush1.msra.mxu0 0.0
  %2565 = vmatprep.subr.mxu0 0.0
  %2566 = vmatpush1.msra.mxu0 0.0
  %2567 = vmatprep.subr.mxu0 0.0
  %2568 = vmatpush1.msra.mxu0 0.0
  %2569 = vmatprep.subr.mxu0 0.0
  %2570 = vmatpush1.msra.mxu0 0.0
  %2571 = vmatprep.subr.mxu0 0.0
  %2572 = vmatpush1.msra.mxu0 0.0
  %2573 = vmatprep.subr.mxu0 0.0
  %2574 = vmatpush1.msra.mxu0 0.0
  %2575 = vmatprep.subr.mxu0 0.0
  %2576 = vmatpush1.msra.mxu0 0.0
  %2577 = vmatprep.subr.mxu0 0.0
  %2578 = vmatpush1.msra.mxu0 0.0
  %2579 = vmatprep.subr.mxu0 0.0
  %2580 = vmatpush1.msra.mxu0 0.0
  %2581 = vmatprep.subr.mxu0 0.0
  %2582 = vmatpush1.msra.mxu0 0.0
  %2583 = vmatprep.subr.mxu0 0.0
  %2584 = vmatpush1.msra.mxu0 0.0
  %2585 = vmatprep.subr.mxu0 0.0
  %2586 = vmatpush1.msra.mxu0 0.0
  %2587 = vmatprep.subr.mxu0 0.0
  %2588 = vmatpush1.msra.mxu0 0.0
  %2589 = vmatprep.subr.mxu0 0.0
  %2590 = vmatpush1.msra.mxu0 0.0
  %2591 = vmatprep.subr.mxu0 0.0
  %2592 = vmatpush1.msra.mxu0 0.0
  %2593 = vmatprep.subr.mxu0 0.0
  %2594 = vmatpush1.msra.mxu0 0.0
  %2595 = vmatprep.subr.mxu0 0.0
  %2596 = vmatpush1.msra.mxu0 0.0
  %2597 = vmatprep.subr.mxu0 0.0
  %2598 = vmatpush1.msra.mxu0 0.0
  %2599 = vmatprep.subr.mxu0 0.0
  %2600 = vmatpush1.msra.mxu0 0.0
  %2601 = vmatprep.subr.mxu0 0.0
  %2602 = vmatpush1.msra.mxu0 0.0
  %2603 = vmatprep.subr.mxu0 0.0
  %2604 = vmatpush1.msra.mxu0 0.0
  %2605 = vmatprep.subr.mxu0 0.0
  %2606 = vmatpush1.msra.mxu0 0.0
  %2607 = vmatprep.subr.mxu0 0.0
  %2608 = vmatpush1.msra.mxu0 0.0
  %2609 = vmatprep.mubr.f32.mxu0 0.0
  %2610 = vmatmul.mubr.f32.gmra.mrb[0].mxu0 %v2540
  %v2611 = vpop.f32.mrb[0].mxu0
  %v2612 = vadd.f32 0.0, %v2611
  %v2613 = vpop.f32.mrb[0].mxu0
  %2614 = vmatprep.mubr.f32.mxu0 0.0
  %2615 = vmatmul.mubr.f32.gmra.mrb[0].mxu0 %v2543
  %v2616 = vpop.f32.mrb[0].mxu0
  %v2617 = vadd.f32 0.0, %v2616
  %v2618 = vpop.f32.mrb[0].mxu0
  %2619 = vdwg.mxu0
  %v2620 = vadd.f32 %v2324, %v2612
  %v2621 = vadd.f32 %v2329, %v2617
  %2622 = vrot.lane.b32.xlu0 %v1750, 104
  %v2623 = vpop.permute.xlu0 %2622
  %2624 = vrot.lane.b32.xlu0 %v1755, 104
  %v2625 = vpop.permute.xlu0 %2624
  %2626 = vrot.lane.b32.xlu0 %v1750, 72
  %v2627 = vpop.permute.xlu0 %2626
  %2628 = vrot.lane.b32.xlu0 %v1755, 72
  %v2629 = vpop.permute.xlu0 %2628
  %v2630 = vsel %vm234, %v2623, 0
  %v2632 = vsel %vm234, %v2625, 0
  %v2634 = vsel %vm234, %v2627, 0
  %v2636 = vsel %vm234, %v2629, 0
  %2638 = vmatprep.subr.mxu0 0.0
  %2639 = vmatpush1.xpose.msra.mxu0 %v2634
  %2640 = vmatprep.subr.mxu0 0.0
  %2641 = vmatpush1.xpose.msra.mxu0 %v2636
  %2642 = vmatprep.subr.mxu0 0.0
  %2643 = vmatpush1.xpose.msra.mxu0 0.0
  %2644 = vmatprep.subr.mxu0 0.0
  %2645 = vmatpush1.xpose.msra.mxu0 0.0
  %2646 = vmatprep.subr.mxu0 0.0
  %2647 = vmatpush1.xpose.msra.mxu0 0.0
  %2648 = vmatprep.subr.mxu0 0.0
  %2649 = vmatpush1.xpose.msra.mxu0 0.0
  %2650 = vmatprep.subr.mxu0 0.0
  %2651 = vmatpush1.xpose.msra.mxu0 0.0
  %2652 = vmatprep.subr.mxu0 0.0
  %2653 = vmatpush1.xpose.msra.mxu0 0.0
  %2654 = vmatprep.subr.mxu0 0.0
  %2655 = vmatpush1.xpose.msra.mxu0 0.0
  %2656 = vmatprep.subr.mxu0 0.0
  %2657 = vmatpush1.xpose.msra.mxu0 0.0
  %2658 = vmatprep.subr.mxu0 0.0
  %2659 = vmatpush1.xpose.msra.mxu0 0.0
  %2660 = vmatprep.subr.mxu0 0.0
  %2661 = vmatpush1.xpose.msra.mxu0 0.0
  %2662 = vmatprep.subr.mxu0 0.0
  %2663 = vmatpush1.xpose.msra.mxu0 0.0
  %2664 = vmatprep.subr.mxu0 0.0
  %2665 = vmatpush1.xpose.msra.mxu0 0.0
  %2666 = vmatprep.subr.mxu0 0.0
  %2667 = vmatpush1.xpose.msra.mxu0 0.0
  %2668 = vmatprep.subr.mxu0 0.0
  %2669 = vmatpush1.xpose.msra.mxu0 0.0
  %2670 = vmatprep.subr.mxu0 0.0
  %2671 = vmatpush1.xpose.msra.mxu0 0.0
  %2672 = vmatprep.subr.mxu0 0.0
  %2673 = vmatpush1.xpose.msra.mxu0 0.0
  %2674 = vmatprep.subr.mxu0 0.0
  %2675 = vmatpush1.xpose.msra.mxu0 0.0
  %2676 = vmatprep.subr.mxu0 0.0
  %2677 = vmatpush1.xpose.msra.mxu0 0.0
  %2678 = vmatprep.subr.mxu0 0.0
  %2679 = vmatpush1.xpose.msra.mxu0 0.0
  %2680 = vmatprep.subr.mxu0 0.0
  %2681 = vmatpush1.xpose.msra.mxu0 0.0
  %2682 = vmatprep.subr.mxu0 0.0
  %2683 = vmatpush1.xpose.msra.mxu0 0.0
  %2684 = vmatprep.subr.mxu0 0.0
  %2685 = vmatpush1.xpose.msra.mxu0 0.0
  %2686 = vmatprep.subr.mxu0 0.0
  %2687 = vmatpush1.xpose.msra.mxu0 0.0
  %2688 = vmatprep.subr.mxu0 0.0
  %2689 = vmatpush1.xpose.msra.mxu0 0.0
  %2690 = vmatprep.subr.mxu0 0.0
  %2691 = vmatpush1.xpose.msra.mxu0 0.0
  %2692 = vmatprep.subr.mxu0 0.0
  %2693 = vmatpush1.xpose.msra.mxu0 0.0
  %2694 = vmatprep.subr.mxu0 0.0
  %2695 = vmatpush1.xpose.msra.mxu0 0.0
  %2696 = vmatprep.subr.mxu0 0.0
  %2697 = vmatpush1.xpose.msra.mxu0 0.0
  %2698 = vmatprep.subr.mxu0 0.0
  %2699 = vmatpush1.xpose.msra.mxu0 0.0
  %2700 = vmatprep.subr.mxu0 0.0
  %2701 = vmatpush1.xpose.msra.mxu0 0.0
  %2702 = vmatprep.mubr.f32.mxu0 0.0
  %2703 = vmatmul.mubr.f32.gmra.mrb[0].mxu0 %v2630
  %v2704 = vpop.f32.mrb[0].mxu0
  %v2705 = vadd.f32 %v140, %v2704
  %v2706 = vpop.f32.mrb[0].mxu0
  %2707 = vmatprep.mubr.f32.mxu0 0.0
  %2708 = vmatmul.mubr.f32.gmra.mrb[0].mxu0 %v2632
  %v2709 = vpop.f32.mrb[0].mxu0
  %v2710 = vadd.f32 %v141, %v2709
  %v2711 = vpop.f32.mrb[0].mxu0
  %2712 = vdwg.mxu0
  %v2713 = vsel %vm318, %v2705, -inf
  %2714 = vmax.xlane.f32.xlu0 %v2713
  %v2715 = vpop.xlane.xlu0 %2714
  %v2716 = vsel %vm318, %v2710, -inf
  %2717 = vmax.xlane.f32.xlu0 %v2716
  %v2718 = vpop.xlane.xlu0 %2717
  %v2719 = vsub.f32 %v2705, %v2715
  %v2720 = vsub.f32 %v2710, %v2718
  %v2721 = vmul.f32 %v2719, 1.442695
  %v2722 = vpow.pop %v2721
  %v2723 = vmul.f32 %v2720, 1.442695
  %v2724 = vpow.pop %v2723
  %v2725 = vsel %vm318, %v2722, 0.0
  %2726 = vadd.xlane.f32.xlu0 %v2725
  %v2727 = vpop.xlane.xlu0 %2726
  %v2728 = vsel %vm318, %v2724, 0.0
  %2729 = vadd.xlane.f32.xlu0 %v2728
  %v2730 = vpop.xlane.xlu0 %2729
  %v2731 = vrcp.pop %v2727
  %v2732 = vmul.f32 %v2722, %v2731
  %v2733 = vrcp.pop %v2730
  %v2734 = vmul.f32 %v2724, %v2733
  %s2735 = scalar_lea.vmem %s11, 112
  %2736 = vst.msk [vmem:[%s2735] sm:$0xff] %vm318, %v2732
  %2737 = vst.msk [vmem:[%s2735 + $0x8] sm:$0xff] %vm318, %v2734
  %2738 = vrot.lane.b32.xlu0 %v1750, 40
  %v2739 = vpop.permute.xlu0 %2738
  %2740 = vrot.lane.b32.xlu0 %v1755, 40
  %v2741 = vpop.permute.xlu0 %2740
  %v2745 = vsel %vm318, %v2732, 0
  %v2748 = vsel %vm318, %v2734, 0
  %2750 = vmatprep.subr.mxu0 0.0
  %2751 = vmatpush1.msra.mxu0 %v2739
  %2752 = vmatprep.subr.mxu0 0.0
  %2753 = vmatpush1.msra.mxu0 %v2741
  %2754 = vmatprep.subr.mxu0 0.0
  %2755 = vmatpush1.msra.mxu0 0.0
  %2756 = vmatprep.subr.mxu0 0.0
  %2757 = vmatpush1.msra.mxu0 0.0
  %2758 = vmatprep.subr.mxu0 0.0
  %2759 = vmatpush1.msra.mxu0 0.0
  %2760 = vmatprep.subr.mxu0 0.0
  %2761 = vmatpush1.msra.mxu0 0.0
  %2762 = vmatprep.subr.mxu0 0.0
  %2763 = vmatpush1.msra.mxu0 0.0
  %2764 = vmatprep.subr.mxu0 0.0
  %2765 = vmatpush1.msra.mxu0 0.0
  %2766 = vmatprep.subr.mxu0 0.0
  %2767 = vmatpush1.msra.mxu0 0.0
  %2768 = vmatprep.subr.mxu0 0.0
  %2769 = vmatpush1.msra.mxu0 0.0
  %2770 = vmatprep.subr.mxu0 0.0
  %2771 = vmatpush1.msra.mxu0 0.0
  %2772 = vmatprep.subr.mxu0 0.0
  %2773 = vmatpush1.msra.mxu0 0.0
  %2774 = vmatprep.subr.mxu0 0.0
  %2775 = vmatpush1.msra.mxu0 0.0
  %2776 = vmatprep.subr.mxu0 0.0
  %2777 = vmatpush1.msra.mxu0 0.0
  %2778 = vmatprep.subr.mxu0 0.0
  %2779 = vmatpush1.msra.mxu0 0.0
  %2780 = vmatprep.subr.mxu0 0.0
  %2781 = vmatpush1.msra.mxu0 0.0
  %2782 = vmatprep.subr.mxu0 0.0
  %2783 = vmatpush1.msra.mxu0 0.0
  %2784 = vmatprep.subr.mxu0 0.0
  %2785 = vmatpush1.msra.mxu0 0.0
  %2786 = vmatprep.subr.mxu0 0.0
  %2787 = vmatpush1.msra.mxu0 0.0
  %2788 = vmatprep.subr.mxu0 0.0
  %2789 = vmatpush1.msra.mxu0 0.0
  %2790 = vmatprep.subr.mxu0 0.0
  %2791 = vmatpush1.msra.mxu0 0.0
  %2792 = vmatprep.subr.mxu0 0.0
  %2793 = vmatpush1.msra.mxu0 0.0
  %2794 = vmatprep.subr.mxu0 0.0
  %2795 = vmatpush1.msra.mxu0 0.0
  %2796 = vmatprep.subr.mxu0 0.0
  %2797 = vmatpush1.msra.mxu0 0.0
  %2798 = vmatprep.subr.mxu0 0.0
  %2799 = vmatpush1.msra.mxu0 0.0
  %2800 = vmatprep.subr.mxu0 0.0
  %2801 = vmatpush1.msra.mxu0 0.0
  %2802 = vmatprep.subr.mxu0 0.0
  %2803 = vmatpush1.msra.mxu0 0.0
  %2804 = vmatprep.subr.mxu0 0.0
  %2805 = vmatpush1.msra.mxu0 0.0
  %2806 = vmatprep.subr.mxu0 0.0
  %2807 = vmatpush1.msra.mxu0 0.0
  %2808 = vmatprep.subr.mxu0 0.0
  %2809 = vmatpush1.msra.mxu0 0.0
  %2810 = vmatprep.subr.mxu0 0.0
  %2811 = vmatpush1.msra.mxu0 0.0
  %2812 = vmatprep.subr.mxu0 0.0
  %2813 = vmatpush1.msra.mxu0 0.0
  %2814 = vmatprep.mubr.f32.mxu0 0.0
  %2815 = vmatmul.mubr.f32.gmra.mrb[0].mxu0 %v2745
  %v2816 = vpop.f32.mrb[0].mxu0
  %v2817 = vadd.f32 0.0, %v2816
  %v2818 = vpop.f32.mrb[0].mxu0
  %2819 = vmatprep.mubr.f32.mxu0 0.0
  %2820 = vmatmul.mubr.f32.gmra.mrb[0].mxu0 %v2748
  %v2821 = vpop.f32.mrb[0].mxu0
  %v2822 = vadd.f32 0.0, %v2821
  %v2823 = vpop.f32.mrb[0].mxu0
  %2824 = vdwg.mxu0
  %2826 = vrot.lane.b32.xlu0 %v1676, 32
  %v2827 = vpop.permute.xlu0 %2826
  %v2830 = vsel %vm234, %v2817, 0
  %v2833 = vsel %vm234, %v2822, 0
  %2835 = vmatprep.subr.mxu0 0.0
  %2836 = vmatpush1.msra.mxu0 %v2827
  %2837 = vmatprep.subr.mxu0 0.0
  %2838 = vmatpush1.msra.mxu0 0.0
  %2839 = vmatprep.subr.mxu0 0.0
  %2840 = vmatpush1.msra.mxu0 0.0
  %2841 = vmatprep.subr.mxu0 0.0
  %2842 = vmatpush1.msra.mxu0 0.0
  %2843 = vmatprep.subr.mxu0 0.0
  %2844 = vmatpush1.msra.mxu0 0.0
  %2845 = vmatprep.subr.mxu0 0.0
  %2846 = vmatpush1.msra.mxu0 0.0
  %2847 = vmatprep.subr.mxu0 0.0
  %2848 = vmatpush1.msra.mxu0 0.0
  %2849 = vmatprep.subr.mxu0 0.0
  %2850 = vmatpush1.msra.mxu0 0.0
  %2851 = vmatprep.subr.mxu0 0.0
  %2852 = vmatpush1.msra.mxu0 0.0
  %2853 = vmatprep.subr.mxu0 0.0
  %2854 = vmatpush1.msra.mxu0 0.0
  %2855 = vmatprep.subr.mxu0 0.0
  %2856 = vmatpush1.msra.mxu0 0.0
  %2857 = vmatprep.subr.mxu0 0.0
  %2858 = vmatpush1.msra.mxu0 0.0
  %2859 = vmatprep.subr.mxu0 0.0
  %2860 = vmatpush1.msra.mxu0 0.0
  %2861 = vmatprep.subr.mxu0 0.0
  %2862 = vmatpush1.msra.mxu0 0.0
  %2863 = vmatprep.subr.mxu0 0.0
  %2864 = vmatpush1.msra.mxu0 0.0
  %2865 = vmatprep.subr.mxu0 0.0
  %2866 = vmatpush1.msra.mxu0 0.0
  %2867 = vmatprep.subr.mxu0 0.0
  %2868 = vmatpush1.msra.mxu0 0.0
  %2869 = vmatprep.subr.mxu0 0.0
  %2870 = vmatpush1.msra.mxu0 0.0
  %2871 = vmatprep.subr.mxu0 0.0
  %2872 = vmatpush1.msra.mxu0 0.0
  %2873 = vmatprep.subr.mxu0 0.0
  %2874 = vmatpush1.msra.mxu0 0.0
  %2875 = vmatprep.subr.mxu0 0.0
  %2876 = vmatpush1.msra.mxu0 0.0
  %2877 = vmatprep.subr.mxu0 0.0
  %2878 = vmatpush1.msra.mxu0 0.0
  %2879 = vmatprep.subr.mxu0 0.0
  %2880 = vmatpush1.msra.mxu0 0.0
  %2881 = vmatprep.subr.mxu0 0.0
  %2882 = vmatpush1.msra.mxu0 0.0
  %2883 = vmatprep.subr.mxu0 0.0
  %2884 = vmatpush1.msra.mxu0 0.0
  %2885 = vmatprep.subr.mxu0 0.0
  %2886 = vmatpush1.msra.mxu0 0.0
  %2887 = vmatprep.subr.mxu0 0.0
  %2888 = vmatpush1.msra.mxu0 0.0
  %2889 = vmatprep.subr.mxu0 0.0
  %2890 = vmatpush1.msra.mxu0 0.0
  %2891 = vmatprep.subr.mxu0 0.0
  %2892 = vmatpush1.msra.mxu0 0.0
  %2893 = vmatprep.subr.mxu0 0.0
  %2894 = vmatpush1.msra.mxu0 0.0
  %2895 = vmatprep.subr.mxu0 0.0
  %2896 = vmatpush1.msra.mxu0 0.0
  %2897 = vmatprep.subr.mxu0 0.0
  %2898 = vmatpush1.msra.mxu0 0.0
  %2899 = vmatprep.mubr.f32.mxu0 0.0
  %2900 = vmatmul.mubr.f32.gmra.mrb[0].mxu0 %v2830
  %v2901 = vpop.f32.mrb[0].mxu0
  %v2902 = vadd.f32 0.0, %v2901
  %v2903 = vpop.f32.mrb[0].mxu0
  %2904 = vmatprep.mubr.f32.mxu0 0.0
  %2905 = vmatmul.mubr.f32.gmra.mrb[0].mxu0 %v2833
  %v2906 = vpop.f32.mrb[0].mxu0
  %v2907 = vadd.f32 0.0, %v2906
  %v2908 = vpop.f32.mrb[0].mxu0
  %2909 = vdwg.mxu0
  %v2910 = vadd.f32 %v2620, %v2902
  %v2911 = vadd.f32 %v2621, %v2907
  %s2912 = scalar_lea.vmem %s9, 1
  %v2913 = vld [vmem:[%s2912] sm:$0x1]
  %v2914 = vadd.f32 %v2910, %v1670
  %v2915 = vadd.f32 %v2911, %v1671
  %v2916 = vsel %vm146, %v2914, 0.0
  %2917 = vadd.xlane.f32.xlu0 %v2916
  %v2918 = vpop.xlane.xlu0 %2917
  %v2919 = vsel %vm146, %v2915, 0.0
  %2920 = vadd.xlane.f32.xlu0 %v2919
  %v2921 = vpop.xlane.xlu0 %2920
  %v2922 = vmul.f32 %v2918, %v1392
  %v2923 = vmul.f32 %v2921, %v1392
  %v2924 = vsub.f32 %v2914, %v2922
  %v2925 = vsub.f32 %v2915, %v2923
  %v2926 = vmul.f32 %v2924, %v2924
  %v2927 = vmul.f32 %v2925, %v2925
  %v2928 = vsel %vm146, %v2926, 0.0
  %2929 = vadd.xlane.f32.xlu0 %v2928
  %v2930 = vpop.xlane.xlu0 %2929
  %v2931 = vsel %vm146, %v2927, 0.0
  %2932 = vadd.xlane.f32.xlu0 %v2931
  %v2933 = vpop.xlane.xlu0 %2932
  %v2934 = vmul.f32 %v2930, %v1392
  %v2935 = vmul.f32 %v2933, %v1392
  %v2936 = vadd.f32 %v2934, 1e-05
  %v2937 = vadd.f32 %v2935, 1e-05
  %v2938 = vrsqrt.pop %v2936
  %v2939 = vrsqrt.pop %v2937
  %v2940 = vmul.f32 %v2924, %v2938
  %v2941 = vmul.f32 %v2925, %v2939
  %v2943 = vlaneseq
  %v2944 = vshrl.u32 %v2943, 7
  %v2945 = vsub.s32 0, %v2944
  %v2946 = vrot.slane %v2913, %v2945
  %v2948 = vmul.f32 %v2940, %v2946
  %v2949 = vmul.f32 %v2941, %v2946
  %2950 = vrot.lane.b32.xlu0 %v2946, 96
  %v2951 = vpop.permute.xlu0 %2950
  %v2953 = vadd.f32 %v2948, %v2951
  %v2954 = vadd.f32 %v2949, %v2951
  %s2955 = scalar_lea.vmem %s8, 64
  %v2956 = vld [vmem:[%s2955] sm:$0xff]
  %v2957 = vld [vmem:[%s2955 + $0x8] sm:$0xff]
  %v2958 = vld [vmem:[%s2955 + $0x10] sm:$0xff]
  %v2959 = vld [vmem:[%s2955 + $0x18] sm:$0xff]
  %v2960 = vld [vmem:[%s2955 + $0x20] sm:$0xff]
  %v2961 = vld [vmem:[%s2955 + $0x28] sm:$0xff]
  %v2962 = vld [vmem:[%s2955 + $0x30] sm:$0xff]
  %v2963 = vld [vmem:[%s2955 + $0x38] sm:$0xff]
  %v2965 = vsel %vm146, %v2953, 0
  %v2968 = vsel %vm146, %v2954, 0
  %2970 = vmatprep.subr.mxu0 0.0
  %2971 = vmatpush1.msra.mxu0 %v2956
  %2972 = vmatprep.subr.mxu0 0.0
  %2973 = vmatpush1.msra.mxu0 %v2957
  %2974 = vmatprep.subr.mxu0 0.0
  %2975 = vmatpush1.msra.mxu0 %v2958
  %2976 = vmatprep.subr.mxu0 0.0
  %2977 = vmatpush1.msra.mxu0 %v2959
  %2978 = vmatprep.subr.mxu0 0.0
  %2979 = vmatpush1.msra.mxu0 0.0
  %2980 = vmatprep.subr.mxu0 0.0
  %2981 = vmatpush1.msra.mxu0 0.0
  %2982 = vmatprep.subr.mxu0 0.0
  %2983 = vmatpush1.msra.mxu0 0.0
  %2984 = vmatprep.subr.mxu0 0.0
  %2985 = vmatpush1.msra.mxu0 0.0
  %2986 = vmatprep.subr.mxu0 0.0
  %2987 = vmatpush1.msra.mxu0 0.0
  %2988 = vmatprep.subr.mxu0 0.0
  %2989 = vmatpush1.msra.mxu0 0.0
  %2990 = vmatprep.subr.mxu0 0.0
  %2991 = vmatpush1.msra.mxu0 0.0
  %2992 = vmatprep.subr.mxu0 0.0
  %2993 = vmatpush1.msra.mxu0 0.0
  %2994 = vmatprep.subr.mxu0 0.0
  %2995 = vmatpush1.msra.mxu0 0.0
  %2996 = vmatprep.subr.mxu0 0.0
  %2997 = vmatpush1.msra.mxu0 0.0
  %2998 = vmatprep.subr.mxu0 0.0
  %2999 = vmatpush1.msra.mxu0 0.0
  %3000 = vmatprep.subr.mxu0 0.0
  %3001 = vmatpush1.msra.mxu0 0.0
  %3002 = vmatprep.subr.mxu0 0.0
  %3003 = vmatpush1.msra.mxu0 0.0
  %3004 = vmatprep.subr.mxu0 0.0
  %3005 = vmatpush1.msra.mxu0 0.0
  %3006 = vmatprep.subr.mxu0 0.0
  %3007 = vmatpush1.msra.mxu0 0.0
  %3008 = vmatprep.subr.mxu0 0.0
  %3009 = vmatpush1.msra.mxu0 0.0
  %3010 = vmatprep.subr.mxu0 0.0
  %3011 = vmatpush1.msra.mxu0 0.0
  %3012 = vmatprep.subr.mxu0 0.0
  %3013 = vmatpush1.msra.mxu0 0.0
  %3014 = vmatprep.subr.mxu0 0.0
  %3015 = vmatpush1.msra.mxu0 0.0
  %3016 = vmatprep.subr.mxu0 0.0
  %3017 = vmatpush1.msra.mxu0 0.0
  %3018 = vmatprep.subr.mxu0 0.0
  %3019 = vmatpush1.msra.mxu0 0.0
  %3020 = vmatprep.subr.mxu0 0.0
  %3021 = vmatpush1.msra.mxu0 0.0
  %3022 = vmatprep.subr.mxu0 0.0
  %3023 = vmatpush1.msra.mxu0 0.0
  %3024 = vmatprep.subr.mxu0 0.0
  %3025 = vmatpush1.msra.mxu0 0.0
  %3026 = vmatprep.subr.mxu0 0.0
  %3027 = vmatpush1.msra.mxu0 0.0
  %3028 = vmatprep.subr.mxu0 0.0
  %3029 = vmatpush1.msra.mxu0 0.0
  %3030 = vmatprep.subr.mxu0 0.0
  %3031 = vmatpush1.msra.mxu0 0.0
  %3032 = vmatprep.subr.mxu0 0.0
  %3033 = vmatpush1.msra.mxu0 0.0
  %3034 = vmatprep.mubr.f32.mxu0 0.0
  %3035 = vmatmul.mubr.f32.gmra.mrb[0].mxu0 %v2965
  %v3036 = vpop.f32.mrb[0].mxu0
  %v3037 = vadd.f32 0.0, %v3036
  %v3038 = vpop.f32.mrb[0].mxu0
  %3039 = vmatprep.mubr.f32.mxu0 0.0
  %3040 = vmatmul.mubr.f32.gmra.mrb[0].mxu0 %v2968
  %v3041 = vpop.f32.mrb[0].mxu0
  %v3042 = vadd.f32 0.0, %v3041
  %v3043 = vpop.f32.mrb[0].mxu0
  %3044 = vdwg.mxu0
  %v3045 = vmax.f32 %v3037, 0.0
  %v3046 = vmax.f32 %v3042, 0.0
  %s3047 = scalar_lea.vmem %s9, 3
  %v3048 = vld [vmem:[%s3047] sm:$0x1]
  %3057 = vrot.lane.b32.xlu0 %v2956, 64
  %v3058 = vpop.permute.xlu0 %3057
  %3059 = vrot.lane.b32.xlu0 %v2957, 64
  %v3060 = vpop.permute.xlu0 %3059
  %3061 = vrot.lane.b32.xlu0 %v2958, 64
  %v3062 = vpop.permute.xlu0 %3061
  %3063 = vrot.lane.b32.xlu0 %v2959, 64
  %v3064 = vpop.permute.xlu0 %3063
  %3065 = vrot.lane.b32.xlu0 %v2960, 64
  %v3066 = vpop.permute.xlu0 %3065
  %3067 = vrot.lane.b32.xlu0 %v2961, 64
  %v3068 = vpop.permute.xlu0 %3067
  %3069 = vrot.lane.b32.xlu0 %v2962, 64
  %v3070 = vpop.permute.xlu0 %3069
  %3071 = vrot.lane.b32.xlu0 %v2963, 64
  %v3072 = vpop.permute.xlu0 %3071
  %v3082 = vsel %vm1551, %v3045, 0
  %v3085 = vsel %vm1551, %v3046, 0
  %3087 = vmatprep.subr.mxu0 0.0
  %3088 = vmatpush1.msra.mxu0 %v3058
  %3089 = vmatprep.subr.mxu0 0.0
  %3090 = vmatpush1.msra.mxu0 %v3060
  %3091 = vmatprep.subr.mxu0 0.0
  %3092 = vmatpush1.msra.mxu0 %v3062
  %3093 = vmatprep.subr.mxu0 0.0
  %3094 = vmatpush1.msra.mxu0 %v3064
  %3095 = vmatprep.subr.mxu0 0.0
  %3096 = vmatpush1.msra.mxu0 %v3066
  %3097 = vmatprep.subr.mxu0 0.0
  %3098 = vmatpush1.msra.mxu0 %v3068
  %3099 = vmatprep.subr.mxu0 0.0
  %3100 = vmatpush1.msra.mxu0 %v3070
  %3101 = vmatprep.subr.mxu0 0.0
  %3102 = vmatpush1.msra.mxu0 %v3072
  %3103 = vmatprep.subr.mxu0 0.0
  %3104 = vmatpush1.msra.mxu0 0.0
  %3105 = vmatprep.subr.mxu0 0.0
  %3106 = vmatpush1.msra.mxu0 0.0
  %3107 = vmatprep.subr.mxu0 0.0
  %3108 = vmatpush1.msra.mxu0 0.0
  %3109 = vmatprep.subr.mxu0 0.0
  %3110 = vmatpush1.msra.mxu0 0.0
  %3111 = vmatprep.subr.mxu0 0.0
  %3112 = vmatpush1.msra.mxu0 0.0
  %3113 = vmatprep.subr.mxu0 0.0
  %3114 = vmatpush1.msra.mxu0 0.0
  %3115 = vmatprep.subr.mxu0 0.0
  %3116 = vmatpush1.msra.mxu0 0.0
  %3117 = vmatprep.subr.mxu0 0.0
  %3118 = vmatpush1.msra.mxu0 0.0
  %3119 = vmatprep.subr.mxu0 0.0
  %3120 = vmatpush1.msra.mxu0 0.0
  %3121 = vmatprep.subr.mxu0 0.0
  %3122 = vmatpush1.msra.mxu0 0.0
  %3123 = vmatprep.subr.mxu0 0.0
  %3124 = vmatpush1.msra.mxu0 0.0
  %3125 = vmatprep.subr.mxu0 0.0
  %3126 = vmatpush1.msra.mxu0 0.0
  %3127 = vmatprep.subr.mxu0 0.0
  %3128 = vmatpush1.msra.mxu0 0.0
  %3129 = vmatprep.subr.mxu0 0.0
  %3130 = vmatpush1.msra.mxu0 0.0
  %3131 = vmatprep.subr.mxu0 0.0
  %3132 = vmatpush1.msra.mxu0 0.0
  %3133 = vmatprep.subr.mxu0 0.0
  %3134 = vmatpush1.msra.mxu0 0.0
  %3135 = vmatprep.subr.mxu0 0.0
  %3136 = vmatpush1.msra.mxu0 0.0
  %3137 = vmatprep.subr.mxu0 0.0
  %3138 = vmatpush1.msra.mxu0 0.0
  %3139 = vmatprep.subr.mxu0 0.0
  %3140 = vmatpush1.msra.mxu0 0.0
  %3141 = vmatprep.subr.mxu0 0.0
  %3142 = vmatpush1.msra.mxu0 0.0
  %3143 = vmatprep.subr.mxu0 0.0
  %3144 = vmatpush1.msra.mxu0 0.0
  %3145 = vmatprep.subr.mxu0 0.0
  %3146 = vmatpush1.msra.mxu0 0.0
  %3147 = vmatprep.subr.mxu0 0.0
  %3148 = vmatpush1.msra.mxu0 0.0
  %3149 = vmatprep.subr.mxu0 0.0
  %3150 = vmatpush1.msra.mxu0 0.0
  %3151 = vmatprep.mubr.f32.mxu0 0.0
  %3152 = vmatmul.mubr.f32.gmra.mrb[0].mxu0 %v3082
  %v3153 = vpop.f32.mrb[0].mxu0
  %v3154 = vadd.f32 %v2953, %v3153
  %v3155 = vpop.f32.mrb[0].mxu0
  %3156 = vmatprep.mubr.f32.mxu0 0.0
  %3157 = vmatmul.mubr.f32.gmra.mrb[0].mxu0 %v3085
  %v3158 = vpop.f32.mrb[0].mxu0
  %v3159 = vadd.f32 %v2954, %v3158
  %v3160 = vpop.f32.mrb[0].mxu0
  %3161 = vdwg.mxu0
  %v3162 = vsel %vm146, %v3154, 0.0
  %3163 = vadd.xlane.f32.xlu0 %v3162
  %v3164 = vpop.xlane.xlu0 %3163
  %v3165 = vsel %vm146, %v3159, 0.0
  %3166 = vadd.xlane.f32.xlu0 %v3165
  %v3167 = vpop.xlane.xlu0 %3166
  %v3168 = vmul.f32 %v3164, %v1392
  %v3169 = vmul.f32 %v3167, %v1392
  %v3170 = vsub.f32 %v3154, %v3168
  %v3171 = vsub.f32 %v3159, %v3169
  %v3172 = vmul.f32 %v3170, %v3170
  %v3173 = vmul.f32 %v3171, %v3171
  %v3174 = vsel %vm146, %v3172, 0.0
  %3175 = vadd.xlane.f32.xlu0 %v3174
  %v3176 = vpop.xlane.xlu0 %3175
  %v3177 = vsel %vm146, %v3173, 0.0
  %3178 = vadd.xlane.f32.xlu0 %v3177
  %v3179 = vpop.xlane.xlu0 %3178
  %v3180 = vmul.f32 %v3176, %v1392
  %v3181 = vmul.f32 %v3179, %v1392
  %v3182 = vadd.f32 %v3180, 1e-05
  %v3183 = vadd.f32 %v3181, 1e-05
  %v3184 = vrsqrt.pop %v3182
  %v3185 = vrsqrt.pop %v3183
  %v3186 = vmul.f32 %v3170, %v3184
  %v3187 = vmul.f32 %v3171, %v3185
  %v3189 = vlaneseq
  %v3190 = vshrl.u32 %v3189, 7
  %v3191 = vsub.s32 0, %v3190
  %v3192 = vrot.slane %v3048, %v3191
  %v3194 = vmul.f32 %v3186, %v3192
  %v3195 = vmul.f32 %v3187, %v3192
  %3196 = vrot.lane.b32.xlu0 %v3192, 96
  %v3197 = vpop.permute.xlu0 %3196
  %v3199 = vadd.f32 %v3194, %v3197
  %v3200 = vadd.f32 %v3195, %v3197
  %v3201 = vld [vmem:[%s3] sm:$0xff]
  %v3202 = vld [vmem:[%s3 + $0x8] sm:$0xff]
  %v3203 = vld [vmem:[%s5] sm:$0xff]
  %v3204 = vld [vmem:[%s5 + $0x8] sm:$0xff]
  %v3205 = vld [vmem:[%s6] sm:$0xff]
  %v3206 = vld [vmem:[%s6 + $0x8] sm:$0xff]
  %s3207 = scalar_lea.vmem %s7, 64
  %v3208 = vld [vmem:[%s3207] sm:$0xff]
  %v3209 = vld [vmem:[%s3207 + $0x8] sm:$0xff]
  %v3210 = vld [vmem:[%s3207 + $0x10] sm:$0xff]
  %v3211 = vld [vmem:[%s3207 + $0x18] sm:$0xff]
  %v3213 = vsel %vm146, %v3201, 0
  %v3216 = vsel %vm146, %v3202, 0
  %3218 = vmatprep.subr.mxu0 0.0
  %3219 = vmatpush1.msra.mxu0 %v3208
  %3220 = vmatprep.subr.mxu0 0.0
  %3221 = vmatpush1.msra.mxu0 %v3209
  %3222 = vmatprep.subr.mxu0 0.0
  %3223 = vmatpush1.msra.mxu0 %v3210
  %3224 = vmatprep.subr.mxu0 0.0
  %3225 = vmatpush1.msra.mxu0 %v3211
  %3226 = vmatprep.subr.mxu0 0.0
  %3227 = vmatpush1.msra.mxu0 0.0
  %3228 = vmatprep.subr.mxu0 0.0
  %3229 = vmatpush1.msra.mxu0 0.0
  %3230 = vmatprep.subr.mxu0 0.0
  %3231 = vmatpush1.msra.mxu0 0.0
  %3232 = vmatprep.subr.mxu0 0.0
  %3233 = vmatpush1.msra.mxu0 0.0
  %3234 = vmatprep.subr.mxu0 0.0
  %3235 = vmatpush1.msra.mxu0 0.0
  %3236 = vmatprep.subr.mxu0 0.0
  %3237 = vmatpush1.msra.mxu0 0.0
  %3238 = vmatprep.subr.mxu0 0.0
  %3239 = vmatpush1.msra.mxu0 0.0
  %3240 = vmatprep.subr.mxu0 0.0
  %3241 = vmatpush1.msra.mxu0 0.0
  %3242 = vmatprep.subr.mxu0 0.0
  %3243 = vmatpush1.msra.mxu0 0.0
  %3244 = vmatprep.subr.mxu0 0.0
  %3245 = vmatpush1.msra.mxu0 0.0
  %3246 = vmatprep.subr.mxu0 0.0
  %3247 = vmatpush1.msra.mxu0 0.0
  %3248 = vmatprep.subr.mxu0 0.0
  %3249 = vmatpush1.msra.mxu0 0.0
  %3250 = vmatprep.subr.mxu0 0.0
  %3251 = vmatpush1.msra.mxu0 0.0
  %3252 = vmatprep.subr.mxu0 0.0
  %3253 = vmatpush1.msra.mxu0 0.0
  %3254 = vmatprep.subr.mxu0 0.0
  %3255 = vmatpush1.msra.mxu0 0.0
  %3256 = vmatprep.subr.mxu0 0.0
  %3257 = vmatpush1.msra.mxu0 0.0
  %3258 = vmatprep.subr.mxu0 0.0
  %3259 = vmatpush1.msra.mxu0 0.0
  %3260 = vmatprep.subr.mxu0 0.0
  %3261 = vmatpush1.msra.mxu0 0.0
  %3262 = vmatprep.subr.mxu0 0.0
  %3263 = vmatpush1.msra.mxu0 0.0
  %3264 = vmatprep.subr.mxu0 0.0
  %3265 = vmatpush1.msra.mxu0 0.0
  %3266 = vmatprep.subr.mxu0 0.0
  %3267 = vmatpush1.msra.mxu0 0.0
  %3268 = vmatprep.subr.mxu0 0.0
  %3269 = vmatpush1.msra.mxu0 0.0
  %3270 = vmatprep.subr.mxu0 0.0
  %3271 = vmatpush1.msra.mxu0 0.0
  %3272 = vmatprep.subr.mxu0 0.0
  %3273 = vmatpush1.msra.mxu0 0.0
  %3274 = vmatprep.subr.mxu0 0.0
  %3275 = vmatpush1.msra.mxu0 0.0
  %3276 = vmatprep.subr.mxu0 0.0
  %3277 = vmatpush1.msra.mxu0 0.0
  %3278 = vmatprep.subr.mxu0 0.0
  %3279 = vmatpush1.msra.mxu0 0.0
  %3280 = vmatprep.subr.mxu0 0.0
  %3281 = vmatpush1.msra.mxu0 0.0
  %3282 = vmatprep.mubr.f32.mxu0 0.0
  %3283 = vmatmul.mubr.f32.gmra.mrb[0].mxu0 %v3213
  %v3284 = vpop.f32.mrb[0].mxu0
  %v3285 = vadd.f32 0.0, %v3284
  %v3286 = vpop.f32.mrb[0].mxu0
  %3287 = vmatprep.mubr.f32.mxu0 0.0
  %3288 = vmatmul.mubr.f32.gmra.mrb[0].mxu0 %v3216
  %v3289 = vpop.f32.mrb[0].mxu0
  %v3290 = vadd.f32 0.0, %v3289
  %v3291 = vpop.f32.mrb[0].mxu0
  %3292 = vdwg.mxu0
  %3295 = vrot.lane.b32.xlu0 %v3285, 96
  %v3296 = vpop.permute.xlu0 %3295
  %3297 = vrot.lane.b32.xlu0 %v3290, 96
  %v3298 = vpop.permute.xlu0 %3297
  %v3299 = vsel %vm234, %v3285, 0
  %v3301 = vsel %vm234, %v3290, 0
  %v3303 = vsel %vm234, %v3296, 0
  %v3305 = vsel %vm234, %v3298, 0
  %3307 = vmatprep.subr.mxu0 0.0
  %3308 = vmatpush1.xpose.msra.mxu0 %v3303
  %3309 = vmatprep.subr.mxu0 0.0
  %3310 = vmatpush1.xpose.msra.mxu0 %v3305
  %3311 = vmatprep.subr.mxu0 0.0
  %3312 = vmatpush1.xpose.msra.mxu0 0.0
  %3313 = vmatprep.subr.mxu0 0.0
  %3314 = vmatpush1.xpose.msra.mxu0 0.0
  %3315 = vmatprep.subr.mxu0 0.0
  %3316 = vmatpush1.xpose.msra.mxu0 0.0
  %3317 = vmatprep.subr.mxu0 0.0
  %3318 = vmatpush1.xpose.msra.mxu0 0.0
  %3319 = vmatprep.subr.mxu0 0.0
  %3320 = vmatpush1.xpose.msra.mxu0 0.0
  %3321 = vmatprep.subr.mxu0 0.0
  %3322 = vmatpush1.xpose.msra.mxu0 0.0
  %3323 = vmatprep.subr.mxu0 0.0
  %3324 = vmatpush1.xpose.msra.mxu0 0.0
  %3325 = vmatprep.subr.mxu0 0.0
  %3326 = vmatpush1.xpose.msra.mxu0 0.0
  %3327 = vmatprep.subr.mxu0 0.0
  %3328 = vmatpush1.xpose.msra.mxu0 0.0
  %3329 = vmatprep.subr.mxu0 0.0
  %3330 = vmatpush1.xpose.msra.mxu0 0.0
  %3331 = vmatprep.subr.mxu0 0.0
  %3332 = vmatpush1.xpose.msra.mxu0 0.0
  %3333 = vmatprep.subr.mxu0 0.0
  %3334 = vmatpush1.xpose.msra.mxu0 0.0
  %3335 = vmatprep.subr.mxu0 0.0
  %3336 = vmatpush1.xpose.msra.mxu0 0.0
  %3337 = vmatprep.subr.mxu0 0.0
  %3338 = vmatpush1.xpose.msra.mxu0 0.0
  %3339 = vmatprep.subr.mxu0 0.0
  %3340 = vmatpush1.xpose.msra.mxu0 0.0
  %3341 = vmatprep.subr.mxu0 0.0
  %3342 = vmatpush1.xpose.msra.mxu0 0.0
  %3343 = vmatprep.subr.mxu0 0.0
  %3344 = vmatpush1.xpose.msra.mxu0 0.0
  %3345 = vmatprep.subr.mxu0 0.0
  %3346 = vmatpush1.xpose.msra.mxu0 0.0
  %3347 = vmatprep.subr.mxu0 0.0
  %3348 = vmatpush1.xpose.msra.mxu0 0.0
  %3349 = vmatprep.subr.mxu0 0.0
  %3350 = vmatpush1.xpose.msra.mxu0 0.0
  %3351 = vmatprep.subr.mxu0 0.0
  %3352 = vmatpush1.xpose.msra.mxu0 0.0
  %3353 = vmatprep.subr.mxu0 0.0
  %3354 = vmatpush1.xpose.msra.mxu0 0.0
  %3355 = vmatprep.subr.mxu0 0.0
  %3356 = vmatpush1.xpose.msra.mxu0 0.0
  %3357 = vmatprep.subr.mxu0 0.0
  %3358 = vmatpush1.xpose.msra.mxu0 0.0
  %3359 = vmatprep.subr.mxu0 0.0
  %3360 = vmatpush1.xpose.msra.mxu0 0.0
  %3361 = vmatprep.subr.mxu0 0.0
  %3362 = vmatpush1.xpose.msra.mxu0 0.0
  %3363 = vmatprep.subr.mxu0 0.0
  %3364 = vmatpush1.xpose.msra.mxu0 0.0
  %3365 = vmatprep.subr.mxu0 0.0
  %3366 = vmatpush1.xpose.msra.mxu0 0.0
  %3367 = vmatprep.subr.mxu0 0.0
  %3368 = vmatpush1.xpose.msra.mxu0 0.0
  %3369 = vmatprep.subr.mxu0 0.0
  %3370 = vmatpush1.xpose.msra.mxu0 0.0
  %3371 = vmatprep.mubr.f32.mxu0 0.0
  %3372 = vmatmul.mubr.f32.gmra.mrb[0].mxu0 %v3299
  %v3373 = vpop.f32.mrb[0].mxu0
  %v3374 = vadd.f32 %v3203, %v3373
  %v3375 = vpop.f32.mrb[0].mxu0
  %3376 = vmatprep.mubr.f32.mxu0 0.0
  %3377 = vmatmul.mubr.f32.gmra.mrb[0].mxu0 %v3301
  %v3378 = vpop.f32.mrb[0].mxu0
  %v3379 = vadd.f32 %v3204, %v3378
  %v3380 = vpop.f32.mrb[0].mxu0
  %3381 = vdwg.mxu0
  %v3382 = vsel %vm318, %v3374, -inf
  %3383 = vmax.xlane.f32.xlu0 %v3382
  %v3384 = vpop.xlane.xlu0 %3383
  %v3385 = vsel %vm318, %v3379, -inf
  %3386 = vmax.xlane.f32.xlu0 %v3385
  %v3387 = vpop.xlane.xlu0 %3386
  %v3388 = vsub.f32 %v3374, %v3384
  %v3389 = vsub.f32 %v3379, %v3387
  %v3390 = vmul.f32 %v3388, 1.442695
  %v3391 = vpow.pop %v3390
  %v3392 = vmul.f32 %v3389, 1.442695
  %v3393 = vpow.pop %v3392
  %v3394 = vsel %vm318, %v3391, 0.0
  %3395 = vadd.xlane.f32.xlu0 %v3394
  %v3396 = vpop.xlane.xlu0 %3395
  %v3397 = vsel %vm318, %v3393, 0.0
  %3398 = vadd.xlane.f32.xlu0 %v3397
  %v3399 = vpop.xlane.xlu0 %3398
  %v3400 = vrcp.pop %v3396
  %v3401 = vmul.f32 %v3391, %v3400
  %v3402 = vrcp.pop %v3399
  %v3403 = vmul.f32 %v3393, %v3402
  %3404 = vst.msk [vmem:[%s12] sm:$0xff] %vm318, %v3401
  %3405 = vst.msk [vmem:[%s12 + $0x8] sm:$0xff] %vm318, %v3403
  %3406 = vrot.lane.b32.xlu0 %v3285, 64
  %v3407 = vpop.permute.xlu0 %3406
  %3408 = vrot.lane.b32.xlu0 %v3290, 64
  %v3409 = vpop.permute.xlu0 %3408
  %v3413 = vsel %vm318, %v3401, 0
  %v3416 = vsel %vm318, %v3403, 0
  %3418 = vmatprep.subr.mxu0 0.0
  %3419 = vmatpush1.msra.mxu0 %v3407
  %3420 = vmatprep.subr.mxu0 0.0
  %3421 = vmatpush1.msra.mxu0 %v3409
  %3422 = vmatprep.subr.mxu0 0.0
  %3423 = vmatpush1.msra.mxu0 0.0
  %3424 = vmatprep.subr.mxu0 0.0
  %3425 = vmatpush1.msra.mxu0 0.0
  %3426 = vmatprep.subr.mxu0 0.0
  %3427 = vmatpush1.msra.mxu0 0.0
  %3428 = vmatprep.subr.mxu0 0.0
  %3429 = vmatpush1.msra.mxu0 0.0
  %3430 = vmatprep.subr.mxu0 0.0
  %3431 = vmatpush1.msra.mxu0 0.0
  %3432 = vmatprep.subr.mxu0 0.0
  %3433 = vmatpush1.msra.mxu0 0.0
  %3434 = vmatprep.subr.mxu0 0.0
  %3435 = vmatpush1.msra.mxu0 0.0
  %3436 = vmatprep.subr.mxu0 0.0
  %3437 = vmatpush1.msra.mxu0 0.0
  %3438 = vmatprep.subr.mxu0 0.0
  %3439 = vmatpush1.msra.mxu0 0.0
  %3440 = vmatprep.subr.mxu0 0.0
  %3441 = vmatpush1.msra.mxu0 0.0
  %3442 = vmatprep.subr.mxu0 0.0
  %3443 = vmatpush1.msra.mxu0 0.0
  %3444 = vmatprep.subr.mxu0 0.0
  %3445 = vmatpush1.msra.mxu0 0.0
  %3446 = vmatprep.subr.mxu0 0.0
  %3447 = vmatpush1.msra.mxu0 0.0
  %3448 = vmatprep.subr.mxu0 0.0
  %3449 = vmatpush1.msra.mxu0 0.0
  %3450 = vmatprep.subr.mxu0 0.0
  %3451 = vmatpush1.msra.mxu0 0.0
  %3452 = vmatprep.subr.mxu0 0.0
  %3453 = vmatpush1.msra.mxu0 0.0
  %3454 = vmatprep.subr.mxu0 0.0
  %3455 = vmatpush1.msra.mxu0 0.0
  %3456 = vmatprep.subr.mxu0 0.0
  %3457 = vmatpush1.msra.mxu0 0.0
  %3458 = vmatprep.subr.mxu0 0.0
  %3459 = vmatpush1.msra.mxu0 0.0
  %3460 = vmatprep.subr.mxu0 0.0
  %3461 = vmatpush1.msra.mxu0 0.0
  %3462 = vmatprep.subr.mxu0 0.0
  %3463 = vmatpush1.msra.mxu0 0.0
  %3464 = vmatprep.subr.mxu0 0.0
  %3465 = vmatpush1.msra.mxu0 0.0
  %3466 = vmatprep.subr.mxu0 0.0
  %3467 = vmatpush1.msra.mxu0 0.0
  %3468 = vmatprep.subr.mxu0 0.0
  %3469 = vmatpush1.msra.mxu0 0.0
  %3470 = vmatprep.subr.mxu0 0.0
  %3471 = vmatpush1.msra.mxu0 0.0
  %3472 = vmatprep.subr.mxu0 0.0
  %3473 = vmatpush1.msra.mxu0 0.0
  %3474 = vmatprep.subr.mxu0 0.0
  %3475 = vmatpush1.msra.mxu0 0.0
  %3476 = vmatprep.subr.mxu0 0.0
  %3477 = vmatpush1.msra.mxu0 0.0
  %3478 = vmatprep.subr.mxu0 0.0
  %3479 = vmatpush1.msra.mxu0 0.0
  %3480 = vmatprep.subr.mxu0 0.0
  %3481 = vmatpush1.msra.mxu0 0.0
  %3482 = vmatprep.mubr.f32.mxu0 0.0
  %3483 = vmatmul.mubr.f32.gmra.mrb[0].mxu0 %v3413
  %v3484 = vpop.f32.mrb[0].mxu0
  %v3485 = vadd.f32 0.0, %v3484
  %v3486 = vpop.f32.mrb[0].mxu0
  %3487 = vmatprep.mubr.f32.mxu0 0.0
  %3488 = vmatmul.mubr.f32.gmra.mrb[0].mxu0 %v3416
  %v3489 = vpop.f32.mrb[0].mxu0
  %v3490 = vadd.f32 0.0, %v3489
  %v3491 = vpop.f32.mrb[0].mxu0
  %3492 = vdwg.mxu0
  %3493 = vrot.lane.b32.xlu0 %v3285, 120
  %v3494 = vpop.permute.xlu0 %3493
  %3495 = vrot.lane.b32.xlu0 %v3290, 120
  %v3496 = vpop.permute.xlu0 %3495
  %3497 = vrot.lane.b32.xlu0 %v3285, 88
  %v3498 = vpop.permute.xlu0 %3497
  %3499 = vrot.lane.b32.xlu0 %v3290, 88
  %v3500 = vpop.permute.xlu0 %3499
  %v3501 = vsel %vm234, %v3494, 0
  %v3503 = vsel %vm234, %v3496, 0
  %v3505 = vsel %vm234, %v3498, 0
  %v3507 = vsel %vm234, %v3500, 0
  %3509 = vmatprep.subr.mxu0 0.0
  %3510 = vmatpush1.xpose.msra.mxu0 %v3505
  %3511 = vmatprep.subr.mxu0 0.0
  %3512 = vmatpush1.xpose.msra.mxu0 %v3507
  %3513 = vmatprep.subr.mxu0 0.0
  %3514 = vmatpush1.xpose.msra.mxu0 0.0
  %3515 = vmatprep.subr.mxu0 0.0
  %3516 = vmatpush1.xpose.msra.mxu0 0.0
  %3517 = vmatprep.subr.mxu0 0.0
  %3518 = vmatpush1.xpose.msra.mxu0 0.0
  %3519 = vmatprep.subr.mxu0 0.0
  %3520 = vmatpush1.xpose.msra.mxu0 0.0
  %3521 = vmatprep.subr.mxu0 0.0
  %3522 = vmatpush1.xpose.msra.mxu0 0.0
  %3523 = vmatprep.subr.mxu0 0.0
  %3524 = vmatpush1.xpose.msra.mxu0 0.0
  %3525 = vmatprep.subr.mxu0 0.0
  %3526 = vmatpush1.xpose.msra.mxu0 0.0
  %3527 = vmatprep.subr.mxu0 0.0
  %3528 = vmatpush1.xpose.msra.mxu0 0.0
  %3529 = vmatprep.subr.mxu0 0.0
  %3530 = vmatpush1.xpose.msra.mxu0 0.0
  %3531 = vmatprep.subr.mxu0 0.0
  %3532 = vmatpush1.xpose.msra.mxu0 0.0
  %3533 = vmatprep.subr.mxu0 0.0
  %3534 = vmatpush1.xpose.msra.mxu0 0.0
  %3535 = vmatprep.subr.mxu0 0.0
  %3536 = vmatpush1.xpose.msra.mxu0 0.0
  %3537 = vmatprep.subr.mxu0 0.0
  %3538 = vmatpush1.xpose.msra.mxu0 0.0
  %3539 = vmatprep.subr.mxu0 0.0
  %3540 = vmatpush1.xpose.msra.mxu0 0.0
  %3541 = vmatprep.subr.mxu0 0.0
  %3542 = vmatpush1.xpose.msra.mxu0 0.0
  %3543 = vmatprep.subr.mxu0 0.0
  %3544 = vmatpush1.xpose.msra.mxu0 0.0
  %3545 = vmatprep.subr.mxu0 0.0
  %3546 = vmatpush1.xpose.msra.mxu0 0.0
  %3547 = vmatprep.subr.mxu0 0.0
  %3548 = vmatpush1.xpose.msra.mxu0 0.0
  %3549 = vmatprep.subr.mxu0 0.0
  %3550 = vmatpush1.xpose.msra.mxu0 0.0
  %3551 = vmatprep.subr.mxu0 0.0
  %3552 = vmatpush1.xpose.msra.mxu0 0.0
  %3553 = vmatprep.subr.mxu0 0.0
  %3554 = vmatpush1.xpose.msra.mxu0 0.0
  %3555 = vmatprep.subr.mxu0 0.0
  %3556 = vmatpush1.xpose.msra.mxu0 0.0
  %3557 = vmatprep.subr.mxu0 0.0
  %3558 = vmatpush1.xpose.msra.mxu0 0.0
  %3559 = vmatprep.subr.mxu0 0.0
  %3560 = vmatpush1.xpose.msra.mxu0 0.0
  %3561 = vmatprep.subr.mxu0 0.0
  %3562 = vmatpush1.xpose.msra.mxu0 0.0
  %3563 = vmatprep.subr.mxu0 0.0
  %3564 = vmatpush1.xpose.msra.mxu0 0.0
  %3565 = vmatprep.subr.mxu0 0.0
  %3566 = vmatpush1.xpose.msra.mxu0 0.0
  %3567 = vmatprep.subr.mxu0 0.0
  %3568 = vmatpush1.xpose.msra.mxu0 0.0
  %3569 = vmatprep.subr.mxu0 0.0
  %3570 = vmatpush1.xpose.msra.mxu0 0.0
  %3571 = vmatprep.subr.mxu0 0.0
  %3572 = vmatpush1.xpose.msra.mxu0 0.0
  %3573 = vmatprep.mubr.f32.mxu0 0.0
  %3574 = vmatmul.mubr.f32.gmra.mrb[0].mxu0 %v3501
  %v3575 = vpop.f32.mrb[0].mxu0
  %v3576 = vadd.f32 %v3203, %v3575
  %v3577 = vpop.f32.mrb[0].mxu0
  %3578 = vmatprep.mubr.f32.mxu0 0.0
  %3579 = vmatmul.mubr.f32.gmra.mrb[0].mxu0 %v3503
  %v3580 = vpop.f32.mrb[0].mxu0
  %v3581 = vadd.f32 %v3204, %v3580
  %v3582 = vpop.f32.mrb[0].mxu0
  %3583 = vdwg.mxu0
  %v3584 = vsel %vm318, %v3576, -inf
  %3585 = vmax.xlane.f32.xlu0 %v3584
  %v3586 = vpop.xlane.xlu0 %3585
  %v3587 = vsel %vm318, %v3581, -inf
  %3588 = vmax.xlane.f32.xlu0 %v3587
  %v3589 = vpop.xlane.xlu0 %3588
  %v3590 = vsub.f32 %v3576, %v3586
  %v3591 = vsub.f32 %v3581, %v3589
  %v3592 = vmul.f32 %v3590, 1.442695
  %v3593 = vpow.pop %v3592
  %v3594 = vmul.f32 %v3591, 1.442695
  %v3595 = vpow.pop %v3594
  %v3596 = vsel %vm318, %v3593, 0.0
  %3597 = vadd.xlane.f32.xlu0 %v3596
  %v3598 = vpop.xlane.xlu0 %3597
  %v3599 = vsel %vm318, %v3595, 0.0
  %3600 = vadd.xlane.f32.xlu0 %v3599
  %v3601 = vpop.xlane.xlu0 %3600
  %v3602 = vrcp.pop %v3598
  %v3603 = vmul.f32 %v3593, %v3602
  %v3604 = vrcp.pop %v3601
  %v3605 = vmul.f32 %v3595, %v3604
  %s3606 = scalar_lea.vmem %s12, 16
  %3607 = vst.msk [vmem:[%s3606] sm:$0xff] %vm318, %v3603
  %3608 = vst.msk [vmem:[%s3606 + $0x8] sm:$0xff] %vm318, %v3605
  %3609 = vrot.lane.b32.xlu0 %v3285, 56
  %v3610 = vpop.permute.xlu0 %3609
  %3611 = vrot.lane.b32.xlu0 %v3290, 56
  %v3612 = vpop.permute.xlu0 %3611
  %v3616 = vsel %vm318, %v3603, 0
  %v3619 = vsel %vm318, %v3605, 0
  %3621 = vmatprep.subr.mxu0 0.0
  %3622 = vmatpush1.msra.mxu0 %v3610
  %3623 = vmatprep.subr.mxu0 0.0
  %3624 = vmatpush1.msra.mxu0 %v3612
  %3625 = vmatprep.subr.mxu0 0.0
  %3626 = vmatpush1.msra.mxu0 0.0
  %3627 = vmatprep.subr.mxu0 0.0
  %3628 = vmatpush1.msra.mxu0 0.0
  %3629 = vmatprep.subr.mxu0 0.0
  %3630 = vmatpush1.msra.mxu0 0.0
  %3631 = vmatprep.subr.mxu0 0.0
  %3632 = vmatpush1.msra.mxu0 0.0
  %3633 = vmatprep.subr.mxu0 0.0
  %3634 = vmatpush1.msra.mxu0 0.0
  %3635 = vmatprep.subr.mxu0 0.0
  %3636 = vmatpush1.msra.mxu0 0.0
  %3637 = vmatprep.subr.mxu0 0.0
  %3638 = vmatpush1.msra.mxu0 0.0
  %3639 = vmatprep.subr.mxu0 0.0
  %3640 = vmatpush1.msra.mxu0 0.0
  %3641 = vmatprep.subr.mxu0 0.0
  %3642 = vmatpush1.msra.mxu0 0.0
  %3643 = vmatprep.subr.mxu0 0.0
  %3644 = vmatpush1.msra.mxu0 0.0
  %3645 = vmatprep.subr.mxu0 0.0
  %3646 = vmatpush1.msra.mxu0 0.0
  %3647 = vmatprep.subr.mxu0 0.0
  %3648 = vmatpush1.msra.mxu0 0.0
  %3649 = vmatprep.subr.mxu0 0.0
  %3650 = vmatpush1.msra.mxu0 0.0
  %3651 = vmatprep.subr.mxu0 0.0
  %3652 = vmatpush1.msra.mxu0 0.0
  %3653 = vmatprep.subr.mxu0 0.0
  %3654 = vmatpush1.msra.mxu0 0.0
  %3655 = vmatprep.subr.mxu0 0.0
  %3656 = vmatpush1.msra.mxu0 0.0
  %3657 = vmatprep.subr.mxu0 0.0
  %3658 = vmatpush1.msra.mxu0 0.0
  %3659 = vmatprep.subr.mxu0 0.0
  %3660 = vmatpush1.msra.mxu0 0.0
  %3661 = vmatprep.subr.mxu0 0.0
  %3662 = vmatpush1.msra.mxu0 0.0
  %3663 = vmatprep.subr.mxu0 0.0
  %3664 = vmatpush1.msra.mxu0 0.0
  %3665 = vmatprep.subr.mxu0 0.0
  %3666 = vmatpush1.msra.mxu0 0.0
  %3667 = vmatprep.subr.mxu0 0.0
  %3668 = vmatpush1.msra.mxu0 0.0
  %3669 = vmatprep.subr.mxu0 0.0
  %3670 = vmatpush1.msra.mxu0 0.0
  %3671 = vmatprep.subr.mxu0 0.0
  %3672 = vmatpush1.msra.mxu0 0.0
  %3673 = vmatprep.subr.mxu0 0.0
  %3674 = vmatpush1.msra.mxu0 0.0
  %3675 = vmatprep.subr.mxu0 0.0
  %3676 = vmatpush1.msra.mxu0 0.0
  %3677 = vmatprep.subr.mxu0 0.0
  %3678 = vmatpush1.msra.mxu0 0.0
  %3679 = vmatprep.subr.mxu0 0.0
  %3680 = vmatpush1.msra.mxu0 0.0
  %3681 = vmatprep.subr.mxu0 0.0
  %3682 = vmatpush1.msra.mxu0 0.0
  %3683 = vmatprep.subr.mxu0 0.0
  %3684 = vmatpush1.msra.mxu0 0.0
  %3685 = vmatprep.mubr.f32.mxu0 0.0
  %3686 = vmatmul.mubr.f32.gmra.mrb[0].mxu0 %v3616
  %v3687 = vpop.f32.mrb[0].mxu0
  %v3688 = vadd.f32 0.0, %v3687
  %v3689 = vpop.f32.mrb[0].mxu0
  %3690 = vmatprep.mubr.f32.mxu0 0.0
  %3691 = vmatmul.mubr.f32.gmra.mrb[0].mxu0 %v3619
  %v3692 = vpop.f32.mrb[0].mxu0
  %v3693 = vadd.f32 0.0, %v3692
  %v3694 = vpop.f32.mrb[0].mxu0
  %3695 = vdwg.mxu0
  %3697 = vrot.lane.b32.xlu0 %v3209, 32
  %v3698 = vpop.permute.xlu0 %3697
  %v3701 = vsel %vm234, %v3688, 0
  %v3704 = vsel %vm234, %v3693, 0
  %3706 = vmatprep.subr.mxu0 0.0
  %3707 = vmatpush1.msra.mxu0 %v3698
  %3708 = vmatprep.subr.mxu0 0.0
  %3709 = vmatpush1.msra.mxu0 0.0
  %3710 = vmatprep.subr.mxu0 0.0
  %3711 = vmatpush1.msra.mxu0 0.0
  %3712 = vmatprep.subr.mxu0 0.0
  %3713 = vmatpush1.msra.mxu0 0.0
  %3714 = vmatprep.subr.mxu0 0.0
  %3715 = vmatpush1.msra.mxu0 0.0
  %3716 = vmatprep.subr.mxu0 0.0
  %3717 = vmatpush1.msra.mxu0 0.0
  %3718 = vmatprep.subr.mxu0 0.0
  %3719 = vmatpush1.msra.mxu0 0.0
  %3720 = vmatprep.subr.mxu0 0.0
  %3721 = vmatpush1.msra.mxu0 0.0
  %3722 = vmatprep.subr.mxu0 0.0
  %3723 = vmatpush1.msra.mxu0 0.0
  %3724 = vmatprep.subr.mxu0 0.0
  %3725 = vmatpush1.msra.mxu0 0.0
  %3726 = vmatprep.subr.mxu0 0.0
  %3727 = vmatpush1.msra.mxu0 0.0
  %3728 = vmatprep.subr.mxu0 0.0
  %3729 = vmatpush1.msra.mxu0 0.0
  %3730 = vmatprep.subr.mxu0 0.0
  %3731 = vmatpush1.msra.mxu0 0.0
  %3732 = vmatprep.subr.mxu0 0.0
  %3733 = vmatpush1.msra.mxu0 0.0
  %3734 = vmatprep.subr.mxu0 0.0
  %3735 = vmatpush1.msra.mxu0 0.0
  %3736 = vmatprep.subr.mxu0 0.0
  %3737 = vmatpush1.msra.mxu0 0.0
  %3738 = vmatprep.subr.mxu0 0.0
  %3739 = vmatpush1.msra.mxu0 0.0
  %3740 = vmatprep.subr.mxu0 0.0
  %3741 = vmatpush1.msra.mxu0 0.0
  %3742 = vmatprep.subr.mxu0 0.0
  %3743 = vmatpush1.msra.mxu0 0.0
  %3744 = vmatprep.subr.mxu0 0.0
  %3745 = vmatpush1.msra.mxu0 0.0
  %3746 = vmatprep.subr.mxu0 0.0
  %3747 = vmatpush1.msra.mxu0 0.0
  %3748 = vmatprep.subr.mxu0 0.0
  %3749 = vmatpush1.msra.mxu0 0.0
  %3750 = vmatprep.subr.mxu0 0.0
  %3751 = vmatpush1.msra.mxu0 0.0
  %3752 = vmatprep.subr.mxu0 0.0
  %3753 = vmatpush1.msra.mxu0 0.0
  %3754 = vmatprep.subr.mxu0 0.0
  %3755 = vmatpush1.msra.mxu0 0.0
  %3756 = vmatprep.subr.mxu0 0.0
  %3757 = vmatpush1.msra.mxu0 0.0
  %3758 = vmatprep.subr.mxu0 0.0
  %3759 = vmatpush1.msra.mxu0 0.0
  %3760 = vmatprep.subr.mxu0 0.0
  %3761 = vmatpush1.msra.mxu0 0.0
  %3762 = vmatprep.subr.mxu0 0.0
  %3763 = vmatpush1.msra.mxu0 0.0
  %3764 = vmatprep.subr.mxu0 0.0
  %3765 = vmatpush1.msra.mxu0 0.0
  %3766 = vmatprep.subr.mxu0 0.0
  %3767 = vmatpush1.msra.mxu0 0.0
  %3768 = vmatprep.subr.mxu0 0.0
  %3769 = vmatpush1.msra.mxu0 0.0
  %3770 = vmatprep.mubr.f32.mxu0 0.0
  %3771 = vmatmul.mubr.f32.gmra.mrb[0].mxu0 %v3701
  %v3772 = vpop.f32.mrb[0].mxu0
  %v3773 = vadd.f32 0.0, %v3772
  %v3774 = vpop.f32.mrb[0].mxu0
  %3775 = vmatprep.mubr.f32.mxu0 0.0
  %3776 = vmatmul.mubr.f32.gmra.mrb[0].mxu0 %v3704
  %v3777 = vpop.f32.mrb[0].mxu0
  %v3778 = vadd.f32 0.0, %v3777
  %v3779 = vpop.f32.mrb[0].mxu0
  %3780 = vdwg.mxu0
  %3782 = vrot.lane.b32.xlu0 %v3208, 32
  %v3783 = vpop.permute.xlu0 %3782
  %v3786 = vsel %vm234, %v3485, 0
  %v3789 = vsel %vm234, %v3490, 0
  %3791 = vmatprep.subr.mxu0 0.0
  %3792 = vmatpush1.msra.mxu0 %v3783
  %3793 = vmatprep.subr.mxu0 0.0
  %3794 = vmatpush1.msra.mxu0 0.0
  %3795 = vmatprep.subr.mxu0 0.0
  %3796 = vmatpush1.msra.mxu0 0.0
  %3797 = vmatprep.subr.mxu0 0.0
  %3798 = vmatpush1.msra.mxu0 0.0
  %3799 = vmatprep.subr.mxu0 0.0
  %3800 = vmatpush1.msra.mxu0 0.0
  %3801 = vmatprep.subr.mxu0 0.0
  %3802 = vmatpush1.msra.mxu0 0.0
  %3803 = vmatprep.subr.mxu0 0.0
  %3804 = vmatpush1.msra.mxu0 0.0
  %3805 = vmatprep.subr.mxu0 0.0
  %3806 = vmatpush1.msra.mxu0 0.0
  %3807 = vmatprep.subr.mxu0 0.0
  %3808 = vmatpush1.msra.mxu0 0.0
  %3809 = vmatprep.subr.mxu0 0.0
  %3810 = vmatpush1.msra.mxu0 0.0
  %3811 = vmatprep.subr.mxu0 0.0
  %3812 = vmatpush1.msra.mxu0 0.0
  %3813 = vmatprep.subr.mxu0 0.0
  %3814 = vmatpush1.msra.mxu0 0.0
  %3815 = vmatprep.subr.mxu0 0.0
  %3816 = vmatpush1.msra.mxu0 0.0
  %3817 = vmatprep.subr.mxu0 0.0
  %3818 = vmatpush1.msra.mxu0 0.0
  %3819 = vmatprep.subr.mxu0 0.0
  %3820 = vmatpush1.msra.mxu0 0.0
  %3821 = vmatprep.subr.mxu0 0.0
  %3822 = vmatpush1.msra.mxu0 0.0
  %3823 = vmatprep.subr.mxu0 0.0
  %3824 = vmatpush1.msra.mxu0 0.0
  %3825 = vmatprep.subr.mxu0 0.0
  %3826 = vmatpush1.msra.mxu0 0.0
  %3827 = vmatprep.subr.mxu0 0.0
  %3828 = vmatpush1.msra.mxu0 0.0
  %3829 = vmatprep.subr.mxu0 0.0
  %3830 = vmatpush1.msra.mxu0 0.0
  %3831 = vmatprep.subr.mxu0 0.0
  %3832 = vmatpush1.msra.mxu0 0.0
  %3833 = vmatprep.subr.mxu0 0.0
  %3834 = vmatpush1.msra.mxu0 0.0
  %3835 = vmatprep.subr.mxu0 0.0
  %3836 = vmatpush1.msra.mxu0 0.0
  %3837 = vmatprep.subr.mxu0 0.0
  %3838 = vmatpush1.msra.mxu0 0.0
  %3839 = vmatprep.subr.mxu0 0.0
  %3840 = vmatpush1.msra.mxu0 0.0
  %3841 = vmatprep.subr.mxu0 0.0
  %3842 = vmatpush1.msra.mxu0 0.0
  %3843 = vmatprep.subr.mxu0 0.0
  %3844 = vmatpush1.msra.mxu0 0.0
  %3845 = vmatprep.subr.mxu0 0.0
  %3846 = vmatpush1.msra.mxu0 0.0
  %3847 = vmatprep.subr.mxu0 0.0
  %3848 = vmatpush1.msra.mxu0 0.0
  %3849 = vmatprep.subr.mxu0 0.0
  %3850 = vmatpush1.msra.mxu0 0.0
  %3851 = vmatprep.subr.mxu0 0.0
  %3852 = vmatpush1.msra.mxu0 0.0
  %3853 = vmatprep.subr.mxu0 0.0
  %3854 = vmatpush1.msra.mxu0 0.0
  %3855 = vmatprep.mubr.f32.mxu0 0.0
  %3856 = vmatmul.mubr.f32.gmra.mrb[0].mxu0 %v3786
  %v3857 = vpop.f32.mrb[0].mxu0
  %v3858 = vadd.f32 %v3773, %v3857
  %v3859 = vpop.f32.mrb[0].mxu0
  %3860 = vmatprep.mubr.f32.mxu0 0.0
  %3861 = vmatmul.mubr.f32.gmra.mrb[0].mxu0 %v3789
  %v3862 = vpop.f32.mrb[0].mxu0
  %v3863 = vadd.f32 %v3778, %v3862
  %v3864 = vpop.f32.mrb[0].mxu0
  %3865 = vdwg.mxu0
  %3866 = vrot.lane.b32.xlu0 %v3285, 112
  %v3867 = vpop.permute.xlu0 %3866
  %3868 = vrot.lane.b32.xlu0 %v3290, 112
  %v3869 = vpop.permute.xlu0 %3868
  %3870 = vrot.lane.b32.xlu0 %v3285, 80
  %v3871 = vpop.permute.xlu0 %3870
  %3872 = vrot.lane.b32.xlu0 %v3290, 80
  %v3873 = vpop.permute.xlu0 %3872
  %v3874 = vsel %vm234, %v3867, 0
  %v3876 = vsel %vm234, %v3869, 0
  %v3878 = vsel %vm234, %v3871, 0
  %v3880 = vsel %vm234, %v3873, 0
  %3882 = vmatprep.subr.mxu0 0.0
  %3883 = vmatpush1.xpose.msra.mxu0 %v3878
  %3884 = vmatprep.subr.mxu0 0.0
  %3885 = vmatpush1.xpose.msra.mxu0 %v3880
  %3886 = vmatprep.subr.mxu0 0.0
  %3887 = vmatpush1.xpose.msra.mxu0 0.0
  %3888 = vmatprep.subr.mxu0 0.0
  %3889 = vmatpush1.xpose.msra.mxu0 0.0
  %3890 = vmatprep.subr.mxu0 0.0
  %3891 = vmatpush1.xpose.msra.mxu0 0.0
  %3892 = vmatprep.subr.mxu0 0.0
  %3893 = vmatpush1.xpose.msra.mxu0 0.0
  %3894 = vmatprep.subr.mxu0 0.0
  %3895 = vmatpush1.xpose.msra.mxu0 0.0
  %3896 = vmatprep.subr.mxu0 0.0
  %3897 = vmatpush1.xpose.msra.mxu0 0.0
  %3898 = vmatprep.subr.mxu0 0.0
  %3899 = vmatpush1.xpose.msra.mxu0 0.0
  %3900 = vmatprep.subr.mxu0 0.0
  %3901 = vmatpush1.xpose.msra.mxu0 0.0
  %3902 = vmatprep.subr.mxu0 0.0
  %3903 = vmatpush1.xpose.msra.mxu0 0.0
  %3904 = vmatprep.subr.mxu0 0.0
  %3905 = vmatpush1.xpose.msra.mxu0 0.0
  %3906 = vmatprep.subr.mxu0 0.0
  %3907 = vmatpush1.xpose.msra.mxu0 0.0
  %3908 = vmatprep.subr.mxu0 0.0
  %3909 = vmatpush1.xpose.msra.mxu0 0.0
  %3910 = vmatprep.subr.mxu0 0.0
  %3911 = vmatpush1.xpose.msra.mxu0 0.0
  %3912 = vmatprep.subr.mxu0 0.0
  %3913 = vmatpush1.xpose.msra.mxu0 0.0
  %3914 = vmatprep.subr.mxu0 0.0
  %3915 = vmatpush1.xpose.msra.mxu0 0.0
  %3916 = vmatprep.subr.mxu0 0.0
  %3917 = vmatpush1.xpose.msra.mxu0 0.0
  %3918 = vmatprep.subr.mxu0 0.0
  %3919 = vmatpush1.xpose.msra.mxu0 0.0
  %3920 = vmatprep.subr.mxu0 0.0
  %3921 = vmatpush1.xpose.msra.mxu0 0.0
  %3922 = vmatprep.subr.mxu0 0.0
  %3923 = vmatpush1.xpose.msra.mxu0 0.0
  %3924 = vmatprep.subr.mxu0 0.0
  %3925 = vmatpush1.xpose.msra.mxu0 0.0
  %3926 = vmatprep.subr.mxu0 0.0
  %3927 = vmatpush1.xpose.msra.mxu0 0.0
  %3928 = vmatprep.subr.mxu0 0.0
  %3929 = vmatpush1.xpose.msra.mxu0 0.0
  %3930 = vmatprep.subr.mxu0 0.0
  %3931 = vmatpush1.xpose.msra.mxu0 0.0
  %3932 = vmatprep.subr.mxu0 0.0
  %3933 = vmatpush1.xpose.msra.mxu0 0.0
  %3934 = vmatprep.subr.mxu0 0.0
  %3935 = vmatpush1.xpose.msra.mxu0 0.0
  %3936 = vmatprep.subr.mxu0 0.0
  %3937 = vmatpush1.xpose.msra.mxu0 0.0
  %3938 = vmatprep.subr.mxu0 0.0
  %3939 = vmatpush1.xpose.msra.mxu0 0.0
  %3940 = vmatprep.subr.mxu0 0.0
  %3941 = vmatpush1.xpose.msra.mxu0 0.0
  %3942 = vmatprep.subr.mxu0 0.0
  %3943 = vmatpush1.xpose.msra.mxu0 0.0
  %3944 = vmatprep.subr.mxu0 0.0
  %3945 = vmatpush1.xpose.msra.mxu0 0.0
  %3946 = vmatprep.mubr.f32.mxu0 0.0
  %3947 = vmatmul.mubr.f32.gmra.mrb[0].mxu0 %v3874
  %v3948 = vpop.f32.mrb[0].mxu0
  %v3949 = vadd.f32 %v3203, %v3948
  %v3950 = vpop.f32.mrb[0].mxu0
  %3951 = vmatprep.mubr.f32.mxu0 0.0
  %3952 = vmatmul.mubr.f32.gmra.mrb[0].mxu0 %v3876
  %v3953 = vpop.f32.mrb[0].mxu0
  %v3954 = vadd.f32 %v3204, %v3953
  %v3955 = vpop.f32.mrb[0].mxu0
  %3956 = vdwg.mxu0
  %v3957 = vsel %vm318, %v3949, -inf
  %3958 = vmax.xlane.f32.xlu0 %v3957
  %v3959 = vpop.xlane.xlu0 %3958
  %v3960 = vsel %vm318, %v3954, -inf
  %3961 = vmax.xlane.f32.xlu0 %v3960
  %v3962 = vpop.xlane.xlu0 %3961
  %v3963 = vsub.f32 %v3949, %v3959
  %v3964 = vsub.f32 %v3954, %v3962
  %v3965 = vmul.f32 %v3963, 1.442695
  %v3966 = vpow.pop %v3965
  %v3967 = vmul.f32 %v3964, 1.442695
  %v3968 = vpow.pop %v3967
  %v3969 = vsel %vm318, %v3966, 0.0
  %3970 = vadd.xlane.f32.xlu0 %v3969
  %v3971 = vpop.xlane.xlu0 %3970
  %v3972 = vsel %vm318, %v3968, 0.0
  %3973 = vadd.xlane.f32.xlu0 %v3972
  %v3974 = vpop.xlane.xlu0 %3973
  %v3975 = vrcp.pop %v3971
  %v3976 = vmul.f32 %v3966, %v3975
  %v3977 = vrcp.pop %v3974
  %v3978 = vmul.f32 %v3968, %v3977
  %s3979 = scalar_lea.vmem %s12, 32
  %3980 = vst.msk [vmem:[%s3979] sm:$0xff] %vm318, %v3976
  %3981 = vst.msk [vmem:[%s3979 + $0x8] sm:$0xff] %vm318, %v3978
  %3982 = vrot.lane.b32.xlu0 %v3285, 48
  %v3983 = vpop.permute.xlu0 %3982
  %3984 = vrot.lane.b32.xlu0 %v3290, 48
  %v3985 = vpop.permute.xlu0 %3984
  %v3989 = vsel %vm318, %v3976, 0
  %v3992 = vsel %vm318, %v3978, 0
  %3994 = vmatprep.subr.mxu0 0.0
  %3995 = vmatpush1.msra.mxu0 %v3983
  %3996 = vmatprep.subr.mxu0 0.0
  %3997 = vmatpush1.msra.mxu0 %v3985
  %3998 = vmatprep.subr.mxu0 0.0
  %3999 = vmatpush1.msra.mxu0 0.0
  %4000 = vmatprep.subr.mxu0 0.0
  %4001 = vmatpush1.msra.mxu0 0.0
  %4002 = vmatprep.subr.mxu0 0.0
  %4003 = vmatpush1.msra.mxu0 0.0
  %4004 = vmatprep.subr.mxu0 0.0
  %4005 = vmatpush1.msra.mxu0 0.0
  %4006 = vmatprep.subr.mxu0 0.0
  %4007 = vmatpush1.msra.mxu0 0.0
  %4008 = vmatprep.subr.mxu0 0.0
  %4009 = vmatpush1.msra.mxu0 0.0
  %4010 = vmatprep.subr.mxu0 0.0
  %4011 = vmatpush1.msra.mxu0 0.0
  %4012 = vmatprep.subr.mxu0 0.0
  %4013 = vmatpush1.msra.mxu0 0.0
  %4014 = vmatprep.subr.mxu0 0.0
  %4015 = vmatpush1.msra.mxu0 0.0
  %4016 = vmatprep.subr.mxu0 0.0
  %4017 = vmatpush1.msra.mxu0 0.0
  %4018 = vmatprep.subr.mxu0 0.0
  %4019 = vmatpush1.msra.mxu0 0.0
  %4020 = vmatprep.subr.mxu0 0.0
  %4021 = vmatpush1.msra.mxu0 0.0
  %4022 = vmatprep.subr.mxu0 0.0
  %4023 = vmatpush1.msra.mxu0 0.0
  %4024 = vmatprep.subr.mxu0 0.0
  %4025 = vmatpush1.msra.mxu0 0.0
  %4026 = vmatprep.subr.mxu0 0.0
  %4027 = vmatpush1.msra.mxu0 0.0
  %4028 = vmatprep.subr.mxu0 0.0
  %4029 = vmatpush1.msra.mxu0 0.0
  %4030 = vmatprep.subr.mxu0 0.0
  %4031 = vmatpush1.msra.mxu0 0.0
  %4032 = vmatprep.subr.mxu0 0.0
  %4033 = vmatpush1.msra.mxu0 0.0
  %4034 = vmatprep.subr.mxu0 0.0
  %4035 = vmatpush1.msra.mxu0 0.0
  %4036 = vmatprep.subr.mxu0 0.0
  %4037 = vmatpush1.msra.mxu0 0.0
  %4038 = vmatprep.subr.mxu0 0.0
  %4039 = vmatpush1.msra.mxu0 0.0
  %4040 = vmatprep.subr.mxu0 0.0
  %4041 = vmatpush1.msra.mxu0 0.0
  %4042 = vmatprep.subr.mxu0 0.0
  %4043 = vmatpush1.msra.mxu0 0.0
  %4044 = vmatprep.subr.mxu0 0.0
  %4045 = vmatpush1.msra.mxu0 0.0
  %4046 = vmatprep.subr.mxu0 0.0
  %4047 = vmatpush1.msra.mxu0 0.0
  %4048 = vmatprep.subr.mxu0 0.0
  %4049 = vmatpush1.msra.mxu0 0.0
  %4050 = vmatprep.subr.mxu0 0.0
  %4051 = vmatpush1.msra.mxu0 0.0
  %4052 = vmatprep.subr.mxu0 0.0
  %4053 = vmatpush1.msra.mxu0 0.0
  %4054 = vmatprep.subr.mxu0 0.0
  %4055 = vmatpush1.msra.mxu0 0.0
  %4056 = vmatprep.subr.mxu0 0.0
  %4057 = vmatpush1.msra.mxu0 0.0
  %4058 = vmatprep.mubr.f32.mxu0 0.0
  %4059 = vmatmul.mubr.f32.gmra.mrb[0].mxu0 %v3989
  %v4060 = vpop.f32.mrb[0].mxu0
  %v4061 = vadd.f32 0.0, %v4060
  %v4062 = vpop.f32.mrb[0].mxu0
  %4063 = vmatprep.mubr.f32.mxu0 0.0
  %4064 = vmatmul.mubr.f32.gmra.mrb[0].mxu0 %v3992
  %v4065 = vpop.f32.mrb[0].mxu0
  %v4066 = vadd.f32 0.0, %v4065
  %v4067 = vpop.f32.mrb[0].mxu0
  %4068 = vdwg.mxu0
  %4070 = vrot.lane.b32.xlu0 %v3210, 32
  %v4071 = vpop.permute.xlu0 %4070
  %v4074 = vsel %vm234, %v4061, 0
  %v4077 = vsel %vm234, %v4066, 0
  %4079 = vmatprep.subr.mxu0 0.0
  %4080 = vmatpush1.msra.mxu0 %v4071
  %4081 = vmatprep.subr.mxu0 0.0
  %4082 = vmatpush1.msra.mxu0 0.0
  %4083 = vmatprep.subr.mxu0 0.0
  %4084 = vmatpush1.msra.mxu0 0.0
  %4085 = vmatprep.subr.mxu0 0.0
  %4086 = vmatpush1.msra.mxu0 0.0
  %4087 = vmatprep.subr.mxu0 0.0
  %4088 = vmatpush1.msra.mxu0 0.0
  %4089 = vmatprep.subr.mxu0 0.0
  %4090 = vmatpush1.msra.mxu0 0.0
  %4091 = vmatprep.subr.mxu0 0.0
  %4092 = vmatpush1.msra.mxu0 0.0
  %4093 = vmatprep.subr.mxu0 0.0
  %4094 = vmatpush1.msra.mxu0 0.0
  %4095 = vmatprep.subr.mxu0 0.0
  %4096 = vmatpush1.msra.mxu0 0.0
  %4097 = vmatprep.subr.mxu0 0.0
  %4098 = vmatpush1.msra.mxu0 0.0
  %4099 = vmatprep.subr.mxu0 0.0
  %4100 = vmatpush1.msra.mxu0 0.0
  %4101 = vmatprep.subr.mxu0 0.0
  %4102 = vmatpush1.msra.mxu0 0.0
  %4103 = vmatprep.subr.mxu0 0.0
  %4104 = vmatpush1.msra.mxu0 0.0
  %4105 = vmatprep.subr.mxu0 0.0
  %4106 = vmatpush1.msra.mxu0 0.0
  %4107 = vmatprep.subr.mxu0 0.0
  %4108 = vmatpush1.msra.mxu0 0.0
  %4109 = vmatprep.subr.mxu0 0.0
  %4110 = vmatpush1.msra.mxu0 0.0
  %4111 = vmatprep.subr.mxu0 0.0
  %4112 = vmatpush1.msra.mxu0 0.0
  %4113 = vmatprep.subr.mxu0 0.0
  %4114 = vmatpush1.msra.mxu0 0.0
  %4115 = vmatprep.subr.mxu0 0.0
  %4116 = vmatpush1.msra.mxu0 0.0
  %4117 = vmatprep.subr.mxu0 0.0
  %4118 = vmatpush1.msra.mxu0 0.0
  %4119 = vmatprep.subr.mxu0 0.0
  %4120 = vmatpush1.msra.mxu0 0.0
  %4121 = vmatprep.subr.mxu0 0.0
  %4122 = vmatpush1.msra.mxu0 0.0
  %4123 = vmatprep.subr.mxu0 0.0
  %4124 = vmatpush1.msra.mxu0 0.0
  %4125 = vmatprep.subr.mxu0 0.0
  %4126 = vmatpush1.msra.mxu0 0.0
  %4127 = vmatprep.subr.mxu0 0.0
  %4128 = vmatpush1.msra.mxu0 0.0
  %4129 = vmatprep.subr.mxu0 0.0
  %4130 = vmatpush1.msra.mxu0 0.0
  %4131 = vmatprep.subr.mxu0 0.0
  %4132 = vmatpush1.msra.mxu0 0.0
  %4133 = vmatprep.subr.mxu0 0.0
  %4134 = vmatpush1.msra.mxu0 0.0
  %4135 = vmatprep.subr.mxu0 0.0
  %4136 = vmatpush1.msra.mxu0 0.0
  %4137 = vmatprep.subr.mxu0 0.0
  %4138 = vmatpush1.msra.mxu0 0.0
  %4139 = vmatprep.subr.mxu0 0.0
  %4140 = vmatpush1.msra.mxu0 0.0
  %4141 = vmatprep.subr.mxu0 0.0
  %4142 = vmatpush1.msra.mxu0 0.0
  %4143 = vmatprep.mubr.f32.mxu0 0.0
  %4144 = vmatmul.mubr.f32.gmra.mrb[0].mxu0 %v4074
  %v4145 = vpop.f32.mrb[0].mxu0
  %v4146 = vadd.f32 0.0, %v4145
  %v4147 = vpop.f32.mrb[0].mxu0
  %4148 = vmatprep.mubr.f32.mxu0 0.0
  %4149 = vmatmul.mubr.f32.gmra.mrb[0].mxu0 %v4077
  %v4150 = vpop.f32.mrb[0].mxu0
  %v4151 = vadd.f32 0.0, %v4150
  %v4152 = vpop.f32.mrb[0].mxu0
  %4153 = vdwg.mxu0
  %v4154 = vadd.f32 %v3858, %v4146
  %v4155 = vadd.f32 %v3863, %v4151
  %4156 = vrot.lane.b32.xlu0 %v3285, 104
  %v4157 = vpop.permute.xlu0 %4156
  %4158 = vrot.lane.b32.xlu0 %v3290, 104
  %v4159 = vpop.permute.xlu0 %4158
  %4160 = vrot.lane.b32.xlu0 %v3285, 72
  %v4161 = vpop.permute.xlu0 %4160
  %4162 = vrot.lane.b32.xlu0 %v3290, 72
  %v4163 = vpop.permute.xlu0 %4162
  %v4164 = vsel %vm234, %v4157, 0
  %v4166 = vsel %vm234, %v4159, 0
  %v4168 = vsel %vm234, %v4161, 0
  %v4170 = vsel %vm234, %v4163, 0
  %4172 = vmatprep.subr.mxu0 0.0
  %4173 = vmatpush1.xpose.msra.mxu0 %v4168
  %4174 = vmatprep.subr.mxu0 0.0
  %4175 = vmatpush1.xpose.msra.mxu0 %v4170
  %4176 = vmatprep.subr.mxu0 0.0
  %4177 = vmatpush1.xpose.msra.mxu0 0.0
  %4178 = vmatprep.subr.mxu0 0.0
  %4179 = vmatpush1.xpose.msra.mxu0 0.0
  %4180 = vmatprep.subr.mxu0 0.0
  %4181 = vmatpush1.xpose.msra.mxu0 0.0
  %4182 = vmatprep.subr.mxu0 0.0
  %4183 = vmatpush1.xpose.msra.mxu0 0.0
  %4184 = vmatprep.subr.mxu0 0.0
  %4185 = vmatpush1.xpose.msra.mxu0 0.0
  %4186 = vmatprep.subr.mxu0 0.0
  %4187 = vmatpush1.xpose.msra.mxu0 0.0
  %4188 = vmatprep.subr.mxu0 0.0
  %4189 = vmatpush1.xpose.msra.mxu0 0.0
  %4190 = vmatprep.subr.mxu0 0.0
  %4191 = vmatpush1.xpose.msra.mxu0 0.0
  %4192 = vmatprep.subr.mxu0 0.0
  %4193 = vmatpush1.xpose.msra.mxu0 0.0
  %4194 = vmatprep.subr.mxu0 0.0
  %4195 = vmatpush1.xpose.msra.mxu0 0.0
  %4196 = vmatprep.subr.mxu0 0.0
  %4197 = vmatpush1.xpose.msra.mxu0 0.0
  %4198 = vmatprep.subr.mxu0 0.0
  %4199 = vmatpush1.xpose.msra.mxu0 0.0
  %4200 = vmatprep.subr.mxu0 0.0
  %4201 = vmatpush1.xpose.msra.mxu0 0.0
  %4202 = vmatprep.subr.mxu0 0.0
  %4203 = vmatpush1.xpose.msra.mxu0 0.0
  %4204 = vmatprep.subr.mxu0 0.0
  %4205 = vmatpush1.xpose.msra.mxu0 0.0
  %4206 = vmatprep.subr.mxu0 0.0
  %4207 = vmatpush1.xpose.msra.mxu0 0.0
  %4208 = vmatprep.subr.mxu0 0.0
  %4209 = vmatpush1.xpose.msra.mxu0 0.0
  %4210 = vmatprep.subr.mxu0 0.0
  %4211 = vmatpush1.xpose.msra.mxu0 0.0
  %4212 = vmatprep.subr.mxu0 0.0
  %4213 = vmatpush1.xpose.msra.mxu0 0.0
  %4214 = vmatprep.subr.mxu0 0.0
  %4215 = vmatpush1.xpose.msra.mxu0 0.0
  %4216 = vmatprep.subr.mxu0 0.0
  %4217 = vmatpush1.xpose.msra.mxu0 0.0
  %4218 = vmatprep.subr.mxu0 0.0
  %4219 = vmatpush1.xpose.msra.mxu0 0.0
  %4220 = vmatprep.subr.mxu0 0.0
  %4221 = vmatpush1.xpose.msra.mxu0 0.0
  %4222 = vmatprep.subr.mxu0 0.0
  %4223 = vmatpush1.xpose.msra.mxu0 0.0
  %4224 = vmatprep.subr.mxu0 0.0
  %4225 = vmatpush1.xpose.msra.mxu0 0.0
  %4226 = vmatprep.subr.mxu0 0.0
  %4227 = vmatpush1.xpose.msra.mxu0 0.0
  %4228 = vmatprep.subr.mxu0 0.0
  %4229 = vmatpush1.xpose.msra.mxu0 0.0
  %4230 = vmatprep.subr.mxu0 0.0
  %4231 = vmatpush1.xpose.msra.mxu0 0.0
  %4232 = vmatprep.subr.mxu0 0.0
  %4233 = vmatpush1.xpose.msra.mxu0 0.0
  %4234 = vmatprep.subr.mxu0 0.0
  %4235 = vmatpush1.xpose.msra.mxu0 0.0
  %4236 = vmatprep.mubr.f32.mxu0 0.0
  %4237 = vmatmul.mubr.f32.gmra.mrb[0].mxu0 %v4164
  %v4238 = vpop.f32.mrb[0].mxu0
  %v4239 = vadd.f32 %v3203, %v4238
  %v4240 = vpop.f32.mrb[0].mxu0
  %4241 = vmatprep.mubr.f32.mxu0 0.0
  %4242 = vmatmul.mubr.f32.gmra.mrb[0].mxu0 %v4166
  %v4243 = vpop.f32.mrb[0].mxu0
  %v4244 = vadd.f32 %v3204, %v4243
  %v4245 = vpop.f32.mrb[0].mxu0
  %4246 = vdwg.mxu0
  %v4247 = vsel %vm318, %v4239, -inf
  %4248 = vmax.xlane.f32.xlu0 %v4247
  %v4249 = vpop.xlane.xlu0 %4248
  %v4250 = vsel %vm318, %v4244, -inf
  %4251 = vmax.xlane.f32.xlu0 %v4250
  %v4252 = vpop.xlane.xlu0 %4251
  %v4253 = vsub.f32 %v4239, %v4249
  %v4254 = vsub.f32 %v4244, %v4252
  %v4255 = vmul.f32 %v4253, 1.442695
  %v4256 = vpow.pop %v4255
  %v4257 = vmul.f32 %v4254, 1.442695
  %v4258 = vpow.pop %v4257
  %v4259 = vsel %vm318, %v4256, 0.0
  %4260 = vadd.xlane.f32.xlu0 %v4259
  %v4261 = vpop.xlane.xlu0 %4260
  %v4262 = vsel %vm318, %v4258, 0.0
  %4263 = vadd.xlane.f32.xlu0 %v4262
  %v4264 = vpop.xlane.xlu0 %4263
  %v4265 = vrcp.pop %v4261
  %v4266 = vmul.f32 %v4256, %v4265
  %v4267 = vrcp.pop %v4264
  %v4268 = vmul.f32 %v4258, %v4267
  %s4269 = scalar_lea.vmem %s12, 48
  %4270 = vst.msk [vmem:[%s4269] sm:$0xff] %vm318, %v4266
  %4271 = vst.msk [vmem:[%s4269 + $0x8] sm:$0xff] %vm318, %v4268
  %4272 = vrot.lane.b32.xlu0 %v3285, 40
  %v4273 = vpop.permute.xlu0 %4272
  %4274 = vrot.lane.b32.xlu0 %v3290, 40
  %v4275 = vpop.permute.xlu0 %4274
  %v4279 = vsel %vm318, %v4266, 0
  %v4282 = vsel %vm318, %v4268, 0
  %4284 = vmatprep.subr.mxu0 0.0
  %4285 = vmatpush1.msra.mxu0 %v4273
  %4286 = vmatprep.subr.mxu0 0.0
  %4287 = vmatpush1.msra.mxu0 %v4275
  %4288 = vmatprep.subr.mxu0 0.0
  %4289 = vmatpush1.msra.mxu0 0.0
  %4290 = vmatprep.subr.mxu0 0.0
  %4291 = vmatpush1.msra.mxu0 0.0
  %4292 = vmatprep.subr.mxu0 0.0
  %4293 = vmatpush1.msra.mxu0 0.0
  %4294 = vmatprep.subr.mxu0 0.0
  %4295 = vmatpush1.msra.mxu0 0.0
  %4296 = vmatprep.subr.mxu0 0.0
  %4297 = vmatpush1.msra.mxu0 0.0
  %4298 = vmatprep.subr.mxu0 0.0
  %4299 = vmatpush1.msra.mxu0 0.0
  %4300 = vmatprep.subr.mxu0 0.0
  %4301 = vmatpush1.msra.mxu0 0.0
  %4302 = vmatprep.subr.mxu0 0.0
  %4303 = vmatpush1.msra.mxu0 0.0
  %4304 = vmatprep.subr.mxu0 0.0
  %4305 = vmatpush1.msra.mxu0 0.0
  %4306 = vmatprep.subr.mxu0 0.0
  %4307 = vmatpush1.msra.mxu0 0.0
  %4308 = vmatprep.subr.mxu0 0.0
  %4309 = vmatpush1.msra.mxu0 0.0
  %4310 = vmatprep.subr.mxu0 0.0
  %4311 = vmatpush1.msra.mxu0 0.0
  %4312 = vmatprep.subr.mxu0 0.0
  %4313 = vmatpush1.msra.mxu0 0.0
  %4314 = vmatprep.subr.mxu0 0.0
  %4315 = vmatpush1.msra.mxu0 0.0
  %4316 = vmatprep.subr.mxu0 0.0
  %4317 = vmatpush1.msra.mxu0 0.0
  %4318 = vmatprep.subr.mxu0 0.0
  %4319 = vmatpush1.msra.mxu0 0.0
  %4320 = vmatprep.subr.mxu0 0.0
  %4321 = vmatpush1.msra.mxu0 0.0
  %4322 = vmatprep.subr.mxu0 0.0
  %4323 = vmatpush1.msra.mxu0 0.0
  %4324 = vmatprep.subr.mxu0 0.0
  %4325 = vmatpush1.msra.mxu0 0.0
  %4326 = vmatprep.subr.mxu0 0.0
  %4327 = vmatpush1.msra.mxu0 0.0
  %4328 = vmatprep.subr.mxu0 0.0
  %4329 = vmatpush1.msra.mxu0 0.0
  %4330 = vmatprep.subr.mxu0 0.0
  %4331 = vmatpush1.msra.mxu0 0.0
  %4332 = vmatprep.subr.mxu0 0.0
  %4333 = vmatpush1.msra.mxu0 0.0
  %4334 = vmatprep.subr.mxu0 0.0
  %4335 = vmatpush1.msra.mxu0 0.0
  %4336 = vmatprep.subr.mxu0 0.0
  %4337 = vmatpush1.msra.mxu0 0.0
  %4338 = vmatprep.subr.mxu0 0.0
  %4339 = vmatpush1.msra.mxu0 0.0
  %4340 = vmatprep.subr.mxu0 0.0
  %4341 = vmatpush1.msra.mxu0 0.0
  %4342 = vmatprep.subr.mxu0 0.0
  %4343 = vmatpush1.msra.mxu0 0.0
  %4344 = vmatprep.subr.mxu0 0.0
  %4345 = vmatpush1.msra.mxu0 0.0
  %4346 = vmatprep.subr.mxu0 0.0
  %4347 = vmatpush1.msra.mxu0 0.0
  %4348 = vmatprep.mubr.f32.mxu0 0.0
  %4349 = vmatmul.mubr.f32.gmra.mrb[0].mxu0 %v4279
  %v4350 = vpop.f32.mrb[0].mxu0
  %v4351 = vadd.f32 0.0, %v4350
  %v4352 = vpop.f32.mrb[0].mxu0
  %4353 = vmatprep.mubr.f32.mxu0 0.0
  %4354 = vmatmul.mubr.f32.gmra.mrb[0].mxu0 %v4282
  %v4355 = vpop.f32.mrb[0].mxu0
  %v4356 = vadd.f32 0.0, %v4355
  %v4357 = vpop.f32.mrb[0].mxu0
  %4358 = vdwg.mxu0
  %4360 = vrot.lane.b32.xlu0 %v3211, 32
  %v4361 = vpop.permute.xlu0 %4360
  %v4364 = vsel %vm234, %v4351, 0
  %v4367 = vsel %vm234, %v4356, 0
  %4369 = vmatprep.subr.mxu0 0.0
  %4370 = vmatpush1.msra.mxu0 %v4361
  %4371 = vmatprep.subr.mxu0 0.0
  %4372 = vmatpush1.msra.mxu0 0.0
  %4373 = vmatprep.subr.mxu0 0.0
  %4374 = vmatpush1.msra.mxu0 0.0
  %4375 = vmatprep.subr.mxu0 0.0
  %4376 = vmatpush1.msra.mxu0 0.0
  %4377 = vmatprep.subr.mxu0 0.0
  %4378 = vmatpush1.msra.mxu0 0.0
  %4379 = vmatprep.subr.mxu0 0.0
  %4380 = vmatpush1.msra.mxu0 0.0
  %4381 = vmatprep.subr.mxu0 0.0
  %4382 = vmatpush1.msra.mxu0 0.0
  %4383 = vmatprep.subr.mxu0 0.0
  %4384 = vmatpush1.msra.mxu0 0.0
  %4385 = vmatprep.subr.mxu0 0.0
  %4386 = vmatpush1.msra.mxu0 0.0
  %4387 = vmatprep.subr.mxu0 0.0
  %4388 = vmatpush1.msra.mxu0 0.0
  %4389 = vmatprep.subr.mxu0 0.0
  %4390 = vmatpush1.msra.mxu0 0.0
  %4391 = vmatprep.subr.mxu0 0.0
  %4392 = vmatpush1.msra.mxu0 0.0
  %4393 = vmatprep.subr.mxu0 0.0
  %4394 = vmatpush1.msra.mxu0 0.0
  %4395 = vmatprep.subr.mxu0 0.0
  %4396 = vmatpush1.msra.mxu0 0.0
  %4397 = vmatprep.subr.mxu0 0.0
  %4398 = vmatpush1.msra.mxu0 0.0
  %4399 = vmatprep.subr.mxu0 0.0
  %4400 = vmatpush1.msra.mxu0 0.0
  %4401 = vmatprep.subr.mxu0 0.0
  %4402 = vmatpush1.msra.mxu0 0.0
  %4403 = vmatprep.subr.mxu0 0.0
  %4404 = vmatpush1.msra.mxu0 0.0
  %4405 = vmatprep.subr.mxu0 0.0
  %4406 = vmatpush1.msra.mxu0 0.0
  %4407 = vmatprep.subr.mxu0 0.0
  %4408 = vmatpush1.msra.mxu0 0.0
  %4409 = vmatprep.subr.mxu0 0.0
  %4410 = vmatpush1.msra.mxu0 0.0
  %4411 = vmatprep.subr.mxu0 0.0
  %4412 = vmatpush1.msra.mxu0 0.0
  %4413 = vmatprep.subr.mxu0 0.0
  %4414 = vmatpush1.msra.mxu0 0.0
  %4415 = vmatprep.subr.mxu0 0.0
  %4416 = vmatpush1.msra.mxu0 0.0
  %4417 = vmatprep.subr.mxu0 0.0
  %4418 = vmatpush1.msra.mxu0 0.0
  %4419 = vmatprep.subr.mxu0 0.0
  %4420 = vmatpush1.msra.mxu0 0.0
  %4421 = vmatprep.subr.mxu0 0.0
  %4422 = vmatpush1.msra.mxu0 0.0
  %4423 = vmatprep.subr.mxu0 0.0
  %4424 = vmatpush1.msra.mxu0 0.0
  %4425 = vmatprep.subr.mxu0 0.0
  %4426 = vmatpush1.msra.mxu0 0.0
  %4427 = vmatprep.subr.mxu0 0.0
  %4428 = vmatpush1.msra.mxu0 0.0
  %4429 = vmatprep.subr.mxu0 0.0
  %4430 = vmatpush1.msra.mxu0 0.0
  %4431 = vmatprep.subr.mxu0 0.0
  %4432 = vmatpush1.msra.mxu0 0.0
  %4433 = vmatprep.mubr.f32.mxu0 0.0
  %4434 = vmatmul.mubr.f32.gmra.mrb[0].mxu0 %v4364
  %v4435 = vpop.f32.mrb[0].mxu0
  %v4436 = vadd.f32 0.0, %v4435
  %v4437 = vpop.f32.mrb[0].mxu0
  %4438 = vmatprep.mubr.f32.mxu0 0.0
  %4439 = vmatmul.mubr.f32.gmra.mrb[0].mxu0 %v4367
  %v4440 = vpop.f32.mrb[0].mxu0
  %v4441 = vadd.f32 0.0, %v4440
  %v4442 = vpop.f32.mrb[0].mxu0
  %4443 = vdwg.mxu0
  %v4444 = vadd.f32 %v4154, %v4436
  %v4445 = vadd.f32 %v4155, %v4441
  %s4446 = scalar_lea.vmem %s9, 4
  %v4447 = vld [vmem:[%s4446] sm:$0x1]
  %v4448 = vadd.f32 %v4444, %v3201
  %v4449 = vadd.f32 %v4445, %v3202
  %v4450 = vsel %vm146, %v4448, 0.0
  %4451 = vadd.xlane.f32.xlu0 %v4450
  %v4452 = vpop.xlane.xlu0 %4451
  %v4453 = vsel %vm146, %v4449, 0.0
  %4454 = vadd.xlane.f32.xlu0 %v4453
  %v4455 = vpop.xlane.xlu0 %4454
  %v4456 = vmul.f32 %v4452, %v1392
  %v4457 = vmul.f32 %v4455, %v1392
  %v4458 = vsub.f32 %v4448, %v4456
  %v4459 = vsub.f32 %v4449, %v4457
  %v4460 = vmul.f32 %v4458, %v4458
  %v4461 = vmul.f32 %v4459, %v4459
  %v4462 = vsel %vm146, %v4460, 0.0
  %4463 = vadd.xlane.f32.xlu0 %v4462
  %v4464 = vpop.xlane.xlu0 %4463
  %v4465 = vsel %vm146, %v4461, 0.0
  %4466 = vadd.xlane.f32.xlu0 %v4465
  %v4467 = vpop.xlane.xlu0 %4466
  %v4468 = vmul.f32 %v4464, %v1392
  %v4469 = vmul.f32 %v4467, %v1392
  %v4470 = vadd.f32 %v4468, 1e-05
  %v4471 = vadd.f32 %v4469, 1e-05
  %v4472 = vrsqrt.pop %v4470
  %v4473 = vrsqrt.pop %v4471
  %v4474 = vmul.f32 %v4458, %v4472
  %v4475 = vmul.f32 %v4459, %v4473
  %v4477 = vlaneseq
  %v4478 = vshrl.u32 %v4477, 7
  %v4479 = vsub.s32 0, %v4478
  %v4480 = vrot.slane %v4447, %v4479
  %v4482 = vmul.f32 %v4474, %v4480
  %v4483 = vmul.f32 %v4475, %v4480
  %4484 = vrot.lane.b32.xlu0 %v4480, 96
  %v4485 = vpop.permute.xlu0 %4484
  %v4487 = vadd.f32 %v4482, %v4485
  %v4488 = vadd.f32 %v4483, %v4485
  %s4489 = scalar_lea.vmem %s7, 128
  %v4490 = vld [vmem:[%s4489] sm:$0xff]
  %v4491 = vld [vmem:[%s4489 + $0x8] sm:$0xff]
  %v4492 = vld [vmem:[%s4489 + $0x10] sm:$0xff]
  %v4493 = vld [vmem:[%s4489 + $0x18] sm:$0xff]
  %v4495 = vsel %vm146, %v4487, 0
  %v4498 = vsel %vm146, %v4488, 0
  %4500 = vmatprep.subr.mxu0 0.0
  %4501 = vmatpush1.msra.mxu0 %v4490
  %4502 = vmatprep.subr.mxu0 0.0
  %4503 = vmatpush1.msra.mxu0 %v4491
  %4504 = vmatprep.subr.mxu0 0.0
  %4505 = vmatpush1.msra.mxu0 %v4492
  %4506 = vmatprep.subr.mxu0 0.0
  %4507 = vmatpush1.msra.mxu0 %v4493
  %4508 = vmatprep.subr.mxu0 0.0
  %4509 = vmatpush1.msra.mxu0 0.0
  %4510 = vmatprep.subr.mxu0 0.0
  %4511 = vmatpush1.msra.mxu0 0.0
  %4512 = vmatprep.subr.mxu0 0.0
  %4513 = vmatpush1.msra.mxu0 0.0
  %4514 = vmatprep.subr.mxu0 0.0
  %4515 = vmatpush1.msra.mxu0 0.0
  %4516 = vmatprep.subr.mxu0 0.0
  %4517 = vmatpush1.msra.mxu0 0.0
  %4518 = vmatprep.subr.mxu0 0.0
  %4519 = vmatpush1.msra.mxu0 0.0
  %4520 = vmatprep.subr.mxu0 0.0
  %4521 = vmatpush1.msra.mxu0 0.0
  %4522 = vmatprep.subr.mxu0 0.0
  %4523 = vmatpush1.msra.mxu0 0.0
  %4524 = vmatprep.subr.mxu0 0.0
  %4525 = vmatpush1.msra.mxu0 0.0
  %4526 = vmatprep.subr.mxu0 0.0
  %4527 = vmatpush1.msra.mxu0 0.0
  %4528 = vmatprep.subr.mxu0 0.0
  %4529 = vmatpush1.msra.mxu0 0.0
  %4530 = vmatprep.subr.mxu0 0.0
  %4531 = vmatpush1.msra.mxu0 0.0
  %4532 = vmatprep.subr.mxu0 0.0
  %4533 = vmatpush1.msra.mxu0 0.0
  %4534 = vmatprep.subr.mxu0 0.0
  %4535 = vmatpush1.msra.mxu0 0.0
  %4536 = vmatprep.subr.mxu0 0.0
  %4537 = vmatpush1.msra.mxu0 0.0
  %4538 = vmatprep.subr.mxu0 0.0
  %4539 = vmatpush1.msra.mxu0 0.0
  %4540 = vmatprep.subr.mxu0 0.0
  %4541 = vmatpush1.msra.mxu0 0.0
  %4542 = vmatprep.subr.mxu0 0.0
  %4543 = vmatpush1.msra.mxu0 0.0
  %4544 = vmatprep.subr.mxu0 0.0
  %4545 = vmatpush1.msra.mxu0 0.0
  %4546 = vmatprep.subr.mxu0 0.0
  %4547 = vmatpush1.msra.mxu0 0.0
  %4548 = vmatprep.subr.mxu0 0.0
  %4549 = vmatpush1.msra.mxu0 0.0
  %4550 = vmatprep.subr.mxu0 0.0
  %4551 = vmatpush1.msra.mxu0 0.0
  %4552 = vmatprep.subr.mxu0 0.0
  %4553 = vmatpush1.msra.mxu0 0.0
  %4554 = vmatprep.subr.mxu0 0.0
  %4555 = vmatpush1.msra.mxu0 0.0
  %4556 = vmatprep.subr.mxu0 0.0
  %4557 = vmatpush1.msra.mxu0 0.0
  %4558 = vmatprep.subr.mxu0 0.0
  %4559 = vmatpush1.msra.mxu0 0.0
  %4560 = vmatprep.subr.mxu0 0.0
  %4561 = vmatpush1.msra.mxu0 0.0
  %4562 = vmatprep.subr.mxu0 0.0
  %4563 = vmatpush1.msra.mxu0 0.0
  %4564 = vmatprep.mubr.f32.mxu0 0.0
  %4565 = vmatmul.mubr.f32.gmra.mrb[0].mxu0 %v4495
  %v4566 = vpop.f32.mrb[0].mxu0
  %v4567 = vadd.f32 0.0, %v4566
  %v4568 = vpop.f32.mrb[0].mxu0
  %4569 = vmatprep.mubr.f32.mxu0 0.0
  %4570 = vmatmul.mubr.f32.gmra.mrb[0].mxu0 %v4498
  %v4571 = vpop.f32.mrb[0].mxu0
  %v4572 = vadd.f32 0.0, %v4571
  %v4573 = vpop.f32.mrb[0].mxu0
  %4574 = vdwg.mxu0
  %4579 = vrot.lane.b32.xlu0 %v4490, 96
  %v4580 = vpop.permute.xlu0 %4579
  %4581 = vrot.lane.b32.xlu0 %v4491, 96
  %v4582 = vpop.permute.xlu0 %4581
  %4583 = vrot.lane.b32.xlu0 %v4492, 96
  %v4584 = vpop.permute.xlu0 %4583
  %4585 = vrot.lane.b32.xlu0 %v4493, 96
  %v4586 = vpop.permute.xlu0 %4585
  %v4592 = vsel %vm146, %v3199, 0
  %v4595 = vsel %vm146, %v3200, 0
  %4597 = vmatprep.subr.mxu0 0.0
  %4598 = vmatpush1.msra.mxu0 %v4580
  %4599 = vmatprep.subr.mxu0 0.0
  %4600 = vmatpush1.msra.mxu0 %v4582
  %4601 = vmatprep.subr.mxu0 0.0
  %4602 = vmatpush1.msra.mxu0 %v4584
  %4603 = vmatprep.subr.mxu0 0.0
  %4604 = vmatpush1.msra.mxu0 %v4586
  %4605 = vmatprep.subr.mxu0 0.0
  %4606 = vmatpush1.msra.mxu0 0.0
  %4607 = vmatprep.subr.mxu0 0.0
  %4608 = vmatpush1.msra.mxu0 0.0
  %4609 = vmatprep.subr.mxu0 0.0
  %4610 = vmatpush1.msra.mxu0 0.0
  %4611 = vmatprep.subr.mxu0 0.0
  %4612 = vmatpush1.msra.mxu0 0.0
  %4613 = vmatprep.subr.mxu0 0.0
  %4614 = vmatpush1.msra.mxu0 0.0
  %4615 = vmatprep.subr.mxu0 0.0
  %4616 = vmatpush1.msra.mxu0 0.0
  %4617 = vmatprep.subr.mxu0 0.0
  %4618 = vmatpush1.msra.mxu0 0.0
  %4619 = vmatprep.subr.mxu0 0.0
  %4620 = vmatpush1.msra.mxu0 0.0
  %4621 = vmatprep.subr.mxu0 0.0
  %4622 = vmatpush1.msra.mxu0 0.0
  %4623 = vmatprep.subr.mxu0 0.0
  %4624 = vmatpush1.msra.mxu0 0.0
  %4625 = vmatprep.subr.mxu0 0.0
  %4626 = vmatpush1.msra.mxu0 0.0
  %4627 = vmatprep.subr.mxu0 0.0
  %4628 = vmatpush1.msra.mxu0 0.0
  %4629 = vmatprep.subr.mxu0 0.0
  %4630 = vmatpush1.msra.mxu0 0.0
  %4631 = vmatprep.subr.mxu0 0.0
  %4632 = vmatpush1.msra.mxu0 0.0
  %4633 = vmatprep.subr.mxu0 0.0
  %4634 = vmatpush1.msra.mxu0 0.0
  %4635 = vmatprep.subr.mxu0 0.0
  %4636 = vmatpush1.msra.mxu0 0.0
  %4637 = vmatprep.subr.mxu0 0.0
  %4638 = vmatpush1.msra.mxu0 0.0
  %4639 = vmatprep.subr.mxu0 0.0
  %4640 = vmatpush1.msra.mxu0 0.0
  %4641 = vmatprep.subr.mxu0 0.0
  %4642 = vmatpush1.msra.mxu0 0.0
  %4643 = vmatprep.subr.mxu0 0.0
  %4644 = vmatpush1.msra.mxu0 0.0
  %4645 = vmatprep.subr.mxu0 0.0
  %4646 = vmatpush1.msra.mxu0 0.0
  %4647 = vmatprep.subr.mxu0 0.0
  %4648 = vmatpush1.msra.mxu0 0.0
  %4649 = vmatprep.subr.mxu0 0.0
  %4650 = vmatpush1.msra.mxu0 0.0
  %4651 = vmatprep.subr.mxu0 0.0
  %4652 = vmatpush1.msra.mxu0 0.0
  %4653 = vmatprep.subr.mxu0 0.0
  %4654 = vmatpush1.msra.mxu0 0.0
  %4655 = vmatprep.subr.mxu0 0.0
  %4656 = vmatpush1.msra.mxu0 0.0
  %4657 = vmatprep.subr.mxu0 0.0
  %4658 = vmatpush1.msra.mxu0 0.0
  %4659 = vmatprep.subr.mxu0 0.0
  %4660 = vmatpush1.msra.mxu0 0.0
  %4661 = vmatprep.mubr.f32.mxu0 0.0
  %4662 = vmatmul.mubr.f32.gmra.mrb[0].mxu0 %v4592
  %v4663 = vpop.f32.mrb[0].mxu0
  %v4664 = vadd.f32 0.0, %v4663
  %v4665 = vpop.f32.mrb[0].mxu0
  %4666 = vmatprep.mubr.f32.mxu0 0.0
  %4667 = vmatmul.mubr.f32.gmra.mrb[0].mxu0 %v4595
  %v4668 = vpop.f32.mrb[0].mxu0
  %v4669 = vadd.f32 0.0, %v4668
  %v4670 = vpop.f32.mrb[0].mxu0
  %4671 = vdwg.mxu0
  %v4673 = vsel %vm234, %v4567, 0
  %v4676 = vsel %vm234, %v4572, 0
  %v4679 = vsel %vm234, %v4664, 0
  %v4682 = vsel %vm234, %v4669, 0
  %4684 = vmatprep.subr.mxu0 0.0
  %4685 = vmatpush1.xpose.msra.mxu0 %v4679
  %4686 = vmatprep.subr.mxu0 0.0
  %4687 = vmatpush1.xpose.msra.mxu0 %v4682
  %4688 = vmatprep.subr.mxu0 0.0
  %4689 = vmatpush1.xpose.msra.mxu0 0.0
  %4690 = vmatprep.subr.mxu0 0.0
  %4691 = vmatpush1.xpose.msra.mxu0 0.0
  %4692 = vmatprep.subr.mxu0 0.0
  %4693 = vmatpush1.xpose.msra.mxu0 0.0
  %4694 = vmatprep.subr.mxu0 0.0
  %4695 = vmatpush1.xpose.msra.mxu0 0.0
  %4696 = vmatprep.subr.mxu0 0.0
  %4697 = vmatpush1.xpose.msra.mxu0 0.0
  %4698 = vmatprep.subr.mxu0 0.0
  %4699 = vmatpush1.xpose.msra.mxu0 0.0
  %4700 = vmatprep.subr.mxu0 0.0
  %4701 = vmatpush1.xpose.msra.mxu0 0.0
  %4702 = vmatprep.subr.mxu0 0.0
  %4703 = vmatpush1.xpose.msra.mxu0 0.0
  %4704 = vmatprep.subr.mxu0 0.0
  %4705 = vmatpush1.xpose.msra.mxu0 0.0
  %4706 = vmatprep.subr.mxu0 0.0
  %4707 = vmatpush1.xpose.msra.mxu0 0.0
  %4708 = vmatprep.subr.mxu0 0.0
  %4709 = vmatpush1.xpose.msra.mxu0 0.0
  %4710 = vmatprep.subr.mxu0 0.0
  %4711 = vmatpush1.xpose.msra.mxu0 0.0
  %4712 = vmatprep.subr.mxu0 0.0
  %4713 = vmatpush1.xpose.msra.mxu0 0.0
  %4714 = vmatprep.subr.mxu0 0.0
  %4715 = vmatpush1.xpose.msra.mxu0 0.0
  %4716 = vmatprep.subr.mxu0 0.0
  %4717 = vmatpush1.xpose.msra.mxu0 0.0
  %4718 = vmatprep.subr.mxu0 0.0
  %4719 = vmatpush1.xpose.msra.mxu0 0.0
  %4720 = vmatprep.subr.mxu0 0.0
  %4721 = vmatpush1.xpose.msra.mxu0 0.0
  %4722 = vmatprep.subr.mxu0 0.0
  %4723 = vmatpush1.xpose.msra.mxu0 0.0
  %4724 = vmatprep.subr.mxu0 0.0
  %4725 = vmatpush1.xpose.msra.mxu0 0.0
  %4726 = vmatprep.subr.mxu0 0.0
  %4727 = vmatpush1.xpose.msra.mxu0 0.0
  %4728 = vmatprep.subr.mxu0 0.0
  %4729 = vmatpush1.xpose.msra.mxu0 0.0
  %4730 = vmatprep.subr.mxu0 0.0
  %4731 = vmatpush1.xpose.msra.mxu0 0.0
  %4732 = vmatprep.subr.mxu0 0.0
  %4733 = vmatpush1.xpose.msra.mxu0 0.0
  %4734 = vmatprep.subr.mxu0 0.0
  %4735 = vmatpush1.xpose.msra.mxu0 0.0
  %4736 = vmatprep.subr.mxu0 0.0
  %4737 = vmatpush1.xpose.msra.mxu0 0.0
  %4738 = vmatprep.subr.mxu0 0.0
  %4739 = vmatpush1.xpose.msra.mxu0 0.0
  %4740 = vmatprep.subr.mxu0 0.0
  %4741 = vmatpush1.xpose.msra.mxu0 0.0
  %4742 = vmatprep.subr.mxu0 0.0
  %4743 = vmatpush1.xpose.msra.mxu0 0.0
  %4744 = vmatprep.subr.mxu0 0.0
  %4745 = vmatpush1.xpose.msra.mxu0 0.0
  %4746 = vmatprep.subr.mxu0 0.0
  %4747 = vmatpush1.xpose.msra.mxu0 0.0
  %4748 = vmatprep.mubr.f32.mxu0 0.0
  %4749 = vmatmul.mubr.f32.gmra.mrb[0].mxu0 %v4673
  %v4750 = vpop.f32.mrb[0].mxu0
  %v4751 = vadd.f32 %v3205, %v4750
  %v4752 = vpop.f32.mrb[0].mxu0
  %4753 = vmatprep.mubr.f32.mxu0 0.0
  %4754 = vmatmul.mubr.f32.gmra.mrb[0].mxu0 %v4676
  %v4755 = vpop.f32.mrb[0].mxu0
  %v4756 = vadd.f32 %v3206, %v4755
  %v4757 = vpop.f32.mrb[0].mxu0
  %4758 = vdwg.mxu0
  %v4759 = vsel %vm318, %v4751, -inf
  %4760 = vmax.xlane.f32.xlu0 %v4759
  %v4761 = vpop.xlane.xlu0 %4760
  %v4762 = vsel %vm318, %v4756, -inf
  %4763 = vmax.xlane.f32.xlu0 %v4762
  %v4764 = vpop.xlane.xlu0 %4763
  %v4765 = vsub.f32 %v4751, %v4761
  %v4766 = vsub.f32 %v4756, %v4764
  %v4767 = vmul.f32 %v4765, 1.442695
  %v4768 = vpow.pop %v4767
  %v4769 = vmul.f32 %v4766, 1.442695
  %v4770 = vpow.pop %v4769
  %v4771 = vsel %vm318, %v4768, 0.0
  %4772 = vadd.xlane.f32.xlu0 %v4771
  %v4773 = vpop.xlane.xlu0 %4772
  %v4774 = vsel %vm318, %v4770, 0.0
  %4775 = vadd.xlane.f32.xlu0 %v4774
  %v4776 = vpop.xlane.xlu0 %4775
  %v4777 = vrcp.pop %v4773
  %v4778 = vmul.f32 %v4768, %v4777
  %v4779 = vrcp.pop %v4776
  %v4780 = vmul.f32 %v4770, %v4779
  %4781 = vst.msk [vmem:[%s13] sm:$0xff] %vm318, %v4778
  %4782 = vst.msk [vmem:[%s13 + $0x8] sm:$0xff] %vm318, %v4780
  %4783 = vrot.lane.b32.xlu0 %v4664, 96
  %v4784 = vpop.permute.xlu0 %4783
  %4785 = vrot.lane.b32.xlu0 %v4669, 96
  %v4786 = vpop.permute.xlu0 %4785
  %v4790 = vsel %vm318, %v4778, 0
  %v4793 = vsel %vm318, %v4780, 0
  %4795 = vmatprep.subr.mxu0 0.0
  %4796 = vmatpush1.msra.mxu0 %v4784
  %4797 = vmatprep.subr.mxu0 0.0
  %4798 = vmatpush1.msra.mxu0 %v4786
  %4799 = vmatprep.subr.mxu0 0.0
  %4800 = vmatpush1.msra.mxu0 0.0
  %4801 = vmatprep.subr.mxu0 0.0
  %4802 = vmatpush1.msra.mxu0 0.0
  %4803 = vmatprep.subr.mxu0 0.0
  %4804 = vmatpush1.msra.mxu0 0.0
  %4805 = vmatprep.subr.mxu0 0.0
  %4806 = vmatpush1.msra.mxu0 0.0
  %4807 = vmatprep.subr.mxu0 0.0
  %4808 = vmatpush1.msra.mxu0 0.0
  %4809 = vmatprep.subr.mxu0 0.0
  %4810 = vmatpush1.msra.mxu0 0.0
  %4811 = vmatprep.subr.mxu0 0.0
  %4812 = vmatpush1.msra.mxu0 0.0
  %4813 = vmatprep.subr.mxu0 0.0
  %4814 = vmatpush1.msra.mxu0 0.0
  %4815 = vmatprep.subr.mxu0 0.0
  %4816 = vmatpush1.msra.mxu0 0.0
  %4817 = vmatprep.subr.mxu0 0.0
  %4818 = vmatpush1.msra.mxu0 0.0
  %4819 = vmatprep.subr.mxu0 0.0
  %4820 = vmatpush1.msra.mxu0 0.0
  %4821 = vmatprep.subr.mxu0 0.0
  %4822 = vmatpush1.msra.mxu0 0.0
  %4823 = vmatprep.subr.mxu0 0.0
  %4824 = vmatpush1.msra.mxu0 0.0
  %4825 = vmatprep.subr.mxu0 0.0
  %4826 = vmatpush1.msra.mxu0 0.0
  %4827 = vmatprep.subr.mxu0 0.0
  %4828 = vmatpush1.msra.mxu0 0.0
  %4829 = vmatprep.subr.mxu0 0.0
  %4830 = vmatpush1.msra.mxu0 0.0
  %4831 = vmatprep.subr.mxu0 0.0
  %4832 = vmatpush1.msra.mxu0 0.0
  %4833 = vmatprep.subr.mxu0 0.0
  %4834 = vmatpush1.msra.mxu0 0.0
  %4835 = vmatprep.subr.mxu0 0.0
  %4836 = vmatpush1.msra.mxu0 0.0
  %4837 = vmatprep.subr.mxu0 0.0
  %4838 = vmatpush1.msra.mxu0 0.0
  %4839 = vmatprep.subr.mxu0 0.0
  %4840 = vmatpush1.msra.mxu0 0.0
  %4841 = vmatprep.subr.mxu0 0.0
  %4842 = vmatpush1.msra.mxu0 0.0
  %4843 = vmatprep.subr.mxu0 0.0
  %4844 = vmatpush1.msra.mxu0 0.0
  %4845 = vmatprep.subr.mxu0 0.0
  %4846 = vmatpush1.msra.mxu0 0.0
  %4847 = vmatprep.subr.mxu0 0.0
  %4848 = vmatpush1.msra.mxu0 0.0
  %4849 = vmatprep.subr.mxu0 0.0
  %4850 = vmatpush1.msra.mxu0 0.0
  %4851 = vmatprep.subr.mxu0 0.0
  %4852 = vmatpush1.msra.mxu0 0.0
  %4853 = vmatprep.subr.mxu0 0.0
  %4854 = vmatpush1.msra.mxu0 0.0
  %4855 = vmatprep.subr.mxu0 0.0
  %4856 = vmatpush1.msra.mxu0 0.0
  %4857 = vmatprep.subr.mxu0 0.0
  %4858 = vmatpush1.msra.mxu0 0.0
  %4859 = vmatprep.mubr.f32.mxu0 0.0
  %4860 = vmatmul.mubr.f32.gmra.mrb[0].mxu0 %v4790
  %v4861 = vpop.f32.mrb[0].mxu0
  %v4862 = vadd.f32 0.0, %v4861
  %v4863 = vpop.f32.mrb[0].mxu0
  %4864 = vmatprep.mubr.f32.mxu0 0.0
  %4865 = vmatmul.mubr.f32.gmra.mrb[0].mxu0 %v4793
  %v4866 = vpop.f32.mrb[0].mxu0
  %v4867 = vadd.f32 0.0, %v4866
  %v4868 = vpop.f32.mrb[0].mxu0
  %4869 = vdwg.mxu0
  %4870 = vrot.lane.b32.xlu0 %v4567, 120
  %v4871 = vpop.permute.xlu0 %4870
  %4872 = vrot.lane.b32.xlu0 %v4572, 120
  %v4873 = vpop.permute.xlu0 %4872
  %4874 = vrot.lane.b32.xlu0 %v4664, 120
  %v4875 = vpop.permute.xlu0 %4874
  %4876 = vrot.lane.b32.xlu0 %v4669, 120
  %v4877 = vpop.permute.xlu0 %4876
  %v4878 = vsel %vm234, %v4871, 0
  %v4880 = vsel %vm234, %v4873, 0
  %v4882 = vsel %vm234, %v4875, 0
  %v4884 = vsel %vm234, %v4877, 0
  %4886 = vmatprep.subr.mxu0 0.0
  %4887 = vmatpush1.xpose.msra.mxu0 %v4882
  %4888 = vmatprep.subr.mxu0 0.0
  %4889 = vmatpush1.xpose.msra.mxu0 %v4884
  %4890 = vmatprep.subr.mxu0 0.0
  %4891 = vmatpush1.xpose.msra.mxu0 0.0
  %4892 = vmatprep.subr.mxu0 0.0
  %4893 = vmatpush1.xpose.msra.mxu0 0.0
  %4894 = vmatprep.subr.mxu0 0.0
  %4895 = vmatpush1.xpose.msra.mxu0 0.0
  %4896 = vmatprep.subr.mxu0 0.0
  %4897 = vmatpush1.xpose.msra.mxu0 0.0
  %4898 = vmatprep.subr.mxu0 0.0
  %4899 = vmatpush1.xpose.msra.mxu0 0.0
  %4900 = vmatprep.subr.mxu0 0.0
  %4901 = vmatpush1.xpose.msra.mxu0 0.0
  %4902 = vmatprep.subr.mxu0 0.0
  %4903 = vmatpush1.xpose.msra.mxu0 0.0
  %4904 = vmatprep.subr.mxu0 0.0
  %4905 = vmatpush1.xpose.msra.mxu0 0.0
  %4906 = vmatprep.subr.mxu0 0.0
  %4907 = vmatpush1.xpose.msra.mxu0 0.0
  %4908 = vmatprep.subr.mxu0 0.0
  %4909 = vmatpush1.xpose.msra.mxu0 0.0
  %4910 = vmatprep.subr.mxu0 0.0
  %4911 = vmatpush1.xpose.msra.mxu0 0.0
  %4912 = vmatprep.subr.mxu0 0.0
  %4913 = vmatpush1.xpose.msra.mxu0 0.0
  %4914 = vmatprep.subr.mxu0 0.0
  %4915 = vmatpush1.xpose.msra.mxu0 0.0
  %4916 = vmatprep.subr.mxu0 0.0
  %4917 = vmatpush1.xpose.msra.mxu0 0.0
  %4918 = vmatprep.subr.mxu0 0.0
  %4919 = vmatpush1.xpose.msra.mxu0 0.0
  %4920 = vmatprep.subr.mxu0 0.0
  %4921 = vmatpush1.xpose.msra.mxu0 0.0
  %4922 = vmatprep.subr.mxu0 0.0
  %4923 = vmatpush1.xpose.msra.mxu0 0.0
  %4924 = vmatprep.subr.mxu0 0.0
  %4925 = vmatpush1.xpose.msra.mxu0 0.0
  %4926 = vmatprep.subr.mxu0 0.0
  %4927 = vmatpush1.xpose.msra.mxu0 0.0
  %4928 = vmatprep.subr.mxu0 0.0
  %4929 = vmatpush1.xpose.msra.mxu0 0.0
  %4930 = vmatprep.subr.mxu0 0.0
  %4931 = vmatpush1.xpose.msra.mxu0 0.0
  %4932 = vmatprep.subr.mxu0 0.0
  %4933 = vmatpush1.xpose.msra.mxu0 0.0
  %4934 = vmatprep.subr.mxu0 0.0
  %4935 = vmatpush1.xpose.msra.mxu0 0.0
  %4936 = vmatprep.subr.mxu0 0.0
  %4937 = vmatpush1.xpose.msra.mxu0 0.0
  %4938 = vmatprep.subr.mxu0 0.0
  %4939 = vmatpush1.xpose.msra.mxu0 0.0
  %4940 = vmatprep.subr.mxu0 0.0
  %4941 = vmatpush1.xpose.msra.mxu0 0.0
  %4942 = vmatprep.subr.mxu0 0.0
  %4943 = vmatpush1.xpose.msra.mxu0 0.0
  %4944 = vmatprep.subr.mxu0 0.0
  %4945 = vmatpush1.xpose.msra.mxu0 0.0
  %4946 = vmatprep.subr.mxu0 0.0
  %4947 = vmatpush1.xpose.msra.mxu0 0.0
  %4948 = vmatprep.subr.mxu0 0.0
  %4949 = vmatpush1.xpose.msra.mxu0 0.0
  %4950 = vmatprep.mubr.f32.mxu0 0.0
  %4951 = vmatmul.mubr.f32.gmra.mrb[0].mxu0 %v4878
  %v4952 = vpop.f32.mrb[0].mxu0
  %v4953 = vadd.f32 %v3205, %v4952
  %v4954 = vpop.f32.mrb[0].mxu0
  %4955 = vmatprep.mubr.f32.mxu0 0.0
  %4956 = vmatmul.mubr.f32.gmra.mrb[0].mxu0 %v4880
  %v4957 = vpop.f32.mrb[0].mxu0
  %v4958 = vadd.f32 %v3206, %v4957
  %v4959 = vpop.f32.mrb[0].mxu0
  %4960 = vdwg.mxu0
  %v4961 = vsel %vm318, %v4953, -inf
  %4962 = vmax.xlane.f32.xlu0 %v4961
  %v4963 = vpop.xlane.xlu0 %4962
  %v4964 = vsel %vm318, %v4958, -inf
  %4965 = vmax.xlane.f32.xlu0 %v4964
  %v4966 = vpop.xlane.xlu0 %4965
  %v4967 = vsub.f32 %v4953, %v4963
  %v4968 = vsub.f32 %v4958, %v4966
  %v4969 = vmul.f32 %v4967, 1.442695
  %v4970 = vpow.pop %v4969
  %v4971 = vmul.f32 %v4968, 1.442695
  %v4972 = vpow.pop %v4971
  %v4973 = vsel %vm318, %v4970, 0.0
  %4974 = vadd.xlane.f32.xlu0 %v4973
  %v4975 = vpop.xlane.xlu0 %4974
  %v4976 = vsel %vm318, %v4972, 0.0
  %4977 = vadd.xlane.f32.xlu0 %v4976
  %v4978 = vpop.xlane.xlu0 %4977
  %v4979 = vrcp.pop %v4975
  %v4980 = vmul.f32 %v4970, %v4979
  %v4981 = vrcp.pop %v4978
  %v4982 = vmul.f32 %v4972, %v4981
  %s4983 = scalar_lea.vmem %s13, 16
  %4984 = vst.msk [vmem:[%s4983] sm:$0xff] %vm318, %v4980
  %4985 = vst.msk [vmem:[%s4983 + $0x8] sm:$0xff] %vm318, %v4982
  %4986 = vrot.lane.b32.xlu0 %v4664, 88
  %v4987 = vpop.permute.xlu0 %4986
  %4988 = vrot.lane.b32.xlu0 %v4669, 88
  %v4989 = vpop.permute.xlu0 %4988
  %v4993 = vsel %vm318, %v4980, 0
  %v4996 = vsel %vm318, %v4982, 0
  %4998 = vmatprep.subr.mxu0 0.0
  %4999 = vmatpush1.msra.mxu0 %v4987
  %5000 = vmatprep.subr.mxu0 0.0
  %5001 = vmatpush1.msra.mxu0 %v4989
  %5002 = vmatprep.subr.mxu0 0.0
  %5003 = vmatpush1.msra.mxu0 0.0
  %5004 = vmatprep.subr.mxu0 0.0
  %5005 = vmatpush1.msra.mxu0 0.0
  %5006 = vmatprep.subr.mxu0 0.0
  %5007 = vmatpush1.msra.mxu0 0.0
  %5008 = vmatprep.subr.mxu0 0.0
  %5009 = vmatpush1.msra.mxu0 0.0
  %5010 = vmatprep.subr.mxu0 0.0
  %5011 = vmatpush1.msra.mxu0 0.0
  %5012 = vmatprep.subr.mxu0 0.0
  %5013 = vmatpush1.msra.mxu0 0.0
  %5014 = vmatprep.subr.mxu0 0.0
  %5015 = vmatpush1.msra.mxu0 0.0
  %5016 = vmatprep.subr.mxu0 0.0
  %5017 = vmatpush1.msra.mxu0 0.0
  %5018 = vmatprep.subr.mxu0 0.0
  %5019 = vmatpush1.msra.mxu0 0.0
  %5020 = vmatprep.subr.mxu0 0.0
  %5021 = vmatpush1.msra.mxu0 0.0
  %5022 = vmatprep.subr.mxu0 0.0
  %5023 = vmatpush1.msra.mxu0 0.0
  %5024 = vmatprep.subr.mxu0 0.0
  %5025 = vmatpush1.msra.mxu0 0.0
  %5026 = vmatprep.subr.mxu0 0.0
  %5027 = vmatpush1.msra.mxu0 0.0
  %5028 = vmatprep.subr.mxu0 0.0
  %5029 = vmatpush1.msra.mxu0 0.0
  %5030 = vmatprep.subr.mxu0 0.0
  %5031 = vmatpush1.msra.mxu0 0.0
  %5032 = vmatprep.subr.mxu0 0.0
  %5033 = vmatpush1.msra.mxu0 0.0
  %5034 = vmatprep.subr.mxu0 0.0
  %5035 = vmatpush1.msra.mxu0 0.0
  %5036 = vmatprep.subr.mxu0 0.0
  %5037 = vmatpush1.msra.mxu0 0.0
  %5038 = vmatprep.subr.mxu0 0.0
  %5039 = vmatpush1.msra.mxu0 0.0
  %5040 = vmatprep.subr.mxu0 0.0
  %5041 = vmatpush1.msra.mxu0 0.0
  %5042 = vmatprep.subr.mxu0 0.0
  %5043 = vmatpush1.msra.mxu0 0.0
  %5044 = vmatprep.subr.mxu0 0.0
  %5045 = vmatpush1.msra.mxu0 0.0
  %5046 = vmatprep.subr.mxu0 0.0
  %5047 = vmatpush1.msra.mxu0 0.0
  %5048 = vmatprep.subr.mxu0 0.0
  %5049 = vmatpush1.msra.mxu0 0.0
  %5050 = vmatprep.subr.mxu0 0.0
  %5051 = vmatpush1.msra.mxu0 0.0
  %5052 = vmatprep.subr.mxu0 0.0
  %5053 = vmatpush1.msra.mxu0 0.0
  %5054 = vmatprep.subr.mxu0 0.0
  %5055 = vmatpush1.msra.mxu0 0.0
  %5056 = vmatprep.subr.mxu0 0.0
  %5057 = vmatpush1.msra.mxu0 0.0
  %5058 = vmatprep.subr.mxu0 0.0
  %5059 = vmatpush1.msra.mxu0 0.0
  %5060 = vmatprep.subr.mxu0 0.0
  %5061 = vmatpush1.msra.mxu0 0.0
  %5062 = vmatprep.mubr.f32.mxu0 0.0
  %5063 = vmatmul.mubr.f32.gmra.mrb[0].mxu0 %v4993
  %v5064 = vpop.f32.mrb[0].mxu0
  %v5065 = vadd.f32 0.0, %v5064
  %v5066 = vpop.f32.mrb[0].mxu0
  %5067 = vmatprep.mubr.f32.mxu0 0.0
  %5068 = vmatmul.mubr.f32.gmra.mrb[0].mxu0 %v4996
  %v5069 = vpop.f32.mrb[0].mxu0
  %v5070 = vadd.f32 0.0, %v5069
  %v5071 = vpop.f32.mrb[0].mxu0
  %5072 = vdwg.mxu0
  %5073 = vrot.lane.b32.xlu0 %v4491, 32
  %v5074 = vpop.permute.xlu0 %5073
  %v5077 = vsel %vm234, %v5065, 0
  %v5080 = vsel %vm234, %v5070, 0
  %5082 = vmatprep.subr.mxu0 0.0
  %5083 = vmatpush1.msra.mxu0 %v5074
  %5084 = vmatprep.subr.mxu0 0.0
  %5085 = vmatpush1.msra.mxu0 0.0
  %5086 = vmatprep.subr.mxu0 0.0
  %5087 = vmatpush1.msra.mxu0 0.0
  %5088 = vmatprep.subr.mxu0 0.0
  %5089 = vmatpush1.msra.mxu0 0.0
  %5090 = vmatprep.subr.mxu0 0.0
  %5091 = vmatpush1.msra.mxu0 0.0
  %5092 = vmatprep.subr.mxu0 0.0
  %5093 = vmatpush1.msra.mxu0 0.0
  %5094 = vmatprep.subr.mxu0 0.0
  %5095 = vmatpush1.msra.mxu0 0.0
  %5096 = vmatprep.subr.mxu0 0.0
  %5097 = vmatpush1.msra.mxu0 0.0
  %5098 = vmatprep.subr.mxu0 0.0
  %5099 = vmatpush1.msra.mxu0 0.0
  %5100 = vmatprep.subr.mxu0 0.0
  %5101 = vmatpush1.msra.mxu0 0.0
  %5102 = vmatprep.subr.mxu0 0.0
  %5103 = vmatpush1.msra.mxu0 0.0
  %5104 = vmatprep.subr.mxu0 0.0
  %5105 = vmatpush1.msra.mxu0 0.0
  %5106 = vmatprep.subr.mxu0 0.0
  %5107 = vmatpush1.msra.mxu0 0.0
  %5108 = vmatprep.subr.mxu0 0.0
  %5109 = vmatpush1.msra.mxu0 0.0
  %5110 = vmatprep.subr.mxu0 0.0
  %5111 = vmatpush1.msra.mxu0 0.0
  %5112 = vmatprep.subr.mxu0 0.0
  %5113 = vmatpush1.msra.mxu0 0.0
  %5114 = vmatprep.subr.mxu0 0.0
  %5115 = vmatpush1.msra.mxu0 0.0
  %5116 = vmatprep.subr.mxu0 0.0
  %5117 = vmatpush1.msra.mxu0 0.0
  %5118 = vmatprep.subr.mxu0 0.0
  %5119 = vmatpush1.msra.mxu0 0.0
  %5120 = vmatprep.subr.mxu0 0.0
  %5121 = vmatpush1.msra.mxu0 0.0
  %5122 = vmatprep.subr.mxu0 0.0
  %5123 = vmatpush1.msra.mxu0 0.0
  %5124 = vmatprep.subr.mxu0 0.0
  %5125 = vmatpush1.msra.mxu0 0.0
  %5126 = vmatprep.subr.mxu0 0.0
  %5127 = vmatpush1.msra.mxu0 0.0
  %5128 = vmatprep.subr.mxu0 0.0
  %5129 = vmatpush1.msra.mxu0 0.0
  %5130 = vmatprep.subr.mxu0 0.0
  %5131 = vmatpush1.msra.mxu0 0.0
  %5132 = vmatprep.subr.mxu0 0.0
  %5133 = vmatpush1.msra.mxu0 0.0
  %5134 = vmatprep.subr.mxu0 0.0
  %5135 = vmatpush1.msra.mxu0 0.0
  %5136 = vmatprep.subr.mxu0 0.0
  %5137 = vmatpush1.msra.mxu0 0.0
  %5138 = vmatprep.subr.mxu0 0.0
  %5139 = vmatpush1.msra.mxu0 0.0
  %5140 = vmatprep.subr.mxu0 0.0
  %5141 = vmatpush1.msra.mxu0 0.0
  %5142 = vmatprep.subr.mxu0 0.0
  %5143 = vmatpush1.msra.mxu0 0.0
  %5144 = vmatprep.subr.mxu0 0.0
  %5145 = vmatpush1.msra.mxu0 0.0
  %5146 = vmatprep.mubr.f32.mxu0 0.0
  %5147 = vmatmul.mubr.f32.gmra.mrb[0].mxu0 %v5077
  %v5148 = vpop.f32.mrb[0].mxu0
  %v5149 = vadd.f32 0.0, %v5148
  %v5150 = vpop.f32.mrb[0].mxu0
  %5151 = vmatprep.mubr.f32.mxu0 0.0
  %5152 = vmatmul.mubr.f32.gmra.mrb[0].mxu0 %v5080
  %v5153 = vpop.f32.mrb[0].mxu0
  %v5154 = vadd.f32 0.0, %v5153
  %v5155 = vpop.f32.mrb[0].mxu0
  %5156 = vdwg.mxu0
  %5157 = vrot.lane.b32.xlu0 %v4490, 32
  %v5158 = vpop.permute.xlu0 %5157
  %v5161 = vsel %vm234, %v4862, 0
  %v5164 = vsel %vm234, %v4867, 0
  %5166 = vmatprep.subr.mxu0 0.0
  %5167 = vmatpush1.msra.mxu0 %v5158
  %5168 = vmatprep.subr.mxu0 0.0
  %5169 = vmatpush1.msra.mxu0 0.0
  %5170 = vmatprep.subr.mxu0 0.0
  %5171 = vmatpush1.msra.mxu0 0.0
  %5172 = vmatprep.subr.mxu0 0.0
  %5173 = vmatpush1.msra.mxu0 0.0
  %5174 = vmatprep.subr.mxu0 0.0
  %5175 = vmatpush1.msra.mxu0 0.0
  %5176 = vmatprep.subr.mxu0 0.0
  %5177 = vmatpush1.msra.mxu0 0.0
  %5178 = vmatprep.subr.mxu0 0.0
  %5179 = vmatpush1.msra.mxu0 0.0
  %5180 = vmatprep.subr.mxu0 0.0
  %5181 = vmatpush1.msra.mxu0 0.0
  %5182 = vmatprep.subr.mxu0 0.0
  %5183 = vmatpush1.msra.mxu0 0.0
  %5184 = vmatprep.subr.mxu0 0.0
  %5185 = vmatpush1.msra.mxu0 0.0
  %5186 = vmatprep.subr.mxu0 0.0
  %5187 = vmatpush1.msra.mxu0 0.0
  %5188 = vmatprep.subr.mxu0 0.0
  %5189 = vmatpush1.msra.mxu0 0.0
  %5190 = vmatprep.subr.mxu0 0.0
  %5191 = vmatpush1.msra.mxu0 0.0
  %5192 = vmatprep.subr.mxu0 0.0
  %5193 = vmatpush1.msra.mxu0 0.0
  %5194 = vmatprep.subr.mxu0 0.0
  %5195 = vmatpush1.msra.mxu0 0.0
  %5196 = vmatprep.subr.mxu0 0.0
  %5197 = vmatpush1.msra.mxu0 0.0
  %5198 = vmatprep.subr.mxu0 0.0
  %5199 = vmatpush1.msra.mxu0 0.0
  %5200 = vmatprep.subr.mxu0 0.0
  %5201 = vmatpush1.msra.mxu0 0.0
  %5202 = vmatprep.subr.mxu0 0.0
  %5203 = vmatpush1.msra.mxu0 0.0
  %5204 = vmatprep.subr.mxu0 0.0
  %5205 = vmatpush1.msra.mxu0 0.0
  %5206 = vmatprep.subr.mxu0 0.0
  %5207 = vmatpush1.msra.mxu0 0.0
  %5208 = vmatprep.subr.mxu0 0.0
  %5209 = vmatpush1.msra.mxu0 0.0
  %5210 = vmatprep.subr.mxu0 0.0
  %5211 = vmatpush1.msra.mxu0 0.0
  %5212 = vmatprep.subr.mxu0 0.0
  %5213 = vmatpush1.msra.mxu0 0.0
  %5214 = vmatprep.subr.mxu0 0.0
  %5215 = vmatpush1.msra.mxu0 0.0
  %5216 = vmatprep.subr.mxu0 0.0
  %5217 = vmatpush1.msra.mxu0 0.0
  %5218 = vmatprep.subr.mxu0 0.0
  %5219 = vmatpush1.msra.mxu0 0.0
  %5220 = vmatprep.subr.mxu0 0.0
  %5221 = vmatpush1.msra.mxu0 0.0
  %5222 = vmatprep.subr.mxu0 0.0
  %5223 = vmatpush1.msra.mxu0 0.0
  %5224 = vmatprep.subr.mxu0 0.0
  %5225 = vmatpush1.msra.mxu0 0.0
  %5226 = vmatprep.subr.mxu0 0.0
  %5227 = vmatpush1.msra.mxu0 0.0
  %5228 = vmatprep.subr.mxu0 0.0
  %5229 = vmatpush1.msra.mxu0 0.0
  %5230 = vmatprep.mubr.f32.mxu0 0.0
  %5231 = vmatmul.mubr.f32.gmra.mrb[0].mxu0 %v5161
  %v5232 = vpop.f32.mrb[0].mxu0
  %v5233 = vadd.f32 %v5149, %v5232
  %v5234 = vpop.f32.mrb[0].mxu0
  %5235 = vmatprep.mubr.f32.mxu0 0.0
  %5236 = vmatmul.mubr.f32.gmra.mrb[0].mxu0 %v5164
  %v5237 = vpop.f32.mrb[0].mxu0
  %v5238 = vadd.f32 %v5154, %v5237
  %v5239 = vpop.f32.mrb[0].mxu0
  %5240 = vdwg.mxu0
  %5241 = vrot.lane.b32.xlu0 %v4567, 112
  %v5242 = vpop.permute.xlu0 %5241
  %5243 = vrot.lane.b32.xlu0 %v4572, 112
  %v5244 = vpop.permute.xlu0 %5243
  %5245 = vrot.lane.b32.xlu0 %v4664, 112
  %v5246 = vpop.permute.xlu0 %5245
  %5247 = vrot.lane.b32.xlu0 %v4669, 112
  %v5248 = vpop.permute.xlu0 %5247
  %v5249 = vsel %vm234, %v5242, 0
  %v5251 = vsel %vm234, %v5244, 0
  %v5253 = vsel %vm234, %v5246, 0
  %v5255 = vsel %vm234, %v5248, 0
  %5257 = vmatprep.subr.mxu0 0.0
  %5258 = vmatpush1.xpose.msra.mxu0 %v5253
  %5259 = vmatprep.subr.mxu0 0.0
  %5260 = vmatpush1.xpose.msra.mxu0 %v5255
  %5261 = vmatprep.subr.mxu0 0.0
  %5262 = vmatpush1.xpose.msra.mxu0 0.0
  %5263 = vmatprep.subr.mxu0 0.0
  %5264 = vmatpush1.xpose.msra.mxu0 0.0
  %5265 = vmatprep.subr.mxu0 0.0
  %5266 = vmatpush1.xpose.msra.mxu0 0.0
  %5267 = vmatprep.subr.mxu0 0.0
  %5268 = vmatpush1.xpose.msra.mxu0 0.0
  %5269 = vmatprep.subr.mxu0 0.0
  %5270 = vmatpush1.xpose.msra.mxu0 0.0
  %5271 = vmatprep.subr.mxu0 0.0
  %5272 = vmatpush1.xpose.msra.mxu0 0.0
  %5273 = vmatprep.subr.mxu0 0.0
  %5274 = vmatpush1.xpose.msra.mxu0 0.0
  %5275 = vmatprep.subr.mxu0 0.0
  %5276 = vmatpush1.xpose.msra.mxu0 0.0
  %5277 = vmatprep.subr.mxu0 0.0
  %5278 = vmatpush1.xpose.msra.mxu0 0.0
  %5279 = vmatprep.subr.mxu0 0.0
  %5280 = vmatpush1.xpose.msra.mxu0 0.0
  %5281 = vmatprep.subr.mxu0 0.0
  %5282 = vmatpush1.xpose.msra.mxu0 0.0
  %5283 = vmatprep.subr.mxu0 0.0
  %5284 = vmatpush1.xpose.msra.mxu0 0.0
  %5285 = vmatprep.subr.mxu0 0.0
  %5286 = vmatpush1.xpose.msra.mxu0 0.0
  %5287 = vmatprep.subr.mxu0 0.0
  %5288 = vmatpush1.xpose.msra.mxu0 0.0
  %5289 = vmatprep.subr.mxu0 0.0
  %5290 = vmatpush1.xpose.msra.mxu0 0.0
  %5291 = vmatprep.subr.mxu0 0.0
  %5292 = vmatpush1.xpose.msra.mxu0 0.0
  %5293 = vmatprep.subr.mxu0 0.0
  %5294 = vmatpush1.xpose.msra.mxu0 0.0
  %5295 = vmatprep.subr.mxu0 0.0
  %5296 = vmatpush1.xpose.msra.mxu0 0.0
  %5297 = vmatprep.subr.mxu0 0.0
  %5298 = vmatpush1.xpose.msra.mxu0 0.0
  %5299 = vmatprep.subr.mxu0 0.0
  %5300 = vmatpush1.xpose.msra.mxu0 0.0
  %5301 = vmatprep.subr.mxu0 0.0
  %5302 = vmatpush1.xpose.msra.mxu0 0.0
  %5303 = vmatprep.subr.mxu0 0.0
  %5304 = vmatpush1.xpose.msra.mxu0 0.0
  %5305 = vmatprep.subr.mxu0 0.0
  %5306 = vmatpush1.xpose.msra.mxu0 0.0
  %5307 = vmatprep.subr.mxu0 0.0
  %5308 = vmatpush1.xpose.msra.mxu0 0.0
  %5309 = vmatprep.subr.mxu0 0.0
  %5310 = vmatpush1.xpose.msra.mxu0 0.0
  %5311 = vmatprep.subr.mxu0 0.0
  %5312 = vmatpush1.xpose.msra.mxu0 0.0
  %5313 = vmatprep.subr.mxu0 0.0
  %5314 = vmatpush1.xpose.msra.mxu0 0.0
  %5315 = vmatprep.subr.mxu0 0.0
  %5316 = vmatpush1.xpose.msra.mxu0 0.0
  %5317 = vmatprep.subr.mxu0 0.0
  %5318 = vmatpush1.xpose.msra.mxu0 0.0
  %5319 = vmatprep.subr.mxu0 0.0
  %5320 = vmatpush1.xpose.msra.mxu0 0.0
  %5321 = vmatprep.mubr.f32.mxu0 0.0
  %5322 = vmatmul.mubr.f32.gmra.mrb[0].mxu0 %v5249
  %v5323 = vpop.f32.mrb[0].mxu0
  %v5324 = vadd.f32 %v3205, %v5323
  %v5325 = vpop.f32.mrb[0].mxu0
  %5326 = vmatprep.mubr.f32.mxu0 0.0
  %5327 = vmatmul.mubr.f32.gmra.mrb[0].mxu0 %v5251
  %v5328 = vpop.f32.mrb[0].mxu0
  %v5329 = vadd.f32 %v3206, %v5328
  %v5330 = vpop.f32.mrb[0].mxu0
  %5331 = vdwg.mxu0
  %v5332 = vsel %vm318, %v5324, -inf
  %5333 = vmax.xlane.f32.xlu0 %v5332
  %v5334 = vpop.xlane.xlu0 %5333
  %v5335 = vsel %vm318, %v5329, -inf
  %5336 = vmax.xlane.f32.xlu0 %v5335
  %v5337 = vpop.xlane.xlu0 %5336
  %v5338 = vsub.f32 %v5324, %v5334
  %v5339 = vsub.f32 %v5329, %v5337
  %v5340 = vmul.f32 %v5338, 1.442695
  %v5341 = vpow.pop %v5340
  %v5342 = vmul.f32 %v5339, 1.442695
  %v5343 = vpow.pop %v5342
  %v5344 = vsel %vm318, %v5341, 0.0
  %5345 = vadd.xlane.f32.xlu0 %v5344
  %v5346 = vpop.xlane.xlu0 %5345
  %v5347 = vsel %vm318, %v5343, 0.0
  %5348 = vadd.xlane.f32.xlu0 %v5347
  %v5349 = vpop.xlane.xlu0 %5348
  %v5350 = vrcp.pop %v5346
  %v5351 = vmul.f32 %v5341, %v5350
  %v5352 = vrcp.pop %v5349
  %v5353 = vmul.f32 %v5343, %v5352
  %s5354 = scalar_lea.vmem %s13, 32
  %5355 = vst.msk [vmem:[%s5354] sm:$0xff] %vm318, %v5351
  %5356 = vst.msk [vmem:[%s5354 + $0x8] sm:$0xff] %vm318, %v5353
  %5357 = vrot.lane.b32.xlu0 %v4664, 80
  %v5358 = vpop.permute.xlu0 %5357
  %5359 = vrot.lane.b32.xlu0 %v4669, 80
  %v5360 = vpop.permute.xlu0 %5359
  %v5364 = vsel %vm318, %v5351, 0
  %v5367 = vsel %vm318, %v5353, 0
  %5369 = vmatprep.subr.mxu0 0.0
  %5370 = vmatpush1.msra.mxu0 %v5358
  %5371 = vmatprep.subr.mxu0 0.0
  %5372 = vmatpush1.msra.mxu0 %v5360
  %5373 = vmatprep.subr.mxu0 0.0
  %5374 = vmatpush1.msra.mxu0 0.0
  %5375 = vmatprep.subr.mxu0 0.0
  %5376 = vmatpush1.msra.mxu0 0.0
  %5377 = vmatprep.subr.mxu0 0.0
  %5378 = vmatpush1.msra.mxu0 0.0
  %5379 = vmatprep.subr.mxu0 0.0
  %5380 = vmatpush1.msra.mxu0 0.0
  %5381 = vmatprep.subr.mxu0 0.0
  %5382 = vmatpush1.msra.mxu0 0.0
  %5383 = vmatprep.subr.mxu0 0.0
  %5384 = vmatpush1.msra.mxu0 0.0
  %5385 = vmatprep.subr.mxu0 0.0
  %5386 = vmatpush1.msra.mxu0 0.0
  %5387 = vmatprep.subr.mxu0 0.0
  %5388 = vmatpush1.msra.mxu0 0.0
  %5389 = vmatprep.subr.mxu0 0.0
  %5390 = vmatpush1.msra.mxu0 0.0
  %5391 = vmatprep.subr.mxu0 0.0
  %5392 = vmatpush1.msra.mxu0 0.0
  %5393 = vmatprep.subr.mxu0 0.0
  %5394 = vmatpush1.msra.mxu0 0.0
  %5395 = vmatprep.subr.mxu0 0.0
  %5396 = vmatpush1.msra.mxu0 0.0
  %5397 = vmatprep.subr.mxu0 0.0
  %5398 = vmatpush1.msra.mxu0 0.0
  %5399 = vmatprep.subr.mxu0 0.0
  %5400 = vmatpush1.msra.mxu0 0.0
  %5401 = vmatprep.subr.mxu0 0.0
  %5402 = vmatpush1.msra.mxu0 0.0
  %5403 = vmatprep.subr.mxu0 0.0
  %5404 = vmatpush1.msra.mxu0 0.0
  %5405 = vmatprep.subr.mxu0 0.0
  %5406 = vmatpush1.msra.mxu0 0.0
  %5407 = vmatprep.subr.mxu0 0.0
  %5408 = vmatpush1.msra.mxu0 0.0
  %5409 = vmatprep.subr.mxu0 0.0
  %5410 = vmatpush1.msra.mxu0 0.0
  %5411 = vmatprep.subr.mxu0 0.0
  %5412 = vmatpush1.msra.mxu0 0.0
  %5413 = vmatprep.subr.mxu0 0.0
  %5414 = vmatpush1.msra.mxu0 0.0
  %5415 = vmatprep.subr.mxu0 0.0
  %5416 = vmatpush1.msra.mxu0 0.0
  %5417 = vmatprep.subr.mxu0 0.0
  %5418 = vmatpush1.msra.mxu0 0.0
  %5419 = vmatprep.subr.mxu0 0.0
  %5420 = vmatpush1.msra.mxu0 0.0
  %5421 = vmatprep.subr.mxu0 0.0
  %5422 = vmatpush1.msra.mxu0 0.0
  %5423 = vmatprep.subr.mxu0 0.0
  %5424 = vmatpush1.msra.mxu0 0.0
  %5425 = vmatprep.subr.mxu0 0.0
  %5426 = vmatpush1.msra.mxu0 0.0
  %5427 = vmatprep.subr.mxu0 0.0
  %5428 = vmatpush1.msra.mxu0 0.0
  %5429 = vmatprep.subr.mxu0 0.0
  %5430 = vmatpush1.msra.mxu0 0.0
  %5431 = vmatprep.subr.mxu0 0.0
  %5432 = vmatpush1.msra.mxu0 0.0
  %5433 = vmatprep.mubr.f32.mxu0 0.0
  %5434 = vmatmul.mubr.f32.gmra.mrb[0].mxu0 %v5364
  %v5435 = vpop.f32.mrb[0].mxu0
  %v5436 = vadd.f32 0.0, %v5435
  %v5437 = vpop.f32.mrb[0].mxu0
  %5438 = vmatprep.mubr.f32.mxu0 0.0
  %5439 = vmatmul.mubr.f32.gmra.mrb[0].mxu0 %v5367
  %v5440 = vpop.f32.mrb[0].mxu0
  %v5441 = vadd.f32 0.0, %v5440
  %v5442 = vpop.f32.mrb[0].mxu0
  %5443 = vdwg.mxu0
  %5444 = vrot.lane.b32.xlu0 %v4492, 32
  %v5445 = vpop.permute.xlu0 %5444
  %v5448 = vsel %vm234, %v5436, 0
  %v5451 = vsel %vm234, %v5441, 0
  %5453 = vmatprep.subr.mxu0 0.0
  %5454 = vmatpush1.msra.mxu0 %v5445
  %5455 = vmatprep.subr.mxu0 0.0
  %5456 = vmatpush1.msra.mxu0 0.0
  %5457 = vmatprep.subr.mxu0 0.0
  %5458 = vmatpush1.msra.mxu0 0.0
  %5459 = vmatprep.subr.mxu0 0.0
  %5460 = vmatpush1.msra.mxu0 0.0
  %5461 = vmatprep.subr.mxu0 0.0
  %5462 = vmatpush1.msra.mxu0 0.0
  %5463 = vmatprep.subr.mxu0 0.0
  %5464 = vmatpush1.msra.mxu0 0.0
  %5465 = vmatprep.subr.mxu0 0.0
  %5466 = vmatpush1.msra.mxu0 0.0
  %5467 = vmatprep.subr.mxu0 0.0
  %5468 = vmatpush1.msra.mxu0 0.0
  %5469 = vmatprep.subr.mxu0 0.0
  %5470 = vmatpush1.msra.mxu0 0.0
  %5471 = vmatprep.subr.mxu0 0.0
  %5472 = vmatpush1.msra.mxu0 0.0
  %5473 = vmatprep.subr.mxu0 0.0
  %5474 = vmatpush1.msra.mxu0 0.0
  %5475 = vmatprep.subr.mxu0 0.0
  %5476 = vmatpush1.msra.mxu0 0.0
  %5477 = vmatprep.subr.mxu0 0.0
  %5478 = vmatpush1.msra.mxu0 0.0
  %5479 = vmatprep.subr.mxu0 0.0
  %5480 = vmatpush1.msra.mxu0 0.0
  %5481 = vmatprep.subr.mxu0 0.0
  %5482 = vmatpush1.msra.mxu0 0.0
  %5483 = vmatprep.subr.mxu0 0.0
  %5484 = vmatpush1.msra.mxu0 0.0
  %5485 = vmatprep.subr.mxu0 0.0
  %5486 = vmatpush1.msra.mxu0 0.0
  %5487 = vmatprep.subr.mxu0 0.0
  %5488 = vmatpush1.msra.mxu0 0.0
  %5489 = vmatprep.subr.mxu0 0.0
  %5490 = vmatpush1.msra.mxu0 0.0
  %5491 = vmatprep.subr.mxu0 0.0
  %5492 = vmatpush1.msra.mxu0 0.0
  %5493 = vmatprep.subr.mxu0 0.0
  %5494 = vmatpush1.msra.mxu0 0.0
  %5495 = vmatprep.subr.mxu0 0.0
  %5496 = vmatpush1.msra.mxu0 0.0
  %5497 = vmatprep.subr.mxu0 0.0
  %5498 = vmatpush1.msra.mxu0 0.0
  %5499 = vmatprep.subr.mxu0 0.0
  %5500 = vmatpush1.msra.mxu0 0.0
  %5501 = vmatprep.subr.mxu0 0.0
  %5502 = vmatpush1.msra.mxu0 0.0
  %5503 = vmatprep.subr.mxu0 0.0
  %5504 = vmatpush1.msra.mxu0 0.0
  %5505 = vmatprep.subr.mxu0 0.0
  %5506 = vmatpush1.msra.mxu0 0.0
  %5507 = vmatprep.subr.mxu0 0.0
  %5508 = vmatpush1.msra.mxu0 0.0
  %5509 = vmatprep.subr.mxu0 0.0
  %5510 = vmatpush1.msra.mxu0 0.0
  %5511 = vmatprep.subr.mxu0 0.0
  %5512 = vmatpush1.msra.mxu0 0.0
  %5513 = vmatprep.subr.mxu0 0.0
  %5514 = vmatpush1.msra.mxu0 0.0
  %5515 = vmatprep.subr.mxu0 0.0
  %5516 = vmatpush1.msra.mxu0 0.0
  %5517 = vmatprep.mubr.f32.mxu0 0.0
  %5518 = vmatmul.mubr.f32.gmra.mrb[0].mxu0 %v5448
  %v5519 = vpop.f32.mrb[0].mxu0
  %v5520 = vadd.f32 0.0, %v5519
  %v5521 = vpop.f32.mrb[0].mxu0
  %5522 = vmatprep.mubr.f32.mxu0 0.0
  %5523 = vmatmul.mubr.f32.gmra.mrb[0].mxu0 %v5451
  %v5524 = vpop.f32.mrb[0].mxu0
  %v5525 = vadd.f32 0.0, %v5524
  %v5526 = vpop.f32.mrb[0].mxu0
  %5527 = vdwg.mxu0
  %v5528 = vadd.f32 %v5233, %v5520
  %v5529 = vadd.f32 %v5238, %v5525
  %5530 = vrot.lane.b32.xlu0 %v4567, 104
  %v5531 = vpop.permute.xlu0 %5530
  %5532 = vrot.lane.b32.xlu0 %v4572, 104
  %v5533 = vpop.permute.xlu0 %5532
  %5534 = vrot.lane.b32.xlu0 %v4664, 104
  %v5535 = vpop.permute.xlu0 %5534
  %5536 = vrot.lane.b32.xlu0 %v4669, 104
  %v5537 = vpop.permute.xlu0 %5536
  %v5538 = vsel %vm234, %v5531, 0
  %v5540 = vsel %vm234, %v5533, 0
  %v5542 = vsel %vm234, %v5535, 0
  %v5544 = vsel %vm234, %v5537, 0
  %5546 = vmatprep.subr.mxu0 0.0
  %5547 = vmatpush1.xpose.msra.mxu0 %v5542
  %5548 = vmatprep.subr.mxu0 0.0
  %5549 = vmatpush1.xpose.msra.mxu0 %v5544
  %5550 = vmatprep.subr.mxu0 0.0
  %5551 = vmatpush1.xpose.msra.mxu0 0.0
  %5552 = vmatprep.subr.mxu0 0.0
  %5553 = vmatpush1.xpose.msra.mxu0 0.0
  %5554 = vmatprep.subr.mxu0 0.0
  %5555 = vmatpush1.xpose.msra.mxu0 0.0
  %5556 = vmatprep.subr.mxu0 0.0
  %5557 = vmatpush1.xpose.msra.mxu0 0.0
  %5558 = vmatprep.subr.mxu0 0.0
  %5559 = vmatpush1.xpose.msra.mxu0 0.0
  %5560 = vmatprep.subr.mxu0 0.0
  %5561 = vmatpush1.xpose.msra.mxu0 0.0
  %5562 = vmatprep.subr.mxu0 0.0
  %5563 = vmatpush1.xpose.msra.mxu0 0.0
  %5564 = vmatprep.subr.mxu0 0.0
  %5565 = vmatpush1.xpose.msra.mxu0 0.0
  %5566 = vmatprep.subr.mxu0 0.0
  %5567 = vmatpush1.xpose.msra.mxu0 0.0
  %5568 = vmatprep.subr.mxu0 0.0
  %5569 = vmatpush1.xpose.msra.mxu0 0.0
  %5570 = vmatprep.subr.mxu0 0.0
  %5571 = vmatpush1.xpose.msra.mxu0 0.0
  %5572 = vmatprep.subr.mxu0 0.0
  %5573 = vmatpush1.xpose.msra.mxu0 0.0
  %5574 = vmatprep.subr.mxu0 0.0
  %5575 = vmatpush1.xpose.msra.mxu0 0.0
  %5576 = vmatprep.subr.mxu0 0.0
  %5577 = vmatpush1.xpose.msra.mxu0 0.0
  %5578 = vmatprep.subr.mxu0 0.0
  %5579 = vmatpush1.xpose.msra.mxu0 0.0
  %5580 = vmatprep.subr.mxu0 0.0
  %5581 = vmatpush1.xpose.msra.mxu0 0.0
  %5582 = vmatprep.subr.mxu0 0.0
  %5583 = vmatpush1.xpose.msra.mxu0 0.0
  %5584 = vmatprep.subr.mxu0 0.0
  %5585 = vmatpush1.xpose.msra.mxu0 0.0
  %5586 = vmatprep.subr.mxu0 0.0
  %5587 = vmatpush1.xpose.msra.mxu0 0.0
  %5588 = vmatprep.subr.mxu0 0.0
  %5589 = vmatpush1.xpose.msra.mxu0 0.0
  %5590 = vmatprep.subr.mxu0 0.0
  %5591 = vmatpush1.xpose.msra.mxu0 0.0
  %5592 = vmatprep.subr.mxu0 0.0
  %5593 = vmatpush1.xpose.msra.mxu0 0.0
  %5594 = vmatprep.subr.mxu0 0.0
  %5595 = vmatpush1.xpose.msra.mxu0 0.0
  %5596 = vmatprep.subr.mxu0 0.0
  %5597 = vmatpush1.xpose.msra.mxu0 0.0
  %5598 = vmatprep.subr.mxu0 0.0
  %5599 = vmatpush1.xpose.msra.mxu0 0.0
  %5600 = vmatprep.subr.mxu0 0.0
  %5601 = vmatpush1.xpose.msra.mxu0 0.0
  %5602 = vmatprep.subr.mxu0 0.0
  %5603 = vmatpush1.xpose.msra.mxu0 0.0
  %5604 = vmatprep.subr.mxu0 0.0
  %5605 = vmatpush1.xpose.msra.mxu0 0.0
  %5606 = vmatprep.subr.mxu0 0.0
  %5607 = vmatpush1.xpose.msra.mxu0 0.0
  %5608 = vmatprep.subr.mxu0 0.0
  %5609 = vmatpush1.xpose.msra.mxu0 0.0
  %5610 = vmatprep.mubr.f32.mxu0 0.0
  %5611 = vmatmul.mubr.f32.gmra.mrb[0].mxu0 %v5538
  %v5612 = vpop.f32.mrb[0].mxu0
  %v5613 = vadd.f32 %v3205, %v5612
  %v5614 = vpop.f32.mrb[0].mxu0
  %5615 = vmatprep.mubr.f32.mxu0 0.0
  %5616 = vmatmul.mubr.f32.gmra.mrb[0].mxu0 %v5540
  %v5617 = vpop.f32.mrb[0].mxu0
  %v5618 = vadd.f32 %v3206, %v5617
  %v5619 = vpop.f32.mrb[0].mxu0
  %5620 = vdwg.mxu0
  %v5621 = vsel %vm318, %v5613, -inf
  %5622 = vmax.xlane.f32.xlu0 %v5621
  %v5623 = vpop.xlane.xlu0 %5622
  %v5624 = vsel %vm318, %v5618, -inf
  %5625 = vmax.xlane.f32.xlu0 %v5624
  %v5626 = vpop.xlane.xlu0 %5625
  %v5627 = vsub.f32 %v5613, %v5623
  %v5628 = vsub.f32 %v5618, %v5626
  %v5629 = vmul.f32 %v5627, 1.442695
  %v5630 = vpow.pop %v5629
  %v5631 = vmul.f32 %v5628, 1.442695
  %v5632 = vpow.pop %v5631
  %v5633 = vsel %vm318, %v5630, 0.0
  %5634 = vadd.xlane.f32.xlu0 %v5633
  %v5635 = vpop.xlane.xlu0 %5634
  %v5636 = vsel %vm318, %v5632, 0.0
  %5637 = vadd.xlane.f32.xlu0 %v5636
  %v5638 = vpop.xlane.xlu0 %5637
  %v5639 = vrcp.pop %v5635
  %v5640 = vmul.f32 %v5630, %v5639
  %v5641 = vrcp.pop %v5638
  %v5642 = vmul.f32 %v5632, %v5641
  %s5643 = scalar_lea.vmem %s13, 48
  %5644 = vst.msk [vmem:[%s5643] sm:$0xff] %vm318, %v5640
  %5645 = vst.msk [vmem:[%s5643 + $0x8] sm:$0xff] %vm318, %v5642
  %5646 = vrot.lane.b32.xlu0 %v4664, 72
  %v5647 = vpop.permute.xlu0 %5646
  %5648 = vrot.lane.b32.xlu0 %v4669, 72
  %v5649 = vpop.permute.xlu0 %5648
  %v5653 = vsel %vm318, %v5640, 0
  %v5656 = vsel %vm318, %v5642, 0
  %5658 = vmatprep.subr.mxu0 0.0
  %5659 = vmatpush1.msra.mxu0 %v5647
  %5660 = vmatprep.subr.mxu0 0.0
  %5661 = vmatpush1.msra.mxu0 %v5649
  %5662 = vmatprep.subr.mxu0 0.0
  %5663 = vmatpush1.msra.mxu0 0.0
  %5664 = vmatprep.subr.mxu0 0.0
  %5665 = vmatpush1.msra.mxu0 0.0
  %5666 = vmatprep.subr.mxu0 0.0
  %5667 = vmatpush1.msra.mxu0 0.0
  %5668 = vmatprep.subr.mxu0 0.0
  %5669 = vmatpush1.msra.mxu0 0.0
  %5670 = vmatprep.subr.mxu0 0.0
  %5671 = vmatpush1.msra.mxu0 0.0
  %5672 = vmatprep.subr.mxu0 0.0
  %5673 = vmatpush1.msra.mxu0 0.0
  %5674 = vmatprep.subr.mxu0 0.0
  %5675 = vmatpush1.msra.mxu0 0.0
  %5676 = vmatprep.subr.mxu0 0.0
  %5677 = vmatpush1.msra.mxu0 0.0
  %5678 = vmatprep.subr.mxu0 0.0
  %5679 = vmatpush1.msra.mxu0 0.0
  %5680 = vmatprep.subr.mxu0 0.0
  %5681 = vmatpush1.msra.mxu0 0.0
  %5682 = vmatprep.subr.mxu0 0.0
  %5683 = vmatpush1.msra.mxu0 0.0
  %5684 = vmatprep.subr.mxu0 0.0
  %5685 = vmatpush1.msra.mxu0 0.0
  %5686 = vmatprep.subr.mxu0 0.0
  %5687 = vmatpush1.msra.mxu0 0.0
  %5688 = vmatprep.subr.mxu0 0.0
  %5689 = vmatpush1.msra.mxu0 0.0
  %5690 = vmatprep.subr.mxu0 0.0
  %5691 = vmatpush1.msra.mxu0 0.0
  %5692 = vmatprep.subr.mxu0 0.0
  %5693 = vmatpush1.msra.mxu0 0.0
  %5694 = vmatprep.subr.mxu0 0.0
  %5695 = vmatpush1.msra.mxu0 0.0
  %5696 = vmatprep.subr.mxu0 0.0
  %5697 = vmatpush1.msra.mxu0 0.0
  %5698 = vmatprep.subr.mxu0 0.0
  %5699 = vmatpush1.msra.mxu0 0.0
  %5700 = vmatprep.subr.mxu0 0.0
  %5701 = vmatpush1.msra.mxu0 0.0
  %5702 = vmatprep.subr.mxu0 0.0
  %5703 = vmatpush1.msra.mxu0 0.0
  %5704 = vmatprep.subr.mxu0 0.0
  %5705 = vmatpush1.msra.mxu0 0.0
  %5706 = vmatprep.subr.mxu0 0.0
  %5707 = vmatpush1.msra.mxu0 0.0
  %5708 = vmatprep.subr.mxu0 0.0
  %5709 = vmatpush1.msra.mxu0 0.0
  %5710 = vmatprep.subr.mxu0 0.0
  %5711 = vmatpush1.msra.mxu0 0.0
  %5712 = vmatprep.subr.mxu0 0.0
  %5713 = vmatpush1.msra.mxu0 0.0
  %5714 = vmatprep.subr.mxu0 0.0
  %5715 = vmatpush1.msra.mxu0 0.0
  %5716 = vmatprep.subr.mxu0 0.0
  %5717 = vmatpush1.msra.mxu0 0.0
  %5718 = vmatprep.subr.mxu0 0.0
  %5719 = vmatpush1.msra.mxu0 0.0
  %5720 = vmatprep.subr.mxu0 0.0
  %5721 = vmatpush1.msra.mxu0 0.0
  %5722 = vmatprep.mubr.f32.mxu0 0.0
  %5723 = vmatmul.mubr.f32.gmra.mrb[0].mxu0 %v5653
  %v5724 = vpop.f32.mrb[0].mxu0
  %v5725 = vadd.f32 0.0, %v5724
  %v5726 = vpop.f32.mrb[0].mxu0
  %5727 = vmatprep.mubr.f32.mxu0 0.0
  %5728 = vmatmul.mubr.f32.gmra.mrb[0].mxu0 %v5656
  %v5729 = vpop.f32.mrb[0].mxu0
  %v5730 = vadd.f32 0.0, %v5729
  %v5731 = vpop.f32.mrb[0].mxu0
  %5732 = vdwg.mxu0
  %5733 = vrot.lane.b32.xlu0 %v4493, 32
  %v5734 = vpop.permute.xlu0 %5733
  %v5737 = vsel %vm234, %v5725, 0
  %v5740 = vsel %vm234, %v5730, 0
  %5742 = vmatprep.subr.mxu0 0.0
  %5743 = vmatpush1.msra.mxu0 %v5734
  %5744 = vmatprep.subr.mxu0 0.0
  %5745 = vmatpush1.msra.mxu0 0.0
  %5746 = vmatprep.subr.mxu0 0.0
  %5747 = vmatpush1.msra.mxu0 0.0
  %5748 = vmatprep.subr.mxu0 0.0
  %5749 = vmatpush1.msra.mxu0 0.0
  %5750 = vmatprep.subr.mxu0 0.0
  %5751 = vmatpush1.msra.mxu0 0.0
  %5752 = vmatprep.subr.mxu0 0.0
  %5753 = vmatpush1.msra.mxu0 0.0
  %5754 = vmatprep.subr.mxu0 0.0
  %5755 = vmatpush1.msra.mxu0 0.0
  %5756 = vmatprep.subr.mxu0 0.0
  %5757 = vmatpush1.msra.mxu0 0.0
  %5758 = vmatprep.subr.mxu0 0.0
  %5759 = vmatpush1.msra.mxu0 0.0
  %5760 = vmatprep.subr.mxu0 0.0
  %5761 = vmatpush1.msra.mxu0 0.0
  %5762 = vmatprep.subr.mxu0 0.0
  %5763 = vmatpush1.msra.mxu0 0.0
  %5764 = vmatprep.subr.mxu0 0.0
  %5765 = vmatpush1.msra.mxu0 0.0
  %5766 = vmatprep.subr.mxu0 0.0
  %5767 = vmatpush1.msra.mxu0 0.0
  %5768 = vmatprep.subr.mxu0 0.0
  %5769 = vmatpush1.msra.mxu0 0.0
  %5770 = vmatprep.subr.mxu0 0.0
  %5771 = vmatpush1.msra.mxu0 0.0
  %5772 = vmatprep.subr.mxu0 0.0
  %5773 = vmatpush1.msra.mxu0 0.0
  %5774 = vmatprep.subr.mxu0 0.0
  %5775 = vmatpush1.msra.mxu0 0.0
  %5776 = vmatprep.subr.mxu0 0.0
  %5777 = vmatpush1.msra.mxu0 0.0
  %5778 = vmatprep.subr.mxu0 0.0
  %5779 = vmatpush1.msra.mxu0 0.0
  %5780 = vmatprep.subr.mxu0 0.0
  %5781 = vmatpush1.msra.mxu0 0.0
  %5782 = vmatprep.subr.mxu0 0.0
  %5783 = vmatpush1.msra.mxu0 0.0
  %5784 = vmatprep.subr.mxu0 0.0
  %5785 = vmatpush1.msra.mxu0 0.0
  %5786 = vmatprep.subr.mxu0 0.0
  %5787 = vmatpush1.msra.mxu0 0.0
  %5788 = vmatprep.subr.mxu0 0.0
  %5789 = vmatpush1.msra.mxu0 0.0
  %5790 = vmatprep.subr.mxu0 0.0
  %5791 = vmatpush1.msra.mxu0 0.0
  %5792 = vmatprep.subr.mxu0 0.0
  %5793 = vmatpush1.msra.mxu0 0.0
  %5794 = vmatprep.subr.mxu0 0.0
  %5795 = vmatpush1.msra.mxu0 0.0
  %5796 = vmatprep.subr.mxu0 0.0
  %5797 = vmatpush1.msra.mxu0 0.0
  %5798 = vmatprep.subr.mxu0 0.0
  %5799 = vmatpush1.msra.mxu0 0.0
  %5800 = vmatprep.subr.mxu0 0.0
  %5801 = vmatpush1.msra.mxu0 0.0
  %5802 = vmatprep.subr.mxu0 0.0
  %5803 = vmatpush1.msra.mxu0 0.0
  %5804 = vmatprep.subr.mxu0 0.0
  %5805 = vmatpush1.msra.mxu0 0.0
  %5806 = vmatprep.mubr.f32.mxu0 0.0
  %5807 = vmatmul.mubr.f32.gmra.mrb[0].mxu0 %v5737
  %v5808 = vpop.f32.mrb[0].mxu0
  %v5809 = vadd.f32 0.0, %v5808
  %v5810 = vpop.f32.mrb[0].mxu0
  %5811 = vmatprep.mubr.f32.mxu0 0.0
  %5812 = vmatmul.mubr.f32.gmra.mrb[0].mxu0 %v5740
  %v5813 = vpop.f32.mrb[0].mxu0
  %v5814 = vadd.f32 0.0, %v5813
  %v5815 = vpop.f32.mrb[0].mxu0
  %5816 = vdwg.mxu0
  %v5817 = vadd.f32 %v5528, %v5809
  %v5818 = vadd.f32 %v5529, %v5814
  %s5819 = scalar_lea.vmem %s9, 6
  %v5820 = vld [vmem:[%s5819] sm:$0x1]
  %v5821 = vadd.f32 %v5817, %v4487
  %v5822 = vadd.f32 %v5818, %v4488
  %v5823 = vsel %vm146, %v5821, 0.0
  %5824 = vadd.xlane.f32.xlu0 %v5823
  %v5825 = vpop.xlane.xlu0 %5824
  %v5826 = vsel %vm146, %v5822, 0.0
  %5827 = vadd.xlane.f32.xlu0 %v5826
  %v5828 = vpop.xlane.xlu0 %5827
  %v5829 = vmul.f32 %v5825, %v1392
  %v5830 = vmul.f32 %v5828, %v1392
  %v5831 = vsub.f32 %v5821, %v5829
  %v5832 = vsub.f32 %v5822, %v5830
  %v5833 = vmul.f32 %v5831, %v5831
  %v5834 = vmul.f32 %v5832, %v5832
  %v5835 = vsel %vm146, %v5833, 0.0
  %5836 = vadd.xlane.f32.xlu0 %v5835
  %v5837 = vpop.xlane.xlu0 %5836
  %v5838 = vsel %vm146, %v5834, 0.0
  %5839 = vadd.xlane.f32.xlu0 %v5838
  %v5840 = vpop.xlane.xlu0 %5839
  %v5841 = vmul.f32 %v5837, %v1392
  %v5842 = vmul.f32 %v5840, %v1392
  %v5843 = vadd.f32 %v5841, 1e-05
  %v5844 = vadd.f32 %v5842, 1e-05
  %v5845 = vrsqrt.pop %v5843
  %v5846 = vrsqrt.pop %v5844
  %v5847 = vmul.f32 %v5831, %v5845
  %v5848 = vmul.f32 %v5832, %v5846
  %v5850 = vlaneseq
  %v5851 = vshrl.u32 %v5850, 7
  %v5852 = vsub.s32 0, %v5851
  %v5853 = vrot.slane %v5820, %v5852
  %v5855 = vmul.f32 %v5847, %v5853
  %v5856 = vmul.f32 %v5848, %v5853
  %5857 = vrot.lane.b32.xlu0 %v5853, 96
  %v5858 = vpop.permute.xlu0 %5857
  %v5860 = vadd.f32 %v5855, %v5858
  %v5861 = vadd.f32 %v5856, %v5858
  %s5862 = scalar_lea.vmem %s8, 128
  %v5863 = vld [vmem:[%s5862] sm:$0xff]
  %v5864 = vld [vmem:[%s5862 + $0x8] sm:$0xff]
  %v5865 = vld [vmem:[%s5862 + $0x10] sm:$0xff]
  %v5866 = vld [vmem:[%s5862 + $0x18] sm:$0xff]
  %v5867 = vld [vmem:[%s5862 + $0x20] sm:$0xff]
  %v5868 = vld [vmem:[%s5862 + $0x28] sm:$0xff]
  %v5869 = vld [vmem:[%s5862 + $0x30] sm:$0xff]
  %v5870 = vld [vmem:[%s5862 + $0x38] sm:$0xff]
  %v5872 = vsel %vm146, %v5860, 0
  %v5875 = vsel %vm146, %v5861, 0
  %5877 = vmatprep.subr.mxu0 0.0
  %5878 = vmatpush1.msra.mxu0 %v5863
  %5879 = vmatprep.subr.mxu0 0.0
  %5880 = vmatpush1.msra.mxu0 %v5864
  %5881 = vmatprep.subr.mxu0 0.0
  %5882 = vmatpush1.msra.mxu0 %v5865
  %5883 = vmatprep.subr.mxu0 0.0
  %5884 = vmatpush1.msra.mxu0 %v5866
  %5885 = vmatprep.subr.mxu0 0.0
  %5886 = vmatpush1.msra.mxu0 0.0
  %5887 = vmatprep.subr.mxu0 0.0
  %5888 = vmatpush1.msra.mxu0 0.0
  %5889 = vmatprep.subr.mxu0 0.0
  %5890 = vmatpush1.msra.mxu0 0.0
  %5891 = vmatprep.subr.mxu0 0.0
  %5892 = vmatpush1.msra.mxu0 0.0
  %5893 = vmatprep.subr.mxu0 0.0
  %5894 = vmatpush1.msra.mxu0 0.0
  %5895 = vmatprep.subr.mxu0 0.0
  %5896 = vmatpush1.msra.mxu0 0.0
  %5897 = vmatprep.subr.mxu0 0.0
  %5898 = vmatpush1.msra.mxu0 0.0
  %5899 = vmatprep.subr.mxu0 0.0
  %5900 = vmatpush1.msra.mxu0 0.0
  %5901 = vmatprep.subr.mxu0 0.0
  %5902 = vmatpush1.msra.mxu0 0.0
  %5903 = vmatprep.subr.mxu0 0.0
  %5904 = vmatpush1.msra.mxu0 0.0
  %5905 = vmatprep.subr.mxu0 0.0
  %5906 = vmatpush1.msra.mxu0 0.0
  %5907 = vmatprep.subr.mxu0 0.0
  %5908 = vmatpush1.msra.mxu0 0.0
  %5909 = vmatprep.subr.mxu0 0.0
  %5910 = vmatpush1.msra.mxu0 0.0
  %5911 = vmatprep.subr.mxu0 0.0
  %5912 = vmatpush1.msra.mxu0 0.0
  %5913 = vmatprep.subr.mxu0 0.0
  %5914 = vmatpush1.msra.mxu0 0.0
  %5915 = vmatprep.subr.mxu0 0.0
  %5916 = vmatpush1.msra.mxu0 0.0
  %5917 = vmatprep.subr.mxu0 0.0
  %5918 = vmatpush1.msra.mxu0 0.0
  %5919 = vmatprep.subr.mxu0 0.0
  %5920 = vmatpush1.msra.mxu0 0.0
  %5921 = vmatprep.subr.mxu0 0.0
  %5922 = vmatpush1.msra.mxu0 0.0
  %5923 = vmatprep.subr.mxu0 0.0
  %5924 = vmatpush1.msra.mxu0 0.0
  %5925 = vmatprep.subr.mxu0 0.0
  %5926 = vmatpush1.msra.mxu0 0.0
  %5927 = vmatprep.subr.mxu0 0.0
  %5928 = vmatpush1.msra.mxu0 0.0
  %5929 = vmatprep.subr.mxu0 0.0
  %5930 = vmatpush1.msra.mxu0 0.0
  %5931 = vmatprep.subr.mxu0 0.0
  %5932 = vmatpush1.msra.mxu0 0.0
  %5933 = vmatprep.subr.mxu0 0.0
  %5934 = vmatpush1.msra.mxu0 0.0
  %5935 = vmatprep.subr.mxu0 0.0
  %5936 = vmatpush1.msra.mxu0 0.0
  %5937 = vmatprep.subr.mxu0 0.0
  %5938 = vmatpush1.msra.mxu0 0.0
  %5939 = vmatprep.subr.mxu0 0.0
  %5940 = vmatpush1.msra.mxu0 0.0
  %5941 = vmatprep.mubr.f32.mxu0 0.0
  %5942 = vmatmul.mubr.f32.gmra.mrb[0].mxu0 %v5872
  %v5943 = vpop.f32.mrb[0].mxu0
  %v5944 = vadd.f32 0.0, %v5943
  %v5945 = vpop.f32.mrb[0].mxu0
  %5946 = vmatprep.mubr.f32.mxu0 0.0
  %5947 = vmatmul.mubr.f32.gmra.mrb[0].mxu0 %v5875
  %v5948 = vpop.f32.mrb[0].mxu0
  %v5949 = vadd.f32 0.0, %v5948
  %v5950 = vpop.f32.mrb[0].mxu0
  %5951 = vdwg.mxu0
  %v5952 = vmax.f32 %v5944, 0.0
  %v5953 = vmax.f32 %v5949, 0.0
  %s5954 = scalar_lea.vmem %s9, 8
  %v5955 = vld [vmem:[%s5954] sm:$0x1]
  %5964 = vrot.lane.b32.xlu0 %v5863, 64
  %v5965 = vpop.permute.xlu0 %5964
  %5966 = vrot.lane.b32.xlu0 %v5864, 64
  %v5967 = vpop.permute.xlu0 %5966
  %5968 = vrot.lane.b32.xlu0 %v5865, 64
  %v5969 = vpop.permute.xlu0 %5968
  %5970 = vrot.lane.b32.xlu0 %v5866, 64
  %v5971 = vpop.permute.xlu0 %5970
  %5972 = vrot.lane.b32.xlu0 %v5867, 64
  %v5973 = vpop.permute.xlu0 %5972
  %5974 = vrot.lane.b32.xlu0 %v5868, 64
  %v5975 = vpop.permute.xlu0 %5974
  %5976 = vrot.lane.b32.xlu0 %v5869, 64
  %v5977 = vpop.permute.xlu0 %5976
  %5978 = vrot.lane.b32.xlu0 %v5870, 64
  %v5979 = vpop.permute.xlu0 %5978
  %v5989 = vsel %vm1551, %v5952, 0
  %v5992 = vsel %vm1551, %v5953, 0
  %5994 = vmatprep.subr.mxu0 0.0
  %5995 = vmatpush1.msra.mxu0 %v5965
  %5996 = vmatprep.subr.mxu0 0.0
  %5997 = vmatpush1.msra.mxu0 %v5967
  %5998 = vmatprep.subr.mxu0 0.0
  %5999 = vmatpush1.msra.mxu0 %v5969
  %6000 = vmatprep.subr.mxu0 0.0
  %6001 = vmatpush1.msra.mxu0 %v5971
  %6002 = vmatprep.subr.mxu0 0.0
  %6003 = vmatpush1.msra.mxu0 %v5973
  %6004 = vmatprep.subr.mxu0 0.0
  %6005 = vmatpush1.msra.mxu0 %v5975
  %6006 = vmatprep.subr.mxu0 0.0
  %6007 = vmatpush1.msra.mxu0 %v5977
  %6008 = vmatprep.subr.mxu0 0.0
  %6009 = vmatpush1.msra.mxu0 %v5979
  %6010 = vmatprep.subr.mxu0 0.0
  %6011 = vmatpush1.msra.mxu0 0.0
  %6012 = vmatprep.subr.mxu0 0.0
  %6013 = vmatpush1.msra.mxu0 0.0
  %6014 = vmatprep.subr.mxu0 0.0
  %6015 = vmatpush1.msra.mxu0 0.0
  %6016 = vmatprep.subr.mxu0 0.0
  %6017 = vmatpush1.msra.mxu0 0.0
  %6018 = vmatprep.subr.mxu0 0.0
  %6019 = vmatpush1.msra.mxu0 0.0
  %6020 = vmatprep.subr.mxu0 0.0
  %6021 = vmatpush1.msra.mxu0 0.0
  %6022 = vmatprep.subr.mxu0 0.0
  %6023 = vmatpush1.msra.mxu0 0.0
  %6024 = vmatprep.subr.mxu0 0.0
  %6025 = vmatpush1.msra.mxu0 0.0
  %6026 = vmatprep.subr.mxu0 0.0
  %6027 = vmatpush1.msra.mxu0 0.0
  %6028 = vmatprep.subr.mxu0 0.0
  %6029 = vmatpush1.msra.mxu0 0.0
  %6030 = vmatprep.subr.mxu0 0.0
  %6031 = vmatpush1.msra.mxu0 0.0
  %6032 = vmatprep.subr.mxu0 0.0
  %6033 = vmatpush1.msra.mxu0 0.0
  %6034 = vmatprep.subr.mxu0 0.0
  %6035 = vmatpush1.msra.mxu0 0.0
  %6036 = vmatprep.subr.mxu0 0.0
  %6037 = vmatpush1.msra.mxu0 0.0
  %6038 = vmatprep.subr.mxu0 0.0
  %6039 = vmatpush1.msra.mxu0 0.0
  %6040 = vmatprep.subr.mxu0 0.0
  %6041 = vmatpush1.msra.mxu0 0.0
  %6042 = vmatprep.subr.mxu0 0.0
  %6043 = vmatpush1.msra.mxu0 0.0
  %6044 = vmatprep.subr.mxu0 0.0
  %6045 = vmatpush1.msra.mxu0 0.0
  %6046 = vmatprep.subr.mxu0 0.0
  %6047 = vmatpush1.msra.mxu0 0.0
  %6048 = vmatprep.subr.mxu0 0.0
  %6049 = vmatpush1.msra.mxu0 0.0
  %6050 = vmatprep.subr.mxu0 0.0
  %6051 = vmatpush1.msra.mxu0 0.0
  %6052 = vmatprep.subr.mxu0 0.0
  %6053 = vmatpush1.msra.mxu0 0.0
  %6054 = vmatprep.subr.mxu0 0.0
  %6055 = vmatpush1.msra.mxu0 0.0
  %6056 = vmatprep.subr.mxu0 0.0
  %6057 = vmatpush1.msra.mxu0 0.0
  %6058 = vmatprep.mubr.f32.mxu0 0.0
  %6059 = vmatmul.mubr.f32.gmra.mrb[0].mxu0 %v5989
  %v6060 = vpop.f32.mrb[0].mxu0
  %v6061 = vadd.f32 %v5860, %v6060
  %v6062 = vpop.f32.mrb[0].mxu0
  %6063 = vmatprep.mubr.f32.mxu0 0.0
  %6064 = vmatmul.mubr.f32.gmra.mrb[0].mxu0 %v5992
  %v6065 = vpop.f32.mrb[0].mxu0
  %v6066 = vadd.f32 %v5861, %v6065
  %v6067 = vpop.f32.mrb[0].mxu0
  %6068 = vdwg.mxu0
  %v6069 = vsel %vm146, %v6061, 0.0
  %6070 = vadd.xlane.f32.xlu0 %v6069
  %v6071 = vpop.xlane.xlu0 %6070
  %v6072 = vsel %vm146, %v6066, 0.0
  %6073 = vadd.xlane.f32.xlu0 %v6072
  %v6074 = vpop.xlane.xlu0 %6073
  %v6075 = vmul.f32 %v6071, %v1392
  %v6076 = vmul.f32 %v6074, %v1392
  %v6077 = vsub.f32 %v6061, %v6075
  %v6078 = vsub.f32 %v6066, %v6076
  %v6079 = vmul.f32 %v6077, %v6077
  %v6080 = vmul.f32 %v6078, %v6078
  %v6081 = vsel %vm146, %v6079, 0.0
  %6082 = vadd.xlane.f32.xlu0 %v6081
  %v6083 = vpop.xlane.xlu0 %6082
  %v6084 = vsel %vm146, %v6080, 0.0
  %6085 = vadd.xlane.f32.xlu0 %v6084
  %v6086 = vpop.xlane.xlu0 %6085
  %v6087 = vmul.f32 %v6083, %v1392
  %v6088 = vmul.f32 %v6086, %v1392
  %v6089 = vadd.f32 %v6087, 1e-05
  %v6090 = vadd.f32 %v6088, 1e-05
  %v6091 = vrsqrt.pop %v6089
  %v6092 = vrsqrt.pop %v6090
  %v6093 = vmul.f32 %v6077, %v6091
  %v6094 = vmul.f32 %v6078, %v6092
  %v6096 = vlaneseq
  %v6097 = vshrl.u32 %v6096, 7
  %v6098 = vsub.s32 0, %v6097
  %v6099 = vrot.slane %v5955, %v6098
  %v6101 = vmul.f32 %v6093, %v6099
  %v6102 = vmul.f32 %v6094, %v6099
  %6103 = vrot.lane.b32.xlu0 %v6099, 96
  %v6104 = vpop.permute.xlu0 %6103
  %v6106 = vadd.f32 %v6101, %v6104
  %v6107 = vadd.f32 %v6102, %v6104
  %s6108 = scalar_lea.vmem %s7, 96
  %v6109 = vld [vmem:[%s6108] sm:$0xff]
  %v6110 = vld [vmem:[%s6108 + $0x8] sm:$0xff]
  %v6111 = vld [vmem:[%s6108 + $0x10] sm:$0xff]
  %v6112 = vld [vmem:[%s6108 + $0x18] sm:$0xff]
  %v6114 = vsel %vm146, %v6106, 0
  %v6117 = vsel %vm146, %v6107, 0
  %6119 = vmatprep.subr.mxu0 0.0
  %6120 = vmatpush1.msra.mxu0 %v6109
  %6121 = vmatprep.subr.mxu0 0.0
  %6122 = vmatpush1.msra.mxu0 %v6110
  %6123 = vmatprep.subr.mxu0 0.0
  %6124 = vmatpush1.msra.mxu0 %v6111
  %6125 = vmatprep.subr.mxu0 0.0
  %6126 = vmatpush1.msra.mxu0 %v6112
  %6127 = vmatprep.subr.mxu0 0.0
  %6128 = vmatpush1.msra.mxu0 0.0
  %6129 = vmatprep.subr.mxu0 0.0
  %6130 = vmatpush1.msra.mxu0 0.0
  %6131 = vmatprep.subr.mxu0 0.0
  %6132 = vmatpush1.msra.mxu0 0.0
  %6133 = vmatprep.subr.mxu0 0.0
  %6134 = vmatpush1.msra.mxu0 0.0
  %6135 = vmatprep.subr.mxu0 0.0
  %6136 = vmatpush1.msra.mxu0 0.0
  %6137 = vmatprep.subr.mxu0 0.0
  %6138 = vmatpush1.msra.mxu0 0.0
  %6139 = vmatprep.subr.mxu0 0.0
  %6140 = vmatpush1.msra.mxu0 0.0
  %6141 = vmatprep.subr.mxu0 0.0
  %6142 = vmatpush1.msra.mxu0 0.0
  %6143 = vmatprep.subr.mxu0 0.0
  %6144 = vmatpush1.msra.mxu0 0.0
  %6145 = vmatprep.subr.mxu0 0.0
  %6146 = vmatpush1.msra.mxu0 0.0
  %6147 = vmatprep.subr.mxu0 0.0
  %6148 = vmatpush1.msra.mxu0 0.0
  %6149 = vmatprep.subr.mxu0 0.0
  %6150 = vmatpush1.msra.mxu0 0.0
  %6151 = vmatprep.subr.mxu0 0.0
  %6152 = vmatpush1.msra.mxu0 0.0
  %6153 = vmatprep.subr.mxu0 0.0
  %6154 = vmatpush1.msra.mxu0 0.0
  %6155 = vmatprep.subr.mxu0 0.0
  %6156 = vmatpush1.msra.mxu0 0.0
  %6157 = vmatprep.subr.mxu0 0.0
  %6158 = vmatpush1.msra.mxu0 0.0
  %6159 = vmatprep.subr.mxu0 0.0
  %6160 = vmatpush1.msra.mxu0 0.0
  %6161 = vmatprep.subr.mxu0 0.0
  %6162 = vmatpush1.msra.mxu0 0.0
  %6163 = vmatprep.subr.mxu0 0.0
  %6164 = vmatpush1.msra.mxu0 0.0
  %6165 = vmatprep.subr.mxu0 0.0
  %6166 = vmatpush1.msra.mxu0 0.0
  %6167 = vmatprep.subr.mxu0 0.0
  %6168 = vmatpush1.msra.mxu0 0.0
  %6169 = vmatprep.subr.mxu0 0.0
  %6170 = vmatpush1.msra.mxu0 0.0
  %6171 = vmatprep.subr.mxu0 0.0
  %6172 = vmatpush1.msra.mxu0 0.0
  %6173 = vmatprep.subr.mxu0 0.0
  %6174 = vmatpush1.msra.mxu0 0.0
  %6175 = vmatprep.subr.mxu0 0.0
  %6176 = vmatpush1.msra.mxu0 0.0
  %6177 = vmatprep.subr.mxu0 0.0
  %6178 = vmatpush1.msra.mxu0 0.0
  %6179 = vmatprep.subr.mxu0 0.0
  %6180 = vmatpush1.msra.mxu0 0.0
  %6181 = vmatprep.subr.mxu0 0.0
  %6182 = vmatpush1.msra.mxu0 0.0
  %6183 = vmatprep.mubr.f32.mxu0 0.0
  %6184 = vmatmul.mubr.f32.gmra.mrb[0].mxu0 %v6114
  %v6185 = vpop.f32.mrb[0].mxu0
  %v6186 = vadd.f32 0.0, %v6185
  %v6187 = vpop.f32.mrb[0].mxu0
  %6188 = vmatprep.mubr.f32.mxu0 0.0
  %6189 = vmatmul.mubr.f32.gmra.mrb[0].mxu0 %v6117
  %v6190 = vpop.f32.mrb[0].mxu0
  %v6191 = vadd.f32 0.0, %v6190
  %v6192 = vpop.f32.mrb[0].mxu0
  %6193 = vdwg.mxu0
  %6196 = vrot.lane.b32.xlu0 %v6186, 96
  %v6197 = vpop.permute.xlu0 %6196
  %6198 = vrot.lane.b32.xlu0 %v6191, 96
  %v6199 = vpop.permute.xlu0 %6198
  %v6200 = vsel %vm234, %v6186, 0
  %v6202 = vsel %vm234, %v6191, 0
  %v6204 = vsel %vm234, %v6197, 0
  %v6206 = vsel %vm234, %v6199, 0
  %6208 = vmatprep.subr.mxu0 0.0
  %6209 = vmatpush1.xpose.msra.mxu0 %v6204
  %6210 = vmatprep.subr.mxu0 0.0
  %6211 = vmatpush1.xpose.msra.mxu0 %v6206
  %6212 = vmatprep.subr.mxu0 0.0
  %6213 = vmatpush1.xpose.msra.mxu0 0.0
  %6214 = vmatprep.subr.mxu0 0.0
  %6215 = vmatpush1.xpose.msra.mxu0 0.0
  %6216 = vmatprep.subr.mxu0 0.0
  %6217 = vmatpush1.xpose.msra.mxu0 0.0
  %6218 = vmatprep.subr.mxu0 0.0
  %6219 = vmatpush1.xpose.msra.mxu0 0.0
  %6220 = vmatprep.subr.mxu0 0.0
  %6221 = vmatpush1.xpose.msra.mxu0 0.0
  %6222 = vmatprep.subr.mxu0 0.0
  %6223 = vmatpush1.xpose.msra.mxu0 0.0
  %6224 = vmatprep.subr.mxu0 0.0
  %6225 = vmatpush1.xpose.msra.mxu0 0.0
  %6226 = vmatprep.subr.mxu0 0.0
  %6227 = vmatpush1.xpose.msra.mxu0 0.0
  %6228 = vmatprep.subr.mxu0 0.0
  %6229 = vmatpush1.xpose.msra.mxu0 0.0
  %6230 = vmatprep.subr.mxu0 0.0
  %6231 = vmatpush1.xpose.msra.mxu0 0.0
  %6232 = vmatprep.subr.mxu0 0.0
  %6233 = vmatpush1.xpose.msra.mxu0 0.0
  %6234 = vmatprep.subr.mxu0 0.0
  %6235 = vmatpush1.xpose.msra.mxu0 0.0
  %6236 = vmatprep.subr.mxu0 0.0
  %6237 = vmatpush1.xpose.msra.mxu0 0.0
  %6238 = vmatprep.subr.mxu0 0.0
  %6239 = vmatpush1.xpose.msra.mxu0 0.0
  %6240 = vmatprep.subr.mxu0 0.0
  %6241 = vmatpush1.xpose.msra.mxu0 0.0
  %6242 = vmatprep.subr.mxu0 0.0
  %6243 = vmatpush1.xpose.msra.mxu0 0.0
  %6244 = vmatprep.subr.mxu0 0.0
  %6245 = vmatpush1.xpose.msra.mxu0 0.0
  %6246 = vmatprep.subr.mxu0 0.0
  %6247 = vmatpush1.xpose.msra.mxu0 0.0
  %6248 = vmatprep.subr.mxu0 0.0
  %6249 = vmatpush1.xpose.msra.mxu0 0.0
  %6250 = vmatprep.subr.mxu0 0.0
  %6251 = vmatpush1.xpose.msra.mxu0 0.0
  %6252 = vmatprep.subr.mxu0 0.0
  %6253 = vmatpush1.xpose.msra.mxu0 0.0
  %6254 = vmatprep.subr.mxu0 0.0
  %6255 = vmatpush1.xpose.msra.mxu0 0.0
  %6256 = vmatprep.subr.mxu0 0.0
  %6257 = vmatpush1.xpose.msra.mxu0 0.0
  %6258 = vmatprep.subr.mxu0 0.0
  %6259 = vmatpush1.xpose.msra.mxu0 0.0
  %6260 = vmatprep.subr.mxu0 0.0
  %6261 = vmatpush1.xpose.msra.mxu0 0.0
  %6262 = vmatprep.subr.mxu0 0.0
  %6263 = vmatpush1.xpose.msra.mxu0 0.0
  %6264 = vmatprep.subr.mxu0 0.0
  %6265 = vmatpush1.xpose.msra.mxu0 0.0
  %6266 = vmatprep.subr.mxu0 0.0
  %6267 = vmatpush1.xpose.msra.mxu0 0.0
  %6268 = vmatprep.subr.mxu0 0.0
  %6269 = vmatpush1.xpose.msra.mxu0 0.0
  %6270 = vmatprep.subr.mxu0 0.0
  %6271 = vmatpush1.xpose.msra.mxu0 0.0
  %6272 = vmatprep.mubr.f32.mxu0 0.0
  %6273 = vmatmul.mubr.f32.gmra.mrb[0].mxu0 %v6200
  %v6274 = vpop.f32.mrb[0].mxu0
  %v6275 = vadd.f32 %v3203, %v6274
  %v6276 = vpop.f32.mrb[0].mxu0
  %6277 = vmatprep.mubr.f32.mxu0 0.0
  %6278 = vmatmul.mubr.f32.gmra.mrb[0].mxu0 %v6202
  %v6279 = vpop.f32.mrb[0].mxu0
  %v6280 = vadd.f32 %v3204, %v6279
  %v6281 = vpop.f32.mrb[0].mxu0
  %6282 = vdwg.mxu0
  %v6283 = vsel %vm318, %v6275, -inf
  %6284 = vmax.xlane.f32.xlu0 %v6283
  %v6285 = vpop.xlane.xlu0 %6284
  %v6286 = vsel %vm318, %v6280, -inf
  %6287 = vmax.xlane.f32.xlu0 %v6286
  %v6288 = vpop.xlane.xlu0 %6287
  %v6289 = vsub.f32 %v6275, %v6285
  %v6290 = vsub.f32 %v6280, %v6288
  %v6291 = vmul.f32 %v6289, 1.442695
  %v6292 = vpow.pop %v6291
  %v6293 = vmul.f32 %v6290, 1.442695
  %v6294 = vpow.pop %v6293
  %v6295 = vsel %vm318, %v6292, 0.0
  %6296 = vadd.xlane.f32.xlu0 %v6295
  %v6297 = vpop.xlane.xlu0 %6296
  %v6298 = vsel %vm318, %v6294, 0.0
  %6299 = vadd.xlane.f32.xlu0 %v6298
  %v6300 = vpop.xlane.xlu0 %6299
  %v6301 = vrcp.pop %v6297
  %v6302 = vmul.f32 %v6292, %v6301
  %v6303 = vrcp.pop %v6300
  %v6304 = vmul.f32 %v6294, %v6303
  %s6305 = scalar_lea.vmem %s12, 64
  %6306 = vst.msk [vmem:[%s6305] sm:$0xff] %vm318, %v6302
  %6307 = vst.msk [vmem:[%s6305 + $0x8] sm:$0xff] %vm318, %v6304
  %6308 = vrot.lane.b32.xlu0 %v6186, 64
  %v6309 = vpop.permute.xlu0 %6308
  %6310 = vrot.lane.b32.xlu0 %v6191, 64
  %v6311 = vpop.permute.xlu0 %6310
  %v6315 = vsel %vm318, %v6302, 0
  %v6318 = vsel %vm318, %v6304, 0
  %6320 = vmatprep.subr.mxu0 0.0
  %6321 = vmatpush1.msra.mxu0 %v6309
  %6322 = vmatprep.subr.mxu0 0.0
  %6323 = vmatpush1.msra.mxu0 %v6311
  %6324 = vmatprep.subr.mxu0 0.0
  %6325 = vmatpush1.msra.mxu0 0.0
  %6326 = vmatprep.subr.mxu0 0.0
  %6327 = vmatpush1.msra.mxu0 0.0
  %6328 = vmatprep.subr.mxu0 0.0
  %6329 = vmatpush1.msra.mxu0 0.0
  %6330 = vmatprep.subr.mxu0 0.0
  %6331 = vmatpush1.msra.mxu0 0.0
  %6332 = vmatprep.subr.mxu0 0.0
  %6333 = vmatpush1.msra.mxu0 0.0
  %6334 = vmatprep.subr.mxu0 0.0
  %6335 = vmatpush1.msra.mxu0 0.0
  %6336 = vmatprep.subr.mxu0 0.0
  %6337 = vmatpush1.msra.mxu0 0.0
  %6338 = vmatprep.subr.mxu0 0.0
  %6339 = vmatpush1.msra.mxu0 0.0
  %6340 = vmatprep.subr.mxu0 0.0
  %6341 = vmatpush1.msra.mxu0 0.0
  %6342 = vmatprep.subr.mxu0 0.0
  %6343 = vmatpush1.msra.mxu0 0.0
  %6344 = vmatprep.subr.mxu0 0.0
  %6345 = vmatpush1.msra.mxu0 0.0
  %6346 = vmatprep.subr.mxu0 0.0
  %6347 = vmatpush1.msra.mxu0 0.0
  %6348 = vmatprep.subr.mxu0 0.0
  %6349 = vmatpush1.msra.mxu0 0.0
  %6350 = vmatprep.subr.mxu0 0.0
  %6351 = vmatpush1.msra.mxu0 0.0
  %6352 = vmatprep.subr.mxu0 0.0
  %6353 = vmatpush1.msra.mxu0 0.0
  %6354 = vmatprep.subr.mxu0 0.0
  %6355 = vmatpush1.msra.mxu0 0.0
  %6356 = vmatprep.subr.mxu0 0.0
  %6357 = vmatpush1.msra.mxu0 0.0
  %6358 = vmatprep.subr.mxu0 0.0
  %6359 = vmatpush1.msra.mxu0 0.0
  %6360 = vmatprep.subr.mxu0 0.0
  %6361 = vmatpush1.msra.mxu0 0.0
  %6362 = vmatprep.subr.mxu0 0.0
  %6363 = vmatpush1.msra.mxu0 0.0
  %6364 = vmatprep.subr.mxu0 0.0
  %6365 = vmatpush1.msra.mxu0 0.0
  %6366 = vmatprep.subr.mxu0 0.0
  %6367 = vmatpush1.msra.mxu0 0.0
  %6368 = vmatprep.subr.mxu0 0.0
  %6369 = vmatpush1.msra.mxu0 0.0
  %6370 = vmatprep.subr.mxu0 0.0
  %6371 = vmatpush1.msra.mxu0 0.0
  %6372 = vmatprep.subr.mxu0 0.0
  %6373 = vmatpush1.msra.mxu0 0.0
  %6374 = vmatprep.subr.mxu0 0.0
  %6375 = vmatpush1.msra.mxu0 0.0
  %6376 = vmatprep.subr.mxu0 0.0
  %6377 = vmatpush1.msra.mxu0 0.0
  %6378 = vmatprep.subr.mxu0 0.0
  %6379 = vmatpush1.msra.mxu0 0.0
  %6380 = vmatprep.subr.mxu0 0.0
  %6381 = vmatpush1.msra.mxu0 0.0
  %6382 = vmatprep.subr.mxu0 0.0
  %6383 = vmatpush1.msra.mxu0 0.0
  %6384 = vmatprep.mubr.f32.mxu0 0.0
  %6385 = vmatmul.mubr.f32.gmra.mrb[0].mxu0 %v6315
  %v6386 = vpop.f32.mrb[0].mxu0
  %v6387 = vadd.f32 0.0, %v6386
  %v6388 = vpop.f32.mrb[0].mxu0
  %6389 = vmatprep.mubr.f32.mxu0 0.0
  %6390 = vmatmul.mubr.f32.gmra.mrb[0].mxu0 %v6318
  %v6391 = vpop.f32.mrb[0].mxu0
  %v6392 = vadd.f32 0.0, %v6391
  %v6393 = vpop.f32.mrb[0].mxu0
  %6394 = vdwg.mxu0
  %6395 = vrot.lane.b32.xlu0 %v6186, 120
  %v6396 = vpop.permute.xlu0 %6395
  %6397 = vrot.lane.b32.xlu0 %v6191, 120
  %v6398 = vpop.permute.xlu0 %6397
  %6399 = vrot.lane.b32.xlu0 %v6186, 88
  %v6400 = vpop.permute.xlu0 %6399
  %6401 = vrot.lane.b32.xlu0 %v6191, 88
  %v6402 = vpop.permute.xlu0 %6401
  %v6403 = vsel %vm234, %v6396, 0
  %v6405 = vsel %vm234, %v6398, 0
  %v6407 = vsel %vm234, %v6400, 0
  %v6409 = vsel %vm234, %v6402, 0
  %6411 = vmatprep.subr.mxu0 0.0
  %6412 = vmatpush1.xpose.msra.mxu0 %v6407
  %6413 = vmatprep.subr.mxu0 0.0
  %6414 = vmatpush1.xpose.msra.mxu0 %v6409
  %6415 = vmatprep.subr.mxu0 0.0
  %6416 = vmatpush1.xpose.msra.mxu0 0.0
  %6417 = vmatprep.subr.mxu0 0.0
  %6418 = vmatpush1.xpose.msra.mxu0 0.0
  %6419 = vmatprep.subr.mxu0 0.0
  %6420 = vmatpush1.xpose.msra.mxu0 0.0
  %6421 = vmatprep.subr.mxu0 0.0
  %6422 = vmatpush1.xpose.msra.mxu0 0.0
  %6423 = vmatprep.subr.mxu0 0.0
  %6424 = vmatpush1.xpose.msra.mxu0 0.0
  %6425 = vmatprep.subr.mxu0 0.0
  %6426 = vmatpush1.xpose.msra.mxu0 0.0
  %6427 = vmatprep.subr.mxu0 0.0
  %6428 = vmatpush1.xpose.msra.mxu0 0.0
  %6429 = vmatprep.subr.mxu0 0.0
  %6430 = vmatpush1.xpose.msra.mxu0 0.0
  %6431 = vmatprep.subr.mxu0 0.0
  %6432 = vmatpush1.xpose.msra.mxu0 0.0
  %6433 = vmatprep.subr.mxu0 0.0
  %6434 = vmatpush1.xpose.msra.mxu0 0.0
  %6435 = vmatprep.subr.mxu0 0.0
  %6436 = vmatpush1.xpose.msra.mxu0 0.0
  %6437 = vmatprep.subr.mxu0 0.0
  %6438 = vmatpush1.xpose.msra.mxu0 0.0
  %6439 = vmatprep.subr.mxu0 0.0
  %6440 = vmatpush1.xpose.msra.mxu0 0.0
  %6441 = vmatprep.subr.mxu0 0.0
  %6442 = vmatpush1.xpose.msra.mxu0 0.0
  %6443 = vmatprep.subr.mxu0 0.0
  %6444 = vmatpush1.xpose.msra.mxu0 0.0
  %6445 = vmatprep.subr.mxu0 0.0
  %6446 = vmatpush1.xpose.msra.mxu0 0.0
  %6447 = vmatprep.subr.mxu0 0.0
  %6448 = vmatpush1.xpose.msra.mxu0 0.0
  %6449 = vmatprep.subr.mxu0 0.0
  %6450 = vmatpush1.xpose.msra.mxu0 0.0
  %6451 = vmatprep.subr.mxu0 0.0
  %6452 = vmatpush1.xpose.msra.mxu0 0.0
  %6453 = vmatprep.subr.mxu0 0.0
  %6454 = vmatpush1.xpose.msra.mxu0 0.0
  %6455 = vmatprep.subr.mxu0 0.0
  %6456 = vmatpush1.xpose.msra.mxu0 0.0
  %6457 = vmatprep.subr.mxu0 0.0
  %6458 = vmatpush1.xpose.msra.mxu0 0.0
  %6459 = vmatprep.subr.mxu0 0.0
  %6460 = vmatpush1.xpose.msra.mxu0 0.0
  %6461 = vmatprep.subr.mxu0 0.0
  %6462 = vmatpush1.xpose.msra.mxu0 0.0
  %6463 = vmatprep.subr.mxu0 0.0
  %6464 = vmatpush1.xpose.msra.mxu0 0.0
  %6465 = vmatprep.subr.mxu0 0.0
  %6466 = vmatpush1.xpose.msra.mxu0 0.0
  %6467 = vmatprep.subr.mxu0 0.0
  %6468 = vmatpush1.xpose.msra.mxu0 0.0
  %6469 = vmatprep.subr.mxu0 0.0
  %6470 = vmatpush1.xpose.msra.mxu0 0.0
  %6471 = vmatprep.subr.mxu0 0.0
  %6472 = vmatpush1.xpose.msra.mxu0 0.0
  %6473 = vmatprep.subr.mxu0 0.0
  %6474 = vmatpush1.xpose.msra.mxu0 0.0
  %6475 = vmatprep.mubr.f32.mxu0 0.0
  %6476 = vmatmul.mubr.f32.gmra.mrb[0].mxu0 %v6403
  %v6477 = vpop.f32.mrb[0].mxu0
  %v6478 = vadd.f32 %v3203, %v6477
  %v6479 = vpop.f32.mrb[0].mxu0
  %6480 = vmatprep.mubr.f32.mxu0 0.0
  %6481 = vmatmul.mubr.f32.gmra.mrb[0].mxu0 %v6405
  %v6482 = vpop.f32.mrb[0].mxu0
  %v6483 = vadd.f32 %v3204, %v6482
  %v6484 = vpop.f32.mrb[0].mxu0
  %6485 = vdwg.mxu0
  %v6486 = vsel %vm318, %v6478, -inf
  %6487 = vmax.xlane.f32.xlu0 %v6486
  %v6488 = vpop.xlane.xlu0 %6487
  %v6489 = vsel %vm318, %v6483, -inf
  %6490 = vmax.xlane.f32.xlu0 %v6489
  %v6491 = vpop.xlane.xlu0 %6490
  %v6492 = vsub.f32 %v6478, %v6488
  %v6493 = vsub.f32 %v6483, %v6491
  %v6494 = vmul.f32 %v6492, 1.442695
  %v6495 = vpow.pop %v6494
  %v6496 = vmul.f32 %v6493, 1.442695
  %v6497 = vpow.pop %v6496
  %v6498 = vsel %vm318, %v6495, 0.0
  %6499 = vadd.xlane.f32.xlu0 %v6498
  %v6500 = vpop.xlane.xlu0 %6499
  %v6501 = vsel %vm318, %v6497, 0.0
  %6502 = vadd.xlane.f32.xlu0 %v6501
  %v6503 = vpop.xlane.xlu0 %6502
  %v6504 = vrcp.pop %v6500
  %v6505 = vmul.f32 %v6495, %v6504
  %v6506 = vrcp.pop %v6503
  %v6507 = vmul.f32 %v6497, %v6506
  %s6508 = scalar_lea.vmem %s12, 80
  %6509 = vst.msk [vmem:[%s6508] sm:$0xff] %vm318, %v6505
  %6510 = vst.msk [vmem:[%s6508 + $0x8] sm:$0xff] %vm318, %v6507
  %6511 = vrot.lane.b32.xlu0 %v6186, 56
  %v6512 = vpop.permute.xlu0 %6511
  %6513 = vrot.lane.b32.xlu0 %v6191, 56
  %v6514 = vpop.permute.xlu0 %6513
  %v6518 = vsel %vm318, %v6505, 0
  %v6521 = vsel %vm318, %v6507, 0
  %6523 = vmatprep.subr.mxu0 0.0
  %6524 = vmatpush1.msra.mxu0 %v6512
  %6525 = vmatprep.subr.mxu0 0.0
  %6526 = vmatpush1.msra.mxu0 %v6514
  %6527 = vmatprep.subr.mxu0 0.0
  %6528 = vmatpush1.msra.mxu0 0.0
  %6529 = vmatprep.subr.mxu0 0.0
  %6530 = vmatpush1.msra.mxu0 0.0
  %6531 = vmatprep.subr.mxu0 0.0
  %6532 = vmatpush1.msra.mxu0 0.0
  %6533 = vmatprep.subr.mxu0 0.0
  %6534 = vmatpush1.msra.mxu0 0.0
  %6535 = vmatprep.subr.mxu0 0.0
  %6536 = vmatpush1.msra.mxu0 0.0
  %6537 = vmatprep.subr.mxu0 0.0
  %6538 = vmatpush1.msra.mxu0 0.0
  %6539 = vmatprep.subr.mxu0 0.0
  %6540 = vmatpush1.msra.mxu0 0.0
  %6541 = vmatprep.subr.mxu0 0.0
  %6542 = vmatpush1.msra.mxu0 0.0
  %6543 = vmatprep.subr.mxu0 0.0
  %6544 = vmatpush1.msra.mxu0 0.0
  %6545 = vmatprep.subr.mxu0 0.0
  %6546 = vmatpush1.msra.mxu0 0.0
  %6547 = vmatprep.subr.mxu0 0.0
  %6548 = vmatpush1.msra.mxu0 0.0
  %6549 = vmatprep.subr.mxu0 0.0
  %6550 = vmatpush1.msra.mxu0 0.0
  %6551 = vmatprep.subr.mxu0 0.0
  %6552 = vmatpush1.msra.mxu0 0.0
  %6553 = vmatprep.subr.mxu0 0.0
  %6554 = vmatpush1.msra.mxu0 0.0
  %6555 = vmatprep.subr.mxu0 0.0
  %6556 = vmatpush1.msra.mxu0 0.0
  %6557 = vmatprep.subr.mxu0 0.0
  %6558 = vmatpush1.msra.mxu0 0.0
  %6559 = vmatprep.subr.mxu0 0.0
  %6560 = vmatpush1.msra.mxu0 0.0
  %6561 = vmatprep.subr.mxu0 0.0
  %6562 = vmatpush1.msra.mxu0 0.0
  %6563 = vmatprep.subr.mxu0 0.0
  %6564 = vmatpush1.msra.mxu0 0.0
  %6565 = vmatprep.subr.mxu0 0.0
  %6566 = vmatpush1.msra.mxu0 0.0
  %6567 = vmatprep.subr.mxu0 0.0
  %6568 = vmatpush1.msra.mxu0 0.0
  %6569 = vmatprep.subr.mxu0 0.0
  %6570 = vmatpush1.msra.mxu0 0.0
  %6571 = vmatprep.subr.mxu0 0.0
  %6572 = vmatpush1.msra.mxu0 0.0
  %6573 = vmatprep.subr.mxu0 0.0
  %6574 = vmatpush1.msra.mxu0 0.0
  %6575 = vmatprep.subr.mxu0 0.0
  %6576 = vmatpush1.msra.mxu0 0.0
  %6577 = vmatprep.subr.mxu0 0.0
  %6578 = vmatpush1.msra.mxu0 0.0
  %6579 = vmatprep.subr.mxu0 0.0
  %6580 = vmatpush1.msra.mxu0 0.0
  %6581 = vmatprep.subr.mxu0 0.0
  %6582 = vmatpush1.msra.mxu0 0.0
  %6583 = vmatprep.subr.mxu0 0.0
  %6584 = vmatpush1.msra.mxu0 0.0
  %6585 = vmatprep.subr.mxu0 0.0
  %6586 = vmatpush1.msra.mxu0 0.0
  %6587 = vmatprep.mubr.f32.mxu0 0.0
  %6588 = vmatmul.mubr.f32.gmra.mrb[0].mxu0 %v6518
  %v6589 = vpop.f32.mrb[0].mxu0
  %v6590 = vadd.f32 0.0, %v6589
  %v6591 = vpop.f32.mrb[0].mxu0
  %6592 = vmatprep.mubr.f32.mxu0 0.0
  %6593 = vmatmul.mubr.f32.gmra.mrb[0].mxu0 %v6521
  %v6594 = vpop.f32.mrb[0].mxu0
  %v6595 = vadd.f32 0.0, %v6594
  %v6596 = vpop.f32.mrb[0].mxu0
  %6597 = vdwg.mxu0
  %6599 = vrot.lane.b32.xlu0 %v6110, 32
  %v6600 = vpop.permute.xlu0 %6599
  %v6603 = vsel %vm234, %v6590, 0
  %v6606 = vsel %vm234, %v6595, 0
  %6608 = vmatprep.subr.mxu0 0.0
  %6609 = vmatpush1.msra.mxu0 %v6600
  %6610 = vmatprep.subr.mxu0 0.0
  %6611 = vmatpush1.msra.mxu0 0.0
  %6612 = vmatprep.subr.mxu0 0.0
  %6613 = vmatpush1.msra.mxu0 0.0
  %6614 = vmatprep.subr.mxu0 0.0
  %6615 = vmatpush1.msra.mxu0 0.0
  %6616 = vmatprep.subr.mxu0 0.0
  %6617 = vmatpush1.msra.mxu0 0.0
  %6618 = vmatprep.subr.mxu0 0.0
  %6619 = vmatpush1.msra.mxu0 0.0
  %6620 = vmatprep.subr.mxu0 0.0
  %6621 = vmatpush1.msra.mxu0 0.0
  %6622 = vmatprep.subr.mxu0 0.0
  %6623 = vmatpush1.msra.mxu0 0.0
  %6624 = vmatprep.subr.mxu0 0.0
  %6625 = vmatpush1.msra.mxu0 0.0
  %6626 = vmatprep.subr.mxu0 0.0
  %6627 = vmatpush1.msra.mxu0 0.0
  %6628 = vmatprep.subr.mxu0 0.0
  %6629 = vmatpush1.msra.mxu0 0.0
  %6630 = vmatprep.subr.mxu0 0.0
  %6631 = vmatpush1.msra.mxu0 0.0
  %6632 = vmatprep.subr.mxu0 0.0
  %6633 = vmatpush1.msra.mxu0 0.0
  %6634 = vmatprep.subr.mxu0 0.0
  %6635 = vmatpush1.msra.mxu0 0.0
  %6636 = vmatprep.subr.mxu0 0.0
  %6637 = vmatpush1.msra.mxu0 0.0
  %6638 = vmatprep.subr.mxu0 0.0
  %6639 = vmatpush1.msra.mxu0 0.0
  %6640 = vmatprep.subr.mxu0 0.0
  %6641 = vmatpush1.msra.mxu0 0.0
  %6642 = vmatprep.subr.mxu0 0.0
  %6643 = vmatpush1.msra.mxu0 0.0
  %6644 = vmatprep.subr.mxu0 0.0
  %6645 = vmatpush1.msra.mxu0 0.0
  %6646 = vmatprep.subr.mxu0 0.0
  %6647 = vmatpush1.msra.mxu0 0.0
  %6648 = vmatprep.subr.mxu0 0.0
  %6649 = vmatpush1.msra.mxu0 0.0
  %6650 = vmatprep.subr.mxu0 0.0
  %6651 = vmatpush1.msra.mxu0 0.0
  %6652 = vmatprep.subr.mxu0 0.0
  %6653 = vmatpush1.msra.mxu0 0.0
  %6654 = vmatprep.subr.mxu0 0.0
  %6655 = vmatpush1.msra.mxu0 0.0
  %6656 = vmatprep.subr.mxu0 0.0
  %6657 = vmatpush1.msra.mxu0 0.0
  %6658 = vmatprep.subr.mxu0 0.0
  %6659 = vmatpush1.msra.mxu0 0.0
  %6660 = vmatprep.subr.mxu0 0.0
  %6661 = vmatpush1.msra.mxu0 0.0
  %6662 = vmatprep.subr.mxu0 0.0
  %6663 = vmatpush1.msra.mxu0 0.0
  %6664 = vmatprep.subr.mxu0 0.0
  %6665 = vmatpush1.msra.mxu0 0.0
  %6666 = vmatprep.subr.mxu0 0.0
  %6667 = vmatpush1.msra.mxu0 0.0
  %6668 = vmatprep.subr.mxu0 0.0
  %6669 = vmatpush1.msra.mxu0 0.0
  %6670 = vmatprep.subr.mxu0 0.0
  %6671 = vmatpush1.msra.mxu0 0.0
  %6672 = vmatprep.mubr.f32.mxu0 0.0
  %6673 = vmatmul.mubr.f32.gmra.mrb[0].mxu0 %v6603
  %v6674 = vpop.f32.mrb[0].mxu0
  %v6675 = vadd.f32 0.0, %v6674
  %v6676 = vpop.f32.mrb[0].mxu0
  %6677 = vmatprep.mubr.f32.mxu0 0.0
  %6678 = vmatmul.mubr.f32.gmra.mrb[0].mxu0 %v6606
  %v6679 = vpop.f32.mrb[0].mxu0
  %v6680 = vadd.f32 0.0, %v6679
  %v6681 = vpop.f32.mrb[0].mxu0
  %6682 = vdwg.mxu0
  %6684 = vrot.lane.b32.xlu0 %v6109, 32
  %v6685 = vpop.permute.xlu0 %6684
  %v6688 = vsel %vm234, %v6387, 0
  %v6691 = vsel %vm234, %v6392, 0
  %6693 = vmatprep.subr.mxu0 0.0
  %6694 = vmatpush1.msra.mxu0 %v6685
  %6695 = vmatprep.subr.mxu0 0.0
  %6696 = vmatpush1.msra.mxu0 0.0
  %6697 = vmatprep.subr.mxu0 0.0
  %6698 = vmatpush1.msra.mxu0 0.0
  %6699 = vmatprep.subr.mxu0 0.0
  %6700 = vmatpush1.msra.mxu0 0.0
  %6701 = vmatprep.subr.mxu0 0.0
  %6702 = vmatpush1.msra.mxu0 0.0
  %6703 = vmatprep.subr.mxu0 0.0
  %6704 = vmatpush1.msra.mxu0 0.0
  %6705 = vmatprep.subr.mxu0 0.0
  %6706 = vmatpush1.msra.mxu0 0.0
  %6707 = vmatprep.subr.mxu0 0.0
  %6708 = vmatpush1.msra.mxu0 0.0
  %6709 = vmatprep.subr.mxu0 0.0
  %6710 = vmatpush1.msra.mxu0 0.0
  %6711 = vmatprep.subr.mxu0 0.0
  %6712 = vmatpush1.msra.mxu0 0.0
  %6713 = vmatprep.subr.mxu0 0.0
  %6714 = vmatpush1.msra.mxu0 0.0
  %6715 = vmatprep.subr.mxu0 0.0
  %6716 = vmatpush1.msra.mxu0 0.0
  %6717 = vmatprep.subr.mxu0 0.0
  %6718 = vmatpush1.msra.mxu0 0.0
  %6719 = vmatprep.subr.mxu0 0.0
  %6720 = vmatpush1.msra.mxu0 0.0
  %6721 = vmatprep.subr.mxu0 0.0
  %6722 = vmatpush1.msra.mxu0 0.0
  %6723 = vmatprep.subr.mxu0 0.0
  %6724 = vmatpush1.msra.mxu0 0.0
  %6725 = vmatprep.subr.mxu0 0.0
  %6726 = vmatpush1.msra.mxu0 0.0
  %6727 = vmatprep.subr.mxu0 0.0
  %6728 = vmatpush1.msra.mxu0 0.0
  %6729 = vmatprep.subr.mxu0 0.0
  %6730 = vmatpush1.msra.mxu0 0.0
  %6731 = vmatprep.subr.mxu0 0.0
  %6732 = vmatpush1.msra.mxu0 0.0
  %6733 = vmatprep.subr.mxu0 0.0
  %6734 = vmatpush1.msra.mxu0 0.0
  %6735 = vmatprep.subr.mxu0 0.0
  %6736 = vmatpush1.msra.mxu0 0.0
  %6737 = vmatprep.subr.mxu0 0.0
  %6738 = vmatpush1.msra.mxu0 0.0
  %6739 = vmatprep.subr.mxu0 0.0
  %6740 = vmatpush1.msra.mxu0 0.0
  %6741 = vmatprep.subr.mxu0 0.0
  %6742 = vmatpush1.msra.mxu0 0.0
  %6743 = vmatprep.subr.mxu0 0.0
  %6744 = vmatpush1.msra.mxu0 0.0
  %6745 = vmatprep.subr.mxu0 0.0
  %6746 = vmatpush1.msra.mxu0 0.0
  %6747 = vmatprep.subr.mxu0 0.0
  %6748 = vmatpush1.msra.mxu0 0.0
  %6749 = vmatprep.subr.mxu0 0.0
  %6750 = vmatpush1.msra.mxu0 0.0
  %6751 = vmatprep.subr.mxu0 0.0
  %6752 = vmatpush1.msra.mxu0 0.0
  %6753 = vmatprep.subr.mxu0 0.0
  %6754 = vmatpush1.msra.mxu0 0.0
  %6755 = vmatprep.subr.mxu0 0.0
  %6756 = vmatpush1.msra.mxu0 0.0
  %6757 = vmatprep.mubr.f32.mxu0 0.0
  %6758 = vmatmul.mubr.f32.gmra.mrb[0].mxu0 %v6688
  %v6759 = vpop.f32.mrb[0].mxu0
  %v6760 = vadd.f32 %v6675, %v6759
  %v6761 = vpop.f32.mrb[0].mxu0
  %6762 = vmatprep.mubr.f32.mxu0 0.0
  %6763 = vmatmul.mubr.f32.gmra.mrb[0].mxu0 %v6691
  %v6764 = vpop.f32.mrb[0].mxu0
  %v6765 = vadd.f32 %v6680, %v6764
  %v6766 = vpop.f32.mrb[0].mxu0
  %6767 = vdwg.mxu0
  %6768 = vrot.lane.b32.xlu0 %v6186, 112
  %v6769 = vpop.permute.xlu0 %6768
  %6770 = vrot.lane.b32.xlu0 %v6191, 112
  %v6771 = vpop.permute.xlu0 %6770
  %6772 = vrot.lane.b32.xlu0 %v6186, 80
  %v6773 = vpop.permute.xlu0 %6772
  %6774 = vrot.lane.b32.xlu0 %v6191, 80
  %v6775 = vpop.permute.xlu0 %6774
  %v6776 = vsel %vm234, %v6769, 0
  %v6778 = vsel %vm234, %v6771, 0
  %v6780 = vsel %vm234, %v6773, 0
  %v6782 = vsel %vm234, %v6775, 0
  %6784 = vmatprep.subr.mxu0 0.0
  %6785 = vmatpush1.xpose.msra.mxu0 %v6780
  %6786 = vmatprep.subr.mxu0 0.0
  %6787 = vmatpush1.xpose.msra.mxu0 %v6782
  %6788 = vmatprep.subr.mxu0 0.0
  %6789 = vmatpush1.xpose.msra.mxu0 0.0
  %6790 = vmatprep.subr.mxu0 0.0
  %6791 = vmatpush1.xpose.msra.mxu0 0.0
  %6792 = vmatprep.subr.mxu0 0.0
  %6793 = vmatpush1.xpose.msra.mxu0 0.0
  %6794 = vmatprep.subr.mxu0 0.0
  %6795 = vmatpush1.xpose.msra.mxu0 0.0
  %6796 = vmatprep.subr.mxu0 0.0
  %6797 = vmatpush1.xpose.msra.mxu0 0.0
  %6798 = vmatprep.subr.mxu0 0.0
  %6799 = vmatpush1.xpose.msra.mxu0 0.0
  %6800 = vmatprep.subr.mxu0 0.0
  %6801 = vmatpush1.xpose.msra.mxu0 0.0
  %6802 = vmatprep.subr.mxu0 0.0
  %6803 = vmatpush1.xpose.msra.mxu0 0.0
  %6804 = vmatprep.subr.mxu0 0.0
  %6805 = vmatpush1.xpose.msra.mxu0 0.0
  %6806 = vmatprep.subr.mxu0 0.0
  %6807 = vmatpush1.xpose.msra.mxu0 0.0
  %6808 = vmatprep.subr.mxu0 0.0
  %6809 = vmatpush1.xpose.msra.mxu0 0.0
  %6810 = vmatprep.subr.mxu0 0.0
  %6811 = vmatpush1.xpose.msra.mxu0 0.0
  %6812 = vmatprep.subr.mxu0 0.0
  %6813 = vmatpush1.xpose.msra.mxu0 0.0
  %6814 = vmatprep.subr.mxu0 0.0
  %6815 = vmatpush1.xpose.msra.mxu0 0.0
  %6816 = vmatprep.subr.mxu0 0.0
  %6817 = vmatpush1.xpose.msra.mxu0 0.0
  %6818 = vmatprep.subr.mxu0 0.0
  %6819 = vmatpush1.xpose.msra.mxu0 0.0
  %6820 = vmatprep.subr.mxu0 0.0
  %6821 = vmatpush1.xpose.msra.mxu0 0.0
  %6822 = vmatprep.subr.mxu0 0.0
  %6823 = vmatpush1.xpose.msra.mxu0 0.0
  %6824 = vmatprep.subr.mxu0 0.0
  %6825 = vmatpush1.xpose.msra.mxu0 0.0
  %6826 = vmatprep.subr.mxu0 0.0
  %6827 = vmatpush1.xpose.msra.mxu0 0.0
  %6828 = vmatprep.subr.mxu0 0.0
  %6829 = vmatpush1.xpose.msra.mxu0 0.0
  %6830 = vmatprep.subr.mxu0 0.0
  %6831 = vmatpush1.xpose.msra.mxu0 0.0
  %6832 = vmatprep.subr.mxu0 0.0
  %6833 = vmatpush1.xpose.msra.mxu0 0.0
  %6834 = vmatprep.subr.mxu0 0.0
  %6835 = vmatpush1.xpose.msra.mxu0 0.0
  %6836 = vmatprep.subr.mxu0 0.0
  %6837 = vmatpush1.xpose.msra.mxu0 0.0
  %6838 = vmatprep.subr.mxu0 0.0
  %6839 = vmatpush1.xpose.msra.mxu0 0.0
  %6840 = vmatprep.subr.mxu0 0.0
  %6841 = vmatpush1.xpose.msra.mxu0 0.0
  %6842 = vmatprep.subr.mxu0 0.0
  %6843 = vmatpush1.xpose.msra.mxu0 0.0
  %6844 = vmatprep.subr.mxu0 0.0
  %6845 = vmatpush1.xpose.msra.mxu0 0.0
  %6846 = vmatprep.subr.mxu0 0.0
  %6847 = vmatpush1.xpose.msra.mxu0 0.0
  %6848 = vmatprep.mubr.f32.mxu0 0.0
  %6849 = vmatmul.mubr.f32.gmra.mrb[0].mxu0 %v6776
  %v6850 = vpop.f32.mrb[0].mxu0
  %v6851 = vadd.f32 %v3203, %v6850
  %v6852 = vpop.f32.mrb[0].mxu0
  %6853 = vmatprep.mubr.f32.mxu0 0.0
  %6854 = vmatmul.mubr.f32.gmra.mrb[0].mxu0 %v6778
  %v6855 = vpop.f32.mrb[0].mxu0
  %v6856 = vadd.f32 %v3204, %v6855
  %v6857 = vpop.f32.mrb[0].mxu0
  %6858 = vdwg.mxu0
  %v6859 = vsel %vm318, %v6851, -inf
  %6860 = vmax.xlane.f32.xlu0 %v6859
  %v6861 = vpop.xlane.xlu0 %6860
  %v6862 = vsel %vm318, %v6856, -inf
  %6863 = vmax.xlane.f32.xlu0 %v6862
  %v6864 = vpop.xlane.xlu0 %6863
  %v6865 = vsub.f32 %v6851, %v6861
  %v6866 = vsub.f32 %v6856, %v6864
  %v6867 = vmul.f32 %v6865, 1.442695
  %v6868 = vpow.pop %v6867
  %v6869 = vmul.f32 %v6866, 1.442695
  %v6870 = vpow.pop %v6869
  %v6871 = vsel %vm318, %v6868, 0.0
  %6872 = vadd.xlane.f32.xlu0 %v6871
  %v6873 = vpop.xlane.xlu0 %6872
  %v6874 = vsel %vm318, %v6870, 0.0
  %6875 = vadd.xlane.f32.xlu0 %v6874
  %v6876 = vpop.xlane.xlu0 %6875
  %v6877 = vrcp.pop %v6873
  %v6878 = vmul.f32 %v6868, %v6877
  %v6879 = vrcp.pop %v6876
  %v6880 = vmul.f32 %v6870, %v6879
  %s6881 = scalar_lea.vmem %s12, 96
  %6882 = vst.msk [vmem:[%s6881] sm:$0xff] %vm318, %v6878
  %6883 = vst.msk [vmem:[%s6881 + $0x8] sm:$0xff] %vm318, %v6880
  %6884 = vrot.lane.b32.xlu0 %v6186, 48
  %v6885 = vpop.permute.xlu0 %6884
  %6886 = vrot.lane.b32.xlu0 %v6191, 48
  %v6887 = vpop.permute.xlu0 %6886
  %v6891 = vsel %vm318, %v6878, 0
  %v6894 = vsel %vm318, %v6880, 0
  %6896 = vmatprep.subr.mxu0 0.0
  %6897 = vmatpush1.msra.mxu0 %v6885
  %6898 = vmatprep.subr.mxu0 0.0
  %6899 = vmatpush1.msra.mxu0 %v6887
  %6900 = vmatprep.subr.mxu0 0.0
  %6901 = vmatpush1.msra.mxu0 0.0
  %6902 = vmatprep.subr.mxu0 0.0
  %6903 = vmatpush1.msra.mxu0 0.0
  %6904 = vmatprep.subr.mxu0 0.0
  %6905 = vmatpush1.msra.mxu0 0.0
  %6906 = vmatprep.subr.mxu0 0.0
  %6907 = vmatpush1.msra.mxu0 0.0
  %6908 = vmatprep.subr.mxu0 0.0
  %6909 = vmatpush1.msra.mxu0 0.0
  %6910 = vmatprep.subr.mxu0 0.0
  %6911 = vmatpush1.msra.mxu0 0.0
  %6912 = vmatprep.subr.mxu0 0.0
  %6913 = vmatpush1.msra.mxu0 0.0
  %6914 = vmatprep.subr.mxu0 0.0
  %6915 = vmatpush1.msra.mxu0 0.0
  %6916 = vmatprep.subr.mxu0 0.0
  %6917 = vmatpush1.msra.mxu0 0.0
  %6918 = vmatprep.subr.mxu0 0.0
  %6919 = vmatpush1.msra.mxu0 0.0
  %6920 = vmatprep.subr.mxu0 0.0
  %6921 = vmatpush1.msra.mxu0 0.0
  %6922 = vmatprep.subr.mxu0 0.0
  %6923 = vmatpush1.msra.mxu0 0.0
  %6924 = vmatprep.subr.mxu0 0.0
  %6925 = vmatpush1.msra.mxu0 0.0
  %6926 = vmatprep.subr.mxu0 0.0
  %6927 = vmatpush1.msra.mxu0 0.0
  %6928 = vmatprep.subr.mxu0 0.0
  %6929 = vmatpush1.msra.mxu0 0.0
  %6930 = vmatprep.subr.mxu0 0.0
  %6931 = vmatpush1.msra.mxu0 0.0
  %6932 = vmatprep.subr.mxu0 0.0
  %6933 = vmatpush1.msra.mxu0 0.0
  %6934 = vmatprep.subr.mxu0 0.0
  %6935 = vmatpush1.msra.mxu0 0.0
  %6936 = vmatprep.subr.mxu0 0.0
  %6937 = vmatpush1.msra.mxu0 0.0
  %6938 = vmatprep.subr.mxu0 0.0
  %6939 = vmatpush1.msra.mxu0 0.0
  %6940 = vmatprep.subr.mxu0 0.0
  %6941 = vmatpush1.msra.mxu0 0.0
  %6942 = vmatprep.subr.mxu0 0.0
  %6943 = vmatpush1.msra.mxu0 0.0
  %6944 = vmatprep.subr.mxu0 0.0
  %6945 = vmatpush1.msra.mxu0 0.0
  %6946 = vmatprep.subr.mxu0 0.0
  %6947 = vmatpush1.msra.mxu0 0.0
  %6948 = vmatprep.subr.mxu0 0.0
  %6949 = vmatpush1.msra.mxu0 0.0
  %6950 = vmatprep.subr.mxu0 0.0
  %6951 = vmatpush1.msra.mxu0 0.0
  %6952 = vmatprep.subr.mxu0 0.0
  %6953 = vmatpush1.msra.mxu0 0.0
  %6954 = vmatprep.subr.mxu0 0.0
  %6955 = vmatpush1.msra.mxu0 0.0
  %6956 = vmatprep.subr.mxu0 0.0
  %6957 = vmatpush1.msra.mxu0 0.0
  %6958 = vmatprep.subr.mxu0 0.0
  %6959 = vmatpush1.msra.mxu0 0.0
  %6960 = vmatprep.mubr.f32.mxu0 0.0
  %6961 = vmatmul.mubr.f32.gmra.mrb[0].mxu0 %v6891
  %v6962 = vpop.f32.mrb[0].mxu0
  %v6963 = vadd.f32 0.0, %v6962
  %v6964 = vpop.f32.mrb[0].mxu0
  %6965 = vmatprep.mubr.f32.mxu0 0.0
  %6966 = vmatmul.mubr.f32.gmra.mrb[0].mxu0 %v6894
  %v6967 = vpop.f32.mrb[0].mxu0
  %v6968 = vadd.f32 0.0, %v6967
  %v6969 = vpop.f32.mrb[0].mxu0
  %6970 = vdwg.mxu0
  %6972 = vrot.lane.b32.xlu0 %v6111, 32
  %v6973 = vpop.permute.xlu0 %6972
  %v6976 = vsel %vm234, %v6963, 0
  %v6979 = vsel %vm234, %v6968, 0
  %6981 = vmatprep.subr.mxu0 0.0
  %6982 = vmatpush1.msra.mxu0 %v6973
  %6983 = vmatprep.subr.mxu0 0.0
  %6984 = vmatpush1.msra.mxu0 0.0
  %6985 = vmatprep.subr.mxu0 0.0
  %6986 = vmatpush1.msra.mxu0 0.0
  %6987 = vmatprep.subr.mxu0 0.0
  %6988 = vmatpush1.msra.mxu0 0.0
  %6989 = vmatprep.subr.mxu0 0.0
  %6990 = vmatpush1.msra.mxu0 0.0
  %6991 = vmatprep.subr.mxu0 0.0
  %6992 = vmatpush1.msra.mxu0 0.0
  %6993 = vmatprep.subr.mxu0 0.0
  %6994 = vmatpush1.msra.mxu0 0.0
  %6995 = vmatprep.subr.mxu0 0.0
  %6996 = vmatpush1.msra.mxu0 0.0
  %6997 = vmatprep.subr.mxu0 0.0
  %6998 = vmatpush1.msra.mxu0 0.0
  %6999 = vmatprep.subr.mxu0 0.0
  %7000 = vmatpush1.msra.mxu0 0.0
  %7001 = vmatprep.subr.mxu0 0.0
  %7002 = vmatpush1.msra.mxu0 0.0
  %7003 = vmatprep.subr.mxu0 0.0
  %7004 = vmatpush1.msra.mxu0 0.0
  %7005 = vmatprep.subr.mxu0 0.0
  %7006 = vmatpush1.msra.mxu0 0.0
  %7007 = vmatprep.subr.mxu0 0.0
  %7008 = vmatpush1.msra.mxu0 0.0
  %7009 = vmatprep.subr.mxu0 0.0
  %7010 = vmatpush1.msra.mxu0 0.0
  %7011 = vmatprep.subr.mxu0 0.0
  %7012 = vmatpush1.msra.mxu0 0.0
  %7013 = vmatprep.subr.mxu0 0.0
  %7014 = vmatpush1.msra.mxu0 0.0
  %7015 = vmatprep.subr.mxu0 0.0
  %7016 = vmatpush1.msra.mxu0 0.0
  %7017 = vmatprep.subr.mxu0 0.0
  %7018 = vmatpush1.msra.mxu0 0.0
  %7019 = vmatprep.subr.mxu0 0.0
  %7020 = vmatpush1.msra.mxu0 0.0
  %7021 = vmatprep.subr.mxu0 0.0
  %7022 = vmatpush1.msra.mxu0 0.0
  %7023 = vmatprep.subr.mxu0 0.0
  %7024 = vmatpush1.msra.mxu0 0.0
  %7025 = vmatprep.subr.mxu0 0.0
  %7026 = vmatpush1.msra.mxu0 0.0
  %7027 = vmatprep.subr.mxu0 0.0
  %7028 = vmatpush1.msra.mxu0 0.0
  %7029 = vmatprep.subr.mxu0 0.0
  %7030 = vmatpush1.msra.mxu0 0.0
  %7031 = vmatprep.subr.mxu0 0.0
  %7032 = vmatpush1.msra.mxu0 0.0
  %7033 = vmatprep.subr.mxu0 0.0
  %7034 = vmatpush1.msra.mxu0 0.0
  %7035 = vmatprep.subr.mxu0 0.0
  %7036 = vmatpush1.msra.mxu0 0.0
  %7037 = vmatprep.subr.mxu0 0.0
  %7038 = vmatpush1.msra.mxu0 0.0
  %7039 = vmatprep.subr.mxu0 0.0
  %7040 = vmatpush1.msra.mxu0 0.0
  %7041 = vmatprep.subr.mxu0 0.0
  %7042 = vmatpush1.msra.mxu0 0.0
  %7043 = vmatprep.subr.mxu0 0.0
  %7044 = vmatpush1.msra.mxu0 0.0
  %7045 = vmatprep.mubr.f32.mxu0 0.0
  %7046 = vmatmul.mubr.f32.gmra.mrb[0].mxu0 %v6976
  %v7047 = vpop.f32.mrb[0].mxu0
  %v7048 = vadd.f32 0.0, %v7047
  %v7049 = vpop.f32.mrb[0].mxu0
  %7050 = vmatprep.mubr.f32.mxu0 0.0
  %7051 = vmatmul.mubr.f32.gmra.mrb[0].mxu0 %v6979
  %v7052 = vpop.f32.mrb[0].mxu0
  %v7053 = vadd.f32 0.0, %v7052
  %v7054 = vpop.f32.mrb[0].mxu0
  %7055 = vdwg.mxu0
  %v7056 = vadd.f32 %v6760, %v7048
  %v7057 = vadd.f32 %v6765, %v7053
  %7058 = vrot.lane.b32.xlu0 %v6186, 104
  %v7059 = vpop.permute.xlu0 %7058
  %7060 = vrot.lane.b32.xlu0 %v6191, 104
  %v7061 = vpop.permute.xlu0 %7060
  %7062 = vrot.lane.b32.xlu0 %v6186, 72
  %v7063 = vpop.permute.xlu0 %7062
  %7064 = vrot.lane.b32.xlu0 %v6191, 72
  %v7065 = vpop.permute.xlu0 %7064
  %v7066 = vsel %vm234, %v7059, 0
  %v7068 = vsel %vm234, %v7061, 0
  %v7070 = vsel %vm234, %v7063, 0
  %v7072 = vsel %vm234, %v7065, 0
  %7074 = vmatprep.subr.mxu0 0.0
  %7075 = vmatpush1.xpose.msra.mxu0 %v7070
  %7076 = vmatprep.subr.mxu0 0.0
  %7077 = vmatpush1.xpose.msra.mxu0 %v7072
  %7078 = vmatprep.subr.mxu0 0.0
  %7079 = vmatpush1.xpose.msra.mxu0 0.0
  %7080 = vmatprep.subr.mxu0 0.0
  %7081 = vmatpush1.xpose.msra.mxu0 0.0
  %7082 = vmatprep.subr.mxu0 0.0
  %7083 = vmatpush1.xpose.msra.mxu0 0.0
  %7084 = vmatprep.subr.mxu0 0.0
  %7085 = vmatpush1.xpose.msra.mxu0 0.0
  %7086 = vmatprep.subr.mxu0 0.0
  %7087 = vmatpush1.xpose.msra.mxu0 0.0
  %7088 = vmatprep.subr.mxu0 0.0
  %7089 = vmatpush1.xpose.msra.mxu0 0.0
  %7090 = vmatprep.subr.mxu0 0.0
  %7091 = vmatpush1.xpose.msra.mxu0 0.0
  %7092 = vmatprep.subr.mxu0 0.0
  %7093 = vmatpush1.xpose.msra.mxu0 0.0
  %7094 = vmatprep.subr.mxu0 0.0
  %7095 = vmatpush1.xpose.msra.mxu0 0.0
  %7096 = vmatprep.subr.mxu0 0.0
  %7097 = vmatpush1.xpose.msra.mxu0 0.0
  %7098 = vmatprep.subr.mxu0 0.0
  %7099 = vmatpush1.xpose.msra.mxu0 0.0
  %7100 = vmatprep.subr.mxu0 0.0
  %7101 = vmatpush1.xpose.msra.mxu0 0.0
  %7102 = vmatprep.subr.mxu0 0.0
  %7103 = vmatpush1.xpose.msra.mxu0 0.0
  %7104 = vmatprep.subr.mxu0 0.0
  %7105 = vmatpush1.xpose.msra.mxu0 0.0
  %7106 = vmatprep.subr.mxu0 0.0
  %7107 = vmatpush1.xpose.msra.mxu0 0.0
  %7108 = vmatprep.subr.mxu0 0.0
  %7109 = vmatpush1.xpose.msra.mxu0 0.0
  %7110 = vmatprep.subr.mxu0 0.0
  %7111 = vmatpush1.xpose.msra.mxu0 0.0
  %7112 = vmatprep.subr.mxu0 0.0
  %7113 = vmatpush1.xpose.msra.mxu0 0.0
  %7114 = vmatprep.subr.mxu0 0.0
  %7115 = vmatpush1.xpose.msra.mxu0 0.0
  %7116 = vmatprep.subr.mxu0 0.0
  %7117 = vmatpush1.xpose.msra.mxu0 0.0
  %7118 = vmatprep.subr.mxu0 0.0
  %7119 = vmatpush1.xpose.msra.mxu0 0.0
  %7120 = vmatprep.subr.mxu0 0.0
  %7121 = vmatpush1.xpose.msra.mxu0 0.0
  %7122 = vmatprep.subr.mxu0 0.0
  %7123 = vmatpush1.xpose.msra.mxu0 0.0
  %7124 = vmatprep.subr.mxu0 0.0
  %7125 = vmatpush1.xpose.msra.mxu0 0.0
  %7126 = vmatprep.subr.mxu0 0.0
  %7127 = vmatpush1.xpose.msra.mxu0 0.0
  %7128 = vmatprep.subr.mxu0 0.0
  %7129 = vmatpush1.xpose.msra.mxu0 0.0
  %7130 = vmatprep.subr.mxu0 0.0
  %7131 = vmatpush1.xpose.msra.mxu0 0.0
  %7132 = vmatprep.subr.mxu0 0.0
  %7133 = vmatpush1.xpose.msra.mxu0 0.0
  %7134 = vmatprep.subr.mxu0 0.0
  %7135 = vmatpush1.xpose.msra.mxu0 0.0
  %7136 = vmatprep.subr.mxu0 0.0
  %7137 = vmatpush1.xpose.msra.mxu0 0.0
  %7138 = vmatprep.mubr.f32.mxu0 0.0
  %7139 = vmatmul.mubr.f32.gmra.mrb[0].mxu0 %v7066
  %v7140 = vpop.f32.mrb[0].mxu0
  %v7141 = vadd.f32 %v3203, %v7140
  %v7142 = vpop.f32.mrb[0].mxu0
  %7143 = vmatprep.mubr.f32.mxu0 0.0
  %7144 = vmatmul.mubr.f32.gmra.mrb[0].mxu0 %v7068
  %v7145 = vpop.f32.mrb[0].mxu0
  %v7146 = vadd.f32 %v3204, %v7145
  %v7147 = vpop.f32.mrb[0].mxu0
  %7148 = vdwg.mxu0
  %v7149 = vsel %vm318, %v7141, -inf
  %7150 = vmax.xlane.f32.xlu0 %v7149
  %v7151 = vpop.xlane.xlu0 %7150
  %v7152 = vsel %vm318, %v7146, -inf
  %7153 = vmax.xlane.f32.xlu0 %v7152
  %v7154 = vpop.xlane.xlu0 %7153
  %v7155 = vsub.f32 %v7141, %v7151
  %v7156 = vsub.f32 %v7146, %v7154
  %v7157 = vmul.f32 %v7155, 1.442695
  %v7158 = vpow.pop %v7157
  %v7159 = vmul.f32 %v7156, 1.442695
  %v7160 = vpow.pop %v7159
  %v7161 = vsel %vm318, %v7158, 0.0
  %7162 = vadd.xlane.f32.xlu0 %v7161
  %v7163 = vpop.xlane.xlu0 %7162
  %v7164 = vsel %vm318, %v7160, 0.0
  %7165 = vadd.xlane.f32.xlu0 %v7164
  %v7166 = vpop.xlane.xlu0 %7165
  %v7167 = vrcp.pop %v7163
  %v7168 = vmul.f32 %v7158, %v7167
  %v7169 = vrcp.pop %v7166
  %v7170 = vmul.f32 %v7160, %v7169
  %s7171 = scalar_lea.vmem %s12, 112
  %7172 = vst.msk [vmem:[%s7171] sm:$0xff] %vm318, %v7168
  %7173 = vst.msk [vmem:[%s7171 + $0x8] sm:$0xff] %vm318, %v7170
  %7174 = vrot.lane.b32.xlu0 %v6186, 40
  %v7175 = vpop.permute.xlu0 %7174
  %7176 = vrot.lane.b32.xlu0 %v6191, 40
  %v7177 = vpop.permute.xlu0 %7176
  %v7181 = vsel %vm318, %v7168, 0
  %v7184 = vsel %vm318, %v7170, 0
  %7186 = vmatprep.subr.mxu0 0.0
  %7187 = vmatpush1.msra.mxu0 %v7175
  %7188 = vmatprep.subr.mxu0 0.0
  %7189 = vmatpush1.msra.mxu0 %v7177
  %7190 = vmatprep.subr.mxu0 0.0
  %7191 = vmatpush1.msra.mxu0 0.0
  %7192 = vmatprep.subr.mxu0 0.0
  %7193 = vmatpush1.msra.mxu0 0.0
  %7194 = vmatprep.subr.mxu0 0.0
  %7195 = vmatpush1.msra.mxu0 0.0
  %7196 = vmatprep.subr.mxu0 0.0
  %7197 = vmatpush1.msra.mxu0 0.0
  %7198 = vmatprep.subr.mxu0 0.0
  %7199 = vmatpush1.msra.mxu0 0.0
  %7200 = vmatprep.subr.mxu0 0.0
  %7201 = vmatpush1.msra.mxu0 0.0
  %7202 = vmatprep.subr.mxu0 0.0
  %7203 = vmatpush1.msra.mxu0 0.0
  %7204 = vmatprep.subr.mxu0 0.0
  %7205 = vmatpush1.msra.mxu0 0.0
  %7206 = vmatprep.subr.mxu0 0.0
  %7207 = vmatpush1.msra.mxu0 0.0
  %7208 = vmatprep.subr.mxu0 0.0
  %7209 = vmatpush1.msra.mxu0 0.0
  %7210 = vmatprep.subr.mxu0 0.0
  %7211 = vmatpush1.msra.mxu0 0.0
  %7212 = vmatprep.subr.mxu0 0.0
  %7213 = vmatpush1.msra.mxu0 0.0
  %7214 = vmatprep.subr.mxu0 0.0
  %7215 = vmatpush1.msra.mxu0 0.0
  %7216 = vmatprep.subr.mxu0 0.0
  %7217 = vmatpush1.msra.mxu0 0.0
  %7218 = vmatprep.subr.mxu0 0.0
  %7219 = vmatpush1.msra.mxu0 0.0
  %7220 = vmatprep.subr.mxu0 0.0
  %7221 = vmatpush1.msra.mxu0 0.0
  %7222 = vmatprep.subr.mxu0 0.0
  %7223 = vmatpush1.msra.mxu0 0.0
  %7224 = vmatprep.subr.mxu0 0.0
  %7225 = vmatpush1.msra.mxu0 0.0
  %7226 = vmatprep.subr.mxu0 0.0
  %7227 = vmatpush1.msra.mxu0 0.0
  %7228 = vmatprep.subr.mxu0 0.0
  %7229 = vmatpush1.msra.mxu0 0.0
  %7230 = vmatprep.subr.mxu0 0.0
  %7231 = vmatpush1.msra.mxu0 0.0
  %7232 = vmatprep.subr.mxu0 0.0
  %7233 = vmatpush1.msra.mxu0 0.0
  %7234 = vmatprep.subr.mxu0 0.0
  %7235 = vmatpush1.msra.mxu0 0.0
  %7236 = vmatprep.subr.mxu0 0.0
  %7237 = vmatpush1.msra.mxu0 0.0
  %7238 = vmatprep.subr.mxu0 0.0
  %7239 = vmatpush1.msra.mxu0 0.0
  %7240 = vmatprep.subr.mxu0 0.0
  %7241 = vmatpush1.msra.mxu0 0.0
  %7242 = vmatprep.subr.mxu0 0.0
  %7243 = vmatpush1.msra.mxu0 0.0
  %7244 = vmatprep.subr.mxu0 0.0
  %7245 = vmatpush1.msra.mxu0 0.0
  %7246 = vmatprep.subr.mxu0 0.0
  %7247 = vmatpush1.msra.mxu0 0.0
  %7248 = vmatprep.subr.mxu0 0.0
  %7249 = vmatpush1.msra.mxu0 0.0
  %7250 = vmatprep.mubr.f32.mxu0 0.0
  %7251 = vmatmul.mubr.f32.gmra.mrb[0].mxu0 %v7181
  %v7252 = vpop.f32.mrb[0].mxu0
  %v7253 = vadd.f32 0.0, %v7252
  %v7254 = vpop.f32.mrb[0].mxu0
  %7255 = vmatprep.mubr.f32.mxu0 0.0
  %7256 = vmatmul.mubr.f32.gmra.mrb[0].mxu0 %v7184
  %v7257 = vpop.f32.mrb[0].mxu0
  %v7258 = vadd.f32 0.0, %v7257
  %v7259 = vpop.f32.mrb[0].mxu0
  %7260 = vdwg.mxu0
  %7262 = vrot.lane.b32.xlu0 %v6112, 32
  %v7263 = vpop.permute.xlu0 %7262
  %v7266 = vsel %vm234, %v7253, 0
  %v7269 = vsel %vm234, %v7258, 0
  %7271 = vmatprep.subr.mxu0 0.0
  %7272 = vmatpush1.msra.mxu0 %v7263
  %7273 = vmatprep.subr.mxu0 0.0
  %7274 = vmatpush1.msra.mxu0 0.0
  %7275 = vmatprep.subr.mxu0 0.0
  %7276 = vmatpush1.msra.mxu0 0.0
  %7277 = vmatprep.subr.mxu0 0.0
  %7278 = vmatpush1.msra.mxu0 0.0
  %7279 = vmatprep.subr.mxu0 0.0
  %7280 = vmatpush1.msra.mxu0 0.0
  %7281 = vmatprep.subr.mxu0 0.0
  %7282 = vmatpush1.msra.mxu0 0.0
  %7283 = vmatprep.subr.mxu0 0.0
  %7284 = vmatpush1.msra.mxu0 0.0
  %7285 = vmatprep.subr.mxu0 0.0
  %7286 = vmatpush1.msra.mxu0 0.0
  %7287 = vmatprep.subr.mxu0 0.0
  %7288 = vmatpush1.msra.mxu0 0.0
  %7289 = vmatprep.subr.mxu0 0.0
  %7290 = vmatpush1.msra.mxu0 0.0
  %7291 = vmatprep.subr.mxu0 0.0
  %7292 = vmatpush1.msra.mxu0 0.0
  %7293 = vmatprep.subr.mxu0 0.0
  %7294 = vmatpush1.msra.mxu0 0.0
  %7295 = vmatprep.subr.mxu0 0.0
  %7296 = vmatpush1.msra.mxu0 0.0
  %7297 = vmatprep.subr.mxu0 0.0
  %7298 = vmatpush1.msra.mxu0 0.0
  %7299 = vmatprep.subr.mxu0 0.0
  %7300 = vmatpush1.msra.mxu0 0.0
  %7301 = vmatprep.subr.mxu0 0.0
  %7302 = vmatpush1.msra.mxu0 0.0
  %7303 = vmatprep.subr.mxu0 0.0
  %7304 = vmatpush1.msra.mxu0 0.0
  %7305 = vmatprep.subr.mxu0 0.0
  %7306 = vmatpush1.msra.mxu0 0.0
  %7307 = vmatprep.subr.mxu0 0.0
  %7308 = vmatpush1.msra.mxu0 0.0
  %7309 = vmatprep.subr.mxu0 0.0
  %7310 = vmatpush1.msra.mxu0 0.0
  %7311 = vmatprep.subr.mxu0 0.0
  %7312 = vmatpush1.msra.mxu0 0.0
  %7313 = vmatprep.subr.mxu0 0.0
  %7314 = vmatpush1.msra.mxu0 0.0
  %7315 = vmatprep.subr.mxu0 0.0
  %7316 = vmatpush1.msra.mxu0 0.0
  %7317 = vmatprep.subr.mxu0 0.0
  %7318 = vmatpush1.msra.mxu0 0.0
  %7319 = vmatprep.subr.mxu0 0.0
  %7320 = vmatpush1.msra.mxu0 0.0
  %7321 = vmatprep.subr.mxu0 0.0
  %7322 = vmatpush1.msra.mxu0 0.0
  %7323 = vmatprep.subr.mxu0 0.0
  %7324 = vmatpush1.msra.mxu0 0.0
  %7325 = vmatprep.subr.mxu0 0.0
  %7326 = vmatpush1.msra.mxu0 0.0
  %7327 = vmatprep.subr.mxu0 0.0
  %7328 = vmatpush1.msra.mxu0 0.0
  %7329 = vmatprep.subr.mxu0 0.0
  %7330 = vmatpush1.msra.mxu0 0.0
  %7331 = vmatprep.subr.mxu0 0.0
  %7332 = vmatpush1.msra.mxu0 0.0
  %7333 = vmatprep.subr.mxu0 0.0
  %7334 = vmatpush1.msra.mxu0 0.0
  %7335 = vmatprep.mubr.f32.mxu0 0.0
  %7336 = vmatmul.mubr.f32.gmra.mrb[0].mxu0 %v7266
  %v7337 = vpop.f32.mrb[0].mxu0
  %v7338 = vadd.f32 0.0, %v7337
  %v7339 = vpop.f32.mrb[0].mxu0
  %7340 = vmatprep.mubr.f32.mxu0 0.0
  %7341 = vmatmul.mubr.f32.gmra.mrb[0].mxu0 %v7269
  %v7342 = vpop.f32.mrb[0].mxu0
  %v7343 = vadd.f32 0.0, %v7342
  %v7344 = vpop.f32.mrb[0].mxu0
  %7345 = vdwg.mxu0
  %v7346 = vadd.f32 %v7056, %v7338
  %v7347 = vadd.f32 %v7057, %v7343
  %s7348 = scalar_lea.vmem %s9, 5
  %v7349 = vld [vmem:[%s7348] sm:$0x1]
  %v7350 = vadd.f32 %v7346, %v6106
  %v7351 = vadd.f32 %v7347, %v6107
  %v7352 = vsel %vm146, %v7350, 0.0
  %7353 = vadd.xlane.f32.xlu0 %v7352
  %v7354 = vpop.xlane.xlu0 %7353
  %v7355 = vsel %vm146, %v7351, 0.0
  %7356 = vadd.xlane.f32.xlu0 %v7355
  %v7357 = vpop.xlane.xlu0 %7356
  %v7358 = vmul.f32 %v7354, %v1392
  %v7359 = vmul.f32 %v7357, %v1392
  %v7360 = vsub.f32 %v7350, %v7358
  %v7361 = vsub.f32 %v7351, %v7359
  %v7362 = vmul.f32 %v7360, %v7360
  %v7363 = vmul.f32 %v7361, %v7361
  %v7364 = vsel %vm146, %v7362, 0.0
  %7365 = vadd.xlane.f32.xlu0 %v7364
  %v7366 = vpop.xlane.xlu0 %7365
  %v7367 = vsel %vm146, %v7363, 0.0
  %7368 = vadd.xlane.f32.xlu0 %v7367
  %v7369 = vpop.xlane.xlu0 %7368
  %v7370 = vmul.f32 %v7366, %v1392
  %v7371 = vmul.f32 %v7369, %v1392
  %v7372 = vadd.f32 %v7370, 1e-05
  %v7373 = vadd.f32 %v7371, 1e-05
  %v7374 = vrsqrt.pop %v7372
  %v7375 = vrsqrt.pop %v7373
  %v7376 = vmul.f32 %v7360, %v7374
  %v7377 = vmul.f32 %v7361, %v7375
  %v7379 = vlaneseq
  %v7380 = vshrl.u32 %v7379, 7
  %v7381 = vsub.s32 0, %v7380
  %v7382 = vrot.slane %v7349, %v7381
  %v7384 = vmul.f32 %v7376, %v7382
  %v7385 = vmul.f32 %v7377, %v7382
  %7386 = vrot.lane.b32.xlu0 %v7382, 96
  %v7387 = vpop.permute.xlu0 %7386
  %v7389 = vadd.f32 %v7384, %v7387
  %v7390 = vadd.f32 %v7385, %v7387
  %s7391 = scalar_lea.vmem %s7, 160
  %v7392 = vld [vmem:[%s7391] sm:$0xff]
  %v7393 = vld [vmem:[%s7391 + $0x8] sm:$0xff]
  %v7394 = vld [vmem:[%s7391 + $0x10] sm:$0xff]
  %v7395 = vld [vmem:[%s7391 + $0x18] sm:$0xff]
  %v7397 = vsel %vm146, %v7389, 0
  %v7400 = vsel %vm146, %v7390, 0
  %7402 = vmatprep.subr.mxu0 0.0
  %7403 = vmatpush1.msra.mxu0 %v7392
  %7404 = vmatprep.subr.mxu0 0.0
  %7405 = vmatpush1.msra.mxu0 %v7393
  %7406 = vmatprep.subr.mxu0 0.0
  %7407 = vmatpush1.msra.mxu0 %v7394
  %7408 = vmatprep.subr.mxu0 0.0
  %7409 = vmatpush1.msra.mxu0 %v7395
  %7410 = vmatprep.subr.mxu0 0.0
  %7411 = vmatpush1.msra.mxu0 0.0
  %7412 = vmatprep.subr.mxu0 0.0
  %7413 = vmatpush1.msra.mxu0 0.0
  %7414 = vmatprep.subr.mxu0 0.0
  %7415 = vmatpush1.msra.mxu0 0.0
  %7416 = vmatprep.subr.mxu0 0.0
  %7417 = vmatpush1.msra.mxu0 0.0
  %7418 = vmatprep.subr.mxu0 0.0
  %7419 = vmatpush1.msra.mxu0 0.0
  %7420 = vmatprep.subr.mxu0 0.0
  %7421 = vmatpush1.msra.mxu0 0.0
  %7422 = vmatprep.subr.mxu0 0.0
  %7423 = vmatpush1.msra.mxu0 0.0
  %7424 = vmatprep.subr.mxu0 0.0
  %7425 = vmatpush1.msra.mxu0 0.0
  %7426 = vmatprep.subr.mxu0 0.0
  %7427 = vmatpush1.msra.mxu0 0.0
  %7428 = vmatprep.subr.mxu0 0.0
  %7429 = vmatpush1.msra.mxu0 0.0
  %7430 = vmatprep.subr.mxu0 0.0
  %7431 = vmatpush1.msra.mxu0 0.0
  %7432 = vmatprep.subr.mxu0 0.0
  %7433 = vmatpush1.msra.mxu0 0.0
  %7434 = vmatprep.subr.mxu0 0.0
  %7435 = vmatpush1.msra.mxu0 0.0
  %7436 = vmatprep.subr.mxu0 0.0
  %7437 = vmatpush1.msra.mxu0 0.0
  %7438 = vmatprep.subr.mxu0 0.0
  %7439 = vmatpush1.msra.mxu0 0.0
  %7440 = vmatprep.subr.mxu0 0.0
  %7441 = vmatpush1.msra.mxu0 0.0
  %7442 = vmatprep.subr.mxu0 0.0
  %7443 = vmatpush1.msra.mxu0 0.0
  %7444 = vmatprep.subr.mxu0 0.0
  %7445 = vmatpush1.msra.mxu0 0.0
  %7446 = vmatprep.subr.mxu0 0.0
  %7447 = vmatpush1.msra.mxu0 0.0
  %7448 = vmatprep.subr.mxu0 0.0
  %7449 = vmatpush1.msra.mxu0 0.0
  %7450 = vmatprep.subr.mxu0 0.0
  %7451 = vmatpush1.msra.mxu0 0.0
  %7452 = vmatprep.subr.mxu0 0.0
  %7453 = vmatpush1.msra.mxu0 0.0
  %7454 = vmatprep.subr.mxu0 0.0
  %7455 = vmatpush1.msra.mxu0 0.0
  %7456 = vmatprep.subr.mxu0 0.0
  %7457 = vmatpush1.msra.mxu0 0.0
  %7458 = vmatprep.subr.mxu0 0.0
  %7459 = vmatpush1.msra.mxu0 0.0
  %7460 = vmatprep.subr.mxu0 0.0
  %7461 = vmatpush1.msra.mxu0 0.0
  %7462 = vmatprep.subr.mxu0 0.0
  %7463 = vmatpush1.msra.mxu0 0.0
  %7464 = vmatprep.subr.mxu0 0.0
  %7465 = vmatpush1.msra.mxu0 0.0
  %7466 = vmatprep.mubr.f32.mxu0 0.0
  %7467 = vmatmul.mubr.f32.gmra.mrb[0].mxu0 %v7397
  %v7468 = vpop.f32.mrb[0].mxu0
  %v7469 = vadd.f32 0.0, %v7468
  %v7470 = vpop.f32.mrb[0].mxu0
  %7471 = vmatprep.mubr.f32.mxu0 0.0
  %7472 = vmatmul.mubr.f32.gmra.mrb[0].mxu0 %v7400
  %v7473 = vpop.f32.mrb[0].mxu0
  %v7474 = vadd.f32 0.0, %v7473
  %v7475 = vpop.f32.mrb[0].mxu0
  %7476 = vdwg.mxu0
  %7481 = vrot.lane.b32.xlu0 %v7392, 96
  %v7482 = vpop.permute.xlu0 %7481
  %7483 = vrot.lane.b32.xlu0 %v7393, 96
  %v7484 = vpop.permute.xlu0 %7483
  %7485 = vrot.lane.b32.xlu0 %v7394, 96
  %v7486 = vpop.permute.xlu0 %7485
  %7487 = vrot.lane.b32.xlu0 %v7395, 96
  %v7488 = vpop.permute.xlu0 %7487
  %7493 = vmatprep.subr.mxu0 0.0
  %7494 = vmatpush1.msra.mxu0 %v7482
  %7495 = vmatprep.subr.mxu0 0.0
  %7496 = vmatpush1.msra.mxu0 %v7484
  %7497 = vmatprep.subr.mxu0 0.0
  %7498 = vmatpush1.msra.mxu0 %v7486
  %7499 = vmatprep.subr.mxu0 0.0
  %7500 = vmatpush1.msra.mxu0 %v7488
  %7501 = vmatprep.subr.mxu0 0.0
  %7502 = vmatpush1.msra.mxu0 0.0
  %7503 = vmatprep.subr.mxu0 0.0
  %7504 = vmatpush1.msra.mxu0 0.0
  %7505 = vmatprep.subr.mxu0 0.0
  %7506 = vmatpush1.msra.mxu0 0.0
  %7507 = vmatprep.subr.mxu0 0.0
  %7508 = vmatpush1.msra.mxu0 0.0
  %7509 = vmatprep.subr.mxu0 0.0
  %7510 = vmatpush1.msra.mxu0 0.0
  %7511 = vmatprep.subr.mxu0 0.0
  %7512 = vmatpush1.msra.mxu0 0.0
  %7513 = vmatprep.subr.mxu0 0.0
  %7514 = vmatpush1.msra.mxu0 0.0
  %7515 = vmatprep.subr.mxu0 0.0
  %7516 = vmatpush1.msra.mxu0 0.0
  %7517 = vmatprep.subr.mxu0 0.0
  %7518 = vmatpush1.msra.mxu0 0.0
  %7519 = vmatprep.subr.mxu0 0.0
  %7520 = vmatpush1.msra.mxu0 0.0
  %7521 = vmatprep.subr.mxu0 0.0
  %7522 = vmatpush1.msra.mxu0 0.0
  %7523 = vmatprep.subr.mxu0 0.0
  %7524 = vmatpush1.msra.mxu0 0.0
  %7525 = vmatprep.subr.mxu0 0.0
  %7526 = vmatpush1.msra.mxu0 0.0
  %7527 = vmatprep.subr.mxu0 0.0
  %7528 = vmatpush1.msra.mxu0 0.0
  %7529 = vmatprep.subr.mxu0 0.0
  %7530 = vmatpush1.msra.mxu0 0.0
  %7531 = vmatprep.subr.mxu0 0.0
  %7532 = vmatpush1.msra.mxu0 0.0
  %7533 = vmatprep.subr.mxu0 0.0
  %7534 = vmatpush1.msra.mxu0 0.0
  %7535 = vmatprep.subr.mxu0 0.0
  %7536 = vmatpush1.msra.mxu0 0.0
  %7537 = vmatprep.subr.mxu0 0.0
  %7538 = vmatpush1.msra.mxu0 0.0
  %7539 = vmatprep.subr.mxu0 0.0
  %7540 = vmatpush1.msra.mxu0 0.0
  %7541 = vmatprep.subr.mxu0 0.0
  %7542 = vmatpush1.msra.mxu0 0.0
  %7543 = vmatprep.subr.mxu0 0.0
  %7544 = vmatpush1.msra.mxu0 0.0
  %7545 = vmatprep.subr.mxu0 0.0
  %7546 = vmatpush1.msra.mxu0 0.0
  %7547 = vmatprep.subr.mxu0 0.0
  %7548 = vmatpush1.msra.mxu0 0.0
  %7549 = vmatprep.subr.mxu0 0.0
  %7550 = vmatpush1.msra.mxu0 0.0
  %7551 = vmatprep.subr.mxu0 0.0
  %7552 = vmatpush1.msra.mxu0 0.0
  %7553 = vmatprep.subr.mxu0 0.0
  %7554 = vmatpush1.msra.mxu0 0.0
  %7555 = vmatprep.subr.mxu0 0.0
  %7556 = vmatpush1.msra.mxu0 0.0
  %7557 = vmatprep.mubr.f32.mxu0 0.0
  %7558 = vmatmul.mubr.f32.gmra.mrb[0].mxu0 %v4592
  %v7559 = vpop.f32.mrb[0].mxu0
  %v7560 = vadd.f32 0.0, %v7559
  %v7561 = vpop.f32.mrb[0].mxu0
  %7562 = vmatprep.mubr.f32.mxu0 0.0
  %7563 = vmatmul.mubr.f32.gmra.mrb[0].mxu0 %v4595
  %v7564 = vpop.f32.mrb[0].mxu0
  %v7565 = vadd.f32 0.0, %v7564
  %v7566 = vpop.f32.mrb[0].mxu0
  %7567 = vdwg.mxu0
  %v7569 = vsel %vm234, %v7469, 0
  %v7572 = vsel %vm234, %v7474, 0
  %v7575 = vsel %vm234, %v7560, 0
  %v7578 = vsel %vm234, %v7565, 0
  %7580 = vmatprep.subr.mxu0 0.0
  %7581 = vmatpush1.xpose.msra.mxu0 %v7575
  %7582 = vmatprep.subr.mxu0 0.0
  %7583 = vmatpush1.xpose.msra.mxu0 %v7578
  %7584 = vmatprep.subr.mxu0 0.0
  %7585 = vmatpush1.xpose.msra.mxu0 0.0
  %7586 = vmatprep.subr.mxu0 0.0
  %7587 = vmatpush1.xpose.msra.mxu0 0.0
  %7588 = vmatprep.subr.mxu0 0.0
  %7589 = vmatpush1.xpose.msra.mxu0 0.0
  %7590 = vmatprep.subr.mxu0 0.0
  %7591 = vmatpush1.xpose.msra.mxu0 0.0
  %7592 = vmatprep.subr.mxu0 0.0
  %7593 = vmatpush1.xpose.msra.mxu0 0.0
  %7594 = vmatprep.subr.mxu0 0.0
  %7595 = vmatpush1.xpose.msra.mxu0 0.0
  %7596 = vmatprep.subr.mxu0 0.0
  %7597 = vmatpush1.xpose.msra.mxu0 0.0
  %7598 = vmatprep.subr.mxu0 0.0
  %7599 = vmatpush1.xpose.msra.mxu0 0.0
  %7600 = vmatprep.subr.mxu0 0.0
  %7601 = vmatpush1.xpose.msra.mxu0 0.0
  %7602 = vmatprep.subr.mxu0 0.0
  %7603 = vmatpush1.xpose.msra.mxu0 0.0
  %7604 = vmatprep.subr.mxu0 0.0
  %7605 = vmatpush1.xpose.msra.mxu0 0.0
  %7606 = vmatprep.subr.mxu0 0.0
  %7607 = vmatpush1.xpose.msra.mxu0 0.0
  %7608 = vmatprep.subr.mxu0 0.0
  %7609 = vmatpush1.xpose.msra.mxu0 0.0
  %7610 = vmatprep.subr.mxu0 0.0
  %7611 = vmatpush1.xpose.msra.mxu0 0.0
  %7612 = vmatprep.subr.mxu0 0.0
  %7613 = vmatpush1.xpose.msra.mxu0 0.0
  %7614 = vmatprep.subr.mxu0 0.0
  %7615 = vmatpush1.xpose.msra.mxu0 0.0
  %7616 = vmatprep.subr.mxu0 0.0
  %7617 = vmatpush1.xpose.msra.mxu0 0.0
  %7618 = vmatprep.subr.mxu0 0.0
  %7619 = vmatpush1.xpose.msra.mxu0 0.0
  %7620 = vmatprep.subr.mxu0 0.0
  %7621 = vmatpush1.xpose.msra.mxu0 0.0
  %7622 = vmatprep.subr.mxu0 0.0
  %7623 = vmatpush1.xpose.msra.mxu0 0.0
  %7624 = vmatprep.subr.mxu0 0.0
  %7625 = vmatpush1.xpose.msra.mxu0 0.0
  %7626 = vmatprep.subr.mxu0 0.0
  %7627 = vmatpush1.xpose.msra.mxu0 0.0
  %7628 = vmatprep.subr.mxu0 0.0
  %7629 = vmatpush1.xpose.msra.mxu0 0.0
  %7630 = vmatprep.subr.mxu0 0.0
  %7631 = vmatpush1.xpose.msra.mxu0 0.0
  %7632 = vmatprep.subr.mxu0 0.0
  %7633 = vmatpush1.xpose.msra.mxu0 0.0
  %7634 = vmatprep.subr.mxu0 0.0
  %7635 = vmatpush1.xpose.msra.mxu0 0.0
  %7636 = vmatprep.subr.mxu0 0.0
  %7637 = vmatpush1.xpose.msra.mxu0 0.0
  %7638 = vmatprep.subr.mxu0 0.0
  %7639 = vmatpush1.xpose.msra.mxu0 0.0
  %7640 = vmatprep.subr.mxu0 0.0
  %7641 = vmatpush1.xpose.msra.mxu0 0.0
  %7642 = vmatprep.subr.mxu0 0.0
  %7643 = vmatpush1.xpose.msra.mxu0 0.0
  %7644 = vmatprep.mubr.f32.mxu0 0.0
  %7645 = vmatmul.mubr.f32.gmra.mrb[0].mxu0 %v7569
  %v7646 = vpop.f32.mrb[0].mxu0
  %v7647 = vadd.f32 %v3205, %v7646
  %v7648 = vpop.f32.mrb[0].mxu0
  %7649 = vmatprep.mubr.f32.mxu0 0.0
  %7650 = vmatmul.mubr.f32.gmra.mrb[0].mxu0 %v7572
  %v7651 = vpop.f32.mrb[0].mxu0
  %v7652 = vadd.f32 %v3206, %v7651
  %v7653 = vpop.f32.mrb[0].mxu0
  %7654 = vdwg.mxu0
  %v7655 = vsel %vm318, %v7647, -inf
  %7656 = vmax.xlane.f32.xlu0 %v7655
  %v7657 = vpop.xlane.xlu0 %7656
  %v7658 = vsel %vm318, %v7652, -inf
  %7659 = vmax.xlane.f32.xlu0 %v7658
  %v7660 = vpop.xlane.xlu0 %7659
  %v7661 = vsub.f32 %v7647, %v7657
  %v7662 = vsub.f32 %v7652, %v7660
  %v7663 = vmul.f32 %v7661, 1.442695
  %v7664 = vpow.pop %v7663
  %v7665 = vmul.f32 %v7662, 1.442695
  %v7666 = vpow.pop %v7665
  %v7667 = vsel %vm318, %v7664, 0.0
  %7668 = vadd.xlane.f32.xlu0 %v7667
  %v7669 = vpop.xlane.xlu0 %7668
  %v7670 = vsel %vm318, %v7666, 0.0
  %7671 = vadd.xlane.f32.xlu0 %v7670
  %v7672 = vpop.xlane.xlu0 %7671
  %v7673 = vrcp.pop %v7669
  %v7674 = vmul.f32 %v7664, %v7673
  %v7675 = vrcp.pop %v7672
  %v7676 = vmul.f32 %v7666, %v7675
  %s7677 = scalar_lea.vmem %s13, 64
  %7678 = vst.msk [vmem:[%s7677] sm:$0xff] %vm318, %v7674
  %7679 = vst.msk [vmem:[%s7677 + $0x8] sm:$0xff] %vm318, %v7676
  %7680 = vrot.lane.b32.xlu0 %v7560, 96
  %v7681 = vpop.permute.xlu0 %7680
  %7682 = vrot.lane.b32.xlu0 %v7565, 96
  %v7683 = vpop.permute.xlu0 %7682
  %v7687 = vsel %vm318, %v7674, 0
  %v7690 = vsel %vm318, %v7676, 0
  %7692 = vmatprep.subr.mxu0 0.0
  %7693 = vmatpush1.msra.mxu0 %v7681
  %7694 = vmatprep.subr.mxu0 0.0
  %7695 = vmatpush1.msra.mxu0 %v7683
  %7696 = vmatprep.subr.mxu0 0.0
  %7697 = vmatpush1.msra.mxu0 0.0
  %7698 = vmatprep.subr.mxu0 0.0
  %7699 = vmatpush1.msra.mxu0 0.0
  %7700 = vmatprep.subr.mxu0 0.0
  %7701 = vmatpush1.msra.mxu0 0.0
  %7702 = vmatprep.subr.mxu0 0.0
  %7703 = vmatpush1.msra.mxu0 0.0
  %7704 = vmatprep.subr.mxu0 0.0
  %7705 = vmatpush1.msra.mxu0 0.0
  %7706 = vmatprep.subr.mxu0 0.0
  %7707 = vmatpush1.msra.mxu0 0.0
  %7708 = vmatprep.subr.mxu0 0.0
  %7709 = vmatpush1.msra.mxu0 0.0
  %7710 = vmatprep.subr.mxu0 0.0
  %7711 = vmatpush1.msra.mxu0 0.0
  %7712 = vmatprep.subr.mxu0 0.0
  %7713 = vmatpush1.msra.mxu0 0.0
  %7714 = vmatprep.subr.mxu0 0.0
  %7715 = vmatpush1.msra.mxu0 0.0
  %7716 = vmatprep.subr.mxu0 0.0
  %7717 = vmatpush1.msra.mxu0 0.0
  %7718 = vmatprep.subr.mxu0 0.0
  %7719 = vmatpush1.msra.mxu0 0.0
  %7720 = vmatprep.subr.mxu0 0.0
  %7721 = vmatpush1.msra.mxu0 0.0
  %7722 = vmatprep.subr.mxu0 0.0
  %7723 = vmatpush1.msra.mxu0 0.0
  %7724 = vmatprep.subr.mxu0 0.0
  %7725 = vmatpush1.msra.mxu0 0.0
  %7726 = vmatprep.subr.mxu0 0.0
  %7727 = vmatpush1.msra.mxu0 0.0
  %7728 = vmatprep.subr.mxu0 0.0
  %7729 = vmatpush1.msra.mxu0 0.0
  %7730 = vmatprep.subr.mxu0 0.0
  %7731 = vmatpush1.msra.mxu0 0.0
  %7732 = vmatprep.subr.mxu0 0.0
  %7733 = vmatpush1.msra.mxu0 0.0
  %7734 = vmatprep.subr.mxu0 0.0
  %7735 = vmatpush1.msra.mxu0 0.0
  %7736 = vmatprep.subr.mxu0 0.0
  %7737 = vmatpush1.msra.mxu0 0.0
  %7738 = vmatprep.subr.mxu0 0.0
  %7739 = vmatpush1.msra.mxu0 0.0
  %7740 = vmatprep.subr.mxu0 0.0
  %7741 = vmatpush1.msra.mxu0 0.0
  %7742 = vmatprep.subr.mxu0 0.0
  %7743 = vmatpush1.msra.mxu0 0.0
  %7744 = vmatprep.subr.mxu0 0.0
  %7745 = vmatpush1.msra.mxu0 0.0
  %7746 = vmatprep.subr.mxu0 0.0
  %7747 = vmatpush1.msra.mxu0 0.0
  %7748 = vmatprep.subr.mxu0 0.0
  %7749 = vmatpush1.msra.mxu0 0.0
  %7750 = vmatprep.subr.mxu0 0.0
  %7751 = vmatpush1.msra.mxu0 0.0
  %7752 = vmatprep.subr.mxu0 0.0
  %7753 = vmatpush1.msra.mxu0 0.0
  %7754 = vmatprep.subr.mxu0 0.0
  %7755 = vmatpush1.msra.mxu0 0.0
  %7756 = vmatprep.mubr.f32.mxu0 0.0
  %7757 = vmatmul.mubr.f32.gmra.mrb[0].mxu0 %v7687
  %v7758 = vpop.f32.mrb[0].mxu0
  %v7759 = vadd.f32 0.0, %v7758
  %v7760 = vpop.f32.mrb[0].mxu0
  %7761 = vmatprep.mubr.f32.mxu0 0.0
  %7762 = vmatmul.mubr.f32.gmra.mrb[0].mxu0 %v7690
  %v7763 = vpop.f32.mrb[0].mxu0
  %v7764 = vadd.f32 0.0, %v7763
  %v7765 = vpop.f32.mrb[0].mxu0
  %7766 = vdwg.mxu0
  %7767 = vrot.lane.b32.xlu0 %v7469, 120
  %v7768 = vpop.permute.xlu0 %7767
  %7769 = vrot.lane.b32.xlu0 %v7474, 120
  %v7770 = vpop.permute.xlu0 %7769
  %7771 = vrot.lane.b32.xlu0 %v7560, 120
  %v7772 = vpop.permute.xlu0 %7771
  %7773 = vrot.lane.b32.xlu0 %v7565, 120
  %v7774 = vpop.permute.xlu0 %7773
  %v7775 = vsel %vm234, %v7768, 0
  %v7777 = vsel %vm234, %v7770, 0
  %v7779 = vsel %vm234, %v7772, 0
  %v7781 = vsel %vm234, %v7774, 0
  %7783 = vmatprep.subr.mxu0 0.0
  %7784 = vmatpush1.xpose.msra.mxu0 %v7779
  %7785 = vmatprep.subr.mxu0 0.0
  %7786 = vmatpush1.xpose.msra.mxu0 %v7781
  %7787 = vmatprep.subr.mxu0 0.0
  %7788 = vmatpush1.xpose.msra.mxu0 0.0
  %7789 = vmatprep.subr.mxu0 0.0
  %7790 = vmatpush1.xpose.msra.mxu0 0.0
  %7791 = vmatprep.subr.mxu0 0.0
  %7792 = vmatpush1.xpose.msra.mxu0 0.0
  %7793 = vmatprep.subr.mxu0 0.0
  %7794 = vmatpush1.xpose.msra.mxu0 0.0
  %7795 = vmatprep.subr.mxu0 0.0
  %7796 = vmatpush1.xpose.msra.mxu0 0.0
  %7797 = vmatprep.subr.mxu0 0.0
  %7798 = vmatpush1.xpose.msra.mxu0 0.0
  %7799 = vmatprep.subr.mxu0 0.0
  %7800 = vmatpush1.xpose.msra.mxu0 0.0
  %7801 = vmatprep.subr.mxu0 0.0
  %7802 = vmatpush1.xpose.msra.mxu0 0.0
  %7803 = vmatprep.subr.mxu0 0.0
  %7804 = vmatpush1.xpose.msra.mxu0 0.0
  %7805 = vmatprep.subr.mxu0 0.0
  %7806 = vmatpush1.xpose.msra.mxu0 0.0
  %7807 = vmatprep.subr.mxu0 0.0
  %7808 = vmatpush1.xpose.msra.mxu0 0.0
  %7809 = vmatprep.subr.mxu0 0.0
  %7810 = vmatpush1.xpose.msra.mxu0 0.0
  %7811 = vmatprep.subr.mxu0 0.0
  %7812 = vmatpush1.xpose.msra.mxu0 0.0
  %7813 = vmatprep.subr.mxu0 0.0
  %7814 = vmatpush1.xpose.msra.mxu0 0.0
  %7815 = vmatprep.subr.mxu0 0.0
  %7816 = vmatpush1.xpose.msra.mxu0 0.0
  %7817 = vmatprep.subr.mxu0 0.0
  %7818 = vmatpush1.xpose.msra.mxu0 0.0
  %7819 = vmatprep.subr.mxu0 0.0
  %7820 = vmatpush1.xpose.msra.mxu0 0.0
  %7821 = vmatprep.subr.mxu0 0.0
  %7822 = vmatpush1.xpose.msra.mxu0 0.0
  %7823 = vmatprep.subr.mxu0 0.0
  %7824 = vmatpush1.xpose.msra.mxu0 0.0
  %7825 = vmatprep.subr.mxu0 0.0
  %7826 = vmatpush1.xpose.msra.mxu0 0.0
  %7827 = vmatprep.subr.mxu0 0.0
  %7828 = vmatpush1.xpose.msra.mxu0 0.0
  %7829 = vmatprep.subr.mxu0 0.0
  %7830 = vmatpush1.xpose.msra.mxu0 0.0
  %7831 = vmatprep.subr.mxu0 0.0
  %7832 = vmatpush1.xpose.msra.mxu0 0.0
  %7833 = vmatprep.subr.mxu0 0.0
  %7834 = vmatpush1.xpose.msra.mxu0 0.0
  %7835 = vmatprep.subr.mxu0 0.0
  %7836 = vmatpush1.xpose.msra.mxu0 0.0
  %7837 = vmatprep.subr.mxu0 0.0
  %7838 = vmatpush1.xpose.msra.mxu0 0.0
  %7839 = vmatprep.subr.mxu0 0.0
  %7840 = vmatpush1.xpose.msra.mxu0 0.0
  %7841 = vmatprep.subr.mxu0 0.0
  %7842 = vmatpush1.xpose.msra.mxu0 0.0
  %7843 = vmatprep.subr.mxu0 0.0
  %7844 = vmatpush1.xpose.msra.mxu0 0.0
  %7845 = vmatprep.subr.mxu0 0.0
  %7846 = vmatpush1.xpose.msra.mxu0 0.0
  %7847 = vmatprep.mubr.f32.mxu0 0.0
  %7848 = vmatmul.mubr.f32.gmra.mrb[0].mxu0 %v7775
  %v7849 = vpop.f32.mrb[0].mxu0
  %v7850 = vadd.f32 %v3205, %v7849
  %v7851 = vpop.f32.mrb[0].mxu0
  %7852 = vmatprep.mubr.f32.mxu0 0.0
  %7853 = vmatmul.mubr.f32.gmra.mrb[0].mxu0 %v7777
  %v7854 = vpop.f32.mrb[0].mxu0
  %v7855 = vadd.f32 %v3206, %v7854
  %v7856 = vpop.f32.mrb[0].mxu0
  %7857 = vdwg.mxu0
  %v7858 = vsel %vm318, %v7850, -inf
  %7859 = vmax.xlane.f32.xlu0 %v7858
  %v7860 = vpop.xlane.xlu0 %7859
  %v7861 = vsel %vm318, %v7855, -inf
  %7862 = vmax.xlane.f32.xlu0 %v7861
  %v7863 = vpop.xlane.xlu0 %7862
  %v7864 = vsub.f32 %v7850, %v7860
  %v7865 = vsub.f32 %v7855, %v7863
  %v7866 = vmul.f32 %v7864, 1.442695
  %v7867 = vpow.pop %v7866
  %v7868 = vmul.f32 %v7865, 1.442695
  %v7869 = vpow.pop %v7868
  %v7870 = vsel %vm318, %v7867, 0.0
  %7871 = vadd.xlane.f32.xlu0 %v7870
  %v7872 = vpop.xlane.xlu0 %7871
  %v7873 = vsel %vm318, %v7869, 0.0
  %7874 = vadd.xlane.f32.xlu0 %v7873
  %v7875 = vpop.xlane.xlu0 %7874
  %v7876 = vrcp.pop %v7872
  %v7877 = vmul.f32 %v7867, %v7876
  %v7878 = vrcp.pop %v7875
  %v7879 = vmul.f32 %v7869, %v7878
  %s7880 = scalar_lea.vmem %s13, 80
  %7881 = vst.msk [vmem:[%s7880] sm:$0xff] %vm318, %v7877
  %7882 = vst.msk [vmem:[%s7880 + $0x8] sm:$0xff] %vm318, %v7879
  %7883 = vrot.lane.b32.xlu0 %v7560, 88
  %v7884 = vpop.permute.xlu0 %7883
  %7885 = vrot.lane.b32.xlu0 %v7565, 88
  %v7886 = vpop.permute.xlu0 %7885
  %v7890 = vsel %vm318, %v7877, 0
  %v7893 = vsel %vm318, %v7879, 0
  %7895 = vmatprep.subr.mxu0 0.0
  %7896 = vmatpush1.msra.mxu0 %v7884
  %7897 = vmatprep.subr.mxu0 0.0
  %7898 = vmatpush1.msra.mxu0 %v7886
  %7899 = vmatprep.subr.mxu0 0.0
  %7900 = vmatpush1.msra.mxu0 0.0
  %7901 = vmatprep.subr.mxu0 0.0
  %7902 = vmatpush1.msra.mxu0 0.0
  %7903 = vmatprep.subr.mxu0 0.0
  %7904 = vmatpush1.msra.mxu0 0.0
  %7905 = vmatprep.subr.mxu0 0.0
  %7906 = vmatpush1.msra.mxu0 0.0
  %7907 = vmatprep.subr.mxu0 0.0
  %7908 = vmatpush1.msra.mxu0 0.0
  %7909 = vmatprep.subr.mxu0 0.0
  %7910 = vmatpush1.msra.mxu0 0.0
  %7911 = vmatprep.subr.mxu0 0.0
  %7912 = vmatpush1.msra.mxu0 0.0
  %7913 = vmatprep.subr.mxu0 0.0
  %7914 = vmatpush1.msra.mxu0 0.0
  %7915 = vmatprep.subr.mxu0 0.0
  %7916 = vmatpush1.msra.mxu0 0.0
  %7917 = vmatprep.subr.mxu0 0.0
  %7918 = vmatpush1.msra.mxu0 0.0
  %7919 = vmatprep.subr.mxu0 0.0
  %7920 = vmatpush1.msra.mxu0 0.0
  %7921 = vmatprep.subr.mxu0 0.0
  %7922 = vmatpush1.msra.mxu0 0.0
  %7923 = vmatprep.subr.mxu0 0.0
  %7924 = vmatpush1.msra.mxu0 0.0
  %7925 = vmatprep.subr.mxu0 0.0
  %7926 = vmatpush1.msra.mxu0 0.0
  %7927 = vmatprep.subr.mxu0 0.0
  %7928 = vmatpush1.msra.mxu0 0.0
  %7929 = vmatprep.subr.mxu0 0.0
  %7930 = vmatpush1.msra.mxu0 0.0
  %7931 = vmatprep.subr.mxu0 0.0
  %7932 = vmatpush1.msra.mxu0 0.0
  %7933 = vmatprep.subr.mxu0 0.0
  %7934 = vmatpush1.msra.mxu0 0.0
  %7935 = vmatprep.subr.mxu0 0.0
  %7936 = vmatpush1.msra.mxu0 0.0
  %7937 = vmatprep.subr.mxu0 0.0
  %7938 = vmatpush1.msra.mxu0 0.0
  %7939 = vmatprep.subr.mxu0 0.0
  %7940 = vmatpush1.msra.mxu0 0.0
  %7941 = vmatprep.subr.mxu0 0.0
  %7942 = vmatpush1.msra.mxu0 0.0
  %7943 = vmatprep.subr.mxu0 0.0
  %7944 = vmatpush1.msra.mxu0 0.0
  %7945 = vmatprep.subr.mxu0 0.0
  %7946 = vmatpush1.msra.mxu0 0.0
  %7947 = vmatprep.subr.mxu0 0.0
  %7948 = vmatpush1.msra.mxu0 0.0
  %7949 = vmatprep.subr.mxu0 0.0
  %7950 = vmatpush1.msra.mxu0 0.0
  %7951 = vmatprep.subr.mxu0 0.0
  %7952 = vmatpush1.msra.mxu0 0.0
  %7953 = vmatprep.subr.mxu0 0.0
  %7954 = vmatpush1.msra.mxu0 0.0
  %7955 = vmatprep.subr.mxu0 0.0
  %7956 = vmatpush1.msra.mxu0 0.0
  %7957 = vmatprep.subr.mxu0 0.0
  %7958 = vmatpush1.msra.mxu0 0.0
  %7959 = vmatprep.mubr.f32.mxu0 0.0
  %7960 = vmatmul.mubr.f32.gmra.mrb[0].mxu0 %v7890
  %v7961 = vpop.f32.mrb[0].mxu0
  %v7962 = vadd.f32 0.0, %v7961
  %v7963 = vpop.f32.mrb[0].mxu0
  %7964 = vmatprep.mubr.f32.mxu0 0.0
  %7965 = vmatmul.mubr.f32.gmra.mrb[0].mxu0 %v7893
  %v7966 = vpop.f32.mrb[0].mxu0
  %v7967 = vadd.f32 0.0, %v7966
  %v7968 = vpop.f32.mrb[0].mxu0
  %7969 = vdwg.mxu0
  %7970 = vrot.lane.b32.xlu0 %v7393, 32
  %v7971 = vpop.permute.xlu0 %7970
  %v7974 = vsel %vm234, %v7962, 0
  %v7977 = vsel %vm234, %v7967, 0
  %7979 = vmatprep.subr.mxu0 0.0
  %7980 = vmatpush1.msra.mxu0 %v7971
  %7981 = vmatprep.subr.mxu0 0.0
  %7982 = vmatpush1.msra.mxu0 0.0
  %7983 = vmatprep.subr.mxu0 0.0
  %7984 = vmatpush1.msra.mxu0 0.0
  %7985 = vmatprep.subr.mxu0 0.0
  %7986 = vmatpush1.msra.mxu0 0.0
  %7987 = vmatprep.subr.mxu0 0.0
  %7988 = vmatpush1.msra.mxu0 0.0
  %7989 = vmatprep.subr.mxu0 0.0
  %7990 = vmatpush1.msra.mxu0 0.0
  %7991 = vmatprep.subr.mxu0 0.0
  %7992 = vmatpush1.msra.mxu0 0.0
  %7993 = vmatprep.subr.mxu0 0.0
  %7994 = vmatpush1.msra.mxu0 0.0
  %7995 = vmatprep.subr.mxu0 0.0
  %7996 = vmatpush1.msra.mxu0 0.0
  %7997 = vmatprep.subr.mxu0 0.0
  %7998 = vmatpush1.msra.mxu0 0.0
  %7999 = vmatprep.subr.mxu0 0.0
  %8000 = vmatpush1.msra.mxu0 0.0
  %8001 = vmatprep.subr.mxu0 0.0
  %8002 = vmatpush1.msra.mxu0 0.0
  %8003 = vmatprep.subr.mxu0 0.0
  %8004 = vmatpush1.msra.mxu0 0.0
  %8005 = vmatprep.subr.mxu0 0.0
  %8006 = vmatpush1.msra.mxu0 0.0
  %8007 = vmatprep.subr.mxu0 0.0
  %8008 = vmatpush1.msra.mxu0 0.0
  %8009 = vmatprep.subr.mxu0 0.0
  %8010 = vmatpush1.msra.mxu0 0.0
  %8011 = vmatprep.subr.mxu0 0.0
  %8012 = vmatpush1.msra.mxu0 0.0
  %8013 = vmatprep.subr.mxu0 0.0
  %8014 = vmatpush1.msra.mxu0 0.0
  %8015 = vmatprep.subr.mxu0 0.0
  %8016 = vmatpush1.msra.mxu0 0.0
  %8017 = vmatprep.subr.mxu0 0.0
  %8018 = vmatpush1.msra.mxu0 0.0
  %8019 = vmatprep.subr.mxu0 0.0
  %8020 = vmatpush1.msra.mxu0 0.0
  %8021 = vmatprep.subr.mxu0 0.0
  %8022 = vmatpush1.msra.mxu0 0.0
  %8023 = vmatprep.subr.mxu0 0.0
  %8024 = vmatpush1.msra.mxu0 0.0
  %8025 = vmatprep.subr.mxu0 0.0
  %8026 = vmatpush1.msra.mxu0 0.0
  %8027 = vmatprep.subr.mxu0 0.0
  %8028 = vmatpush1.msra.mxu0 0.0
  %8029 = vmatprep.subr.mxu0 0.0
  %8030 = vmatpush1.msra.mxu0 0.0
  %8031 = vmatprep.subr.mxu0 0.0
  %8032 = vmatpush1.msra.mxu0 0.0
  %8033 = vmatprep.subr.mxu0 0.0
  %8034 = vmatpush1.msra.mxu0 0.0
  %8035 = vmatprep.subr.mxu0 0.0
  %8036 = vmatpush1.msra.mxu0 0.0
  %8037 = vmatprep.subr.mxu0 0.0
  %8038 = vmatpush1.msra.mxu0 0.0
  %8039 = vmatprep.subr.mxu0 0.0
  %8040 = vmatpush1.msra.mxu0 0.0
  %8041 = vmatprep.subr.mxu0 0.0
  %8042 = vmatpush1.msra.mxu0 0.0
  %8043 = vmatprep.mubr.f32.mxu0 0.0
  %8044 = vmatmul.mubr.f32.gmra.mrb[0].mxu0 %v7974
  %v8045 = vpop.f32.mrb[0].mxu0
  %v8046 = vadd.f32 0.0, %v8045
  %v8047 = vpop.f32.mrb[0].mxu0
  %8048 = vmatprep.mubr.f32.mxu0 0.0
  %8049 = vmatmul.mubr.f32.gmra.mrb[0].mxu0 %v7977
  %v8050 = vpop.f32.mrb[0].mxu0
  %v8051 = vadd.f32 0.0, %v8050
  %v8052 = vpop.f32.mrb[0].mxu0
  %8053 = vdwg.mxu0
  %8054 = vrot.lane.b32.xlu0 %v7392, 32
  %v8055 = vpop.permute.xlu0 %8054
  %v8058 = vsel %vm234, %v7759, 0
  %v8061 = vsel %vm234, %v7764, 0
  %8063 = vmatprep.subr.mxu0 0.0
  %8064 = vmatpush1.msra.mxu0 %v8055
  %8065 = vmatprep.subr.mxu0 0.0
  %8066 = vmatpush1.msra.mxu0 0.0
  %8067 = vmatprep.subr.mxu0 0.0
  %8068 = vmatpush1.msra.mxu0 0.0
  %8069 = vmatprep.subr.mxu0 0.0
  %8070 = vmatpush1.msra.mxu0 0.0
  %8071 = vmatprep.subr.mxu0 0.0
  %8072 = vmatpush1.msra.mxu0 0.0
  %8073 = vmatprep.subr.mxu0 0.0
  %8074 = vmatpush1.msra.mxu0 0.0
  %8075 = vmatprep.subr.mxu0 0.0
  %8076 = vmatpush1.msra.mxu0 0.0
  %8077 = vmatprep.subr.mxu0 0.0
  %8078 = vmatpush1.msra.mxu0 0.0
  %8079 = vmatprep.subr.mxu0 0.0
  %8080 = vmatpush1.msra.mxu0 0.0
  %8081 = vmatprep.subr.mxu0 0.0
  %8082 = vmatpush1.msra.mxu0 0.0
  %8083 = vmatprep.subr.mxu0 0.0
  %8084 = vmatpush1.msra.mxu0 0.0
  %8085 = vmatprep.subr.mxu0 0.0
  %8086 = vmatpush1.msra.mxu0 0.0
  %8087 = vmatprep.subr.mxu0 0.0
  %8088 = vmatpush1.msra.mxu0 0.0
  %8089 = vmatprep.subr.mxu0 0.0
  %8090 = vmatpush1.msra.mxu0 0.0
  %8091 = vmatprep.subr.mxu0 0.0
  %8092 = vmatpush1.msra.mxu0 0.0
  %8093 = vmatprep.subr.mxu0 0.0
  %8094 = vmatpush1.msra.mxu0 0.0
  %8095 = vmatprep.subr.mxu0 0.0
  %8096 = vmatpush1.msra.mxu0 0.0
  %8097 = vmatprep.subr.mxu0 0.0
  %8098 = vmatpush1.msra.mxu0 0.0
  %8099 = vmatprep.subr.mxu0 0.0
  %8100 = vmatpush1.msra.mxu0 0.0
  %8101 = vmatprep.subr.mxu0 0.0
  %8102 = vmatpush1.msra.mxu0 0.0
  %8103 = vmatprep.subr.mxu0 0.0
  %8104 = vmatpush1.msra.mxu0 0.0
  %8105 = vmatprep.subr.mxu0 0.0
  %8106 = vmatpush1.msra.mxu0 0.0
  %8107 = vmatprep.subr.mxu0 0.0
  %8108 = vmatpush1.msra.mxu0 0.0
  %8109 = vmatprep.subr.mxu0 0.0
  %8110 = vmatpush1.msra.mxu0 0.0
  %8111 = vmatprep.subr.mxu0 0.0
  %8112 = vmatpush1.msra.mxu0 0.0
  %8113 = vmatprep.subr.mxu0 0.0
  %8114 = vmatpush1.msra.mxu0 0.0
  %8115 = vmatprep.subr.mxu0 0.0
  %8116 = vmatpush1.msra.mxu0 0.0
  %8117 = vmatprep.subr.mxu0 0.0
  %8118 = vmatpush1.msra.mxu0 0.0
  %8119 = vmatprep.subr.mxu0 0.0
  %8120 = vmatpush1.msra.mxu0 0.0
  %8121 = vmatprep.subr.mxu0 0.0
  %8122 = vmatpush1.msra.mxu0 0.0
  %8123 = vmatprep.subr.mxu0 0.0
  %8124 = vmatpush1.msra.mxu0 0.0
  %8125 = vmatprep.subr.mxu0 0.0
  %8126 = vmatpush1.msra.mxu0 0.0
  %8127 = vmatprep.mubr.f32.mxu0 0.0
  %8128 = vmatmul.mubr.f32.gmra.mrb[0].mxu0 %v8058
  %v8129 = vpop.f32.mrb[0].mxu0
  %v8130 = vadd.f32 %v8046, %v8129
  %v8131 = vpop.f32.mrb[0].mxu0
  %8132 = vmatprep.mubr.f32.mxu0 0.0
  %8133 = vmatmul.mubr.f32.gmra.mrb[0].mxu0 %v8061
  %v8134 = vpop.f32.mrb[0].mxu0
  %v8135 = vadd.f32 %v8051, %v8134
  %v8136 = vpop.f32.mrb[0].mxu0
  %8137 = vdwg.mxu0
  %8138 = vrot.lane.b32.xlu0 %v7469, 112
  %v8139 = vpop.permute.xlu0 %8138
  %8140 = vrot.lane.b32.xlu0 %v7474, 112
  %v8141 = vpop.permute.xlu0 %8140
  %8142 = vrot.lane.b32.xlu0 %v7560, 112
  %v8143 = vpop.permute.xlu0 %8142
  %8144 = vrot.lane.b32.xlu0 %v7565, 112
  %v8145 = vpop.permute.xlu0 %8144
  %v8146 = vsel %vm234, %v8139, 0
  %v8148 = vsel %vm234, %v8141, 0
  %v8150 = vsel %vm234, %v8143, 0
  %v8152 = vsel %vm234, %v8145, 0
  %8154 = vmatprep.subr.mxu0 0.0
  %8155 = vmatpush1.xpose.msra.mxu0 %v8150
  %8156 = vmatprep.subr.mxu0 0.0
  %8157 = vmatpush1.xpose.msra.mxu0 %v8152
  %8158 = vmatprep.subr.mxu0 0.0
  %8159 = vmatpush1.xpose.msra.mxu0 0.0
  %8160 = vmatprep.subr.mxu0 0.0
  %8161 = vmatpush1.xpose.msra.mxu0 0.0
  %8162 = vmatprep.subr.mxu0 0.0
  %8163 = vmatpush1.xpose.msra.mxu0 0.0
  %8164 = vmatprep.subr.mxu0 0.0
  %8165 = vmatpush1.xpose.msra.mxu0 0.0
  %8166 = vmatprep.subr.mxu0 0.0
  %8167 = vmatpush1.xpose.msra.mxu0 0.0
  %8168 = vmatprep.subr.mxu0 0.0
  %8169 = vmatpush1.xpose.msra.mxu0 0.0
  %8170 = vmatprep.subr.mxu0 0.0
  %8171 = vmatpush1.xpose.msra.mxu0 0.0
  %8172 = vmatprep.subr.mxu0 0.0
  %8173 = vmatpush1.xpose.msra.mxu0 0.0
  %8174 = vmatprep.subr.mxu0 0.0
  %8175 = vmatpush1.xpose.msra.mxu0 0.0
  %8176 = vmatprep.subr.mxu0 0.0
  %8177 = vmatpush1.xpose.msra.mxu0 0.0
  %8178 = vmatprep.subr.mxu0 0.0
  %8179 = vmatpush1.xpose.msra.mxu0 0.0
  %8180 = vmatprep.subr.mxu0 0.0
  %8181 = vmatpush1.xpose.msra.mxu0 0.0
  %8182 = vmatprep.subr.mxu0 0.0
  %8183 = vmatpush1.xpose.msra.mxu0 0.0
  %8184 = vmatprep.subr.mxu0 0.0
  %8185 = vmatpush1.xpose.msra.mxu0 0.0
  %8186 = vmatprep.subr.mxu0 0.0
  %8187 = vmatpush1.xpose.msra.mxu0 0.0
  %8188 = vmatprep.subr.mxu0 0.0
  %8189 = vmatpush1.xpose.msra.mxu0 0.0
  %8190 = vmatprep.subr.mxu0 0.0
  %8191 = vmatpush1.xpose.msra.mxu0 0.0
  %8192 = vmatprep.subr.mxu0 0.0
  %8193 = vmatpush1.xpose.msra.mxu0 0.0
  %8194 = vmatprep.subr.mxu0 0.0
  %8195 = vmatpush1.xpose.msra.mxu0 0.0
  %8196 = vmatprep.subr.mxu0 0.0
  %8197 = vmatpush1.xpose.msra.mxu0 0.0
  %8198 = vmatprep.subr.mxu0 0.0
  %8199 = vmatpush1.xpose.msra.mxu0 0.0
  %8200 = vmatprep.subr.mxu0 0.0
  %8201 = vmatpush1.xpose.msra.mxu0 0.0
  %8202 = vmatprep.subr.mxu0 0.0
  %8203 = vmatpush1.xpose.msra.mxu0 0.0
  %8204 = vmatprep.subr.mxu0 0.0
  %8205 = vmatpush1.xpose.msra.mxu0 0.0
  %8206 = vmatprep.subr.mxu0 0.0
  %8207 = vmatpush1.xpose.msra.mxu0 0.0
  %8208 = vmatprep.subr.mxu0 0.0
  %8209 = vmatpush1.xpose.msra.mxu0 0.0
  %8210 = vmatprep.subr.mxu0 0.0
  %8211 = vmatpush1.xpose.msra.mxu0 0.0
  %8212 = vmatprep.subr.mxu0 0.0
  %8213 = vmatpush1.xpose.msra.mxu0 0.0
  %8214 = vmatprep.subr.mxu0 0.0
  %8215 = vmatpush1.xpose.msra.mxu0 0.0
  %8216 = vmatprep.subr.mxu0 0.0
  %8217 = vmatpush1.xpose.msra.mxu0 0.0
  %8218 = vmatprep.mubr.f32.mxu0 0.0
  %8219 = vmatmul.mubr.f32.gmra.mrb[0].mxu0 %v8146
  %v8220 = vpop.f32.mrb[0].mxu0
  %v8221 = vadd.f32 %v3205, %v8220
  %v8222 = vpop.f32.mrb[0].mxu0
  %8223 = vmatprep.mubr.f32.mxu0 0.0
  %8224 = vmatmul.mubr.f32.gmra.mrb[0].mxu0 %v8148
  %v8225 = vpop.f32.mrb[0].mxu0
  %v8226 = vadd.f32 %v3206, %v8225
  %v8227 = vpop.f32.mrb[0].mxu0
  %8228 = vdwg.mxu0
  %v8229 = vsel %vm318, %v8221, -inf
  %8230 = vmax.xlane.f32.xlu0 %v8229
  %v8231 = vpop.xlane.xlu0 %8230
  %v8232 = vsel %vm318, %v8226, -inf
  %8233 = vmax.xlane.f32.xlu0 %v8232
  %v8234 = vpop.xlane.xlu0 %8233
  %v8235 = vsub.f32 %v8221, %v8231
  %v8236 = vsub.f32 %v8226, %v8234
  %v8237 = vmul.f32 %v8235, 1.442695
  %v8238 = vpow.pop %v8237
  %v8239 = vmul.f32 %v8236, 1.442695
  %v8240 = vpow.pop %v8239
  %v8241 = vsel %vm318, %v8238, 0.0
  %8242 = vadd.xlane.f32.xlu0 %v8241
  %v8243 = vpop.xlane.xlu0 %8242
  %v8244 = vsel %vm318, %v8240, 0.0
  %8245 = vadd.xlane.f32.xlu0 %v8244
  %v8246 = vpop.xlane.xlu0 %8245
  %v8247 = vrcp.pop %v8243
  %v8248 = vmul.f32 %v8238, %v8247
  %v8249 = vrcp.pop %v8246
  %v8250 = vmul.f32 %v8240, %v8249
  %s8251 = scalar_lea.vmem %s13, 96
  %8252 = vst.msk [vmem:[%s8251] sm:$0xff] %vm318, %v8248
  %8253 = vst.msk [vmem:[%s8251 + $0x8] sm:$0xff] %vm318, %v8250
  %8254 = vrot.lane.b32.xlu0 %v7560, 80
  %v8255 = vpop.permute.xlu0 %8254
  %8256 = vrot.lane.b32.xlu0 %v7565, 80
  %v8257 = vpop.permute.xlu0 %8256
  %v8261 = vsel %vm318, %v8248, 0
  %v8264 = vsel %vm318, %v8250, 0
  %8266 = vmatprep.subr.mxu0 0.0
  %8267 = vmatpush1.msra.mxu0 %v8255
  %8268 = vmatprep.subr.mxu0 0.0
  %8269 = vmatpush1.msra.mxu0 %v8257
  %8270 = vmatprep.subr.mxu0 0.0
  %8271 = vmatpush1.msra.mxu0 0.0
  %8272 = vmatprep.subr.mxu0 0.0
  %8273 = vmatpush1.msra.mxu0 0.0
  %8274 = vmatprep.subr.mxu0 0.0
  %8275 = vmatpush1.msra.mxu0 0.0
  %8276 = vmatprep.subr.mxu0 0.0
  %8277 = vmatpush1.msra.mxu0 0.0
  %8278 = vmatprep.subr.mxu0 0.0
  %8279 = vmatpush1.msra.mxu0 0.0
  %8280 = vmatprep.subr.mxu0 0.0
  %8281 = vmatpush1.msra.mxu0 0.0
  %8282 = vmatprep.subr.mxu0 0.0
  %8283 = vmatpush1.msra.mxu0 0.0
  %8284 = vmatprep.subr.mxu0 0.0
  %8285 = vmatpush1.msra.mxu0 0.0
  %8286 = vmatprep.subr.mxu0 0.0
  %8287 = vmatpush1.msra.mxu0 0.0
  %8288 = vmatprep.subr.mxu0 0.0
  %8289 = vmatpush1.msra.mxu0 0.0
  %8290 = vmatprep.subr.mxu0 0.0
  %8291 = vmatpush1.msra.mxu0 0.0
  %8292 = vmatprep.subr.mxu0 0.0
  %8293 = vmatpush1.msra.mxu0 0.0
  %8294 = vmatprep.subr.mxu0 0.0
  %8295 = vmatpush1.msra.mxu0 0.0
  %8296 = vmatprep.subr.mxu0 0.0
  %8297 = vmatpush1.msra.mxu0 0.0
  %8298 = vmatprep.subr.mxu0 0.0
  %8299 = vmatpush1.msra.mxu0 0.0
  %8300 = vmatprep.subr.mxu0 0.0
  %8301 = vmatpush1.msra.mxu0 0.0
  %8302 = vmatprep.subr.mxu0 0.0
  %8303 = vmatpush1.msra.mxu0 0.0
  %8304 = vmatprep.subr.mxu0 0.0
  %8305 = vmatpush1.msra.mxu0 0.0
  %8306 = vmatprep.subr.mxu0 0.0
  %8307 = vmatpush1.msra.mxu0 0.0
  %8308 = vmatprep.subr.mxu0 0.0
  %8309 = vmatpush1.msra.mxu0 0.0
  %8310 = vmatprep.subr.mxu0 0.0
  %8311 = vmatpush1.msra.mxu0 0.0
  %8312 = vmatprep.subr.mxu0 0.0
  %8313 = vmatpush1.msra.mxu0 0.0
  %8314 = vmatprep.subr.mxu0 0.0
  %8315 = vmatpush1.msra.mxu0 0.0
  %8316 = vmatprep.subr.mxu0 0.0
  %8317 = vmatpush1.msra.mxu0 0.0
  %8318 = vmatprep.subr.mxu0 0.0
  %8319 = vmatpush1.msra.mxu0 0.0
  %8320 = vmatprep.subr.mxu0 0.0
  %8321 = vmatpush1.msra.mxu0 0.0
  %8322 = vmatprep.subr.mxu0 0.0
  %8323 = vmatpush1.msra.mxu0 0.0
  %8324 = vmatprep.subr.mxu0 0.0
  %8325 = vmatpush1.msra.mxu0 0.0
  %8326 = vmatprep.subr.mxu0 0.0
  %8327 = vmatpush1.msra.mxu0 0.0
  %8328 = vmatprep.subr.mxu0 0.0
  %8329 = vmatpush1.msra.mxu0 0.0
  %8330 = vmatprep.mubr.f32.mxu0 0.0
  %8331 = vmatmul.mubr.f32.gmra.mrb[0].mxu0 %v8261
  %v8332 = vpop.f32.mrb[0].mxu0
  %v8333 = vadd.f32 0.0, %v8332
  %v8334 = vpop.f32.mrb[0].mxu0
  %8335 = vmatprep.mubr.f32.mxu0 0.0
  %8336 = vmatmul.mubr.f32.gmra.mrb[0].mxu0 %v8264
  %v8337 = vpop.f32.mrb[0].mxu0
  %v8338 = vadd.f32 0.0, %v8337
  %v8339 = vpop.f32.mrb[0].mxu0
  %8340 = vdwg.mxu0
  %8341 = vrot.lane.b32.xlu0 %v7394, 32
  %v8342 = vpop.permute.xlu0 %8341
  %v8345 = vsel %vm234, %v8333, 0
  %v8348 = vsel %vm234, %v8338, 0
  %8350 = vmatprep.subr.mxu0 0.0
  %8351 = vmatpush1.msra.mxu0 %v8342
  %8352 = vmatprep.subr.mxu0 0.0
  %8353 = vmatpush1.msra.mxu0 0.0
  %8354 = vmatprep.subr.mxu0 0.0
  %8355 = vmatpush1.msra.mxu0 0.0
  %8356 = vmatprep.subr.mxu0 0.0
  %8357 = vmatpush1.msra.mxu0 0.0
  %8358 = vmatprep.subr.mxu0 0.0
  %8359 = vmatpush1.msra.mxu0 0.0
  %8360 = vmatprep.subr.mxu0 0.0
  %8361 = vmatpush1.msra.mxu0 0.0
  %8362 = vmatprep.subr.mxu0 0.0
  %8363 = vmatpush1.msra.mxu0 0.0
  %8364 = vmatprep.subr.mxu0 0.0
  %8365 = vmatpush1.msra.mxu0 0.0
  %8366 = vmatprep.subr.mxu0 0.0
  %8367 = vmatpush1.msra.mxu0 0.0
  %8368 = vmatprep.subr.mxu0 0.0
  %8369 = vmatpush1.msra.mxu0 0.0
  %8370 = vmatprep.subr.mxu0 0.0
  %8371 = vmatpush1.msra.mxu0 0.0
  %8372 = vmatprep.subr.mxu0 0.0
  %8373 = vmatpush1.msra.mxu0 0.0
  %8374 = vmatprep.subr.mxu0 0.0
  %8375 = vmatpush1.msra.mxu0 0.0
  %8376 = vmatprep.subr.mxu0 0.0
  %8377 = vmatpush1.msra.mxu0 0.0
  %8378 = vmatprep.subr.mxu0 0.0
  %8379 = vmatpush1.msra.mxu0 0.0
  %8380 = vmatprep.subr.mxu0 0.0
  %8381 = vmatpush1.msra.mxu0 0.0
  %8382 = vmatprep.subr.mxu0 0.0
  %8383 = vmatpush1.msra.mxu0 0.0
  %8384 = vmatprep.subr.mxu0 0.0
  %8385 = vmatpush1.msra.mxu0 0.0
  %8386 = vmatprep.subr.mxu0 0.0
  %8387 = vmatpush1.msra.mxu0 0.0
  %8388 = vmatprep.subr.mxu0 0.0
  %8389 = vmatpush1.msra.mxu0 0.0
  %8390 = vmatprep.subr.mxu0 0.0
  %8391 = vmatpush1.msra.mxu0 0.0
  %8392 = vmatprep.subr.mxu0 0.0
  %8393 = vmatpush1.msra.mxu0 0.0
  %8394 = vmatprep.subr.mxu0 0.0
  %8395 = vmatpush1.msra.mxu0 0.0
  %8396 = vmatprep.subr.mxu0 0.0
  %8397 = vmatpush1.msra.mxu0 0.0
  %8398 = vmatprep.subr.mxu0 0.0
  %8399 = vmatpush1.msra.mxu0 0.0
  %8400 = vmatprep.subr.mxu0 0.0
  %8401 = vmatpush1.msra.mxu0 0.0
  %8402 = vmatprep.subr.mxu0 0.0
  %8403 = vmatpush1.msra.mxu0 0.0
  %8404 = vmatprep.subr.mxu0 0.0
  %8405 = vmatpush1.msra.mxu0 0.0
  %8406 = vmatprep.subr.mxu0 0.0
  %8407 = vmatpush1.msra.mxu0 0.0
  %8408 = vmatprep.subr.mxu0 0.0
  %8409 = vmatpush1.msra.mxu0 0.0
  %8410 = vmatprep.subr.mxu0 0.0
  %8411 = vmatpush1.msra.mxu0 0.0
  %8412 = vmatprep.subr.mxu0 0.0
  %8413 = vmatpush1.msra.mxu0 0.0
  %8414 = vmatprep.mubr.f32.mxu0 0.0
  %8415 = vmatmul.mubr.f32.gmra.mrb[0].mxu0 %v8345
  %v8416 = vpop.f32.mrb[0].mxu0
  %v8417 = vadd.f32 0.0, %v8416
  %v8418 = vpop.f32.mrb[0].mxu0
  %8419 = vmatprep.mubr.f32.mxu0 0.0
  %8420 = vmatmul.mubr.f32.gmra.mrb[0].mxu0 %v8348
  %v8421 = vpop.f32.mrb[0].mxu0
  %v8422 = vadd.f32 0.0, %v8421
  %v8423 = vpop.f32.mrb[0].mxu0
  %8424 = vdwg.mxu0
  %v8425 = vadd.f32 %v8130, %v8417
  %v8426 = vadd.f32 %v8135, %v8422
  %8427 = vrot.lane.b32.xlu0 %v7469, 104
  %v8428 = vpop.permute.xlu0 %8427
  %8429 = vrot.lane.b32.xlu0 %v7474, 104
  %v8430 = vpop.permute.xlu0 %8429
  %8431 = vrot.lane.b32.xlu0 %v7560, 104
  %v8432 = vpop.permute.xlu0 %8431
  %8433 = vrot.lane.b32.xlu0 %v7565, 104
  %v8434 = vpop.permute.xlu0 %8433
  %v8435 = vsel %vm234, %v8428, 0
  %v8437 = vsel %vm234, %v8430, 0
  %v8439 = vsel %vm234, %v8432, 0
  %v8441 = vsel %vm234, %v8434, 0
  %8443 = vmatprep.subr.mxu0 0.0
  %8444 = vmatpush1.xpose.msra.mxu0 %v8439
  %8445 = vmatprep.subr.mxu0 0.0
  %8446 = vmatpush1.xpose.msra.mxu0 %v8441
  %8447 = vmatprep.subr.mxu0 0.0
  %8448 = vmatpush1.xpose.msra.mxu0 0.0
  %8449 = vmatprep.subr.mxu0 0.0
  %8450 = vmatpush1.xpose.msra.mxu0 0.0
  %8451 = vmatprep.subr.mxu0 0.0
  %8452 = vmatpush1.xpose.msra.mxu0 0.0
  %8453 = vmatprep.subr.mxu0 0.0
  %8454 = vmatpush1.xpose.msra.mxu0 0.0
  %8455 = vmatprep.subr.mxu0 0.0
  %8456 = vmatpush1.xpose.msra.mxu0 0.0
  %8457 = vmatprep.subr.mxu0 0.0
  %8458 = vmatpush1.xpose.msra.mxu0 0.0
  %8459 = vmatprep.subr.mxu0 0.0
  %8460 = vmatpush1.xpose.msra.mxu0 0.0
  %8461 = vmatprep.subr.mxu0 0.0
  %8462 = vmatpush1.xpose.msra.mxu0 0.0
  %8463 = vmatprep.subr.mxu0 0.0
  %8464 = vmatpush1.xpose.msra.mxu0 0.0
  %8465 = vmatprep.subr.mxu0 0.0
  %8466 = vmatpush1.xpose.msra.mxu0 0.0
  %8467 = vmatprep.subr.mxu0 0.0
  %8468 = vmatpush1.xpose.msra.mxu0 0.0
  %8469 = vmatprep.subr.mxu0 0.0
  %8470 = vmatpush1.xpose.msra.mxu0 0.0
  %8471 = vmatprep.subr.mxu0 0.0
  %8472 = vmatpush1.xpose.msra.mxu0 0.0
  %8473 = vmatprep.subr.mxu0 0.0
  %8474 = vmatpush1.xpose.msra.mxu0 0.0
  %8475 = vmatprep.subr.mxu0 0.0
  %8476 = vmatpush1.xpose.msra.mxu0 0.0
  %8477 = vmatprep.subr.mxu0 0.0
  %8478 = vmatpush1.xpose.msra.mxu0 0.0
  %8479 = vmatprep.subr.mxu0 0.0
  %8480 = vmatpush1.xpose.msra.mxu0 0.0
  %8481 = vmatprep.subr.mxu0 0.0
  %8482 = vmatpush1.xpose.msra.mxu0 0.0
  %8483 = vmatprep.subr.mxu0 0.0
  %8484 = vmatpush1.xpose.msra.mxu0 0.0
  %8485 = vmatprep.subr.mxu0 0.0
  %8486 = vmatpush1.xpose.msra.mxu0 0.0
  %8487 = vmatprep.subr.mxu0 0.0
  %8488 = vmatpush1.xpose.msra.mxu0 0.0
  %8489 = vmatprep.subr.mxu0 0.0
  %8490 = vmatpush1.xpose.msra.mxu0 0.0
  %8491 = vmatprep.subr.mxu0 0.0
  %8492 = vmatpush1.xpose.msra.mxu0 0.0
  %8493 = vmatprep.subr.mxu0 0.0
  %8494 = vmatpush1.xpose.msra.mxu0 0.0
  %8495 = vmatprep.subr.mxu0 0.0
  %8496 = vmatpush1.xpose.msra.mxu0 0.0
  %8497 = vmatprep.subr.mxu0 0.0
  %8498 = vmatpush1.xpose.msra.mxu0 0.0
  %8499 = vmatprep.subr.mxu0 0.0
  %8500 = vmatpush1.xpose.msra.mxu0 0.0
  %8501 = vmatprep.subr.mxu0 0.0
  %8502 = vmatpush1.xpose.msra.mxu0 0.0
  %8503 = vmatprep.subr.mxu0 0.0
  %8504 = vmatpush1.xpose.msra.mxu0 0.0
  %8505 = vmatprep.subr.mxu0 0.0
  %8506 = vmatpush1.xpose.msra.mxu0 0.0
  %8507 = vmatprep.mubr.f32.mxu0 0.0
  %8508 = vmatmul.mubr.f32.gmra.mrb[0].mxu0 %v8435
  %v8509 = vpop.f32.mrb[0].mxu0
  %v8510 = vadd.f32 %v3205, %v8509
  %v8511 = vpop.f32.mrb[0].mxu0
  %8512 = vmatprep.mubr.f32.mxu0 0.0
  %8513 = vmatmul.mubr.f32.gmra.mrb[0].mxu0 %v8437
  %v8514 = vpop.f32.mrb[0].mxu0
  %v8515 = vadd.f32 %v3206, %v8514
  %v8516 = vpop.f32.mrb[0].mxu0
  %8517 = vdwg.mxu0
  %v8518 = vsel %vm318, %v8510, -inf
  %8519 = vmax.xlane.f32.xlu0 %v8518
  %v8520 = vpop.xlane.xlu0 %8519
  %v8521 = vsel %vm318, %v8515, -inf
  %8522 = vmax.xlane.f32.xlu0 %v8521
  %v8523 = vpop.xlane.xlu0 %8522
  %v8524 = vsub.f32 %v8510, %v8520
  %v8525 = vsub.f32 %v8515, %v8523
  %v8526 = vmul.f32 %v8524, 1.442695
  %v8527 = vpow.pop %v8526
  %v8528 = vmul.f32 %v8525, 1.442695
  %v8529 = vpow.pop %v8528
  %v8530 = vsel %vm318, %v8527, 0.0
  %8531 = vadd.xlane.f32.xlu0 %v8530
  %v8532 = vpop.xlane.xlu0 %8531
  %v8533 = vsel %vm318, %v8529, 0.0
  %8534 = vadd.xlane.f32.xlu0 %v8533
  %v8535 = vpop.xlane.xlu0 %8534
  %v8536 = vrcp.pop %v8532
  %v8537 = vmul.f32 %v8527, %v8536
  %v8538 = vrcp.pop %v8535
  %v8539 = vmul.f32 %v8529, %v8538
  %s8540 = scalar_lea.vmem %s13, 112
  %8541 = vst.msk [vmem:[%s8540] sm:$0xff] %vm318, %v8537
  %8542 = vst.msk [vmem:[%s8540 + $0x8] sm:$0xff] %vm318, %v8539
  %8543 = vrot.lane.b32.xlu0 %v7560, 72
  %v8544 = vpop.permute.xlu0 %8543
  %8545 = vrot.lane.b32.xlu0 %v7565, 72
  %v8546 = vpop.permute.xlu0 %8545
  %v8550 = vsel %vm318, %v8537, 0
  %v8553 = vsel %vm318, %v8539, 0
  %8555 = vmatprep.subr.mxu0 0.0
  %8556 = vmatpush1.msra.mxu0 %v8544
  %8557 = vmatprep.subr.mxu0 0.0
  %8558 = vmatpush1.msra.mxu0 %v8546
  %8559 = vmatprep.subr.mxu0 0.0
  %8560 = vmatpush1.msra.mxu0 0.0
  %8561 = vmatprep.subr.mxu0 0.0
  %8562 = vmatpush1.msra.mxu0 0.0
  %8563 = vmatprep.subr.mxu0 0.0
  %8564 = vmatpush1.msra.mxu0 0.0
  %8565 = vmatprep.subr.mxu0 0.0
  %8566 = vmatpush1.msra.mxu0 0.0
  %8567 = vmatprep.subr.mxu0 0.0
  %8568 = vmatpush1.msra.mxu0 0.0
  %8569 = vmatprep.subr.mxu0 0.0
  %8570 = vmatpush1.msra.mxu0 0.0
  %8571 = vmatprep.subr.mxu0 0.0
  %8572 = vmatpush1.msra.mxu0 0.0
  %8573 = vmatprep.subr.mxu0 0.0
  %8574 = vmatpush1.msra.mxu0 0.0
  %8575 = vmatprep.subr.mxu0 0.0
  %8576 = vmatpush1.msra.mxu0 0.0
  %8577 = vmatprep.subr.mxu0 0.0
  %8578 = vmatpush1.msra.mxu0 0.0
  %8579 = vmatprep.subr.mxu0 0.0
  %8580 = vmatpush1.msra.mxu0 0.0
  %8581 = vmatprep.subr.mxu0 0.0
  %8582 = vmatpush1.msra.mxu0 0.0
  %8583 = vmatprep.subr.mxu0 0.0
  %8584 = vmatpush1.msra.mxu0 0.0
  %8585 = vmatprep.subr.mxu0 0.0
  %8586 = vmatpush1.msra.mxu0 0.0
  %8587 = vmatprep.subr.mxu0 0.0
  %8588 = vmatpush1.msra.mxu0 0.0
  %8589 = vmatprep.subr.mxu0 0.0
  %8590 = vmatpush1.msra.mxu0 0.0
  %8591 = vmatprep.subr.mxu0 0.0
  %8592 = vmatpush1.msra.mxu0 0.0
  %8593 = vmatprep.subr.mxu0 0.0
  %8594 = vmatpush1.msra.mxu0 0.0
  %8595 = vmatprep.subr.mxu0 0.0
  %8596 = vmatpush1.msra.mxu0 0.0
  %8597 = vmatprep.subr.mxu0 0.0
  %8598 = vmatpush1.msra.mxu0 0.0
  %8599 = vmatprep.subr.mxu0 0.0
  %8600 = vmatpush1.msra.mxu0 0.0
  %8601 = vmatprep.subr.mxu0 0.0
  %8602 = vmatpush1.msra.mxu0 0.0
  %8603 = vmatprep.subr.mxu0 0.0
  %8604 = vmatpush1.msra.mxu0 0.0
  %8605 = vmatprep.subr.mxu0 0.0
  %8606 = vmatpush1.msra.mxu0 0.0
  %8607 = vmatprep.subr.mxu0 0.0
  %8608 = vmatpush1.msra.mxu0 0.0
  %8609 = vmatprep.subr.mxu0 0.0
  %8610 = vmatpush1.msra.mxu0 0.0
  %8611 = vmatprep.subr.mxu0 0.0
  %8612 = vmatpush1.msra.mxu0 0.0
  %8613 = vmatprep.subr.mxu0 0.0
  %8614 = vmatpush1.msra.mxu0 0.0
  %8615 = vmatprep.subr.mxu0 0.0
  %8616 = vmatpush1.msra.mxu0 0.0
  %8617 = vmatprep.subr.mxu0 0.0
  %8618 = vmatpush1.msra.mxu0 0.0
  %8619 = vmatprep.mubr.f32.mxu0 0.0
  %8620 = vmatmul.mubr.f32.gmra.mrb[0].mxu0 %v8550
  %v8621 = vpop.f32.mrb[0].mxu0
  %v8622 = vadd.f32 0.0, %v8621
  %v8623 = vpop.f32.mrb[0].mxu0
  %8624 = vmatprep.mubr.f32.mxu0 0.0
  %8625 = vmatmul.mubr.f32.gmra.mrb[0].mxu0 %v8553
  %v8626 = vpop.f32.mrb[0].mxu0
  %v8627 = vadd.f32 0.0, %v8626
  %v8628 = vpop.f32.mrb[0].mxu0
  %8629 = vdwg.mxu0
  %8630 = vrot.lane.b32.xlu0 %v7395, 32
  %v8631 = vpop.permute.xlu0 %8630
  %v8634 = vsel %vm234, %v8622, 0
  %v8637 = vsel %vm234, %v8627, 0
  %8639 = vmatprep.subr.mxu0 0.0
  %8640 = vmatpush1.msra.mxu0 %v8631
  %8641 = vmatprep.subr.mxu0 0.0
  %8642 = vmatpush1.msra.mxu0 0.0
  %8643 = vmatprep.subr.mxu0 0.0
  %8644 = vmatpush1.msra.mxu0 0.0
  %8645 = vmatprep.subr.mxu0 0.0
  %8646 = vmatpush1.msra.mxu0 0.0
  %8647 = vmatprep.subr.mxu0 0.0
  %8648 = vmatpush1.msra.mxu0 0.0
  %8649 = vmatprep.subr.mxu0 0.0
  %8650 = vmatpush1.msra.mxu0 0.0
  %8651 = vmatprep.subr.mxu0 0.0
  %8652 = vmatpush1.msra.mxu0 0.0
  %8653 = vmatprep.subr.mxu0 0.0
  %8654 = vmatpush1.msra.mxu0 0.0
  %8655 = vmatprep.subr.mxu0 0.0
  %8656 = vmatpush1.msra.mxu0 0.0
  %8657 = vmatprep.subr.mxu0 0.0
  %8658 = vmatpush1.msra.mxu0 0.0
  %8659 = vmatprep.subr.mxu0 0.0
  %8660 = vmatpush1.msra.mxu0 0.0
  %8661 = vmatprep.subr.mxu0 0.0
  %8662 = vmatpush1.msra.mxu0 0.0
  %8663 = vmatprep.subr.mxu0 0.0
  %8664 = vmatpush1.msra.mxu0 0.0
  %8665 = vmatprep.subr.mxu0 0.0
  %8666 = vmatpush1.msra.mxu0 0.0
  %8667 = vmatprep.subr.mxu0 0.0
  %8668 = vmatpush1.msra.mxu0 0.0
  %8669 = vmatprep.subr.mxu0 0.0
  %8670 = vmatpush1.msra.mxu0 0.0
  %8671 = vmatprep.subr.mxu0 0.0
  %8672 = vmatpush1.msra.mxu0 0.0
  %8673 = vmatprep.subr.mxu0 0.0
  %8674 = vmatpush1.msra.mxu0 0.0
  %8675 = vmatprep.subr.mxu0 0.0
  %8676 = vmatpush1.msra.mxu0 0.0
  %8677 = vmatprep.subr.mxu0 0.0
  %8678 = vmatpush1.msra.mxu0 0.0
  %8679 = vmatprep.subr.mxu0 0.0
  %8680 = vmatpush1.msra.mxu0 0.0
  %8681 = vmatprep.subr.mxu0 0.0
  %8682 = vmatpush1.msra.mxu0 0.0
  %8683 = vmatprep.subr.mxu0 0.0
  %8684 = vmatpush1.msra.mxu0 0.0
  %8685 = vmatprep.subr.mxu0 0.0
  %8686 = vmatpush1.msra.mxu0 0.0
  %8687 = vmatprep.subr.mxu0 0.0
  %8688 = vmatpush1.msra.mxu0 0.0
  %8689 = vmatprep.subr.mxu0 0.0
  %8690 = vmatpush1.msra.mxu0 0.0
  %8691 = vmatprep.subr.mxu0 0.0
  %8692 = vmatpush1.msra.mxu0 0.0
  %8693 = vmatprep.subr.mxu0 0.0
  %8694 = vmatpush1.msra.mxu0 0.0
  %8695 = vmatprep.subr.mxu0 0.0
  %8696 = vmatpush1.msra.mxu0 0.0
  %8697 = vmatprep.subr.mxu0 0.0
  %8698 = vmatpush1.msra.mxu0 0.0
  %8699 = vmatprep.subr.mxu0 0.0
  %8700 = vmatpush1.msra.mxu0 0.0
  %8701 = vmatprep.subr.mxu0 0.0
  %8702 = vmatpush1.msra.mxu0 0.0
  %8703 = vmatprep.mubr.f32.mxu0 0.0
  %8704 = vmatmul.mubr.f32.gmra.mrb[0].mxu0 %v8634
  %v8705 = vpop.f32.mrb[0].mxu0
  %v8706 = vadd.f32 0.0, %v8705
  %v8707 = vpop.f32.mrb[0].mxu0
  %8708 = vmatprep.mubr.f32.mxu0 0.0
  %8709 = vmatmul.mubr.f32.gmra.mrb[0].mxu0 %v8637
  %v8710 = vpop.f32.mrb[0].mxu0
  %v8711 = vadd.f32 0.0, %v8710
  %v8712 = vpop.f32.mrb[0].mxu0
  %8713 = vdwg.mxu0
  %v8714 = vadd.f32 %v8425, %v8706
  %v8715 = vadd.f32 %v8426, %v8711
  %s8716 = scalar_lea.vmem %s9, 7
  %v8717 = vld [vmem:[%s8716] sm:$0x1]
  %v8718 = vadd.f32 %v8714, %v7389
  %v8719 = vadd.f32 %v8715, %v7390
  %v8720 = vsel %vm146, %v8718, 0.0
  %8721 = vadd.xlane.f32.xlu0 %v8720
  %v8722 = vpop.xlane.xlu0 %8721
  %v8723 = vsel %vm146, %v8719, 0.0
  %8724 = vadd.xlane.f32.xlu0 %v8723
  %v8725 = vpop.xlane.xlu0 %8724
  %v8726 = vmul.f32 %v8722, %v1392
  %v8727 = vmul.f32 %v8725, %v1392
  %v8728 = vsub.f32 %v8718, %v8726
  %v8729 = vsub.f32 %v8719, %v8727
  %v8730 = vmul.f32 %v8728, %v8728
  %v8731 = vmul.f32 %v8729, %v8729
  %v8732 = vsel %vm146, %v8730, 0.0
  %8733 = vadd.xlane.f32.xlu0 %v8732
  %v8734 = vpop.xlane.xlu0 %8733
  %v8735 = vsel %vm146, %v8731, 0.0
  %8736 = vadd.xlane.f32.xlu0 %v8735
  %v8737 = vpop.xlane.xlu0 %8736
  %v8738 = vmul.f32 %v8734, %v1392
  %v8739 = vmul.f32 %v8737, %v1392
  %v8740 = vadd.f32 %v8738, 1e-05
  %v8741 = vadd.f32 %v8739, 1e-05
  %v8742 = vrsqrt.pop %v8740
  %v8743 = vrsqrt.pop %v8741
  %v8744 = vmul.f32 %v8728, %v8742
  %v8745 = vmul.f32 %v8729, %v8743
  %v8747 = vlaneseq
  %v8748 = vshrl.u32 %v8747, 7
  %v8749 = vsub.s32 0, %v8748
  %v8750 = vrot.slane %v8717, %v8749
  %v8752 = vmul.f32 %v8744, %v8750
  %v8753 = vmul.f32 %v8745, %v8750
  %8754 = vrot.lane.b32.xlu0 %v8750, 96
  %v8755 = vpop.permute.xlu0 %8754
  %v8757 = vadd.f32 %v8752, %v8755
  %v8758 = vadd.f32 %v8753, %v8755
  %s8759 = scalar_lea.vmem %s8, 192
  %v8760 = vld [vmem:[%s8759] sm:$0xff]
  %v8761 = vld [vmem:[%s8759 + $0x8] sm:$0xff]
  %v8762 = vld [vmem:[%s8759 + $0x10] sm:$0xff]
  %v8763 = vld [vmem:[%s8759 + $0x18] sm:$0xff]
  %v8764 = vld [vmem:[%s8759 + $0x20] sm:$0xff]
  %v8765 = vld [vmem:[%s8759 + $0x28] sm:$0xff]
  %v8766 = vld [vmem:[%s8759 + $0x30] sm:$0xff]
  %v8767 = vld [vmem:[%s8759 + $0x38] sm:$0xff]
  %v8769 = vsel %vm146, %v8757, 0
  %v8772 = vsel %vm146, %v8758, 0
  %8774 = vmatprep.subr.mxu0 0.0
  %8775 = vmatpush1.msra.mxu0 %v8760
  %8776 = vmatprep.subr.mxu0 0.0
  %8777 = vmatpush1.msra.mxu0 %v8761
  %8778 = vmatprep.subr.mxu0 0.0
  %8779 = vmatpush1.msra.mxu0 %v8762
  %8780 = vmatprep.subr.mxu0 0.0
  %8781 = vmatpush1.msra.mxu0 %v8763
  %8782 = vmatprep.subr.mxu0 0.0
  %8783 = vmatpush1.msra.mxu0 0.0
  %8784 = vmatprep.subr.mxu0 0.0
  %8785 = vmatpush1.msra.mxu0 0.0
  %8786 = vmatprep.subr.mxu0 0.0
  %8787 = vmatpush1.msra.mxu0 0.0
  %8788 = vmatprep.subr.mxu0 0.0
  %8789 = vmatpush1.msra.mxu0 0.0
  %8790 = vmatprep.subr.mxu0 0.0
  %8791 = vmatpush1.msra.mxu0 0.0
  %8792 = vmatprep.subr.mxu0 0.0
  %8793 = vmatpush1.msra.mxu0 0.0
  %8794 = vmatprep.subr.mxu0 0.0
  %8795 = vmatpush1.msra.mxu0 0.0
  %8796 = vmatprep.subr.mxu0 0.0
  %8797 = vmatpush1.msra.mxu0 0.0
  %8798 = vmatprep.subr.mxu0 0.0
  %8799 = vmatpush1.msra.mxu0 0.0
  %8800 = vmatprep.subr.mxu0 0.0
  %8801 = vmatpush1.msra.mxu0 0.0
  %8802 = vmatprep.subr.mxu0 0.0
  %8803 = vmatpush1.msra.mxu0 0.0
  %8804 = vmatprep.subr.mxu0 0.0
  %8805 = vmatpush1.msra.mxu0 0.0
  %8806 = vmatprep.subr.mxu0 0.0
  %8807 = vmatpush1.msra.mxu0 0.0
  %8808 = vmatprep.subr.mxu0 0.0
  %8809 = vmatpush1.msra.mxu0 0.0
  %8810 = vmatprep.subr.mxu0 0.0
  %8811 = vmatpush1.msra.mxu0 0.0
  %8812 = vmatprep.subr.mxu0 0.0
  %8813 = vmatpush1.msra.mxu0 0.0
  %8814 = vmatprep.subr.mxu0 0.0
  %8815 = vmatpush1.msra.mxu0 0.0
  %8816 = vmatprep.subr.mxu0 0.0
  %8817 = vmatpush1.msra.mxu0 0.0
  %8818 = vmatprep.subr.mxu0 0.0
  %8819 = vmatpush1.msra.mxu0 0.0
  %8820 = vmatprep.subr.mxu0 0.0
  %8821 = vmatpush1.msra.mxu0 0.0
  %8822 = vmatprep.subr.mxu0 0.0
  %8823 = vmatpush1.msra.mxu0 0.0
  %8824 = vmatprep.subr.mxu0 0.0
  %8825 = vmatpush1.msra.mxu0 0.0
  %8826 = vmatprep.subr.mxu0 0.0
  %8827 = vmatpush1.msra.mxu0 0.0
  %8828 = vmatprep.subr.mxu0 0.0
  %8829 = vmatpush1.msra.mxu0 0.0
  %8830 = vmatprep.subr.mxu0 0.0
  %8831 = vmatpush1.msra.mxu0 0.0
  %8832 = vmatprep.subr.mxu0 0.0
  %8833 = vmatpush1.msra.mxu0 0.0
  %8834 = vmatprep.subr.mxu0 0.0
  %8835 = vmatpush1.msra.mxu0 0.0
  %8836 = vmatprep.subr.mxu0 0.0
  %8837 = vmatpush1.msra.mxu0 0.0
  %8838 = vmatprep.mubr.f32.mxu0 0.0
  %8839 = vmatmul.mubr.f32.gmra.mrb[0].mxu0 %v8769
  %v8840 = vpop.f32.mrb[0].mxu0
  %v8841 = vadd.f32 0.0, %v8840
  %v8842 = vpop.f32.mrb[0].mxu0
  %8843 = vmatprep.mubr.f32.mxu0 0.0
  %8844 = vmatmul.mubr.f32.gmra.mrb[0].mxu0 %v8772
  %v8845 = vpop.f32.mrb[0].mxu0
  %v8846 = vadd.f32 0.0, %v8845
  %v8847 = vpop.f32.mrb[0].mxu0
  %8848 = vdwg.mxu0
  %v8849 = vmax.f32 %v8841, 0.0
  %v8850 = vmax.f32 %v8846, 0.0
  %s8851 = scalar_lea.vmem %s9, 9
  %v8852 = vld [vmem:[%s8851] sm:$0x1]
  %8861 = vrot.lane.b32.xlu0 %v8760, 64
  %v8862 = vpop.permute.xlu0 %8861
  %8863 = vrot.lane.b32.xlu0 %v8761, 64
  %v8864 = vpop.permute.xlu0 %8863
  %8865 = vrot.lane.b32.xlu0 %v8762, 64
  %v8866 = vpop.permute.xlu0 %8865
  %8867 = vrot.lane.b32.xlu0 %v8763, 64
  %v8868 = vpop.permute.xlu0 %8867
  %8869 = vrot.lane.b32.xlu0 %v8764, 64
  %v8870 = vpop.permute.xlu0 %8869
  %8871 = vrot.lane.b32.xlu0 %v8765, 64
  %v8872 = vpop.permute.xlu0 %8871
  %8873 = vrot.lane.b32.xlu0 %v8766, 64
  %v8874 = vpop.permute.xlu0 %8873
  %8875 = vrot.lane.b32.xlu0 %v8767, 64
  %v8876 = vpop.permute.xlu0 %8875
  %v8886 = vsel %vm1551, %v8849, 0
  %v8889 = vsel %vm1551, %v8850, 0
  %8891 = vmatprep.subr.mxu0 0.0
  %8892 = vmatpush1.msra.mxu0 %v8862
  %8893 = vmatprep.subr.mxu0 0.0
  %8894 = vmatpush1.msra.mxu0 %v8864
  %8895 = vmatprep.subr.mxu0 0.0
  %8896 = vmatpush1.msra.mxu0 %v8866
  %8897 = vmatprep.subr.mxu0 0.0
  %8898 = vmatpush1.msra.mxu0 %v8868
  %8899 = vmatprep.subr.mxu0 0.0
  %8900 = vmatpush1.msra.mxu0 %v8870
  %8901 = vmatprep.subr.mxu0 0.0
  %8902 = vmatpush1.msra.mxu0 %v8872
  %8903 = vmatprep.subr.mxu0 0.0
  %8904 = vmatpush1.msra.mxu0 %v8874
  %8905 = vmatprep.subr.mxu0 0.0
  %8906 = vmatpush1.msra.mxu0 %v8876
  %8907 = vmatprep.subr.mxu0 0.0
  %8908 = vmatpush1.msra.mxu0 0.0
  %8909 = vmatprep.subr.mxu0 0.0
  %8910 = vmatpush1.msra.mxu0 0.0
  %8911 = vmatprep.subr.mxu0 0.0
  %8912 = vmatpush1.msra.mxu0 0.0
  %8913 = vmatprep.subr.mxu0 0.0
  %8914 = vmatpush1.msra.mxu0 0.0
  %8915 = vmatprep.subr.mxu0 0.0
  %8916 = vmatpush1.msra.mxu0 0.0
  %8917 = vmatprep.subr.mxu0 0.0
  %8918 = vmatpush1.msra.mxu0 0.0
  %8919 = vmatprep.subr.mxu0 0.0
  %8920 = vmatpush1.msra.mxu0 0.0
  %8921 = vmatprep.subr.mxu0 0.0
  %8922 = vmatpush1.msra.mxu0 0.0
  %8923 = vmatprep.subr.mxu0 0.0
  %8924 = vmatpush1.msra.mxu0 0.0
  %8925 = vmatprep.subr.mxu0 0.0
  %8926 = vmatpush1.msra.mxu0 0.0
  %8927 = vmatprep.subr.mxu0 0.0
  %8928 = vmatpush1.msra.mxu0 0.0
  %8929 = vmatprep.subr.mxu0 0.0
  %8930 = vmatpush1.msra.mxu0 0.0
  %8931 = vmatprep.subr.mxu0 0.0
  %8932 = vmatpush1.msra.mxu0 0.0
  %8933 = vmatprep.subr.mxu0 0.0
  %8934 = vmatpush1.msra.mxu0 0.0
  %8935 = vmatprep.subr.mxu0 0.0
  %8936 = vmatpush1.msra.mxu0 0.0
  %8937 = vmatprep.subr.mxu0 0.0
  %8938 = vmatpush1.msra.mxu0 0.0
  %8939 = vmatprep.subr.mxu0 0.0
  %8940 = vmatpush1.msra.mxu0 0.0
  %8941 = vmatprep.subr.mxu0 0.0
  %8942 = vmatpush1.msra.mxu0 0.0
  %8943 = vmatprep.subr.mxu0 0.0
  %8944 = vmatpush1.msra.mxu0 0.0
  %8945 = vmatprep.subr.mxu0 0.0
  %8946 = vmatpush1.msra.mxu0 0.0
  %8947 = vmatprep.subr.mxu0 0.0
  %8948 = vmatpush1.msra.mxu0 0.0
  %8949 = vmatprep.subr.mxu0 0.0
  %8950 = vmatpush1.msra.mxu0 0.0
  %8951 = vmatprep.subr.mxu0 0.0
  %8952 = vmatpush1.msra.mxu0 0.0
  %8953 = vmatprep.subr.mxu0 0.0
  %8954 = vmatpush1.msra.mxu0 0.0
  %8955 = vmatprep.mubr.f32.mxu0 0.0
  %8956 = vmatmul.mubr.f32.gmra.mrb[0].mxu0 %v8886
  %v8957 = vpop.f32.mrb[0].mxu0
  %v8958 = vadd.f32 %v8757, %v8957
  %v8959 = vpop.f32.mrb[0].mxu0
  %8960 = vmatprep.mubr.f32.mxu0 0.0
  %8961 = vmatmul.mubr.f32.gmra.mrb[0].mxu0 %v8889
  %v8962 = vpop.f32.mrb[0].mxu0
  %v8963 = vadd.f32 %v8758, %v8962
  %v8964 = vpop.f32.mrb[0].mxu0
  %8965 = vdwg.mxu0
  %v8966 = vsel %vm146, %v8958, 0.0
  %8967 = vadd.xlane.f32.xlu0 %v8966
  %v8968 = vpop.xlane.xlu0 %8967
  %v8969 = vsel %vm146, %v8963, 0.0
  %8970 = vadd.xlane.f32.xlu0 %v8969
  %v8971 = vpop.xlane.xlu0 %8970
  %v8972 = vmul.f32 %v8968, %v1392
  %v8973 = vmul.f32 %v8971, %v1392
  %v8974 = vsub.f32 %v8958, %v8972
  %v8975 = vsub.f32 %v8963, %v8973
  %v8976 = vmul.f32 %v8974, %v8974
  %v8977 = vmul.f32 %v8975, %v8975
  %v8978 = vsel %vm146, %v8976, 0.0
  %8979 = vadd.xlane.f32.xlu0 %v8978
  %v8980 = vpop.xlane.xlu0 %8979
  %v8981 = vsel %vm146, %v8977, 0.0
  %8982 = vadd.xlane.f32.xlu0 %v8981
  %v8983 = vpop.xlane.xlu0 %8982
  %v8984 = vmul.f32 %v8980, %v1392
  %v8985 = vmul.f32 %v8983, %v1392
  %v8986 = vadd.f32 %v8984, 1e-05
  %v8987 = vadd.f32 %v8985, 1e-05
  %v8988 = vrsqrt.pop %v8986
  %v8989 = vrsqrt.pop %v8987
  %v8990 = vmul.f32 %v8974, %v8988
  %v8991 = vmul.f32 %v8975, %v8989
  %v8993 = vlaneseq
  %v8994 = vshrl.u32 %v8993, 7
  %v8995 = vsub.s32 0, %v8994
  %v8996 = vrot.slane %v8852, %v8995
  %v8998 = vmul.f32 %v8990, %v8996
  %v8999 = vmul.f32 %v8991, %v8996
  %9000 = vrot.lane.b32.xlu0 %v8996, 96
  %v9001 = vpop.permute.xlu0 %9000
  %v9003 = vadd.f32 %v8998, %v9001
  %v9004 = vadd.f32 %v8999, %v9001
  %s9005 = scalar_lea.vmem %s7, 192
  %v9006 = vld [vmem:[%s9005] sm:$0xff]
  %v9007 = vld [vmem:[%s9005 + $0x8] sm:$0xff]
  %v9008 = vld [vmem:[%s9005 + $0x10] sm:$0xff]
  %v9009 = vld [vmem:[%s9005 + $0x18] sm:$0xff]
  %v9011 = vsel %vm146, %v9003, 0
  %v9014 = vsel %vm146, %v9004, 0
  %9016 = vmatprep.subr.mxu0 0.0
  %9017 = vmatpush1.msra.mxu0 %v9006
  %9018 = vmatprep.subr.mxu0 0.0
  %9019 = vmatpush1.msra.mxu0 %v9007
  %9020 = vmatprep.subr.mxu0 0.0
  %9021 = vmatpush1.msra.mxu0 %v9008
  %9022 = vmatprep.subr.mxu0 0.0
  %9023 = vmatpush1.msra.mxu0 %v9009
  %9024 = vmatprep.subr.mxu0 0.0
  %9025 = vmatpush1.msra.mxu0 0.0
  %9026 = vmatprep.subr.mxu0 0.0
  %9027 = vmatpush1.msra.mxu0 0.0
  %9028 = vmatprep.subr.mxu0 0.0
  %9029 = vmatpush1.msra.mxu0 0.0
  %9030 = vmatprep.subr.mxu0 0.0
  %9031 = vmatpush1.msra.mxu0 0.0
  %9032 = vmatprep.subr.mxu0 0.0
  %9033 = vmatpush1.msra.mxu0 0.0
  %9034 = vmatprep.subr.mxu0 0.0
  %9035 = vmatpush1.msra.mxu0 0.0
  %9036 = vmatprep.subr.mxu0 0.0
  %9037 = vmatpush1.msra.mxu0 0.0
  %9038 = vmatprep.subr.mxu0 0.0
  %9039 = vmatpush1.msra.mxu0 0.0
  %9040 = vmatprep.subr.mxu0 0.0
  %9041 = vmatpush1.msra.mxu0 0.0
  %9042 = vmatprep.subr.mxu0 0.0
  %9043 = vmatpush1.msra.mxu0 0.0
  %9044 = vmatprep.subr.mxu0 0.0
  %9045 = vmatpush1.msra.mxu0 0.0
  %9046 = vmatprep.subr.mxu0 0.0
  %9047 = vmatpush1.msra.mxu0 0.0
  %9048 = vmatprep.subr.mxu0 0.0
  %9049 = vmatpush1.msra.mxu0 0.0
  %9050 = vmatprep.subr.mxu0 0.0
  %9051 = vmatpush1.msra.mxu0 0.0
  %9052 = vmatprep.subr.mxu0 0.0
  %9053 = vmatpush1.msra.mxu0 0.0
  %9054 = vmatprep.subr.mxu0 0.0
  %9055 = vmatpush1.msra.mxu0 0.0
  %9056 = vmatprep.subr.mxu0 0.0
  %9057 = vmatpush1.msra.mxu0 0.0
  %9058 = vmatprep.subr.mxu0 0.0
  %9059 = vmatpush1.msra.mxu0 0.0
  %9060 = vmatprep.subr.mxu0 0.0
  %9061 = vmatpush1.msra.mxu0 0.0
  %9062 = vmatprep.subr.mxu0 0.0
  %9063 = vmatpush1.msra.mxu0 0.0
  %9064 = vmatprep.subr.mxu0 0.0
  %9065 = vmatpush1.msra.mxu0 0.0
  %9066 = vmatprep.subr.mxu0 0.0
  %9067 = vmatpush1.msra.mxu0 0.0
  %9068 = vmatprep.subr.mxu0 0.0
  %9069 = vmatpush1.msra.mxu0 0.0
  %9070 = vmatprep.subr.mxu0 0.0
  %9071 = vmatpush1.msra.mxu0 0.0
  %9072 = vmatprep.subr.mxu0 0.0
  %9073 = vmatpush1.msra.mxu0 0.0
  %9074 = vmatprep.subr.mxu0 0.0
  %9075 = vmatpush1.msra.mxu0 0.0
  %9076 = vmatprep.subr.mxu0 0.0
  %9077 = vmatpush1.msra.mxu0 0.0
  %9078 = vmatprep.subr.mxu0 0.0
  %9079 = vmatpush1.msra.mxu0 0.0
  %9080 = vmatprep.mubr.f32.mxu0 0.0
  %9081 = vmatmul.mubr.f32.gmra.mrb[0].mxu0 %v9011
  %v9082 = vpop.f32.mrb[0].mxu0
  %v9083 = vadd.f32 0.0, %v9082
  %v9084 = vpop.f32.mrb[0].mxu0
  %9085 = vmatprep.mubr.f32.mxu0 0.0
  %9086 = vmatmul.mubr.f32.gmra.mrb[0].mxu0 %v9014
  %v9087 = vpop.f32.mrb[0].mxu0
  %v9088 = vadd.f32 0.0, %v9087
  %v9089 = vpop.f32.mrb[0].mxu0
  %9090 = vdwg.mxu0
  %9091 = vst [vmem:[%s10] sm:$0xff] %v9083
  %9092 = vst [vmem:[%s10 + $0x8] sm:$0xff] %v9088
  // Predicated region
  $region42: #{transformer_forward.1} parent=0 // pred_check
    _
  $region43: #{transformer_forward.1} parent=0 // pred_check_branch
    %9094 = sbr.rel (0) target = $region45
  $region44: #{transformer_forward.1} parent=0 // pred_region
    _
  $region45: #{transformer_forward.1} parent=0 // pred_fallthru
    _
  // Predicated region
  $region46: #{transformer_forward.1} parent=0 // pred_check
    _
  $region47: #{transformer_forward.1} parent=0 // pred_check_branch
    %9096 = sbr.rel (0) target = $region49
  $region48: #{transformer_forward.1} parent=0 // pred_region
    _
  $region49: #{transformer_forward.1} parent=0 // pred_fallthru
    _
  // Predicated region
  $region50: #{transformer_forward.1} parent=0 // pred_check
    _
  $region51: #{transformer_forward.1} parent=0 // pred_check_branch
    %9098 = sbr.rel (0) target = $region53
  $region52: #{transformer_forward.1} parent=0 // pred_region
    _
  $region53: #{transformer_forward.1} parent=0 // pred_fallthru
    _
  // Predicated region
  $region54: #{transformer_forward.1} parent=0 // pred_check
    _
  $region55: #{transformer_forward.1} parent=0 // pred_check_branch
    %9100 = sbr.rel (0) target = $region57
  $region56: #{transformer_forward.1} parent=0 // pred_region
    _
  $region57: #{transformer_forward.1} parent=0 // pred_fallthru
    _
  // Predicated region
  $region58: #{transformer_forward.1} parent=0 // pred_check
    _
  $region59: #{transformer_forward.1} parent=0 // pred_check_branch
    %9102 = sbr.rel (0) target = $region61
  $region60: #{transformer_forward.1} parent=0 // pred_region
    _
  $region61: #{transformer_forward.1} parent=0 // pred_fallthru
    _
  // Predicated region
  $region62: #{transformer_forward.1} parent=0 // pred_check
    _
  $region63: #{transformer_forward.1} parent=0 // pred_check_branch
    %9104 = sbr.rel (0) target = $region65
  $region64: #{transformer_forward.1} parent=0 // pred_region
    _
  $region65: #{transformer_forward.1} parent=0 // pred_fallthru
    _
  // Predicated region
  $region66: #{transformer_forward.1} parent=0 // pred_check
    _
  $region67: #{transformer_forward.1} parent=0 // pred_check_branch
    %9106 = sbr.rel (0) target = $region69
  $region68: #{transformer_forward.1} parent=0 // pred_region
    _
  $region69: #{transformer_forward.1} parent=0 // pred_fallthru
    _
  // Predicated region
  $region70: #{transformer_forward.1} parent=0 // pred_check
    _
  $region71: #{transformer_forward.1} parent=0 // pred_check_branch
    %9108 = sbr.rel (0) target = $region73
  $region72: #{transformer_forward.1} parent=0 // pred_region
    _
  $region73: #{transformer_forward.1} parent=0 // pred_fallthru
    _

</llo_original>
